<compile_context>
chip_gen: v7x
topology: tpu7x:2x2x1
jax: 0.10.0
libtpu: 0.0.40
codegen_flags: <defaults>
</compile_context>

<pallas_src>
import numpy as np
import jax
import jax.numpy as jnp
from jax import lax
from jax.experimental import pallas as pl
from jax.experimental.pallas import tpu as pltpu

# ----------------------- configuration (small shapes) -----------------------
B        = 2
IN_CHANS = 3
IMG      = 16
PATCH    = 4
EMBED    = 96          # embed_dim (module default)
DEPTH    = 2           # depth (scaled down from 4)
HEADS    = 3           # num_heads (module default)
CLASSES  = 4
N        = (IMG // PATCH) ** 2          # 16 patches per image
P        = IN_CHANS * PATCH * PATCH     # 48 = flattened patch size
HD       = EMBED // HEADS               # 32 = head dim
HID      = 4 * EMBED                    # 384 = MLP hidden (already 128-multiple)
SCALE    = float(HD) ** -0.5
EPS      = 1e-5                         # nn.LayerNorm default eps

BN = B * N                              # 32 fused token rows
DP = 128                                # EMBED zero-padded to lane width
PP = 128                                # patch dim zero-padded to lane width
CP = 128                                # classes zero-padded to lane width


# ------------------------------ kernel helpers ------------------------------
def _layernorm(x, w, b, mask):
    # Padded lanes of x are exactly zero, so mean = sum/EMBED is correct; the
    # mask keeps padded lanes out of the variance.  w/b are zero on padded
    # lanes -> padded lanes of the output stay zero.
    mu  = jnp.sum(x, axis=-1, keepdims=True) * (1.0 / EMBED)
    xc  = x - mu
    xcm = xc * mask
    var = jnp.sum(xcm * xcm, axis=-1, keepdims=True) * (1.0 / EMBED)
    return xc * lax.rsqrt(var + EPS) * w + b


def _gelu(x):
    # tanh formulation keeps the transcendental on the EUP (free slot) instead
    # of a long VALU polynomial; max deviation vs. exact erf-GELU ~3e-4.
    c = float(np.sqrt(2.0 / np.pi))
    return 0.5 * x * (1.0 + jnp.tanh(c * (x + 0.044715 * x * x * x)))


def _softmax(x):
    m = jnp.max(x, axis=-1, keepdims=True)
    e = jnp.exp(x - m)
    return e * pl.reciprocal(jnp.sum(e, axis=-1, keepdims=True), approx=True)


def _mm(a, b):
    # bf16 MXU matmul with f32 accumulation (weights already bf16).
    return jnp.dot(a.astype(jnp.bfloat16), b, preferred_element_type=jnp.float32)


# --------------------------------- kernel -----------------------------------
def mini_swin_kernel(patches_ref, wp_ref, bp_ref, pos_ref,
                     ln1w_ref, ln1b_ref,
                     qw_ref, qb_ref, kw_ref, kb_ref, vw_ref, vb_ref,
                     projw_ref, projb_ref,
                     ln2w_ref, ln2b_ref, m1w_ref, m1b_ref, m2w_ref, m2b_ref,
                     nw_ref, nb_ref, hw_ref, hb_ref,
                     out_ref):
    bf16 = jnp.bfloat16
    # mask of the real EMBED lanes (computed once, hoisted by tracing)
    lane = lax.broadcasted_iota(jnp.int32, (1, DP), 1)
    mask = (lane < EMBED).astype(jnp.float32)

    # patch embed (== Conv2d kernel=stride=PATCH) + positional embedding,
    # all samples fused into the row dimension: (B*N, DP)
    x = _mm(patches_ref[...], wp_ref[...]) + bp_ref[...] + pos_ref[...]

    for d in range(DEPTH):                              # static unroll
        # ------------------------- attention -------------------------
        h  = _layernorm(x, ln1w_ref[d], ln1b_ref[d], mask)
        hb = h.astype(bf16)
        acc = jnp.zeros((BN, DP), jnp.float32)
        for hh in range(HEADS):                         # static unroll
            g = d * HEADS + hh                          # per-(layer, head) weight slab
            q = (jnp.dot(hb, qw_ref[g], preferred_element_type=jnp.float32)
                 + qb_ref[g]).reshape(B, N, HD)
            k = (jnp.dot(hb, kw_ref[g], preferred_element_type=jnp.float32)
                 + kb_ref[g]).reshape(B, N, HD)
            v = (jnp.dot(hb, vw_ref[g], preferred_element_type=jnp.float32)
                 + vb_ref[g]).reshape(B, N, HD)
            # q @ k^T without materializing a transpose (contract last dims)
            s = jnp.einsum('bne,bme->bnm', q.astype(bf16), k.astype(bf16),
                           preferred_element_type=jnp.float32) * SCALE
            p = _softmax(s)
            # TODO(synk): attn_map side effect (.detach().cpu()) is not
            # materialized; it does not affect the forward output.
            o = jnp.einsum('bnm,bme->bne', p.astype(bf16), v.astype(bf16),
                           preferred_element_type=jnp.float32)
            # fold the head-concat directly into the output projection
            acc = acc + jnp.dot(o.reshape(BN, HD).astype(bf16), projw_ref[g],
                                preferred_element_type=jnp.float32)
        x = x + acc + projb_ref[d]

        # ---------------------------- MLP -----------------------------
        h2 = _layernorm(x, ln2w_ref[d], ln2b_ref[d], mask)
        m  = _gelu(_mm(h2, m1w_ref[d]) + m1b_ref[d])            # (BN, HID)
        x  = x + _mm(m, m2w_ref[d]) + m2b_ref[d]

    # final LayerNorm, per-sample mean pool, classification head
    xf = _layernorm(x, nw_ref[...], nb_ref[...], mask)
    pooled = jnp.mean(xf.reshape(B, N, DP), axis=1)             # (B, DP)
    out_ref[...] = _mm(pooled, hw_ref[...]) + hb_ref[...]       # (B, CP) lane-dense


# --------------------------------- wrapper -----------------------------------
WEIGHT_ORDER = ["wp", "bp", "pos", "ln1w", "ln1b",
                "qw", "qb", "kw", "kb", "vw", "vb",
                "projw", "projb", "ln2w", "ln2b",
                "m1w", "m1b", "m2w", "m2b", "nw", "nb", "hw", "hb"]


def _full_spec(shape):
    nd = len(shape)
    return pl.BlockSpec(shape, lambda i, _nd=nd: (0,) * _nd)


def _pad_to(a, shape):
    return jnp.pad(a, [(0, t - s) for s, t in zip(a.shape, shape)])


def _extract_patches(x_nchw):
    b, c, h, w = x_nchw.shape
    gh, gw = h // PATCH, w // PATCH
    p = x_nchw.reshape(b, c, gh, PATCH, gw, PATCH)
    p = p.transpose(0, 2, 4, 1, 3, 5)                   # (B, gh, gw, c, ph, pw)
    return p.reshape(b, gh * gw, c * PATCH * PATCH)     # (B, N, P)


def prepare_inputs(x_nchw, p):
    bf16, f32 = jnp.bfloat16, jnp.float32
    patches = _extract_patches(x_nchw).reshape(BN, P).astype(f32)
    patches = _pad_to(patches, (BN, PP))

    # split QKV / proj weights per (layer, head) in the wrapper so the kernel
    # never slices at lane offsets nor concatenates heads.
    qkvw, qkvb = p["qkvw"], p["qkvb"]

    def head_split_w(wslab):                            # (DEPTH, EMBED, EMBED)
        w = wslab.reshape(DEPTH, EMBED, HEADS, HD).transpose(0, 2, 1, 3)
        w = w.reshape(DEPTH * HEADS, EMBED, HD)
        return _pad_to(w, (DEPTH * HEADS, DP, HD)).astype(bf16)

    def head_split_b(bslab):                            # (DEPTH, 1, EMBED)
        return bslab.reshape(DEPTH, HEADS, HD).reshape(DEPTH * HEADS, 1, HD).astype(f32)

    qw = head_split_w(qkvw[:, :, 0 * EMBED:1 * EMBED])
    kw = head_split_w(qkvw[:, :, 1 * EMBED:2 * EMBED])
    vw = head_split_w(qkvw[:, :, 2 * EMBED:3 * EMBED])
    qb = head_split_b(qkvb[:, :, 0 * EMBED:1 * EMBED])
    kb = head_split_b(qkvb[:, :, 1 * EMBED:2 * EMBED])
    vb = head_split_b(qkvb[:, :, 2 * EMBED:3 * EMBED])

    projw = p["projw"].reshape(DEPTH, HEADS, HD, EMBED).reshape(DEPTH * HEADS, HD, EMBED)
    projw = _pad_to(projw, (DEPTH * HEADS, HD, DP)).astype(bf16)

    weights = dict(
        wp=_pad_to(p["wp"], (PP, DP)).astype(bf16),
        bp=_pad_to(p["bp"], (1, DP)).astype(f32),
        pos=jnp.tile(_pad_to(p["pos"], (N, DP)), (B, 1)).astype(f32),   # (BN, DP)
        ln1w=_pad_to(p["ln1w"], (DEPTH, 1, DP)).astype(f32),
        ln1b=_pad_to(p["ln1b"], (DEPTH, 1, DP)).astype(f32),
        qw=qw, qb=qb, kw=kw, kb=kb, vw=vw, vb=vb,
        projw=projw,
        projb=_pad_to(p["projb"], (DEPTH, 1, DP)).astype(f32),
        ln2w=_pad_to(p["ln2w"], (DEPTH, 1, DP)).astype(f32),
        ln2b=_pad_to(p["ln2b"], (DEPTH, 1, DP)).astype(f32),
        m1w=_pad_to(p["m1w"], (DEPTH, DP, HID)).astype(bf16),
        m1b=p["m1b"].astype(f32),
        m2w=_pad_to(p["m2w"], (DEPTH, HID, DP)).astype(bf16),
        m2b=_pad_to(p["m2b"], (DEPTH, 1, DP)).astype(f32),
        nw=_pad_to(p["nw"], (1, DP)).astype(f32),
        nb=_pad_to(p["nb"], (1, DP)).astype(f32),
        hw=_pad_to(p["hw"], (DP, CP)).astype(bf16),
        hb=_pad_to(p["hb"], (1, CP)).astype(f32),
    )
    return patches, weights


def mini_swin_forward(x_nchw, params):
    patches, w = prepare_inputs(x_nchw, params)
    weights = [w[k] for k in WEIGHT_ORDER]

    in_specs = [_full_spec(patches.shape)] + [_full_spec(a.shape) for a in weights]
    out = pl.pallas_call(
        mini_swin_kernel,
        out_shape=jax.ShapeDtypeStruct((B, CP), jnp.float32),
        grid_spec=pltpu.PrefetchScalarGridSpec(
            num_scalar_prefetch=0,
            grid=(1,),                     # whole batch fused into one step
            in_specs=in_specs,
            out_specs=pl.BlockSpec((B, CP), lambda i: (0, 0)),
        ),
        compiler_params=pltpu.CompilerParams(
            dimension_semantics=("arbitrary",)),
    )(patches, *weights)
    return out[:, :CLASSES]


# ------------------------- deterministic parameters --------------------------
def init_params(key):
    ks = list(jax.random.split(key, 16))
    it = iter(ks)

    def nx(shape, std=0.02):
        return jax.random.normal(next(it), shape, dtype=jnp.float32) * std

    conv_w = nx((EMBED, IN_CHANS, PATCH, PATCH))      # PyTorch Conv2d layout
    params = {
        # flatten conv weight to (C*p*p, D) matching the patch pixel order
        "wp":    conv_w.transpose(1, 2, 3, 0).reshape(P, EMBED),
        "bp":    nx((1, EMBED)),
        "pos":   nx((N, EMBED)),
        "ln1w":  jnp.ones((DEPTH, 1, EMBED), jnp.float32),
        "ln1b":  jnp.zeros((DEPTH, 1, EMBED), jnp.float32),
        "qkvw":  nx((DEPTH, EMBED, 3 * EMBED)),
        "qkvb":  nx((DEPTH, 1, 3 * EMBED)),
        "projw": nx((DEPTH, EMBED, EMBED)),
        "projb": nx((DEPTH, 1, EMBED)),
        "ln2w":  jnp.ones((DEPTH, 1, EMBED), jnp.float32),
        "ln2b":  jnp.zeros((DEPTH, 1, EMBED), jnp.float32),
        "m1w":   nx((DEPTH, EMBED, 4 * EMBED)),
        "m1b":   nx((DEPTH, 1, 4 * EMBED)),
        "m2w":   nx((DEPTH, 4 * EMBED, EMBED)),
        "m2b":   nx((DEPTH, 1, EMBED)),
        "nw":    jnp.ones((1, EMBED), jnp.float32),
        "nb":    jnp.zeros((1, EMBED), jnp.float32),
        "hw":    nx((EMBED, CLASSES)),
        "hb":    nx((1, CLASSES)),
    }
    return params


# --------------------------- pure-JAX reference ------------------------------
def reference_forward(x_nchw, p):
    x = _extract_patches(x_nchw) @ p["wp"] + p["bp"]          # (B, N, D)
    x = x + p["pos"]

    def ln(v, w, b):
        mu = v.mean(-1, keepdims=True)
        var = ((v - mu) ** 2).mean(-1, keepdims=True)
        return (v - mu) * jax.lax.rsqrt(var + EPS) * w + b

    for d in range(DEPTH):
        h = ln(x, p["ln1w"][d], p["ln1b"][d])
        qkv = h @ p["qkvw"][d] + p["qkvb"][d]
        q, k, v = (qkv[..., :EMBED], qkv[..., EMBED:2 * EMBED], qkv[..., 2 * EMBED:])
        sp = lambda t: t.reshape(B, N, HEADS, HD).transpose(0, 2, 1, 3)
        q, k, v = sp(q), sp(k), sp(v)
        attn = jax.nn.softmax(jnp.einsum("bhqd,bhkd->bhqk", q, k) * SCALE, axis=-1)
        o = jnp.einsum("bhqk,bhkd->bhqd", attn, v).transpose(0, 2, 1, 3).reshape(B, N, EMBED)
        x = x + o @ p["projw"][d] + p["projb"][d]
        h2 = ln(x, p["ln2w"][d], p["ln2b"][d])
        m = jax.nn.gelu(h2 @ p["m1w"][d] + p["m1b"][d], approximate=False)
        x = x + m @ p["m2w"][d] + p["m2b"][d]

    x = ln(x, p["nw"], p["nb"])
    return x.mean(axis=1) @ p["hw"] + p["hb"]


# ----------------------------------- main ------------------------------------
if __name__ == "__main__":
    root = jax.random.PRNGKey(0)
    pkey, xkey = jax.random.split(root)
    params = init_params(pkey)
    x = jax.random.normal(xkey, (B, IN_CHANS, IMG, IMG), dtype=jnp.float32)

    out = mini_swin_forward(x, params)
    out = jax.block_until_ready(out)
    assert out.shape == (B, CLASSES)

    ref = np.asarray(reference_forward(x, params))
    if not np.allclose(np.asarray(out), ref, atol=1e-2, rtol=1e-2):
        raise SystemExit(
            f"mismatch: max abs err {np.max(np.abs(np.asarray(out) - ref))}")

    print("KERNEL_OK")
</pallas_src>

<mosaic_0001>
module attributes {stable_mosaic.version = 11 : i64} {
  func.func @mini_swin_kernel(%arg0: i32, %arg1: memref<32x128xf32, #tpu.memory_space<vmem>>, %arg2: memref<128x128xbf16, #tpu.memory_space<vmem>>, %arg3: memref<1x128xf32, #tpu.memory_space<vmem>>, %arg4: memref<32x128xf32, #tpu.memory_space<vmem>>, %arg5: memref<2x1x128xf32, #tpu.memory_space<vmem>>, %arg6: memref<2x1x128xf32, #tpu.memory_space<vmem>>, %arg7: memref<6x128x32xbf16, #tpu.memory_space<vmem>>, %arg8: memref<6x1x32xf32, #tpu.memory_space<vmem>>, %arg9: memref<6x128x32xbf16, #tpu.memory_space<vmem>>, %arg10: memref<6x1x32xf32, #tpu.memory_space<vmem>>, %arg11: memref<6x128x32xbf16, #tpu.memory_space<vmem>>, %arg12: memref<6x1x32xf32, #tpu.memory_space<vmem>>, %arg13: memref<6x32x128xbf16, #tpu.memory_space<vmem>>, %arg14: memref<2x1x128xf32, #tpu.memory_space<vmem>>, %arg15: memref<2x1x128xf32, #tpu.memory_space<vmem>>, %arg16: memref<2x1x128xf32, #tpu.memory_space<vmem>>, %arg17: memref<2x128x384xbf16, #tpu.memory_space<vmem>>, %arg18: memref<2x1x384xf32, #tpu.memory_space<vmem>>, %arg19: memref<2x384x128xbf16, #tpu.memory_space<vmem>>, %arg20: memref<2x1x128xf32, #tpu.memory_space<vmem>>, %arg21: memref<1x128xf32, #tpu.memory_space<vmem>>, %arg22: memref<1x128xf32, #tpu.memory_space<vmem>>, %arg23: memref<128x128xbf16, #tpu.memory_space<vmem>>, %arg24: memref<1x128xf32, #tpu.memory_space<vmem>>, %arg25: memref<2x128xf32, #tpu.memory_space<vmem>>) attributes {dimension_semantics = [#tpu.dimension_semantics<arbitrary>], iteration_bounds = array<i64: 1>, scalar_prefetch = 0 : i64, scratch_operands = 0 : i64, tpu.core_type = #tpu.core_type<tc>, window_params = [{pipeline_mode = #tpu.pipeline_mode<synchronous>, transform_indices = @transform_0, window_bounds = array<i64: 32, 128>}, {pipeline_mode = #tpu.pipeline_mode<synchronous>, transform_indices = @transform_1, window_bounds = array<i64: 128, 128>}, {pipeline_mode = #tpu.pipeline_mode<synchronous>, transform_indices = @transform_2, window_bounds = array<i64: 1, 128>}, {pipeline_mode = #tpu.pipeline_mode<synchronous>, transform_indices = @transform_3, window_bounds = array<i64: 32, 128>}, {pipeline_mode = #tpu.pipeline_mode<synchronous>, transform_indices = @transform_4, window_bounds = array<i64: 2, 1, 128>}, {pipeline_mode = #tpu.pipeline_mode<synchronous>, transform_indices = @transform_5, window_bounds = array<i64: 2, 1, 128>}, {pipeline_mode = #tpu.pipeline_mode<synchronous>, transform_indices = @transform_6, window_bounds = array<i64: 6, 128, 32>}, {pipeline_mode = #tpu.pipeline_mode<synchronous>, transform_indices = @transform_7, window_bounds = array<i64: 6, 1, 32>}, {pipeline_mode = #tpu.pipeline_mode<synchronous>, transform_indices = @transform_8, window_bounds = array<i64: 6, 128, 32>}, {pipeline_mode = #tpu.pipeline_mode<synchronous>, transform_indices = @transform_9, window_bounds = array<i64: 6, 1, 32>}, {pipeline_mode = #tpu.pipeline_mode<synchronous>, transform_indices = @transform_10, window_bounds = array<i64: 6, 128, 32>}, {pipeline_mode = #tpu.pipeline_mode<synchronous>, transform_indices = @transform_11, window_bounds = array<i64: 6, 1, 32>}, {pipeline_mode = #tpu.pipeline_mode<synchronous>, transform_indices = @transform_12, window_bounds = array<i64: 6, 32, 128>}, {pipeline_mode = #tpu.pipeline_mode<synchronous>, transform_indices = @transform_13, window_bounds = array<i64: 2, 1, 128>}, {pipeline_mode = #tpu.pipeline_mode<synchronous>, transform_indices = @transform_14, window_bounds = array<i64: 2, 1, 128>}, {pipeline_mode = #tpu.pipeline_mode<synchronous>, transform_indices = @transform_15, window_bounds = array<i64: 2, 1, 128>}, {pipeline_mode = #tpu.pipeline_mode<synchronous>, transform_indices = @transform_16, window_bounds = array<i64: 2, 128, 384>}, {pipeline_mode = #tpu.pipeline_mode<synchronous>, transform_indices = @transform_17, window_bounds = array<i64: 2, 1, 384>}, {pipeline_mode = #tpu.pipeline_mode<synchronous>, transform_indices = @transform_18, window_bounds = array<i64: 2, 384, 128>}, {pipeline_mode = #tpu.pipeline_mode<synchronous>, transform_indices = @transform_19, window_bounds = array<i64: 2, 1, 128>}, {pipeline_mode = #tpu.pipeline_mode<synchronous>, transform_indices = @transform_20, window_bounds = array<i64: 1, 128>}, {pipeline_mode = #tpu.pipeline_mode<synchronous>, transform_indices = @transform_21, window_bounds = array<i64: 1, 128>}, {pipeline_mode = #tpu.pipeline_mode<synchronous>, transform_indices = @transform_22, window_bounds = array<i64: 128, 128>}, {pipeline_mode = #tpu.pipeline_mode<synchronous>, transform_indices = @transform_23, window_bounds = array<i64: 1, 128>}, {pipeline_mode = #tpu.pipeline_mode<synchronous>, transform_indices = @transform_24, window_bounds = array<i64: 2, 128>}]} {
    %0 = tpu.iota {dimensions = array<i32: 1>} : vector<1x128xi32>
    %c96_i32 = arith.constant 96 : i32
    %1 = vector.broadcast %c96_i32 : i32 to vector<1x128xi32>
    %2 = arith.cmpi slt, %0, %1 : vector<1x128xi32>
    %3 = arith.extui %2 : vector<1x128xi1> to vector<1x128xi32>
    %4 = arith.sitofp %3 : vector<1x128xi32> to vector<1x128xf32>
    %c0 = arith.constant 0 : index
    %c0_0 = arith.constant 0 : index
    %5 = vector.load %arg1[%c0, %c0_0] : memref<32x128xf32, #tpu.memory_space<vmem>>, vector<32x128xf32>
    %c0_1 = arith.constant 0 : index
    %c0_2 = arith.constant 0 : index
    %6 = vector.load %arg2[%c0_1, %c0_2] : memref<128x128xbf16, #tpu.memory_space<vmem>>, vector<128x128xbf16>
    %7 = arith.truncf %5 : vector<32x128xf32> to vector<32x128xbf16>
    %cst = arith.constant dense<0.000000e+00> : vector<32x128xf32>
    %8 = tpu.matmul %7, %6, %cst {dimension_numbers = #tpu.dot_dimension_numbers<[1], [0], [0], [1], [0, 0, 1, 1], [], []>} : vector<32x128xbf16>, vector<128x128xbf16>, vector<32x128xf32> -> vector<32x128xf32>
    %c0_3 = arith.constant 0 : index
    %c0_4 = arith.constant 0 : index
    %9 = vector.load %arg3[%c0_3, %c0_4] : memref<1x128xf32, #tpu.memory_space<vmem>>, vector<1x128xf32>
    %10 = vector.broadcast %9 : vector<1x128xf32> to vector<32x128xf32>
    %11 = arith.addf %8, %10 : vector<32x128xf32>
    %c0_5 = arith.constant 0 : index
    %c0_6 = arith.constant 0 : index
    %12 = vector.load %arg4[%c0_5, %c0_6] : memref<32x128xf32, #tpu.memory_space<vmem>>, vector<32x128xf32>
    %13 = arith.addf %11, %12 : vector<32x128xf32>
    %c0_7 = arith.constant 0 : index
    %c0_8 = arith.constant 0 : index
    %c0_9 = arith.constant 0 : index
    %14 = vector.load %arg5[%c0_7, %c0_8, %c0_9] : memref<2x1x128xf32, #tpu.memory_space<vmem>>, vector<1x1x128xf32>
    %15 = vector.shape_cast %14 : vector<1x1x128xf32> to vector<1x128xf32>
    %c0_10 = arith.constant 0 : index
    %c0_11 = arith.constant 0 : index
    %c0_12 = arith.constant 0 : index
    %16 = vector.load %arg6[%c0_10, %c0_11, %c0_12] : memref<2x1x128xf32, #tpu.memory_space<vmem>>, vector<1x1x128xf32>
    %17 = vector.shape_cast %16 : vector<1x1x128xf32> to vector<1x128xf32>
    %cst_13 = arith.constant dense<0.000000e+00> : vector<32xf32>
    %18 = vector.multi_reduction <add>, %13, %cst_13 [1] : vector<32x128xf32> to vector<32xf32>
    %19 = vector.shape_cast %18 : vector<32xf32> to vector<32x1xf32>
    %cst_14 = arith.constant 0.010416667 : f32
    %20 = vector.broadcast %cst_14 : f32 to vector<32x1xf32>
    %21 = arith.mulf %19, %20 : vector<32x1xf32>
    %22 = vector.broadcast %21 : vector<32x1xf32> to vector<32x128xf32>
    %23 = arith.subf %13, %22 : vector<32x128xf32>
    %24 = vector.broadcast %4 : vector<1x128xf32> to vector<32x128xf32>
    %25 = arith.mulf %23, %24 : vector<32x128xf32>
    %26 = arith.mulf %25, %25 : vector<32x128xf32>
    %cst_15 = arith.constant dense<0.000000e+00> : vector<32xf32>
    %27 = vector.multi_reduction <add>, %26, %cst_15 [1] : vector<32x128xf32> to vector<32xf32>
    %28 = vector.shape_cast %27 : vector<32xf32> to vector<32x1xf32>
    %cst_16 = arith.constant 0.010416667 : f32
    %29 = vector.broadcast %cst_16 : f32 to vector<32x1xf32>
    %30 = arith.mulf %28, %29 : vector<32x1xf32>
    %cst_17 = arith.constant 9.99999974E-6 : f32
    %31 = vector.broadcast %cst_17 : f32 to vector<32x1xf32>
    %32 = arith.addf %30, %31 : vector<32x1xf32>
    %33 = math.rsqrt %32 : vector<32x1xf32>
    %34 = vector.broadcast %33 : vector<32x1xf32> to vector<32x128xf32>
    %35 = arith.mulf %23, %34 : vector<32x128xf32>
    %36 = vector.broadcast %15 : vector<1x128xf32> to vector<32x128xf32>
    %37 = arith.mulf %35, %36 : vector<32x128xf32>
    %38 = vector.broadcast %17 : vector<1x128xf32> to vector<32x128xf32>
    %39 = arith.addf %37, %38 : vector<32x128xf32>
    %40 = arith.truncf %39 : vector<32x128xf32> to vector<32x128xbf16>
    %cst_18 = arith.constant 0.000000e+00 : f32
    %41 = vector.broadcast %cst_18 : f32 to vector<32x128xf32>
    %c0_19 = arith.constant 0 : index
    %c0_20 = arith.constant 0 : index
    %c0_21 = arith.constant 0 : index
    %42 = vector.load %arg7[%c0_19, %c0_20, %c0_21] : memref<6x128x32xbf16, #tpu.memory_space<vmem>>, vector<1x128x32xbf16>
    %43 = vector.shape_cast %42 : vector<1x128x32xbf16> to vector<128x32xbf16>
    %cst_22 = arith.constant dense<0.000000e+00> : vector<32x32xf32>
    %44 = tpu.matmul %40, %43, %cst_22 {dimension_numbers = #tpu.dot_dimension_numbers<[1], [0], [0], [1], [0, 0, 1, 1], [], []>} : vector<32x128xbf16>, vector<128x32xbf16>, vector<32x32xf32> -> vector<32x32xf32>
    %c0_23 = arith.constant 0 : index
    %c0_24 = arith.constant 0 : index
    %c0_25 = arith.constant 0 : index
    %45 = vector.load %arg8[%c0_23, %c0_24, %c0_25] : memref<6x1x32xf32, #tpu.memory_space<vmem>>, vector<1x1x32xf32>
    %46 = vector.shape_cast %45 : vector<1x1x32xf32> to vector<1x32xf32>
    %47 = vector.broadcast %46 : vector<1x32xf32> to vector<32x32xf32>
    %48 = arith.addf %44, %47 : vector<32x32xf32>
    %49 = vector.shape_cast %48 : vector<32x32xf32> to vector<2x16x32xf32>
    %c0_26 = arith.constant 0 : index
    %c0_27 = arith.constant 0 : index
    %c0_28 = arith.constant 0 : index
    %50 = vector.load %arg9[%c0_26, %c0_27, %c0_28] : memref<6x128x32xbf16, #tpu.memory_space<vmem>>, vector<1x128x32xbf16>
    %51 = vector.shape_cast %50 : vector<1x128x32xbf16> to vector<128x32xbf16>
    %cst_29 = arith.constant dense<0.000000e+00> : vector<32x32xf32>
    %52 = tpu.matmul %40, %51, %cst_29 {dimension_numbers = #tpu.dot_dimension_numbers<[1], [0], [0], [1], [0, 0, 1, 1], [], []>} : vector<32x128xbf16>, vector<128x32xbf16>, vector<32x32xf32> -> vector<32x32xf32>
    %c0_30 = arith.constant 0 : index
    %c0_31 = arith.constant 0 : index
    %c0_32 = arith.constant 0 : index
    %53 = vector.load %arg10[%c0_30, %c0_31, %c0_32] : memref<6x1x32xf32, #tpu.memory_space<vmem>>, vector<1x1x32xf32>
    %54 = vector.shape_cast %53 : vector<1x1x32xf32> to vector<1x32xf32>
    %55 = vector.broadcast %54 : vector<1x32xf32> to vector<32x32xf32>
    %56 = arith.addf %52, %55 : vector<32x32xf32>
    %57 = vector.shape_cast %56 : vector<32x32xf32> to vector<2x16x32xf32>
    %c0_33 = arith.constant 0 : index
    %c0_34 = arith.constant 0 : index
    %c0_35 = arith.constant 0 : index
    %58 = vector.load %arg11[%c0_33, %c0_34, %c0_35] : memref<6x128x32xbf16, #tpu.memory_space<vmem>>, vector<1x128x32xbf16>
    %59 = vector.shape_cast %58 : vector<1x128x32xbf16> to vector<128x32xbf16>
    %cst_36 = arith.constant dense<0.000000e+00> : vector<32x32xf32>
    %60 = tpu.matmul %40, %59, %cst_36 {dimension_numbers = #tpu.dot_dimension_numbers<[1], [0], [0], [1], [0, 0, 1, 1], [], []>} : vector<32x128xbf16>, vector<128x32xbf16>, vector<32x32xf32> -> vector<32x32xf32>
    %c0_37 = arith.constant 0 : index
    %c0_38 = arith.constant 0 : index
    %c0_39 = arith.constant 0 : index
    %61 = vector.load %arg12[%c0_37, %c0_38, %c0_39] : memref<6x1x32xf32, #tpu.memory_space<vmem>>, vector<1x1x32xf32>
    %62 = vector.shape_cast %61 : vector<1x1x32xf32> to vector<1x32xf32>
    %63 = vector.broadcast %62 : vector<1x32xf32> to vector<32x32xf32>
    %64 = arith.addf %60, %63 : vector<32x32xf32>
    %65 = vector.shape_cast %64 : vector<32x32xf32> to vector<2x16x32xf32>
    %66 = arith.truncf %49 : vector<2x16x32xf32> to vector<2x16x32xbf16>
    %67 = arith.truncf %57 : vector<2x16x32xf32> to vector<2x16x32xbf16>
    "tpu.trace_start"() <{level = 10 : i32, message = "bne,bme->bnm"}> : () -> ()
    %cst_40 = arith.constant dense<0.000000e+00> : vector<2x16x16xf32>
    %68 = tpu.matmul %66, %67, %cst_40 {dimension_numbers = #tpu.dot_dimension_numbers<[2], [2], [1], [1], [0, 0, 0, 1, 1, 1], [0], [0]>} : vector<2x16x32xbf16>, vector<2x16x32xbf16>, vector<2x16x16xf32> -> vector<2x16x16xf32>
    "tpu.trace_stop"() : () -> ()
    %cst_41 = arith.constant 0.176776692 : f32
    %69 = vector.broadcast %cst_41 : f32 to vector<2x16x16xf32>
    %70 = arith.mulf %68, %69 : vector<2x16x16xf32>
    %cst_42 = arith.constant dense<0xFF800000> : vector<2x16xf32>
    %71 = vector.multi_reduction <maximumf>, %70, %cst_42 [2] : vector<2x16x16xf32> to vector<2x16xf32>
    %72 = vector.shape_cast %71 : vector<2x16xf32> to vector<2x16x1xf32>
    %73 = vector.broadcast %72 : vector<2x16x1xf32> to vector<2x16x16xf32>
    %74 = arith.subf %70, %73 : vector<2x16x16xf32>
    %75 = math.exp %74 : vector<2x16x16xf32>
    %cst_43 = arith.constant dense<0.000000e+00> : vector<2x16xf32>
    %76 = vector.multi_reduction <add>, %75, %cst_43 [2] : vector<2x16x16xf32> to vector<2x16xf32>
    %77 = vector.shape_cast %76 : vector<2x16xf32> to vector<2x16x1xf32>
    %78 = tpu.reciprocal %77 {approx = true} : vector<2x16x1xf32> -> vector<2x16x1xf32>
    %79 = vector.broadcast %78 : vector<2x16x1xf32> to vector<2x16x16xf32>
    %80 = arith.mulf %75, %79 : vector<2x16x16xf32>
    %81 = arith.truncf %80 : vector<2x16x16xf32> to vector<2x16x16xbf16>
    %82 = arith.truncf %65 : vector<2x16x32xf32> to vector<2x16x32xbf16>
    "tpu.trace_start"() <{level = 10 : i32, message = "bnm,bme->bne"}> : () -> ()
    %cst_44 = arith.constant dense<0.000000e+00> : vector<2x16x32xf32>
    %83 = tpu.matmul %81, %82, %cst_44 {dimension_numbers = #tpu.dot_dimension_numbers<[2], [1], [1], [2], [0, 0, 0, 1, 1, 2], [0], [0]>} : vector<2x16x16xbf16>, vector<2x16x32xbf16>, vector<2x16x32xf32> -> vector<2x16x32xf32>
    "tpu.trace_stop"() : () -> ()
    %84 = vector.shape_cast %83 : vector<2x16x32xf32> to vector<32x32xf32>
    %85 = arith.truncf %84 : vector<32x32xf32> to vector<32x32xbf16>
    %c0_45 = arith.constant 0 : index
    %c0_46 = arith.constant 0 : index
    %c0_47 = arith.constant 0 : index
    %86 = vector.load %arg13[%c0_45, %c0_46, %c0_47] : memref<6x32x128xbf16, #tpu.memory_space<vmem>>, vector<1x32x128xbf16>
    %87 = vector.shape_cast %86 : vector<1x32x128xbf16> to vector<32x128xbf16>
    %cst_48 = arith.constant dense<0.000000e+00> : vector<32x128xf32>
    %88 = tpu.matmul %85, %87, %cst_48 {dimension_numbers = #tpu.dot_dimension_numbers<[1], [0], [0], [1], [0, 0, 1, 1], [], []>} : vector<32x32xbf16>, vector<32x128xbf16>, vector<32x128xf32> -> vector<32x128xf32>
    %89 = arith.addf %41, %88 : vector<32x128xf32>
    %c1 = arith.constant 1 : index
    %c0_49 = arith.constant 0 : index
    %c0_50 = arith.constant 0 : index
    %90 = vector.load %arg7[%c1, %c0_49, %c0_50] : memref<6x128x32xbf16, #tpu.memory_space<vmem>>, vector<1x128x32xbf16>
    %91 = vector.shape_cast %90 : vector<1x128x32xbf16> to vector<128x32xbf16>
    %cst_51 = arith.constant dense<0.000000e+00> : vector<32x32xf32>
    %92 = tpu.matmul %40, %91, %cst_51 {dimension_numbers = #tpu.dot_dimension_numbers<[1], [0], [0], [1], [0, 0, 1, 1], [], []>} : vector<32x128xbf16>, vector<128x32xbf16>, vector<32x32xf32> -> vector<32x32xf32>
    %c1_52 = arith.constant 1 : index
    %c0_53 = arith.constant 0 : index
    %c0_54 = arith.constant 0 : index
    %93 = vector.load %arg8[%c1_52, %c0_53, %c0_54] : memref<6x1x32xf32, #tpu.memory_space<vmem>>, vector<1x1x32xf32>
    %94 = vector.shape_cast %93 : vector<1x1x32xf32> to vector<1x32xf32>
    %95 = vector.broadcast %94 : vector<1x32xf32> to vector<32x32xf32>
    %96 = arith.addf %92, %95 : vector<32x32xf32>
    %97 = vector.shape_cast %96 : vector<32x32xf32> to vector<2x16x32xf32>
    %c1_55 = arith.constant 1 : index
    %c0_56 = arith.constant 0 : index
    %c0_57 = arith.constant 0 : index
    %98 = vector.load %arg9[%c1_55, %c0_56, %c0_57] : memref<6x128x32xbf16, #tpu.memory_space<vmem>>, vector<1x128x32xbf16>
    %99 = vector.shape_cast %98 : vector<1x128x32xbf16> to vector<128x32xbf16>
    %cst_58 = arith.constant dense<0.000000e+00> : vector<32x32xf32>
    %100 = tpu.matmul %40, %99, %cst_58 {dimension_numbers = #tpu.dot_dimension_numbers<[1], [0], [0], [1], [0, 0, 1, 1], [], []>} : vector<32x128xbf16>, vector<128x32xbf16>, vector<32x32xf32> -> vector<32x32xf32>
    %c1_59 = arith.constant 1 : index
    %c0_60 = arith.constant 0 : index
    %c0_61 = arith.constant 0 : index
    %101 = vector.load %arg10[%c1_59, %c0_60, %c0_61] : memref<6x1x32xf32, #tpu.memory_space<vmem>>, vector<1x1x32xf32>
    %102 = vector.shape_cast %101 : vector<1x1x32xf32> to vector<1x32xf32>
    %103 = vector.broadcast %102 : vector<1x32xf32> to vector<32x32xf32>
    %104 = arith.addf %100, %103 : vector<32x32xf32>
    %105 = vector.shape_cast %104 : vector<32x32xf32> to vector<2x16x32xf32>
    %c1_62 = arith.constant 1 : index
    %c0_63 = arith.constant 0 : index
    %c0_64 = arith.constant 0 : index
    %106 = vector.load %arg11[%c1_62, %c0_63, %c0_64] : memref<6x128x32xbf16, #tpu.memory_space<vmem>>, vector<1x128x32xbf16>
    %107 = vector.shape_cast %106 : vector<1x128x32xbf16> to vector<128x32xbf16>
    %cst_65 = arith.constant dense<0.000000e+00> : vector<32x32xf32>
    %108 = tpu.matmul %40, %107, %cst_65 {dimension_numbers = #tpu.dot_dimension_numbers<[1], [0], [0], [1], [0, 0, 1, 1], [], []>} : vector<32x128xbf16>, vector<128x32xbf16>, vector<32x32xf32> -> vector<32x32xf32>
    %c1_66 = arith.constant 1 : index
    %c0_67 = arith.constant 0 : index
    %c0_68 = arith.constant 0 : index
    %109 = vector.load %arg12[%c1_66, %c0_67, %c0_68] : memref<6x1x32xf32, #tpu.memory_space<vmem>>, vector<1x1x32xf32>
    %110 = vector.shape_cast %109 : vector<1x1x32xf32> to vector<1x32xf32>
    %111 = vector.broadcast %110 : vector<1x32xf32> to vector<32x32xf32>
    %112 = arith.addf %108, %111 : vector<32x32xf32>
    %113 = vector.shape_cast %112 : vector<32x32xf32> to vector<2x16x32xf32>
    %114 = arith.truncf %97 : vector<2x16x32xf32> to vector<2x16x32xbf16>
    %115 = arith.truncf %105 : vector<2x16x32xf32> to vector<2x16x32xbf16>
    "tpu.trace_start"() <{level = 10 : i32, message = "bne,bme->bnm"}> : () -> ()
    %cst_69 = arith.constant dense<0.000000e+00> : vector<2x16x16xf32>
    %116 = tpu.matmul %114, %115, %cst_69 {dimension_numbers = #tpu.dot_dimension_numbers<[2], [2], [1], [1], [0, 0, 0, 1, 1, 1], [0], [0]>} : vector<2x16x32xbf16>, vector<2x16x32xbf16>, vector<2x16x16xf32> -> vector<2x16x16xf32>
    "tpu.trace_stop"() : () -> ()
    %cst_70 = arith.constant 0.176776692 : f32
    %117 = vector.broadcast %cst_70 : f32 to vector<2x16x16xf32>
    %118 = arith.mulf %116, %117 : vector<2x16x16xf32>
    %cst_71 = arith.constant dense<0xFF800000> : vector<2x16xf32>
    %119 = vector.multi_reduction <maximumf>, %118, %cst_71 [2] : vector<2x16x16xf32> to vector<2x16xf32>
    %120 = vector.shape_cast %119 : vector<2x16xf32> to vector<2x16x1xf32>
    %121 = vector.broadcast %120 : vector<2x16x1xf32> to vector<2x16x16xf32>
    %122 = arith.subf %118, %121 : vector<2x16x16xf32>
    %123 = math.exp %122 : vector<2x16x16xf32>
    %cst_72 = arith.constant dense<0.000000e+00> : vector<2x16xf32>
    %124 = vector.multi_reduction <add>, %123, %cst_72 [2] : vector<2x16x16xf32> to vector<2x16xf32>
    %125 = vector.shape_cast %124 : vector<2x16xf32> to vector<2x16x1xf32>
    %126 = tpu.reciprocal %125 {approx = true} : vector<2x16x1xf32> -> vector<2x16x1xf32>
    %127 = vector.broadcast %126 : vector<2x16x1xf32> to vector<2x16x16xf32>
    %128 = arith.mulf %123, %127 : vector<2x16x16xf32>
    %129 = arith.truncf %128 : vector<2x16x16xf32> to vector<2x16x16xbf16>
    %130 = arith.truncf %113 : vector<2x16x32xf32> to vector<2x16x32xbf16>
    "tpu.trace_start"() <{level = 10 : i32, message = "bnm,bme->bne"}> : () -> ()
    %cst_73 = arith.constant dense<0.000000e+00> : vector<2x16x32xf32>
    %131 = tpu.matmul %129, %130, %cst_73 {dimension_numbers = #tpu.dot_dimension_numbers<[2], [1], [1], [2], [0, 0, 0, 1, 1, 2], [0], [0]>} : vector<2x16x16xbf16>, vector<2x16x32xbf16>, vector<2x16x32xf32> -> vector<2x16x32xf32>
    "tpu.trace_stop"() : () -> ()
    %132 = vector.shape_cast %131 : vector<2x16x32xf32> to vector<32x32xf32>
    %133 = arith.truncf %132 : vector<32x32xf32> to vector<32x32xbf16>
    %c1_74 = arith.constant 1 : index
    %c0_75 = arith.constant 0 : index
    %c0_76 = arith.constant 0 : index
    %134 = vector.load %arg13[%c1_74, %c0_75, %c0_76] : memref<6x32x128xbf16, #tpu.memory_space<vmem>>, vector<1x32x128xbf16>
    %135 = vector.shape_cast %134 : vector<1x32x128xbf16> to vector<32x128xbf16>
    %cst_77 = arith.constant dense<0.000000e+00> : vector<32x128xf32>
    %136 = tpu.matmul %133, %135, %cst_77 {dimension_numbers = #tpu.dot_dimension_numbers<[1], [0], [0], [1], [0, 0, 1, 1], [], []>} : vector<32x32xbf16>, vector<32x128xbf16>, vector<32x128xf32> -> vector<32x128xf32>
    %137 = arith.addf %89, %136 : vector<32x128xf32>
    %c2 = arith.constant 2 : index
    %c0_78 = arith.constant 0 : index
    %c0_79 = arith.constant 0 : index
    %138 = vector.load %arg7[%c2, %c0_78, %c0_79] : memref<6x128x32xbf16, #tpu.memory_space<vmem>>, vector<1x128x32xbf16>
    %139 = vector.shape_cast %138 : vector<1x128x32xbf16> to vector<128x32xbf16>
    %cst_80 = arith.constant dense<0.000000e+00> : vector<32x32xf32>
    %140 = tpu.matmul %40, %139, %cst_80 {dimension_numbers = #tpu.dot_dimension_numbers<[1], [0], [0], [1], [0, 0, 1, 1], [], []>} : vector<32x128xbf16>, vector<128x32xbf16>, vector<32x32xf32> -> vector<32x32xf32>
    %c2_81 = arith.constant 2 : index
    %c0_82 = arith.constant 0 : index
    %c0_83 = arith.constant 0 : index
    %141 = vector.load %arg8[%c2_81, %c0_82, %c0_83] : memref<6x1x32xf32, #tpu.memory_space<vmem>>, vector<1x1x32xf32>
    %142 = vector.shape_cast %141 : vector<1x1x32xf32> to vector<1x32xf32>
    %143 = vector.broadcast %142 : vector<1x32xf32> to vector<32x32xf32>
    %144 = arith.addf %140, %143 : vector<32x32xf32>
    %145 = vector.shape_cast %144 : vector<32x32xf32> to vector<2x16x32xf32>
    %c2_84 = arith.constant 2 : index
    %c0_85 = arith.constant 0 : index
    %c0_86 = arith.constant 0 : index
    %146 = vector.load %arg9[%c2_84, %c0_85, %c0_86] : memref<6x128x32xbf16, #tpu.memory_space<vmem>>, vector<1x128x32xbf16>
    %147 = vector.shape_cast %146 : vector<1x128x32xbf16> to vector<128x32xbf16>
    %cst_87 = arith.constant dense<0.000000e+00> : vector<32x32xf32>
    %148 = tpu.matmul %40, %147, %cst_87 {dimension_numbers = #tpu.dot_dimension_numbers<[1], [0], [0], [1], [0, 0, 1, 1], [], []>} : vector<32x128xbf16>, vector<128x32xbf16>, vector<32x32xf32> -> vector<32x32xf32>
    %c2_88 = arith.constant 2 : index
    %c0_89 = arith.constant 0 : index
    %c0_90 = arith.constant 0 : index
    %149 = vector.load %arg10[%c2_88, %c0_89, %c0_90] : memref<6x1x32xf32, #tpu.memory_space<vmem>>, vector<1x1x32xf32>
    %150 = vector.shape_cast %149 : vector<1x1x32xf32> to vector<1x32xf32>
    %151 = vector.broadcast %150 : vector<1x32xf32> to vector<32x32xf32>
    %152 = arith.addf %148, %151 : vector<32x32xf32>
    %153 = vector.shape_cast %152 : vector<32x32xf32> to vector<2x16x32xf32>
    %c2_91 = arith.constant 2 : index
    %c0_92 = arith.constant 0 : index
    %c0_93 = arith.constant 0 : index
    %154 = vector.load %arg11[%c2_91, %c0_92, %c0_93] : memref<6x128x32xbf16, #tpu.memory_space<vmem>>, vector<1x128x32xbf16>
    %155 = vector.shape_cast %154 : vector<1x128x32xbf16> to vector<128x32xbf16>
    %cst_94 = arith.constant dense<0.000000e+00> : vector<32x32xf32>
    %156 = tpu.matmul %40, %155, %cst_94 {dimension_numbers = #tpu.dot_dimension_numbers<[1], [0], [0], [1], [0, 0, 1, 1], [], []>} : vector<32x128xbf16>, vector<128x32xbf16>, vector<32x32xf32> -> vector<32x32xf32>
    %c2_95 = arith.constant 2 : index
    %c0_96 = arith.constant 0 : index
    %c0_97 = arith.constant 0 : index
    %157 = vector.load %arg12[%c2_95, %c0_96, %c0_97] : memref<6x1x32xf32, #tpu.memory_space<vmem>>, vector<1x1x32xf32>
    %158 = vector.shape_cast %157 : vector<1x1x32xf32> to vector<1x32xf32>
    %159 = vector.broadcast %158 : vector<1x32xf32> to vector<32x32xf32>
    %160 = arith.addf %156, %159 : vector<32x32xf32>
    %161 = vector.shape_cast %160 : vector<32x32xf32> to vector<2x16x32xf32>
    %162 = arith.truncf %145 : vector<2x16x32xf32> to vector<2x16x32xbf16>
    %163 = arith.truncf %153 : vector<2x16x32xf32> to vector<2x16x32xbf16>
    "tpu.trace_start"() <{level = 10 : i32, message = "bne,bme->bnm"}> : () -> ()
    %cst_98 = arith.constant dense<0.000000e+00> : vector<2x16x16xf32>
    %164 = tpu.matmul %162, %163, %cst_98 {dimension_numbers = #tpu.dot_dimension_numbers<[2], [2], [1], [1], [0, 0, 0, 1, 1, 1], [0], [0]>} : vector<2x16x32xbf16>, vector<2x16x32xbf16>, vector<2x16x16xf32> -> vector<2x16x16xf32>
    "tpu.trace_stop"() : () -> ()
    %cst_99 = arith.constant 0.176776692 : f32
    %165 = vector.broadcast %cst_99 : f32 to vector<2x16x16xf32>
    %166 = arith.mulf %164, %165 : vector<2x16x16xf32>
    %cst_100 = arith.constant dense<0xFF800000> : vector<2x16xf32>
    %167 = vector.multi_reduction <maximumf>, %166, %cst_100 [2] : vector<2x16x16xf32> to vector<2x16xf32>
    %168 = vector.shape_cast %167 : vector<2x16xf32> to vector<2x16x1xf32>
    %169 = vector.broadcast %168 : vector<2x16x1xf32> to vector<2x16x16xf32>
    %170 = arith.subf %166, %169 : vector<2x16x16xf32>
    %171 = math.exp %170 : vector<2x16x16xf32>
    %cst_101 = arith.constant dense<0.000000e+00> : vector<2x16xf32>
    %172 = vector.multi_reduction <add>, %171, %cst_101 [2] : vector<2x16x16xf32> to vector<2x16xf32>
    %173 = vector.shape_cast %172 : vector<2x16xf32> to vector<2x16x1xf32>
    %174 = tpu.reciprocal %173 {approx = true} : vector<2x16x1xf32> -> vector<2x16x1xf32>
    %175 = vector.broadcast %174 : vector<2x16x1xf32> to vector<2x16x16xf32>
    %176 = arith.mulf %171, %175 : vector<2x16x16xf32>
    %177 = arith.truncf %176 : vector<2x16x16xf32> to vector<2x16x16xbf16>
    %178 = arith.truncf %161 : vector<2x16x32xf32> to vector<2x16x32xbf16>
    "tpu.trace_start"() <{level = 10 : i32, message = "bnm,bme->bne"}> : () -> ()
    %cst_102 = arith.constant dense<0.000000e+00> : vector<2x16x32xf32>
    %179 = tpu.matmul %177, %178, %cst_102 {dimension_numbers = #tpu.dot_dimension_numbers<[2], [1], [1], [2], [0, 0, 0, 1, 1, 2], [0], [0]>} : vector<2x16x16xbf16>, vector<2x16x32xbf16>, vector<2x16x32xf32> -> vector<2x16x32xf32>
    "tpu.trace_stop"() : () -> ()
    %180 = vector.shape_cast %179 : vector<2x16x32xf32> to vector<32x32xf32>
    %181 = arith.truncf %180 : vector<32x32xf32> to vector<32x32xbf16>
    %c2_103 = arith.constant 2 : index
    %c0_104 = arith.constant 0 : index
    %c0_105 = arith.constant 0 : index
    %182 = vector.load %arg13[%c2_103, %c0_104, %c0_105] : memref<6x32x128xbf16, #tpu.memory_space<vmem>>, vector<1x32x128xbf16>
    %183 = vector.shape_cast %182 : vector<1x32x128xbf16> to vector<32x128xbf16>
    %cst_106 = arith.constant dense<0.000000e+00> : vector<32x128xf32>
    %184 = tpu.matmul %181, %183, %cst_106 {dimension_numbers = #tpu.dot_dimension_numbers<[1], [0], [0], [1], [0, 0, 1, 1], [], []>} : vector<32x32xbf16>, vector<32x128xbf16>, vector<32x128xf32> -> vector<32x128xf32>
    %185 = arith.addf %137, %184 : vector<32x128xf32>
    %186 = arith.addf %13, %185 : vector<32x128xf32>
    %c0_107 = arith.constant 0 : index
    %c0_108 = arith.constant 0 : index
    %c0_109 = arith.constant 0 : index
    %187 = vector.load %arg14[%c0_107, %c0_108, %c0_109] : memref<2x1x128xf32, #tpu.memory_space<vmem>>, vector<1x1x128xf32>
    %188 = vector.shape_cast %187 : vector<1x1x128xf32> to vector<1x128xf32>
    %189 = vector.broadcast %188 : vector<1x128xf32> to vector<32x128xf32>
    %190 = arith.addf %186, %189 : vector<32x128xf32>
    %c0_110 = arith.constant 0 : index
    %c0_111 = arith.constant 0 : index
    %c0_112 = arith.constant 0 : index
    %191 = vector.load %arg15[%c0_110, %c0_111, %c0_112] : memref<2x1x128xf32, #tpu.memory_space<vmem>>, vector<1x1x128xf32>
    %192 = vector.shape_cast %191 : vector<1x1x128xf32> to vector<1x128xf32>
    %c0_113 = arith.constant 0 : index
    %c0_114 = arith.constant 0 : index
    %c0_115 = arith.constant 0 : index
    %193 = vector.load %arg16[%c0_113, %c0_114, %c0_115] : memref<2x1x128xf32, #tpu.memory_space<vmem>>, vector<1x1x128xf32>
    %194 = vector.shape_cast %193 : vector<1x1x128xf32> to vector<1x128xf32>
    %cst_116 = arith.constant dense<0.000000e+00> : vector<32xf32>
    %195 = vector.multi_reduction <add>, %190, %cst_116 [1] : vector<32x128xf32> to vector<32xf32>
    %196 = vector.shape_cast %195 : vector<32xf32> to vector<32x1xf32>
    %cst_117 = arith.constant 0.010416667 : f32
    %197 = vector.broadcast %cst_117 : f32 to vector<32x1xf32>
    %198 = arith.mulf %196, %197 : vector<32x1xf32>
    %199 = vector.broadcast %198 : vector<32x1xf32> to vector<32x128xf32>
    %200 = arith.subf %190, %199 : vector<32x128xf32>
    %201 = vector.broadcast %4 : vector<1x128xf32> to vector<32x128xf32>
    %202 = arith.mulf %200, %201 : vector<32x128xf32>
    %203 = arith.mulf %202, %202 : vector<32x128xf32>
    %cst_118 = arith.constant dense<0.000000e+00> : vector<32xf32>
    %204 = vector.multi_reduction <add>, %203, %cst_118 [1] : vector<32x128xf32> to vector<32xf32>
    %205 = vector.shape_cast %204 : vector<32xf32> to vector<32x1xf32>
    %cst_119 = arith.constant 0.010416667 : f32
    %206 = vector.broadcast %cst_119 : f32 to vector<32x1xf32>
    %207 = arith.mulf %205, %206 : vector<32x1xf32>
    %cst_120 = arith.constant 9.99999974E-6 : f32
    %208 = vector.broadcast %cst_120 : f32 to vector<32x1xf32>
    %209 = arith.addf %207, %208 : vector<32x1xf32>
    %210 = math.rsqrt %209 : vector<32x1xf32>
    %211 = vector.broadcast %210 : vector<32x1xf32> to vector<32x128xf32>
    %212 = arith.mulf %200, %211 : vector<32x128xf32>
    %213 = vector.broadcast %192 : vector<1x128xf32> to vector<32x128xf32>
    %214 = arith.mulf %212, %213 : vector<32x128xf32>
    %215 = vector.broadcast %194 : vector<1x128xf32> to vector<32x128xf32>
    %216 = arith.addf %214, %215 : vector<32x128xf32>
    %c0_121 = arith.constant 0 : index
    %c0_122 = arith.constant 0 : index
    %c0_123 = arith.constant 0 : index
    %217 = vector.load %arg17[%c0_121, %c0_122, %c0_123] : memref<2x128x384xbf16, #tpu.memory_space<vmem>>, vector<1x128x384xbf16>
    %218 = vector.shape_cast %217 : vector<1x128x384xbf16> to vector<128x384xbf16>
    %219 = arith.truncf %216 : vector<32x128xf32> to vector<32x128xbf16>
    %cst_124 = arith.constant dense<0.000000e+00> : vector<32x384xf32>
    %220 = tpu.matmul %219, %218, %cst_124 {dimension_numbers = #tpu.dot_dimension_numbers<[1], [0], [0], [1], [0, 0, 1, 1], [], []>} : vector<32x128xbf16>, vector<128x384xbf16>, vector<32x384xf32> -> vector<32x384xf32>
    %c0_125 = arith.constant 0 : index
    %c0_126 = arith.constant 0 : index
    %c0_127 = arith.constant 0 : index
    %221 = vector.load %arg18[%c0_125, %c0_126, %c0_127] : memref<2x1x384xf32, #tpu.memory_space<vmem>>, vector<1x1x384xf32>
    %222 = vector.shape_cast %221 : vector<1x1x384xf32> to vector<1x384xf32>
    %223 = vector.broadcast %222 : vector<1x384xf32> to vector<32x384xf32>
    %224 = arith.addf %220, %223 : vector<32x384xf32>
    %cst_128 = arith.constant 5.000000e-01 : f32
    %225 = vector.broadcast %cst_128 : f32 to vector<32x384xf32>
    %226 = arith.mulf %225, %224 : vector<32x384xf32>
    %cst_129 = arith.constant 4.471500e-02 : f32
    %227 = vector.broadcast %cst_129 : f32 to vector<32x384xf32>
    %228 = arith.mulf %227, %224 : vector<32x384xf32>
    %229 = arith.mulf %228, %224 : vector<32x384xf32>
    %230 = arith.mulf %229, %224 : vector<32x384xf32>
    %231 = arith.addf %224, %230 : vector<32x384xf32>
    %cst_130 = arith.constant 0.797884583 : f32
    %232 = vector.broadcast %cst_130 : f32 to vector<32x384xf32>
    %233 = arith.mulf %232, %231 : vector<32x384xf32>
    %234 = math.tanh %233 : vector<32x384xf32>
    %cst_131 = arith.constant 1.000000e+00 : f32
    %235 = vector.broadcast %cst_131 : f32 to vector<32x384xf32>
    %236 = arith.addf %235, %234 : vector<32x384xf32>
    %237 = arith.mulf %226, %236 : vector<32x384xf32>
    %c0_132 = arith.constant 0 : index
    %c0_133 = arith.constant 0 : index
    %c0_134 = arith.constant 0 : index
    %238 = vector.load %arg19[%c0_132, %c0_133, %c0_134] : memref<2x384x128xbf16, #tpu.memory_space<vmem>>, vector<1x384x128xbf16>
    %239 = vector.shape_cast %238 : vector<1x384x128xbf16> to vector<384x128xbf16>
    %240 = arith.truncf %237 : vector<32x384xf32> to vector<32x384xbf16>
    %cst_135 = arith.constant dense<0.000000e+00> : vector<32x128xf32>
    %241 = tpu.matmul %240, %239, %cst_135 {dimension_numbers = #tpu.dot_dimension_numbers<[1], [0], [0], [1], [0, 0, 1, 1], [], []>} : vector<32x384xbf16>, vector<384x128xbf16>, vector<32x128xf32> -> vector<32x128xf32>
    %242 = arith.addf %190, %241 : vector<32x128xf32>
    %c0_136 = arith.constant 0 : index
    %c0_137 = arith.constant 0 : index
    %c0_138 = arith.constant 0 : index
    %243 = vector.load %arg20[%c0_136, %c0_137, %c0_138] : memref<2x1x128xf32, #tpu.memory_space<vmem>>, vector<1x1x128xf32>
    %244 = vector.shape_cast %243 : vector<1x1x128xf32> to vector<1x128xf32>
    %245 = vector.broadcast %244 : vector<1x128xf32> to vector<32x128xf32>
    %246 = arith.addf %242, %245 : vector<32x128xf32>
    %c1_139 = arith.constant 1 : index
    %c0_140 = arith.constant 0 : index
    %c0_141 = arith.constant 0 : index
    %247 = vector.load %arg5[%c1_139, %c0_140, %c0_141] : memref<2x1x128xf32, #tpu.memory_space<vmem>>, vector<1x1x128xf32>
    %248 = vector.shape_cast %247 : vector<1x1x128xf32> to vector<1x128xf32>
    %c1_142 = arith.constant 1 : index
    %c0_143 = arith.constant 0 : index
    %c0_144 = arith.constant 0 : index
    %249 = vector.load %arg6[%c1_142, %c0_143, %c0_144] : memref<2x1x128xf32, #tpu.memory_space<vmem>>, vector<1x1x128xf32>
    %250 = vector.shape_cast %249 : vector<1x1x128xf32> to vector<1x128xf32>
    %cst_145 = arith.constant dense<0.000000e+00> : vector<32xf32>
    %251 = vector.multi_reduction <add>, %246, %cst_145 [1] : vector<32x128xf32> to vector<32xf32>
    %252 = vector.shape_cast %251 : vector<32xf32> to vector<32x1xf32>
    %cst_146 = arith.constant 0.010416667 : f32
    %253 = vector.broadcast %cst_146 : f32 to vector<32x1xf32>
    %254 = arith.mulf %252, %253 : vector<32x1xf32>
    %255 = vector.broadcast %254 : vector<32x1xf32> to vector<32x128xf32>
    %256 = arith.subf %246, %255 : vector<32x128xf32>
    %257 = vector.broadcast %4 : vector<1x128xf32> to vector<32x128xf32>
    %258 = arith.mulf %256, %257 : vector<32x128xf32>
    %259 = arith.mulf %258, %258 : vector<32x128xf32>
    %cst_147 = arith.constant dense<0.000000e+00> : vector<32xf32>
    %260 = vector.multi_reduction <add>, %259, %cst_147 [1] : vector<32x128xf32> to vector<32xf32>
    %261 = vector.shape_cast %260 : vector<32xf32> to vector<32x1xf32>
    %cst_148 = arith.constant 0.010416667 : f32
    %262 = vector.broadcast %cst_148 : f32 to vector<32x1xf32>
    %263 = arith.mulf %261, %262 : vector<32x1xf32>
    %cst_149 = arith.constant 9.99999974E-6 : f32
    %264 = vector.broadcast %cst_149 : f32 to vector<32x1xf32>
    %265 = arith.addf %263, %264 : vector<32x1xf32>
    %266 = math.rsqrt %265 : vector<32x1xf32>
    %267 = vector.broadcast %266 : vector<32x1xf32> to vector<32x128xf32>
    %268 = arith.mulf %256, %267 : vector<32x128xf32>
    %269 = vector.broadcast %248 : vector<1x128xf32> to vector<32x128xf32>
    %270 = arith.mulf %268, %269 : vector<32x128xf32>
    %271 = vector.broadcast %250 : vector<1x128xf32> to vector<32x128xf32>
    %272 = arith.addf %270, %271 : vector<32x128xf32>
    %273 = arith.truncf %272 : vector<32x128xf32> to vector<32x128xbf16>
    %cst_150 = arith.constant 0.000000e+00 : f32
    %274 = vector.broadcast %cst_150 : f32 to vector<32x128xf32>
    %c3 = arith.constant 3 : index
    %c0_151 = arith.constant 0 : index
    %c0_152 = arith.constant 0 : index
    %275 = vector.load %arg7[%c3, %c0_151, %c0_152] : memref<6x128x32xbf16, #tpu.memory_space<vmem>>, vector<1x128x32xbf16>
    %276 = vector.shape_cast %275 : vector<1x128x32xbf16> to vector<128x32xbf16>
    %cst_153 = arith.constant dense<0.000000e+00> : vector<32x32xf32>
    %277 = tpu.matmul %273, %276, %cst_153 {dimension_numbers = #tpu.dot_dimension_numbers<[1], [0], [0], [1], [0, 0, 1, 1], [], []>} : vector<32x128xbf16>, vector<128x32xbf16>, vector<32x32xf32> -> vector<32x32xf32>
    %c3_154 = arith.constant 3 : index
    %c0_155 = arith.constant 0 : index
    %c0_156 = arith.constant 0 : index
    %278 = vector.load %arg8[%c3_154, %c0_155, %c0_156] : memref<6x1x32xf32, #tpu.memory_space<vmem>>, vector<1x1x32xf32>
    %279 = vector.shape_cast %278 : vector<1x1x32xf32> to vector<1x32xf32>
    %280 = vector.broadcast %279 : vector<1x32xf32> to vector<32x32xf32>
    %281 = arith.addf %277, %280 : vector<32x32xf32>
    %282 = vector.shape_cast %281 : vector<32x32xf32> to vector<2x16x32xf32>
    %c3_157 = arith.constant 3 : index
    %c0_158 = arith.constant 0 : index
    %c0_159 = arith.constant 0 : index
    %283 = vector.load %arg9[%c3_157, %c0_158, %c0_159] : memref<6x128x32xbf16, #tpu.memory_space<vmem>>, vector<1x128x32xbf16>
    %284 = vector.shape_cast %283 : vector<1x128x32xbf16> to vector<128x32xbf16>
    %cst_160 = arith.constant dense<0.000000e+00> : vector<32x32xf32>
    %285 = tpu.matmul %273, %284, %cst_160 {dimension_numbers = #tpu.dot_dimension_numbers<[1], [0], [0], [1], [0, 0, 1, 1], [], []>} : vector<32x128xbf16>, vector<128x32xbf16>, vector<32x32xf32> -> vector<32x32xf32>
    %c3_161 = arith.constant 3 : index
    %c0_162 = arith.constant 0 : index
    %c0_163 = arith.constant 0 : index
    %286 = vector.load %arg10[%c3_161, %c0_162, %c0_163] : memref<6x1x32xf32, #tpu.memory_space<vmem>>, vector<1x1x32xf32>
    %287 = vector.shape_cast %286 : vector<1x1x32xf32> to vector<1x32xf32>
    %288 = vector.broadcast %287 : vector<1x32xf32> to vector<32x32xf32>
    %289 = arith.addf %285, %288 : vector<32x32xf32>
    %290 = vector.shape_cast %289 : vector<32x32xf32> to vector<2x16x32xf32>
    %c3_164 = arith.constant 3 : index
    %c0_165 = arith.constant 0 : index
    %c0_166 = arith.constant 0 : index
    %291 = vector.load %arg11[%c3_164, %c0_165, %c0_166] : memref<6x128x32xbf16, #tpu.memory_space<vmem>>, vector<1x128x32xbf16>
    %292 = vector.shape_cast %291 : vector<1x128x32xbf16> to vector<128x32xbf16>
    %cst_167 = arith.constant dense<0.000000e+00> : vector<32x32xf32>
    %293 = tpu.matmul %273, %292, %cst_167 {dimension_numbers = #tpu.dot_dimension_numbers<[1], [0], [0], [1], [0, 0, 1, 1], [], []>} : vector<32x128xbf16>, vector<128x32xbf16>, vector<32x32xf32> -> vector<32x32xf32>
    %c3_168 = arith.constant 3 : index
    %c0_169 = arith.constant 0 : index
    %c0_170 = arith.constant 0 : index
    %294 = vector.load %arg12[%c3_168, %c0_169, %c0_170] : memref<6x1x32xf32, #tpu.memory_space<vmem>>, vector<1x1x32xf32>
    %295 = vector.shape_cast %294 : vector<1x1x32xf32> to vector<1x32xf32>
    %296 = vector.broadcast %295 : vector<1x32xf32> to vector<32x32xf32>
    %297 = arith.addf %293, %296 : vector<32x32xf32>
    %298 = vector.shape_cast %297 : vector<32x32xf32> to vector<2x16x32xf32>
    %299 = arith.truncf %282 : vector<2x16x32xf32> to vector<2x16x32xbf16>
    %300 = arith.truncf %290 : vector<2x16x32xf32> to vector<2x16x32xbf16>
    "tpu.trace_start"() <{level = 10 : i32, message = "bne,bme->bnm"}> : () -> ()
    %cst_171 = arith.constant dense<0.000000e+00> : vector<2x16x16xf32>
    %301 = tpu.matmul %299, %300, %cst_171 {dimension_numbers = #tpu.dot_dimension_numbers<[2], [2], [1], [1], [0, 0, 0, 1, 1, 1], [0], [0]>} : vector<2x16x32xbf16>, vector<2x16x32xbf16>, vector<2x16x16xf32> -> vector<2x16x16xf32>
    "tpu.trace_stop"() : () -> ()
    %cst_172 = arith.constant 0.176776692 : f32
    %302 = vector.broadcast %cst_172 : f32 to vector<2x16x16xf32>
    %303 = arith.mulf %301, %302 : vector<2x16x16xf32>
    %cst_173 = arith.constant dense<0xFF800000> : vector<2x16xf32>
    %304 = vector.multi_reduction <maximumf>, %303, %cst_173 [2] : vector<2x16x16xf32> to vector<2x16xf32>
    %305 = vector.shape_cast %304 : vector<2x16xf32> to vector<2x16x1xf32>
    %306 = vector.broadcast %305 : vector<2x16x1xf32> to vector<2x16x16xf32>
    %307 = arith.subf %303, %306 : vector<2x16x16xf32>
    %308 = math.exp %307 : vector<2x16x16xf32>
    %cst_174 = arith.constant dense<0.000000e+00> : vector<2x16xf32>
    %309 = vector.multi_reduction <add>, %308, %cst_174 [2] : vector<2x16x16xf32> to vector<2x16xf32>
    %310 = vector.shape_cast %309 : vector<2x16xf32> to vector<2x16x1xf32>
    %311 = tpu.reciprocal %310 {approx = true} : vector<2x16x1xf32> -> vector<2x16x1xf32>
    %312 = vector.broadcast %311 : vector<2x16x1xf32> to vector<2x16x16xf32>
    %313 = arith.mulf %308, %312 : vector<2x16x16xf32>
    %314 = arith.truncf %313 : vector<2x16x16xf32> to vector<2x16x16xbf16>
    %315 = arith.truncf %298 : vector<2x16x32xf32> to vector<2x16x32xbf16>
    "tpu.trace_start"() <{level = 10 : i32, message = "bnm,bme->bne"}> : () -> ()
    %cst_175 = arith.constant dense<0.000000e+00> : vector<2x16x32xf32>
    %316 = tpu.matmul %314, %315, %cst_175 {dimension_numbers = #tpu.dot_dimension_numbers<[2], [1], [1], [2], [0, 0, 0, 1, 1, 2], [0], [0]>} : vector<2x16x16xbf16>, vector<2x16x32xbf16>, vector<2x16x32xf32> -> vector<2x16x32xf32>
    "tpu.trace_stop"() : () -> ()
    %317 = vector.shape_cast %316 : vector<2x16x32xf32> to vector<32x32xf32>
    %318 = arith.truncf %317 : vector<32x32xf32> to vector<32x32xbf16>
    %c3_176 = arith.constant 3 : index
    %c0_177 = arith.constant 0 : index
    %c0_178 = arith.constant 0 : index
    %319 = vector.load %arg13[%c3_176, %c0_177, %c0_178] : memref<6x32x128xbf16, #tpu.memory_space<vmem>>, vector<1x32x128xbf16>
    %320 = vector.shape_cast %319 : vector<1x32x128xbf16> to vector<32x128xbf16>
    %cst_179 = arith.constant dense<0.000000e+00> : vector<32x128xf32>
    %321 = tpu.matmul %318, %320, %cst_179 {dimension_numbers = #tpu.dot_dimension_numbers<[1], [0], [0], [1], [0, 0, 1, 1], [], []>} : vector<32x32xbf16>, vector<32x128xbf16>, vector<32x128xf32> -> vector<32x128xf32>
    %322 = arith.addf %274, %321 : vector<32x128xf32>
    %c4 = arith.constant 4 : index
    %c0_180 = arith.constant 0 : index
    %c0_181 = arith.constant 0 : index
    %323 = vector.load %arg7[%c4, %c0_180, %c0_181] : memref<6x128x32xbf16, #tpu.memory_space<vmem>>, vector<1x128x32xbf16>
    %324 = vector.shape_cast %323 : vector<1x128x32xbf16> to vector<128x32xbf16>
    %cst_182 = arith.constant dense<0.000000e+00> : vector<32x32xf32>
    %325 = tpu.matmul %273, %324, %cst_182 {dimension_numbers = #tpu.dot_dimension_numbers<[1], [0], [0], [1], [0, 0, 1, 1], [], []>} : vector<32x128xbf16>, vector<128x32xbf16>, vector<32x32xf32> -> vector<32x32xf32>
    %c4_183 = arith.constant 4 : index
    %c0_184 = arith.constant 0 : index
    %c0_185 = arith.constant 0 : index
    %326 = vector.load %arg8[%c4_183, %c0_184, %c0_185] : memref<6x1x32xf32, #tpu.memory_space<vmem>>, vector<1x1x32xf32>
    %327 = vector.shape_cast %326 : vector<1x1x32xf32> to vector<1x32xf32>
    %328 = vector.broadcast %327 : vector<1x32xf32> to vector<32x32xf32>
    %329 = arith.addf %325, %328 : vector<32x32xf32>
    %330 = vector.shape_cast %329 : vector<32x32xf32> to vector<2x16x32xf32>
    %c4_186 = arith.constant 4 : index
    %c0_187 = arith.constant 0 : index
    %c0_188 = arith.constant 0 : index
    %331 = vector.load %arg9[%c4_186, %c0_187, %c0_188] : memref<6x128x32xbf16, #tpu.memory_space<vmem>>, vector<1x128x32xbf16>
    %332 = vector.shape_cast %331 : vector<1x128x32xbf16> to vector<128x32xbf16>
    %cst_189 = arith.constant dense<0.000000e+00> : vector<32x32xf32>
    %333 = tpu.matmul %273, %332, %cst_189 {dimension_numbers = #tpu.dot_dimension_numbers<[1], [0], [0], [1], [0, 0, 1, 1], [], []>} : vector<32x128xbf16>, vector<128x32xbf16>, vector<32x32xf32> -> vector<32x32xf32>
    %c4_190 = arith.constant 4 : index
    %c0_191 = arith.constant 0 : index
    %c0_192 = arith.constant 0 : index
    %334 = vector.load %arg10[%c4_190, %c0_191, %c0_192] : memref<6x1x32xf32, #tpu.memory_space<vmem>>, vector<1x1x32xf32>
    %335 = vector.shape_cast %334 : vector<1x1x32xf32> to vector<1x32xf32>
    %336 = vector.broadcast %335 : vector<1x32xf32> to vector<32x32xf32>
    %337 = arith.addf %333, %336 : vector<32x32xf32>
    %338 = vector.shape_cast %337 : vector<32x32xf32> to vector<2x16x32xf32>
    %c4_193 = arith.constant 4 : index
    %c0_194 = arith.constant 0 : index
    %c0_195 = arith.constant 0 : index
    %339 = vector.load %arg11[%c4_193, %c0_194, %c0_195] : memref<6x128x32xbf16, #tpu.memory_space<vmem>>, vector<1x128x32xbf16>
    %340 = vector.shape_cast %339 : vector<1x128x32xbf16> to vector<128x32xbf16>
    %cst_196 = arith.constant dense<0.000000e+00> : vector<32x32xf32>
    %341 = tpu.matmul %273, %340, %cst_196 {dimension_numbers = #tpu.dot_dimension_numbers<[1], [0], [0], [1], [0, 0, 1, 1], [], []>} : vector<32x128xbf16>, vector<128x32xbf16>, vector<32x32xf32> -> vector<32x32xf32>
    %c4_197 = arith.constant 4 : index
    %c0_198 = arith.constant 0 : index
    %c0_199 = arith.constant 0 : index
    %342 = vector.load %arg12[%c4_197, %c0_198, %c0_199] : memref<6x1x32xf32, #tpu.memory_space<vmem>>, vector<1x1x32xf32>
    %343 = vector.shape_cast %342 : vector<1x1x32xf32> to vector<1x32xf32>
    %344 = vector.broadcast %343 : vector<1x32xf32> to vector<32x32xf32>
    %345 = arith.addf %341, %344 : vector<32x32xf32>
    %346 = vector.shape_cast %345 : vector<32x32xf32> to vector<2x16x32xf32>
    %347 = arith.truncf %330 : vector<2x16x32xf32> to vector<2x16x32xbf16>
    %348 = arith.truncf %338 : vector<2x16x32xf32> to vector<2x16x32xbf16>
    "tpu.trace_start"() <{level = 10 : i32, message = "bne,bme->bnm"}> : () -> ()
    %cst_200 = arith.constant dense<0.000000e+00> : vector<2x16x16xf32>
    %349 = tpu.matmul %347, %348, %cst_200 {dimension_numbers = #tpu.dot_dimension_numbers<[2], [2], [1], [1], [0, 0, 0, 1, 1, 1], [0], [0]>} : vector<2x16x32xbf16>, vector<2x16x32xbf16>, vector<2x16x16xf32> -> vector<2x16x16xf32>
    "tpu.trace_stop"() : () -> ()
    %cst_201 = arith.constant 0.176776692 : f32
    %350 = vector.broadcast %cst_201 : f32 to vector<2x16x16xf32>
    %351 = arith.mulf %349, %350 : vector<2x16x16xf32>
    %cst_202 = arith.constant dense<0xFF800000> : vector<2x16xf32>
    %352 = vector.multi_reduction <maximumf>, %351, %cst_202 [2] : vector<2x16x16xf32> to vector<2x16xf32>
    %353 = vector.shape_cast %352 : vector<2x16xf32> to vector<2x16x1xf32>
    %354 = vector.broadcast %353 : vector<2x16x1xf32> to vector<2x16x16xf32>
    %355 = arith.subf %351, %354 : vector<2x16x16xf32>
    %356 = math.exp %355 : vector<2x16x16xf32>
    %cst_203 = arith.constant dense<0.000000e+00> : vector<2x16xf32>
    %357 = vector.multi_reduction <add>, %356, %cst_203 [2] : vector<2x16x16xf32> to vector<2x16xf32>
    %358 = vector.shape_cast %357 : vector<2x16xf32> to vector<2x16x1xf32>
    %359 = tpu.reciprocal %358 {approx = true} : vector<2x16x1xf32> -> vector<2x16x1xf32>
    %360 = vector.broadcast %359 : vector<2x16x1xf32> to vector<2x16x16xf32>
    %361 = arith.mulf %356, %360 : vector<2x16x16xf32>
    %362 = arith.truncf %361 : vector<2x16x16xf32> to vector<2x16x16xbf16>
    %363 = arith.truncf %346 : vector<2x16x32xf32> to vector<2x16x32xbf16>
    "tpu.trace_start"() <{level = 10 : i32, message = "bnm,bme->bne"}> : () -> ()
    %cst_204 = arith.constant dense<0.000000e+00> : vector<2x16x32xf32>
    %364 = tpu.matmul %362, %363, %cst_204 {dimension_numbers = #tpu.dot_dimension_numbers<[2], [1], [1], [2], [0, 0, 0, 1, 1, 2], [0], [0]>} : vector<2x16x16xbf16>, vector<2x16x32xbf16>, vector<2x16x32xf32> -> vector<2x16x32xf32>
    "tpu.trace_stop"() : () -> ()
    %365 = vector.shape_cast %364 : vector<2x16x32xf32> to vector<32x32xf32>
    %366 = arith.truncf %365 : vector<32x32xf32> to vector<32x32xbf16>
    %c4_205 = arith.constant 4 : index
    %c0_206 = arith.constant 0 : index
    %c0_207 = arith.constant 0 : index
    %367 = vector.load %arg13[%c4_205, %c0_206, %c0_207] : memref<6x32x128xbf16, #tpu.memory_space<vmem>>, vector<1x32x128xbf16>
    %368 = vector.shape_cast %367 : vector<1x32x128xbf16> to vector<32x128xbf16>
    %cst_208 = arith.constant dense<0.000000e+00> : vector<32x128xf32>
    %369 = tpu.matmul %366, %368, %cst_208 {dimension_numbers = #tpu.dot_dimension_numbers<[1], [0], [0], [1], [0, 0, 1, 1], [], []>} : vector<32x32xbf16>, vector<32x128xbf16>, vector<32x128xf32> -> vector<32x128xf32>
    %370 = arith.addf %322, %369 : vector<32x128xf32>
    %c5 = arith.constant 5 : index
    %c0_209 = arith.constant 0 : index
    %c0_210 = arith.constant 0 : index
    %371 = vector.load %arg7[%c5, %c0_209, %c0_210] : memref<6x128x32xbf16, #tpu.memory_space<vmem>>, vector<1x128x32xbf16>
    %372 = vector.shape_cast %371 : vector<1x128x32xbf16> to vector<128x32xbf16>
    %cst_211 = arith.constant dense<0.000000e+00> : vector<32x32xf32>
    %373 = tpu.matmul %273, %372, %cst_211 {dimension_numbers = #tpu.dot_dimension_numbers<[1], [0], [0], [1], [0, 0, 1, 1], [], []>} : vector<32x128xbf16>, vector<128x32xbf16>, vector<32x32xf32> -> vector<32x32xf32>
    %c5_212 = arith.constant 5 : index
    %c0_213 = arith.constant 0 : index
    %c0_214 = arith.constant 0 : index
    %374 = vector.load %arg8[%c5_212, %c0_213, %c0_214] : memref<6x1x32xf32, #tpu.memory_space<vmem>>, vector<1x1x32xf32>
    %375 = vector.shape_cast %374 : vector<1x1x32xf32> to vector<1x32xf32>
    %376 = vector.broadcast %375 : vector<1x32xf32> to vector<32x32xf32>
    %377 = arith.addf %373, %376 : vector<32x32xf32>
    %378 = vector.shape_cast %377 : vector<32x32xf32> to vector<2x16x32xf32>
    %c5_215 = arith.constant 5 : index
    %c0_216 = arith.constant 0 : index
    %c0_217 = arith.constant 0 : index
    %379 = vector.load %arg9[%c5_215, %c0_216, %c0_217] : memref<6x128x32xbf16, #tpu.memory_space<vmem>>, vector<1x128x32xbf16>
    %380 = vector.shape_cast %379 : vector<1x128x32xbf16> to vector<128x32xbf16>
    %cst_218 = arith.constant dense<0.000000e+00> : vector<32x32xf32>
    %381 = tpu.matmul %273, %380, %cst_218 {dimension_numbers = #tpu.dot_dimension_numbers<[1], [0], [0], [1], [0, 0, 1, 1], [], []>} : vector<32x128xbf16>, vector<128x32xbf16>, vector<32x32xf32> -> vector<32x32xf32>
    %c5_219 = arith.constant 5 : index
    %c0_220 = arith.constant 0 : index
    %c0_221 = arith.constant 0 : index
    %382 = vector.load %arg10[%c5_219, %c0_220, %c0_221] : memref<6x1x32xf32, #tpu.memory_space<vmem>>, vector<1x1x32xf32>
    %383 = vector.shape_cast %382 : vector<1x1x32xf32> to vector<1x32xf32>
    %384 = vector.broadcast %383 : vector<1x32xf32> to vector<32x32xf32>
    %385 = arith.addf %381, %384 : vector<32x32xf32>
    %386 = vector.shape_cast %385 : vector<32x32xf32> to vector<2x16x32xf32>
    %c5_222 = arith.constant 5 : index
    %c0_223 = arith.constant 0 : index
    %c0_224 = arith.constant 0 : index
    %387 = vector.load %arg11[%c5_222, %c0_223, %c0_224] : memref<6x128x32xbf16, #tpu.memory_space<vmem>>, vector<1x128x32xbf16>
    %388 = vector.shape_cast %387 : vector<1x128x32xbf16> to vector<128x32xbf16>
    %cst_225 = arith.constant dense<0.000000e+00> : vector<32x32xf32>
    %389 = tpu.matmul %273, %388, %cst_225 {dimension_numbers = #tpu.dot_dimension_numbers<[1], [0], [0], [1], [0, 0, 1, 1], [], []>} : vector<32x128xbf16>, vector<128x32xbf16>, vector<32x32xf32> -> vector<32x32xf32>
    %c5_226 = arith.constant 5 : index
    %c0_227 = arith.constant 0 : index
    %c0_228 = arith.constant 0 : index
    %390 = vector.load %arg12[%c5_226, %c0_227, %c0_228] : memref<6x1x32xf32, #tpu.memory_space<vmem>>, vector<1x1x32xf32>
    %391 = vector.shape_cast %390 : vector<1x1x32xf32> to vector<1x32xf32>
    %392 = vector.broadcast %391 : vector<1x32xf32> to vector<32x32xf32>
    %393 = arith.addf %389, %392 : vector<32x32xf32>
    %394 = vector.shape_cast %393 : vector<32x32xf32> to vector<2x16x32xf32>
    %395 = arith.truncf %378 : vector<2x16x32xf32> to vector<2x16x32xbf16>
    %396 = arith.truncf %386 : vector<2x16x32xf32> to vector<2x16x32xbf16>
    "tpu.trace_start"() <{level = 10 : i32, message = "bne,bme->bnm"}> : () -> ()
    %cst_229 = arith.constant dense<0.000000e+00> : vector<2x16x16xf32>
    %397 = tpu.matmul %395, %396, %cst_229 {dimension_numbers = #tpu.dot_dimension_numbers<[2], [2], [1], [1], [0, 0, 0, 1, 1, 1], [0], [0]>} : vector<2x16x32xbf16>, vector<2x16x32xbf16>, vector<2x16x16xf32> -> vector<2x16x16xf32>
    "tpu.trace_stop"() : () -> ()
    %cst_230 = arith.constant 0.176776692 : f32
    %398 = vector.broadcast %cst_230 : f32 to vector<2x16x16xf32>
    %399 = arith.mulf %397, %398 : vector<2x16x16xf32>
    %cst_231 = arith.constant dense<0xFF800000> : vector<2x16xf32>
    %400 = vector.multi_reduction <maximumf>, %399, %cst_231 [2] : vector<2x16x16xf32> to vector<2x16xf32>
    %401 = vector.shape_cast %400 : vector<2x16xf32> to vector<2x16x1xf32>
    %402 = vector.broadcast %401 : vector<2x16x1xf32> to vector<2x16x16xf32>
    %403 = arith.subf %399, %402 : vector<2x16x16xf32>
    %404 = math.exp %403 : vector<2x16x16xf32>
    %cst_232 = arith.constant dense<0.000000e+00> : vector<2x16xf32>
    %405 = vector.multi_reduction <add>, %404, %cst_232 [2] : vector<2x16x16xf32> to vector<2x16xf32>
    %406 = vector.shape_cast %405 : vector<2x16xf32> to vector<2x16x1xf32>
    %407 = tpu.reciprocal %406 {approx = true} : vector<2x16x1xf32> -> vector<2x16x1xf32>
    %408 = vector.broadcast %407 : vector<2x16x1xf32> to vector<2x16x16xf32>
    %409 = arith.mulf %404, %408 : vector<2x16x16xf32>
    %410 = arith.truncf %409 : vector<2x16x16xf32> to vector<2x16x16xbf16>
    %411 = arith.truncf %394 : vector<2x16x32xf32> to vector<2x16x32xbf16>
    "tpu.trace_start"() <{level = 10 : i32, message = "bnm,bme->bne"}> : () -> ()
    %cst_233 = arith.constant dense<0.000000e+00> : vector<2x16x32xf32>
    %412 = tpu.matmul %410, %411, %cst_233 {dimension_numbers = #tpu.dot_dimension_numbers<[2], [1], [1], [2], [0, 0, 0, 1, 1, 2], [0], [0]>} : vector<2x16x16xbf16>, vector<2x16x32xbf16>, vector<2x16x32xf32> -> vector<2x16x32xf32>
    "tpu.trace_stop"() : () -> ()
    %413 = vector.shape_cast %412 : vector<2x16x32xf32> to vector<32x32xf32>
    %414 = arith.truncf %413 : vector<32x32xf32> to vector<32x32xbf16>
    %c5_234 = arith.constant 5 : index
    %c0_235 = arith.constant 0 : index
    %c0_236 = arith.constant 0 : index
    %415 = vector.load %arg13[%c5_234, %c0_235, %c0_236] : memref<6x32x128xbf16, #tpu.memory_space<vmem>>, vector<1x32x128xbf16>
    %416 = vector.shape_cast %415 : vector<1x32x128xbf16> to vector<32x128xbf16>
    %cst_237 = arith.constant dense<0.000000e+00> : vector<32x128xf32>
    %417 = tpu.matmul %414, %416, %cst_237 {dimension_numbers = #tpu.dot_dimension_numbers<[1], [0], [0], [1], [0, 0, 1, 1], [], []>} : vector<32x32xbf16>, vector<32x128xbf16>, vector<32x128xf32> -> vector<32x128xf32>
    %418 = arith.addf %370, %417 : vector<32x128xf32>
    %419 = arith.addf %246, %418 : vector<32x128xf32>
    %c1_238 = arith.constant 1 : index
    %c0_239 = arith.constant 0 : index
    %c0_240 = arith.constant 0 : index
    %420 = vector.load %arg14[%c1_238, %c0_239, %c0_240] : memref<2x1x128xf32, #tpu.memory_space<vmem>>, vector<1x1x128xf32>
    %421 = vector.shape_cast %420 : vector<1x1x128xf32> to vector<1x128xf32>
    %422 = vector.broadcast %421 : vector<1x128xf32> to vector<32x128xf32>
    %423 = arith.addf %419, %422 : vector<32x128xf32>
    %c1_241 = arith.constant 1 : index
    %c0_242 = arith.constant 0 : index
    %c0_243 = arith.constant 0 : index
    %424 = vector.load %arg15[%c1_241, %c0_242, %c0_243] : memref<2x1x128xf32, #tpu.memory_space<vmem>>, vector<1x1x128xf32>
    %425 = vector.shape_cast %424 : vector<1x1x128xf32> to vector<1x128xf32>
    %c1_244 = arith.constant 1 : index
    %c0_245 = arith.constant 0 : index
    %c0_246 = arith.constant 0 : index
    %426 = vector.load %arg16[%c1_244, %c0_245, %c0_246] : memref<2x1x128xf32, #tpu.memory_space<vmem>>, vector<1x1x128xf32>
    %427 = vector.shape_cast %426 : vector<1x1x128xf32> to vector<1x128xf32>
    %cst_247 = arith.constant dense<0.000000e+00> : vector<32xf32>
    %428 = vector.multi_reduction <add>, %423, %cst_247 [1] : vector<32x128xf32> to vector<32xf32>
    %429 = vector.shape_cast %428 : vector<32xf32> to vector<32x1xf32>
    %cst_248 = arith.constant 0.010416667 : f32
    %430 = vector.broadcast %cst_248 : f32 to vector<32x1xf32>
    %431 = arith.mulf %429, %430 : vector<32x1xf32>
    %432 = vector.broadcast %431 : vector<32x1xf32> to vector<32x128xf32>
    %433 = arith.subf %423, %432 : vector<32x128xf32>
    %434 = vector.broadcast %4 : vector<1x128xf32> to vector<32x128xf32>
    %435 = arith.mulf %433, %434 : vector<32x128xf32>
    %436 = arith.mulf %435, %435 : vector<32x128xf32>
    %cst_249 = arith.constant dense<0.000000e+00> : vector<32xf32>
    %437 = vector.multi_reduction <add>, %436, %cst_249 [1] : vector<32x128xf32> to vector<32xf32>
    %438 = vector.shape_cast %437 : vector<32xf32> to vector<32x1xf32>
    %cst_250 = arith.constant 0.010416667 : f32
    %439 = vector.broadcast %cst_250 : f32 to vector<32x1xf32>
    %440 = arith.mulf %438, %439 : vector<32x1xf32>
    %cst_251 = arith.constant 9.99999974E-6 : f32
    %441 = vector.broadcast %cst_251 : f32 to vector<32x1xf32>
    %442 = arith.addf %440, %441 : vector<32x1xf32>
    %443 = math.rsqrt %442 : vector<32x1xf32>
    %444 = vector.broadcast %443 : vector<32x1xf32> to vector<32x128xf32>
    %445 = arith.mulf %433, %444 : vector<32x128xf32>
    %446 = vector.broadcast %425 : vector<1x128xf32> to vector<32x128xf32>
    %447 = arith.mulf %445, %446 : vector<32x128xf32>
    %448 = vector.broadcast %427 : vector<1x128xf32> to vector<32x128xf32>
    %449 = arith.addf %447, %448 : vector<32x128xf32>
    %c1_252 = arith.constant 1 : index
    %c0_253 = arith.constant 0 : index
    %c0_254 = arith.constant 0 : index
    %450 = vector.load %arg17[%c1_252, %c0_253, %c0_254] : memref<2x128x384xbf16, #tpu.memory_space<vmem>>, vector<1x128x384xbf16>
    %451 = vector.shape_cast %450 : vector<1x128x384xbf16> to vector<128x384xbf16>
    %452 = arith.truncf %449 : vector<32x128xf32> to vector<32x128xbf16>
    %cst_255 = arith.constant dense<0.000000e+00> : vector<32x384xf32>
    %453 = tpu.matmul %452, %451, %cst_255 {dimension_numbers = #tpu.dot_dimension_numbers<[1], [0], [0], [1], [0, 0, 1, 1], [], []>} : vector<32x128xbf16>, vector<128x384xbf16>, vector<32x384xf32> -> vector<32x384xf32>
    %c1_256 = arith.constant 1 : index
    %c0_257 = arith.constant 0 : index
    %c0_258 = arith.constant 0 : index
    %454 = vector.load %arg18[%c1_256, %c0_257, %c0_258] : memref<2x1x384xf32, #tpu.memory_space<vmem>>, vector<1x1x384xf32>
    %455 = vector.shape_cast %454 : vector<1x1x384xf32> to vector<1x384xf32>
    %456 = vector.broadcast %455 : vector<1x384xf32> to vector<32x384xf32>
    %457 = arith.addf %453, %456 : vector<32x384xf32>
    %cst_259 = arith.constant 5.000000e-01 : f32
    %458 = vector.broadcast %cst_259 : f32 to vector<32x384xf32>
    %459 = arith.mulf %458, %457 : vector<32x384xf32>
    %cst_260 = arith.constant 4.471500e-02 : f32
    %460 = vector.broadcast %cst_260 : f32 to vector<32x384xf32>
    %461 = arith.mulf %460, %457 : vector<32x384xf32>
    %462 = arith.mulf %461, %457 : vector<32x384xf32>
    %463 = arith.mulf %462, %457 : vector<32x384xf32>
    %464 = arith.addf %457, %463 : vector<32x384xf32>
    %cst_261 = arith.constant 0.797884583 : f32
    %465 = vector.broadcast %cst_261 : f32 to vector<32x384xf32>
    %466 = arith.mulf %465, %464 : vector<32x384xf32>
    %467 = math.tanh %466 : vector<32x384xf32>
    %cst_262 = arith.constant 1.000000e+00 : f32
    %468 = vector.broadcast %cst_262 : f32 to vector<32x384xf32>
    %469 = arith.addf %468, %467 : vector<32x384xf32>
    %470 = arith.mulf %459, %469 : vector<32x384xf32>
    %c1_263 = arith.constant 1 : index
    %c0_264 = arith.constant 0 : index
    %c0_265 = arith.constant 0 : index
    %471 = vector.load %arg19[%c1_263, %c0_264, %c0_265] : memref<2x384x128xbf16, #tpu.memory_space<vmem>>, vector<1x384x128xbf16>
    %472 = vector.shape_cast %471 : vector<1x384x128xbf16> to vector<384x128xbf16>
    %473 = arith.truncf %470 : vector<32x384xf32> to vector<32x384xbf16>
    %cst_266 = arith.constant dense<0.000000e+00> : vector<32x128xf32>
    %474 = tpu.matmul %473, %472, %cst_266 {dimension_numbers = #tpu.dot_dimension_numbers<[1], [0], [0], [1], [0, 0, 1, 1], [], []>} : vector<32x384xbf16>, vector<384x128xbf16>, vector<32x128xf32> -> vector<32x128xf32>
    %475 = arith.addf %423, %474 : vector<32x128xf32>
    %c1_267 = arith.constant 1 : index
    %c0_268 = arith.constant 0 : index
    %c0_269 = arith.constant 0 : index
    %476 = vector.load %arg20[%c1_267, %c0_268, %c0_269] : memref<2x1x128xf32, #tpu.memory_space<vmem>>, vector<1x1x128xf32>
    %477 = vector.shape_cast %476 : vector<1x1x128xf32> to vector<1x128xf32>
    %478 = vector.broadcast %477 : vector<1x128xf32> to vector<32x128xf32>
    %479 = arith.addf %475, %478 : vector<32x128xf32>
    %c0_270 = arith.constant 0 : index
    %c0_271 = arith.constant 0 : index
    %480 = vector.load %arg21[%c0_270, %c0_271] : memref<1x128xf32, #tpu.memory_space<vmem>>, vector<1x128xf32>
    %c0_272 = arith.constant 0 : index
    %c0_273 = arith.constant 0 : index
    %481 = vector.load %arg22[%c0_272, %c0_273] : memref<1x128xf32, #tpu.memory_space<vmem>>, vector<1x128xf32>
    %cst_274 = arith.constant dense<0.000000e+00> : vector<32xf32>
    %482 = vector.multi_reduction <add>, %479, %cst_274 [1] : vector<32x128xf32> to vector<32xf32>
    %483 = vector.shape_cast %482 : vector<32xf32> to vector<32x1xf32>
    %cst_275 = arith.constant 0.010416667 : f32
    %484 = vector.broadcast %cst_275 : f32 to vector<32x1xf32>
    %485 = arith.mulf %483, %484 : vector<32x1xf32>
    %486 = vector.broadcast %485 : vector<32x1xf32> to vector<32x128xf32>
    %487 = arith.subf %479, %486 : vector<32x128xf32>
    %488 = vector.broadcast %4 : vector<1x128xf32> to vector<32x128xf32>
    %489 = arith.mulf %487, %488 : vector<32x128xf32>
    %490 = arith.mulf %489, %489 : vector<32x128xf32>
    %cst_276 = arith.constant dense<0.000000e+00> : vector<32xf32>
    %491 = vector.multi_reduction <add>, %490, %cst_276 [1] : vector<32x128xf32> to vector<32xf32>
    %492 = vector.shape_cast %491 : vector<32xf32> to vector<32x1xf32>
    %cst_277 = arith.constant 0.010416667 : f32
    %493 = vector.broadcast %cst_277 : f32 to vector<32x1xf32>
    %494 = arith.mulf %492, %493 : vector<32x1xf32>
    %cst_278 = arith.constant 9.99999974E-6 : f32
    %495 = vector.broadcast %cst_278 : f32 to vector<32x1xf32>
    %496 = arith.addf %494, %495 : vector<32x1xf32>
    %497 = math.rsqrt %496 : vector<32x1xf32>
    %498 = vector.broadcast %497 : vector<32x1xf32> to vector<32x128xf32>
    %499 = arith.mulf %487, %498 : vector<32x128xf32>
    %500 = vector.broadcast %480 : vector<1x128xf32> to vector<32x128xf32>
    %501 = arith.mulf %499, %500 : vector<32x128xf32>
    %502 = vector.broadcast %481 : vector<1x128xf32> to vector<32x128xf32>
    %503 = arith.addf %501, %502 : vector<32x128xf32>
    %504 = vector.shape_cast %503 : vector<32x128xf32> to vector<2x16x128xf32>
    %cst_279 = arith.constant dense<0.000000e+00> : vector<2x128xf32>
    %505 = vector.multi_reduction <add>, %504, %cst_279 [1] : vector<2x16x128xf32> to vector<2x128xf32>
    %cst_280 = arith.constant 1.600000e+01 : f32
    %506 = vector.broadcast %cst_280 : f32 to vector<2x128xf32>
    %507 = arith.divf %505, %506 : vector<2x128xf32>
    %c0_281 = arith.constant 0 : index
    %c0_282 = arith.constant 0 : index
    %508 = vector.load %arg23[%c0_281, %c0_282] : memref<128x128xbf16, #tpu.memory_space<vmem>>, vector<128x128xbf16>
    %509 = arith.truncf %507 : vector<2x128xf32> to vector<2x128xbf16>
    %cst_283 = arith.constant dense<0.000000e+00> : vector<2x128xf32>
    %510 = tpu.matmul %509, %508, %cst_283 {dimension_numbers = #tpu.dot_dimension_numbers<[1], [0], [0], [1], [0, 0, 1, 1], [], []>} : vector<2x128xbf16>, vector<128x128xbf16>, vector<2x128xf32> -> vector<2x128xf32>
    %c0_284 = arith.constant 0 : index
    %c0_285 = arith.constant 0 : index
    %511 = vector.load %arg24[%c0_284, %c0_285] : memref<1x128xf32, #tpu.memory_space<vmem>>, vector<1x128xf32>
    %512 = vector.broadcast %511 : vector<1x128xf32> to vector<2x128xf32>
    %513 = arith.addf %510, %512 : vector<2x128xf32>
    %c0_286 = arith.constant 0 : index
    %c0_287 = arith.constant 0 : index
    %514 = vector.load %arg25[%c0_286, %c0_287] : memref<2x128xf32, #tpu.memory_space<vmem>>, vector<2x128xf32>
    tpu.vector_store %arg25[%c0_286, %c0_287], %513 {strides = array<i32>} : memref<2x128xf32, #tpu.memory_space<vmem>>, vector<2x128xf32>,
    return
  }
  func.func @transform_0(%arg0: i32) -> (i32, i32) {
    %c0_i32 = arith.constant 0 : i32
    %c0_i32_0 = arith.constant 0 : i32
    %c0_i32_1 = arith.constant 0 : i32
    return %c0_i32, %c0_i32_0 : i32, i32
  }
  func.func @transform_1(%arg0: i32) -> (i32, i32) {
    %c0_i32 = arith.constant 0 : i32
    %c0_i32_0 = arith.constant 0 : i32
    %c0_i32_1 = arith.constant 0 : i32
    return %c0_i32, %c0_i32_0 : i32, i32
  }
  func.func @transform_2(%arg0: i32) -> (i32, i32) {
    %c0_i32 = arith.constant 0 : i32
    %c0_i32_0 = arith.constant 0 : i32
    %c0_i32_1 = arith.constant 0 : i32
    return %c0_i32, %c0_i32_0 : i32, i32
  }
  func.func @transform_3(%arg0: i32) -> (i32, i32) {
    %c0_i32 = arith.constant 0 : i32
    %c0_i32_0 = arith.constant 0 : i32
    %c0_i32_1 = arith.constant 0 : i32
    return %c0_i32, %c0_i32_0 : i32, i32
  }
  func.func @transform_4(%arg0: i32) -> (i32, i32, i32) {
    %c0_i32 = arith.constant 0 : i32
    %c0_i32_0 = arith.constant 0 : i32
    %c0_i32_1 = arith.constant 0 : i32
    %c0_i32_2 = arith.constant 0 : i32
    return %c0_i32, %c0_i32_0, %c0_i32_1 : i32, i32, i32
  }
  func.func @transform_5(%arg0: i32) -> (i32, i32, i32) {
    %c0_i32 = arith.constant 0 : i32
    %c0_i32_0 = arith.constant 0 : i32
    %c0_i32_1 = arith.constant 0 : i32
    %c0_i32_2 = arith.constant 0 : i32
    return %c0_i32, %c0_i32_0, %c0_i32_1 : i32, i32, i32
  }
  func.func @transform_6(%arg0: i32) -> (i32, i32, i32) {
    %c0_i32 = arith.constant 0 : i32
    %c0_i32_0 = arith.constant 0 : i32
    %c0_i32_1 = arith.constant 0 : i32
    %c0_i32_2 = arith.constant 0 : i32
    return %c0_i32, %c0_i32_0, %c0_i32_1 : i32, i32, i32
  }
  func.func @transform_7(%arg0: i32) -> (i32, i32, i32) {
    %c0_i32 = arith.constant 0 : i32
    %c0_i32_0 = arith.constant 0 : i32
    %c0_i32_1 = arith.constant 0 : i32
    %c0_i32_2 = arith.constant 0 : i32
    return %c0_i32, %c0_i32_0, %c0_i32_1 : i32, i32, i32
  }
  func.func @transform_8(%arg0: i32) -> (i32, i32, i32) {
    %c0_i32 = arith.constant 0 : i32
    %c0_i32_0 = arith.constant 0 : i32
    %c0_i32_1 = arith.constant 0 : i32
    %c0_i32_2 = arith.constant 0 : i32
    return %c0_i32, %c0_i32_0, %c0_i32_1 : i32, i32, i32
  }
  func.func @transform_9(%arg0: i32) -> (i32, i32, i32) {
    %c0_i32 = arith.constant 0 : i32
    %c0_i32_0 = arith.constant 0 : i32
    %c0_i32_1 = arith.constant 0 : i32
    %c0_i32_2 = arith.constant 0 : i32
    return %c0_i32, %c0_i32_0, %c0_i32_1 : i32, i32, i32
  }
  func.func @transform_10(%arg0: i32) -> (i32, i32, i32) {
    %c0_i32 = arith.constant 0 : i32
    %c0_i32_0 = arith.constant 0 : i32
    %c0_i32_1 = arith.constant 0 : i32
    %c0_i32_2 = arith.constant 0 : i32
    return %c0_i32, %c0_i32_0, %c0_i32_1 : i32, i32, i32
  }
  func.func @transform_11(%arg0: i32) -> (i32, i32, i32) {
    %c0_i32 = arith.constant 0 : i32
    %c0_i32_0 = arith.constant 0 : i32
    %c0_i32_1 = arith.constant 0 : i32
    %c0_i32_2 = arith.constant 0 : i32
    return %c0_i32, %c0_i32_0, %c0_i32_1 : i32, i32, i32
  }
  func.func @transform_12(%arg0: i32) -> (i32, i32, i32) {
    %c0_i32 = arith.constant 0 : i32
    %c0_i32_0 = arith.constant 0 : i32
    %c0_i32_1 = arith.constant 0 : i32
    %c0_i32_2 = arith.constant 0 : i32
    return %c0_i32, %c0_i32_0, %c0_i32_1 : i32, i32, i32
  }
  func.func @transform_13(%arg0: i32) -> (i32, i32, i32) {
    %c0_i32 = arith.constant 0 : i32
    %c0_i32_0 = arith.constant 0 : i32
    %c0_i32_1 = arith.constant 0 : i32
    %c0_i32_2 = arith.constant 0 : i32
    return %c0_i32, %c0_i32_0, %c0_i32_1 : i32, i32, i32
  }
  func.func @transform_14(%arg0: i32) -> (i32, i32, i32) {
    %c0_i32 = arith.constant 0 : i32
    %c0_i32_0 = arith.constant 0 : i32
    %c0_i32_1 = arith.constant 0 : i32
    %c0_i32_2 = arith.constant 0 : i32
    return %c0_i32, %c0_i32_0, %c0_i32_1 : i32, i32, i32
  }
  func.func @transform_15(%arg0: i32) -> (i32, i32, i32) {
    %c0_i32 = arith.constant 0 : i32
    %c0_i32_0 = arith.constant 0 : i32
    %c0_i32_1 = arith.constant 0 : i32
    %c0_i32_2 = arith.constant 0 : i32
    return %c0_i32, %c0_i32_0, %c0_i32_1 : i32, i32, i32
  }
  func.func @transform_16(%arg0: i32) -> (i32, i32, i32) {
    %c0_i32 = arith.constant 0 : i32
    %c0_i32_0 = arith.constant 0 : i32
    %c0_i32_1 = arith.constant 0 : i32
    %c0_i32_2 = arith.constant 0 : i32
    return %c0_i32, %c0_i32_0, %c0_i32_1 : i32, i32, i32
  }
  func.func @transform_17(%arg0: i32) -> (i32, i32, i32) {
    %c0_i32 = arith.constant 0 : i32
    %c0_i32_0 = arith.constant 0 : i32
    %c0_i32_1 = arith.constant 0 : i32
    %c0_i32_2 = arith.constant 0 : i32
    return %c0_i32, %c0_i32_0, %c0_i32_1 : i32, i32, i32
  }
  func.func @transform_18(%arg0: i32) -> (i32, i32, i32) {
    %c0_i32 = arith.constant 0 : i32
    %c0_i32_0 = arith.constant 0 : i32
    %c0_i32_1 = arith.constant 0 : i32
    %c0_i32_2 = arith.constant 0 : i32
    return %c0_i32, %c0_i32_0, %c0_i32_1 : i32, i32, i32
  }
  func.func @transform_19(%arg0: i32) -> (i32, i32, i32) {
    %c0_i32 = arith.constant 0 : i32
    %c0_i32_0 = arith.constant 0 : i32
    %c0_i32_1 = arith.constant 0 : i32
    %c0_i32_2 = arith.constant 0 : i32
    return %c0_i32, %c0_i32_0, %c0_i32_1 : i32, i32, i32
  }
  func.func @transform_20(%arg0: i32) -> (i32, i32) {
    %c0_i32 = arith.constant 0 : i32
    %c0_i32_0 = arith.constant 0 : i32
    %c0_i32_1 = arith.constant 0 : i32
    return %c0_i32, %c0_i32_0 : i32, i32
  }
  func.func @transform_21(%arg0: i32) -> (i32, i32) {
    %c0_i32 = arith.constant 0 : i32
    %c0_i32_0 = arith.constant 0 : i32
    %c0_i32_1 = arith.constant 0 : i32
    return %c0_i32, %c0_i32_0 : i32, i32
  }
  func.func @transform_22(%arg0: i32) -> (i32, i32) {
    %c0_i32 = arith.constant 0 : i32
    %c0_i32_0 = arith.constant 0 : i32
    %c0_i32_1 = arith.constant 0 : i32
    return %c0_i32, %c0_i32_0 : i32, i32
  }
  func.func @transform_23(%arg0: i32) -> (i32, i32) {
    %c0_i32 = arith.constant 0 : i32
    %c0_i32_0 = arith.constant 0 : i32
    %c0_i32_1 = arith.constant 0 : i32
    return %c0_i32, %c0_i32_0 : i32, i32
  }
  func.func @transform_24(%arg0: i32) -> (i32, i32) {
    %c0_i32 = arith.constant 0 : i32
    %c0_i32_0 = arith.constant 0 : i32
    %c0_i32_1 = arith.constant 0 : i32
    return %c0_i32, %c0_i32_0 : i32, i32
  }
}

</mosaic_0001>

<llo_original>
// kernel: tpu_custom_call.1
$region0: #{tpu_custom_call.1}
  #allocation0 [shape = 'u32[]', space=smem, size = 0x4, offset = 0x4, fixed_abs, tag = 'smem constant byte address 0x4 - core index']
  #allocation1 [shape = 'u32[144,128]{1,0:T(1,128)}', space=vmem, size = 0x12000, scoped, tag = 'internal scratch']
  %s0 = inlined_call_operand.vmem [shape: f32[32,128], index: 0, kind: input, shape index: {}]
  %s1 = inlined_call_operand.vmem [shape: bf16[128,128], index: 1, kind: input, shape index: {}]
  %s2 = inlined_call_operand.vmem [shape: f32[1,128], index: 2, kind: input, shape index: {}]
  %s3 = inlined_call_operand.vmem [shape: f32[32,128], index: 3, kind: input, shape index: {}]
  %s4 = inlined_call_operand.vmem [shape: f32[2,1,128], index: 4, kind: input, shape index: {}]
  %s5 = inlined_call_operand.vmem [shape: f32[2,1,128], index: 5, kind: input, shape index: {}]
  %s6 = inlined_call_operand.vmem [shape: bf16[6,128,32], index: 6, kind: input, shape index: {}]
  %s7 = inlined_call_operand.vmem [shape: f32[6,1,32], index: 7, kind: input, shape index: {}]
  %s8 = inlined_call_operand.vmem [shape: bf16[6,128,32], index: 8, kind: input, shape index: {}]
  %s9 = inlined_call_operand.vmem [shape: f32[6,1,32], index: 9, kind: input, shape index: {}]
  %s10 = inlined_call_operand.vmem [shape: bf16[6,128,32], index: 10, kind: input, shape index: {}]
  %s11 = inlined_call_operand.vmem [shape: f32[6,1,32], index: 11, kind: input, shape index: {}]
  %s12 = inlined_call_operand.vmem [shape: bf16[6,32,128], index: 12, kind: input, shape index: {}]
  %s13 = inlined_call_operand.vmem [shape: f32[2,1,128], index: 13, kind: input, shape index: {}]
  %s14 = inlined_call_operand.vmem [shape: f32[2,1,128], index: 14, kind: input, shape index: {}]
  %s15 = inlined_call_operand.vmem [shape: f32[2,1,128], index: 15, kind: input, shape index: {}]
  %s16 = inlined_call_operand.vmem [shape: bf16[2,128,384], index: 16, kind: input, shape index: {}]
  %s17 = inlined_call_operand.vmem [shape: f32[2,1,384], index: 17, kind: input, shape index: {}]
  %s18 = inlined_call_operand.vmem [shape: bf16[2,384,128], index: 18, kind: input, shape index: {}]
  %s19 = inlined_call_operand.vmem [shape: f32[2,1,128], index: 19, kind: input, shape index: {}]
  %s20 = inlined_call_operand.vmem [shape: f32[1,128], index: 20, kind: input, shape index: {}]
  %s21 = inlined_call_operand.vmem [shape: f32[1,128], index: 21, kind: input, shape index: {}]
  %s22 = inlined_call_operand.vmem [shape: bf16[128,128], index: 22, kind: input, shape index: {}]
  %s23 = inlined_call_operand.vmem [shape: f32[1,128], index: 23, kind: input, shape index: {}]
  %s24 = inlined_call_operand.hbm [shape: f32[2,128], index: 24, kind: output, shape index: {}]
  %s25 = sld [smem:[#allocation0]]
  $region106: #{tpu_custom_call.1} parent=0
    _
  %s27 = ssub.s32 1, %s25
  %s28 = scalar_select 0, %s27, %s25
  $region1: #{tpu_custom_call.1} parent=0
    #allocation2 [shape = 'u8[1024]{0}', space=vmem, size = 0x400, scoped, tag = 'output window, operand 0, single buffered']
    #allocation3 [shape = 's32[1]{0}', space=sflag, size = 0x4, scoped, tag = 'scoped memory for tpu_custom_call.1']
    %29 = vsyncpa [#allocation3], 0
    // Predicated region
    $region2: #{tpu_custom_call.1} parent=1 // pred_check
      _
    $region3: #{tpu_custom_call.1} parent=1 // pred_check_branch
      %31 = sbr.rel (0) target = $region5
    $region4: #{tpu_custom_call.1} parent=1 // pred_region
      _
    $region5: #{tpu_custom_call.1} parent=1 // pred_fallthru
      _
    // Predicated region
    $region6: #{tpu_custom_call.1} parent=1 // pred_check
      _
    $region7: #{tpu_custom_call.1} parent=1 // pred_check_branch
      %33 = sbr.rel (0) target = $region9
    $region8: #{tpu_custom_call.1} parent=1 // pred_region
      _
    $region9: #{tpu_custom_call.1} parent=1 // pred_fallthru
      _
    // Predicated region
    $region10: #{tpu_custom_call.1} parent=1 // pred_check
      _
    $region11: #{tpu_custom_call.1} parent=1 // pred_check_branch
      %35 = sbr.rel (0) target = $region13
    $region12: #{tpu_custom_call.1} parent=1 // pred_region
      _
    $region13: #{tpu_custom_call.1} parent=1 // pred_fallthru
      _
    // Predicated region
    $region14: #{tpu_custom_call.1} parent=1 // pred_check
      _
    $region15: #{tpu_custom_call.1} parent=1 // pred_check_branch
      %37 = sbr.rel (0) target = $region17
    $region16: #{tpu_custom_call.1} parent=1 // pred_region
      _
    $region17: #{tpu_custom_call.1} parent=1 // pred_fallthru
      _
    // Predicated region
    $region18: #{tpu_custom_call.1} parent=1 // pred_check
      _
    $region19: #{tpu_custom_call.1} parent=1 // pred_check_branch
      %39 = sbr.rel (0) target = $region21
    $region20: #{tpu_custom_call.1} parent=1 // pred_region
      _
    $region21: #{tpu_custom_call.1} parent=1 // pred_fallthru
      _
    // Predicated region
    $region22: #{tpu_custom_call.1} parent=1 // pred_check
      _
    $region23: #{tpu_custom_call.1} parent=1 // pred_check_branch
      %41 = sbr.rel (0) target = $region25
    $region24: #{tpu_custom_call.1} parent=1 // pred_region
      _
    $region25: #{tpu_custom_call.1} parent=1 // pred_fallthru
      _
    // Predicated region
    $region26: #{tpu_custom_call.1} parent=1 // pred_check
      _
    $region27: #{tpu_custom_call.1} parent=1 // pred_check_branch
      %43 = sbr.rel (0) target = $region29
    $region28: #{tpu_custom_call.1} parent=1 // pred_region
      _
    $region29: #{tpu_custom_call.1} parent=1 // pred_fallthru
      _
    // Predicated region
    $region30: #{tpu_custom_call.1} parent=1 // pred_check
      _
    $region31: #{tpu_custom_call.1} parent=1 // pred_check_branch
      %45 = sbr.rel (0) target = $region33
    $region32: #{tpu_custom_call.1} parent=1 // pred_region
      _
    $region33: #{tpu_custom_call.1} parent=1 // pred_fallthru
      _
    // Predicated region
    $region34: #{tpu_custom_call.1} parent=1 // pred_check
      _
    $region35: #{tpu_custom_call.1} parent=1 // pred_check_branch
      %47 = sbr.rel (0) target = $region37
    $region36: #{tpu_custom_call.1} parent=1 // pred_region
      _
    $region37: #{tpu_custom_call.1} parent=1 // pred_fallthru
      _
    // Predicated region
    $region38: #{tpu_custom_call.1} parent=1 // pred_check
      _
    $region39: #{tpu_custom_call.1} parent=1 // pred_check_branch
      %49 = sbr.rel (0) target = $region41
    $region40: #{tpu_custom_call.1} parent=1 // pred_region
      _
    $region41: #{tpu_custom_call.1} parent=1 // pred_fallthru
      _
    // Predicated region
    $region42: #{tpu_custom_call.1} parent=1 // pred_check
      _
    $region43: #{tpu_custom_call.1} parent=1 // pred_check_branch
      %51 = sbr.rel (0) target = $region45
    $region44: #{tpu_custom_call.1} parent=1 // pred_region
      _
    $region45: #{tpu_custom_call.1} parent=1 // pred_fallthru
      _
    // Predicated region
    $region46: #{tpu_custom_call.1} parent=1 // pred_check
      _
    $region47: #{tpu_custom_call.1} parent=1 // pred_check_branch
      %53 = sbr.rel (0) target = $region49
    $region48: #{tpu_custom_call.1} parent=1 // pred_region
      _
    $region49: #{tpu_custom_call.1} parent=1 // pred_fallthru
      _
    // Predicated region
    $region50: #{tpu_custom_call.1} parent=1 // pred_check
      _
    $region51: #{tpu_custom_call.1} parent=1 // pred_check_branch
      %55 = sbr.rel (0) target = $region53
    $region52: #{tpu_custom_call.1} parent=1 // pred_region
      _
    $region53: #{tpu_custom_call.1} parent=1 // pred_fallthru
      _
    // Predicated region
    $region54: #{tpu_custom_call.1} parent=1 // pred_check
      _
    $region55: #{tpu_custom_call.1} parent=1 // pred_check_branch
      %57 = sbr.rel (0) target = $region57
    $region56: #{tpu_custom_call.1} parent=1 // pred_region
      _
    $region57: #{tpu_custom_call.1} parent=1 // pred_fallthru
      _
    // Predicated region
    $region58: #{tpu_custom_call.1} parent=1 // pred_check
      _
    $region59: #{tpu_custom_call.1} parent=1 // pred_check_branch
      %59 = sbr.rel (0) target = $region61
    $region60: #{tpu_custom_call.1} parent=1 // pred_region
      _
    $region61: #{tpu_custom_call.1} parent=1 // pred_fallthru
      _
    // Predicated region
    $region62: #{tpu_custom_call.1} parent=1 // pred_check
      _
    $region63: #{tpu_custom_call.1} parent=1 // pred_check_branch
      %61 = sbr.rel (0) target = $region65
    $region64: #{tpu_custom_call.1} parent=1 // pred_region
      _
    $region65: #{tpu_custom_call.1} parent=1 // pred_fallthru
      _
    // Predicated region
    $region66: #{tpu_custom_call.1} parent=1 // pred_check
      _
    $region67: #{tpu_custom_call.1} parent=1 // pred_check_branch
      %63 = sbr.rel (0) target = $region69
    $region68: #{tpu_custom_call.1} parent=1 // pred_region
      _
    $region69: #{tpu_custom_call.1} parent=1 // pred_fallthru
      _
    // Predicated region
    $region70: #{tpu_custom_call.1} parent=1 // pred_check
      _
    $region71: #{tpu_custom_call.1} parent=1 // pred_check_branch
      %65 = sbr.rel (0) target = $region73
    $region72: #{tpu_custom_call.1} parent=1 // pred_region
      _
    $region73: #{tpu_custom_call.1} parent=1 // pred_fallthru
      _
    // Predicated region
    $region74: #{tpu_custom_call.1} parent=1 // pred_check
      _
    $region75: #{tpu_custom_call.1} parent=1 // pred_check_branch
      %67 = sbr.rel (0) target = $region77
    $region76: #{tpu_custom_call.1} parent=1 // pred_region
      _
    $region77: #{tpu_custom_call.1} parent=1 // pred_fallthru
      _
    // Predicated region
    $region78: #{tpu_custom_call.1} parent=1 // pred_check
      _
    $region79: #{tpu_custom_call.1} parent=1 // pred_check_branch
      %69 = sbr.rel (0) target = $region81
    $region80: #{tpu_custom_call.1} parent=1 // pred_region
      _
    $region81: #{tpu_custom_call.1} parent=1 // pred_fallthru
      _
    // Predicated region
    $region82: #{tpu_custom_call.1} parent=1 // pred_check
      _
    $region83: #{tpu_custom_call.1} parent=1 // pred_check_branch
      %71 = sbr.rel (0) target = $region85
    $region84: #{tpu_custom_call.1} parent=1 // pred_region
      _
    $region85: #{tpu_custom_call.1} parent=1 // pred_fallthru
      _
    // Predicated region
    $region86: #{tpu_custom_call.1} parent=1 // pred_check
      _
    $region87: #{tpu_custom_call.1} parent=1 // pred_check_branch
      %73 = sbr.rel (0) target = $region89
    $region88: #{tpu_custom_call.1} parent=1 // pred_region
      _
    $region89: #{tpu_custom_call.1} parent=1 // pred_fallthru
      _
    // Predicated region
    $region90: #{tpu_custom_call.1} parent=1 // pred_check
      _
    $region91: #{tpu_custom_call.1} parent=1 // pred_check_branch
      %75 = sbr.rel (0) target = $region93
    $region92: #{tpu_custom_call.1} parent=1 // pred_region
      _
    $region93: #{tpu_custom_call.1} parent=1 // pred_fallthru
      _
    // Predicated region
    $region94: #{tpu_custom_call.1} parent=1 // pred_check
      _
    $region95: #{tpu_custom_call.1} parent=1 // pred_check_branch
      %77 = sbr.rel (0) target = $region97
    $region96: #{tpu_custom_call.1} parent=1 // pred_region
      _
    $region97: #{tpu_custom_call.1} parent=1 // pred_fallthru
      _
    %v79 = vlaneseq
    %v80 = vand.u32 %v79, 127
    %vm81 = vcmp.lt.s32.totalorder %v80, 96
    %v82 = vsel %vm81, 1, 0
    %v83 = vcvt.s32.f32 %v82
    %v84 = vld [vmem:[%s0] sm:$0xff]
    %v85 = vld [vmem:[%s0 + $0x8] sm:$0xff]
    %v86 = vld [vmem:[%s0 + $0x10] sm:$0xff]
    %v87 = vld [vmem:[%s0 + $0x18] sm:$0xff]
    %v88 = vld [vmem:[%s1] sm:$0xf]
    %v89 = vld [vmem:[%s1 + $0x4] sm:$0xf]
    %v90 = vld [vmem:[%s1 + $0x8] sm:$0xf]
    %v91 = vld [vmem:[%s1 + $0xc] sm:$0xf]
    %v92 = vld [vmem:[%s1 + $0x10] sm:$0xf]
    %v93 = vld [vmem:[%s1 + $0x14] sm:$0xf]
    %v94 = vld [vmem:[%s1 + $0x18] sm:$0xf]
    %v95 = vld [vmem:[%s1 + $0x1c] sm:$0xf]
    %v96 = vld [vmem:[%s1 + $0x20] sm:$0xf]
    %v97 = vld [vmem:[%s1 + $0x24] sm:$0xf]
    %v98 = vld [vmem:[%s1 + $0x28] sm:$0xf]
    %v99 = vld [vmem:[%s1 + $0x2c] sm:$0xf]
    %v100 = vld [vmem:[%s1 + $0x30] sm:$0xf]
    %v101 = vld [vmem:[%s1 + $0x34] sm:$0xf]
    %v102 = vld [vmem:[%s1 + $0x38] sm:$0xf]
    %v103 = vld [vmem:[%s1 + $0x3c] sm:$0xf]
    %v104 = vpack.c.bf16 %v85, %v84
    %v105 = vpack.c.bf16 %v87, %v86
    %v106 = vld [vmem:[%s2] sm:$0x1]
    %v108 = vlaneseq
    %v109 = vshrl.u32 %v108, 7
    %v110 = vsub.s32 0, %v109
    %v111 = vrot.slane %v106, %v110
    %v129 = vunpack.c.l.b16 %v88
    %v130 = vunpack.c.l.b16 %v89
    %v131 = vunpack.c.l.b16 %v90
    %v132 = vunpack.c.l.b16 %v91
    %v133 = vunpack.c.l.b16 %v92
    %v134 = vunpack.c.l.b16 %v93
    %v135 = vunpack.c.l.b16 %v94
    %v136 = vunpack.c.l.b16 %v95
    %v137 = vunpack.c.l.b16 %v96
    %v138 = vunpack.c.l.b16 %v97
    %v139 = vunpack.c.l.b16 %v98
    %v140 = vunpack.c.l.b16 %v99
    %v141 = vunpack.c.l.b16 %v100
    %v142 = vunpack.c.l.b16 %v101
    %v143 = vunpack.c.l.b16 %v102
    %v144 = vunpack.c.l.b16 %v103
    %v145 = vpack.c.b16 %v130, %v129
    %v146 = vpack.c.b16 %v132, %v131
    %v147 = vpack.c.b16 %v134, %v133
    %v148 = vpack.c.b16 %v136, %v135
    %v149 = vpack.c.b16 %v138, %v137
    %v150 = vpack.c.b16 %v140, %v139
    %v151 = vpack.c.b16 %v142, %v141
    %v152 = vpack.c.b16 %v144, %v143
    %161 = vmatprep.subr.bf16.mxu0 0
    %162 = vmatpush1.bf16.msra.mxu0 %v145
    %163 = vmatprep.subr.bf16.mxu0 0
    %164 = vmatpush1.bf16.msra.mxu0 %v146
    %165 = vmatprep.subr.bf16.mxu0 0
    %166 = vmatpush1.bf16.msra.mxu0 %v147
    %167 = vmatprep.subr.bf16.mxu0 0
    %168 = vmatpush1.bf16.msra.mxu0 %v148
    %169 = vmatprep.subr.bf16.mxu0 0
    %170 = vmatpush1.bf16.msra.mxu0 %v149
    %171 = vmatprep.subr.bf16.mxu0 0
    %172 = vmatpush1.bf16.msra.mxu0 %v150
    %173 = vmatprep.subr.bf16.mxu0 0
    %174 = vmatpush1.bf16.msra.mxu0 %v151
    %175 = vmatprep.subr.bf16.mxu0 0
    %176 = vmatpush1.bf16.msra.mxu0 %v152
    %177 = vmatprep.subr.bf16.mxu0 0
    %178 = vmatpush1.bf16.msra.mxu0 0
    %179 = vmatprep.subr.bf16.mxu0 0
    %180 = vmatpush1.bf16.msra.mxu0 0
    %181 = vmatprep.subr.bf16.mxu0 0
    %182 = vmatpush1.bf16.msra.mxu0 0
    %183 = vmatprep.subr.bf16.mxu0 0
    %184 = vmatpush1.bf16.msra.mxu0 0
    %185 = vmatprep.subr.bf16.mxu0 0
    %186 = vmatpush1.bf16.msra.mxu0 0
    %187 = vmatprep.subr.bf16.mxu0 0
    %188 = vmatpush1.bf16.msra.mxu0 0
    %189 = vmatprep.subr.bf16.mxu0 0
    %190 = vmatpush1.bf16.msra.mxu0 0
    %191 = vmatprep.subr.bf16.mxu0 0
    %192 = vmatpush1.bf16.msra.mxu0 0
    %193 = vmatprep.mubr.bf16.mxu0 0
    %194 = vmatmul.mubr.bf16.gmra.mrb[0].mxu0 %v104
    %v195 = vpop.f32.mrb[0].mxu0
    %v196 = vadd.f32 %v111, %v195
    %v197 = vpop.f32.mrb[0].mxu0
    %v198 = vpop.f32.mrb[0].mxu0
    %v199 = vadd.f32 %v111, %v198
    %v200 = vpop.f32.mrb[0].mxu0
    %201 = vmatprep.mubr.bf16.mxu0 0
    %202 = vmatmul.mubr.bf16.gmra.mrb[0].mxu0 %v105
    %v203 = vpop.f32.mrb[0].mxu0
    %v204 = vadd.f32 %v111, %v203
    %v205 = vpop.f32.mrb[0].mxu0
    %v206 = vpop.f32.mrb[0].mxu0
    %v207 = vadd.f32 %v111, %v206
    %v208 = vpop.f32.mrb[0].mxu0
    %209 = vdwg.mxu0
    %v210 = vld [vmem:[%s3] sm:$0xff]
    %v211 = vld [vmem:[%s3 + $0x8] sm:$0xff]
    %v212 = vld [vmem:[%s3 + $0x10] sm:$0xff]
    %v213 = vld [vmem:[%s3 + $0x18] sm:$0xff]
    %v214 = vadd.f32 %v196, %v210
    %v215 = vadd.f32 %v199, %v211
    %v216 = vadd.f32 %v204, %v212
    %v217 = vadd.f32 %v207, %v213
    %v218 = vld [vmem:[%s4] sm:$0x1]
    %v219 = vld [vmem:[%s5] sm:$0x1]
    %220 = vadd.xlane.f32.xlu0 %v214
    %v221 = vpop.xlane.xlu0 %220
    %222 = vadd.xlane.f32.xlu0 %v215
    %v223 = vpop.xlane.xlu0 %222
    %224 = vadd.xlane.f32.xlu0 %v216
    %v225 = vpop.xlane.xlu0 %224
    %226 = vadd.xlane.f32.xlu0 %v217
    %v227 = vpop.xlane.xlu0 %226
    %v228 = vmul.f32 %v221, 0.010416667
    %v229 = vmul.f32 %v223, 0.010416667
    %v230 = vmul.f32 %v225, 0.010416667
    %v231 = vmul.f32 %v227, 0.010416667
    %v232 = vsub.f32 %v214, %v228
    %v233 = vsub.f32 %v215, %v229
    %v234 = vsub.f32 %v216, %v230
    %v235 = vsub.f32 %v217, %v231
    %v236 = vmul.f32 %v232, %v83
    %v237 = vmul.f32 %v233, %v83
    %v238 = vmul.f32 %v234, %v83
    %v239 = vmul.f32 %v235, %v83
    %v240 = vmul.f32 %v236, %v236
    %v241 = vmul.f32 %v237, %v237
    %v242 = vmul.f32 %v238, %v238
    %v243 = vmul.f32 %v239, %v239
    %244 = vadd.xlane.f32.xlu0 %v240
    %v245 = vpop.xlane.xlu0 %244
    %246 = vadd.xlane.f32.xlu0 %v241
    %v247 = vpop.xlane.xlu0 %246
    %248 = vadd.xlane.f32.xlu0 %v242
    %v249 = vpop.xlane.xlu0 %248
    %250 = vadd.xlane.f32.xlu0 %v243
    %v251 = vpop.xlane.xlu0 %250
    %v252 = vmul.f32 %v245, 0.010416667
    %v253 = vmul.f32 %v247, 0.010416667
    %v254 = vmul.f32 %v249, 0.010416667
    %v255 = vmul.f32 %v251, 0.010416667
    %v256 = vadd.f32 %v252, 1e-05
    %v257 = vadd.f32 %v253, 1e-05
    %v258 = vadd.f32 %v254, 1e-05
    %v259 = vadd.f32 %v255, 1e-05
    %v260 = vrsqrt.pop %v256
    %v261 = vrsqrt.pop %v257
    %v262 = vrsqrt.pop %v258
    %v263 = vrsqrt.pop %v259
    %v264 = vmul.f32 %v232, %v260
    %v265 = vmul.f32 %v233, %v261
    %v266 = vmul.f32 %v234, %v262
    %v267 = vmul.f32 %v235, %v263
    %v269 = vlaneseq
    %v270 = vshrl.u32 %v269, 7
    %v271 = vsub.s32 0, %v270
    %v272 = vrot.slane %v218, %v271
    %v274 = vmul.f32 %v264, %v272
    %v275 = vmul.f32 %v265, %v272
    %v276 = vmul.f32 %v266, %v272
    %v277 = vmul.f32 %v267, %v272
    %v279 = vlaneseq
    %v280 = vshrl.u32 %v279, 7
    %v281 = vsub.s32 0, %v280
    %v282 = vrot.slane %v219, %v281
    %v284 = vadd.f32 %v274, %v282
    %v285 = vadd.f32 %v275, %v282
    %v286 = vadd.f32 %v276, %v282
    %v287 = vadd.f32 %v277, %v282
    %v288 = vpack.c.bf16 %v285, %v284
    %v289 = vpack.c.bf16 %v287, %v286
    %v290 = vld [vmem:[%s6] sm:$0xf]
    %v291 = vld [vmem:[%s6 + $0x4] sm:$0xf]
    %v292 = vld [vmem:[%s6 + $0x8] sm:$0xf]
    %v293 = vld [vmem:[%s6 + $0xc] sm:$0xf]
    %v294 = vld [vmem:[%s6 + $0x10] sm:$0xf]
    %v295 = vld [vmem:[%s6 + $0x14] sm:$0xf]
    %v296 = vld [vmem:[%s6 + $0x18] sm:$0xf]
    %v297 = vld [vmem:[%s6 + $0x1c] sm:$0xf]
    %v298 = vld [vmem:[%s6 + $0x20] sm:$0xf]
    %v299 = vld [vmem:[%s6 + $0x24] sm:$0xf]
    %v300 = vld [vmem:[%s6 + $0x28] sm:$0xf]
    %v301 = vld [vmem:[%s6 + $0x2c] sm:$0xf]
    %v302 = vld [vmem:[%s6 + $0x30] sm:$0xf]
    %v303 = vld [vmem:[%s6 + $0x34] sm:$0xf]
    %v304 = vld [vmem:[%s6 + $0x38] sm:$0xf]
    %v305 = vld [vmem:[%s6 + $0x3c] sm:$0xf]
    %v306 = vld [vmem:[%s7] sm:$0x1]
    %v308 = vlaneseq
    %v309 = vshrl.u32 %v308, 7
    %v310 = vsub.s32 0, %v309
    %v311 = vrot.slane %v306, %v310
    %v329 = vunpack.c.l.b16 %v290
    %v330 = vunpack.c.l.b16 %v291
    %v331 = vunpack.c.l.b16 %v292
    %v332 = vunpack.c.l.b16 %v293
    %v333 = vunpack.c.l.b16 %v294
    %v334 = vunpack.c.l.b16 %v295
    %v335 = vunpack.c.l.b16 %v296
    %v336 = vunpack.c.l.b16 %v297
    %v337 = vunpack.c.l.b16 %v298
    %v338 = vunpack.c.l.b16 %v299
    %v339 = vunpack.c.l.b16 %v300
    %v340 = vunpack.c.l.b16 %v301
    %v341 = vunpack.c.l.b16 %v302
    %v342 = vunpack.c.l.b16 %v303
    %v343 = vunpack.c.l.b16 %v304
    %v344 = vunpack.c.l.b16 %v305
    %v345 = vpack.c.b16 %v330, %v329
    %v346 = vpack.c.b16 %v332, %v331
    %v347 = vpack.c.b16 %v334, %v333
    %v348 = vpack.c.b16 %v336, %v335
    %v349 = vpack.c.b16 %v338, %v337
    %v350 = vpack.c.b16 %v340, %v339
    %v351 = vpack.c.b16 %v342, %v341
    %v352 = vpack.c.b16 %v344, %v343
    %361 = vmatprep.subr.bf16.mxu0 0
    %362 = vmatpush1.bf16.msra.mxu0 %v345
    %363 = vmatprep.subr.bf16.mxu0 0
    %364 = vmatpush1.bf16.msra.mxu0 %v346
    %365 = vmatprep.subr.bf16.mxu0 0
    %366 = vmatpush1.bf16.msra.mxu0 %v347
    %367 = vmatprep.subr.bf16.mxu0 0
    %368 = vmatpush1.bf16.msra.mxu0 %v348
    %369 = vmatprep.subr.bf16.mxu0 0
    %370 = vmatpush1.bf16.msra.mxu0 %v349
    %371 = vmatprep.subr.bf16.mxu0 0
    %372 = vmatpush1.bf16.msra.mxu0 %v350
    %373 = vmatprep.subr.bf16.mxu0 0
    %374 = vmatpush1.bf16.msra.mxu0 %v351
    %375 = vmatprep.subr.bf16.mxu0 0
    %376 = vmatpush1.bf16.msra.mxu0 %v352
    %377 = vmatprep.subr.bf16.mxu0 0
    %378 = vmatpush1.bf16.msra.mxu0 0
    %379 = vmatprep.subr.bf16.mxu0 0
    %380 = vmatpush1.bf16.msra.mxu0 0
    %381 = vmatprep.subr.bf16.mxu0 0
    %382 = vmatpush1.bf16.msra.mxu0 0
    %383 = vmatprep.subr.bf16.mxu0 0
    %384 = vmatpush1.bf16.msra.mxu0 0
    %385 = vmatprep.subr.bf16.mxu0 0
    %386 = vmatpush1.bf16.msra.mxu0 0
    %387 = vmatprep.subr.bf16.mxu0 0
    %388 = vmatpush1.bf16.msra.mxu0 0
    %389 = vmatprep.subr.bf16.mxu0 0
    %390 = vmatpush1.bf16.msra.mxu0 0
    %391 = vmatprep.subr.bf16.mxu0 0
    %392 = vmatpush1.bf16.msra.mxu0 0
    %393 = vmatprep.mubr.bf16.mxu0 0
    %394 = vmatmul.mubr.bf16.gmra.mrb[0].mxu0 %v288
    %v395 = vpop.f32.mrb[0].mxu0
    %v396 = vadd.f32 %v311, %v395
    %v397 = vpop.f32.mrb[0].mxu0
    %v398 = vpop.f32.mrb[0].mxu0
    %v399 = vadd.f32 %v311, %v398
    %v400 = vpop.f32.mrb[0].mxu0
    %401 = vmatprep.mubr.bf16.mxu0 0
    %402 = vmatmul.mubr.bf16.gmra.mrb[0].mxu0 %v289
    %v403 = vpop.f32.mrb[0].mxu0
    %v404 = vadd.f32 %v311, %v403
    %v405 = vpop.f32.mrb[0].mxu0
    %v406 = vpop.f32.mrb[0].mxu0
    %v407 = vadd.f32 %v311, %v406
    %v408 = vpop.f32.mrb[0].mxu0
    %409 = vdwg.mxu0
    %v410 = vld [vmem:[%s8] sm:$0xf]
    %v411 = vld [vmem:[%s8 + $0x4] sm:$0xf]
    %v412 = vld [vmem:[%s8 + $0x8] sm:$0xf]
    %v413 = vld [vmem:[%s8 + $0xc] sm:$0xf]
    %v414 = vld [vmem:[%s8 + $0x10] sm:$0xf]
    %v415 = vld [vmem:[%s8 + $0x14] sm:$0xf]
    %v416 = vld [vmem:[%s8 + $0x18] sm:$0xf]
    %v417 = vld [vmem:[%s8 + $0x1c] sm:$0xf]
    %v418 = vld [vmem:[%s8 + $0x20] sm:$0xf]
    %v419 = vld [vmem:[%s8 + $0x24] sm:$0xf]
    %v420 = vld [vmem:[%s8 + $0x28] sm:$0xf]
    %v421 = vld [vmem:[%s8 + $0x2c] sm:$0xf]
    %v422 = vld [vmem:[%s8 + $0x30] sm:$0xf]
    %v423 = vld [vmem:[%s8 + $0x34] sm:$0xf]
    %v424 = vld [vmem:[%s8 + $0x38] sm:$0xf]
    %v425 = vld [vmem:[%s8 + $0x3c] sm:$0xf]
    %v426 = vld [vmem:[%s9] sm:$0x1]
    %v428 = vlaneseq
    %v429 = vshrl.u32 %v428, 7
    %v430 = vsub.s32 0, %v429
    %v431 = vrot.slane %v426, %v430
    %v449 = vunpack.c.l.b16 %v410
    %v450 = vunpack.c.l.b16 %v411
    %v451 = vunpack.c.l.b16 %v412
    %v452 = vunpack.c.l.b16 %v413
    %v453 = vunpack.c.l.b16 %v414
    %v454 = vunpack.c.l.b16 %v415
    %v455 = vunpack.c.l.b16 %v416
    %v456 = vunpack.c.l.b16 %v417
    %v457 = vunpack.c.l.b16 %v418
    %v458 = vunpack.c.l.b16 %v419
    %v459 = vunpack.c.l.b16 %v420
    %v460 = vunpack.c.l.b16 %v421
    %v461 = vunpack.c.l.b16 %v422
    %v462 = vunpack.c.l.b16 %v423
    %v463 = vunpack.c.l.b16 %v424
    %v464 = vunpack.c.l.b16 %v425
    %v465 = vpack.c.b16 %v450, %v449
    %v466 = vpack.c.b16 %v452, %v451
    %v467 = vpack.c.b16 %v454, %v453
    %v468 = vpack.c.b16 %v456, %v455
    %v469 = vpack.c.b16 %v458, %v457
    %v470 = vpack.c.b16 %v460, %v459
    %v471 = vpack.c.b16 %v462, %v461
    %v472 = vpack.c.b16 %v464, %v463
    %481 = vmatprep.subr.bf16.mxu0 0
    %482 = vmatpush1.bf16.msra.mxu0 %v465
    %483 = vmatprep.subr.bf16.mxu0 0
    %484 = vmatpush1.bf16.msra.mxu0 %v466
    %485 = vmatprep.subr.bf16.mxu0 0
    %486 = vmatpush1.bf16.msra.mxu0 %v467
    %487 = vmatprep.subr.bf16.mxu0 0
    %488 = vmatpush1.bf16.msra.mxu0 %v468
    %489 = vmatprep.subr.bf16.mxu0 0
    %490 = vmatpush1.bf16.msra.mxu0 %v469
    %491 = vmatprep.subr.bf16.mxu0 0
    %492 = vmatpush1.bf16.msra.mxu0 %v470
    %493 = vmatprep.subr.bf16.mxu0 0
    %494 = vmatpush1.bf16.msra.mxu0 %v471
    %495 = vmatprep.subr.bf16.mxu0 0
    %496 = vmatpush1.bf16.msra.mxu0 %v472
    %497 = vmatprep.subr.bf16.mxu0 0
    %498 = vmatpush1.bf16.msra.mxu0 0
    %499 = vmatprep.subr.bf16.mxu0 0
    %500 = vmatpush1.bf16.msra.mxu0 0
    %501 = vmatprep.subr.bf16.mxu0 0
    %502 = vmatpush1.bf16.msra.mxu0 0
    %503 = vmatprep.subr.bf16.mxu0 0
    %504 = vmatpush1.bf16.msra.mxu0 0
    %505 = vmatprep.subr.bf16.mxu0 0
    %506 = vmatpush1.bf16.msra.mxu0 0
    %507 = vmatprep.subr.bf16.mxu0 0
    %508 = vmatpush1.bf16.msra.mxu0 0
    %509 = vmatprep.subr.bf16.mxu0 0
    %510 = vmatpush1.bf16.msra.mxu0 0
    %511 = vmatprep.subr.bf16.mxu0 0
    %512 = vmatpush1.bf16.msra.mxu0 0
    %513 = vmatprep.mubr.bf16.mxu0 0
    %514 = vmatmul.mubr.bf16.gmra.mrb[0].mxu0 %v288
    %v515 = vpop.f32.mrb[0].mxu0
    %v516 = vadd.f32 %v431, %v515
    %v517 = vpop.f32.mrb[0].mxu0
    %v518 = vpop.f32.mrb[0].mxu0
    %v519 = vadd.f32 %v431, %v518
    %v520 = vpop.f32.mrb[0].mxu0
    %521 = vmatprep.mubr.bf16.mxu0 0
    %522 = vmatmul.mubr.bf16.gmra.mrb[0].mxu0 %v289
    %v523 = vpop.f32.mrb[0].mxu0
    %v524 = vadd.f32 %v431, %v523
    %v525 = vpop.f32.mrb[0].mxu0
    %v526 = vpop.f32.mrb[0].mxu0
    %v527 = vadd.f32 %v431, %v526
    %v528 = vpop.f32.mrb[0].mxu0
    %529 = vdwg.mxu0
    %v530 = vld [vmem:[%s10] sm:$0xf]
    %v531 = vld [vmem:[%s10 + $0x4] sm:$0xf]
    %v532 = vld [vmem:[%s10 + $0x8] sm:$0xf]
    %v533 = vld [vmem:[%s10 + $0xc] sm:$0xf]
    %v534 = vld [vmem:[%s10 + $0x10] sm:$0xf]
    %v535 = vld [vmem:[%s10 + $0x14] sm:$0xf]
    %v536 = vld [vmem:[%s10 + $0x18] sm:$0xf]
    %v537 = vld [vmem:[%s10 + $0x1c] sm:$0xf]
    %v538 = vld [vmem:[%s10 + $0x20] sm:$0xf]
    %v539 = vld [vmem:[%s10 + $0x24] sm:$0xf]
    %v540 = vld [vmem:[%s10 + $0x28] sm:$0xf]
    %v541 = vld [vmem:[%s10 + $0x2c] sm:$0xf]
    %v542 = vld [vmem:[%s10 + $0x30] sm:$0xf]
    %v543 = vld [vmem:[%s10 + $0x34] sm:$0xf]
    %v544 = vld [vmem:[%s10 + $0x38] sm:$0xf]
    %v545 = vld [vmem:[%s10 + $0x3c] sm:$0xf]
    %v546 = vld [vmem:[%s11] sm:$0x1]
    %v548 = vlaneseq
    %v549 = vshrl.u32 %v548, 7
    %v550 = vsub.s32 0, %v549
    %v551 = vrot.slane %v546, %v550
    %v569 = vunpack.c.l.b16 %v530
    %v570 = vunpack.c.l.b16 %v531
    %v571 = vunpack.c.l.b16 %v532
    %v572 = vunpack.c.l.b16 %v533
    %v573 = vunpack.c.l.b16 %v534
    %v574 = vunpack.c.l.b16 %v535
    %v575 = vunpack.c.l.b16 %v536
    %v576 = vunpack.c.l.b16 %v537
    %v577 = vunpack.c.l.b16 %v538
    %v578 = vunpack.c.l.b16 %v539
    %v579 = vunpack.c.l.b16 %v540
    %v580 = vunpack.c.l.b16 %v541
    %v581 = vunpack.c.l.b16 %v542
    %v582 = vunpack.c.l.b16 %v543
    %v583 = vunpack.c.l.b16 %v544
    %v584 = vunpack.c.l.b16 %v545
    %v585 = vpack.c.b16 %v570, %v569
    %v586 = vpack.c.b16 %v572, %v571
    %v587 = vpack.c.b16 %v574, %v573
    %v588 = vpack.c.b16 %v576, %v575
    %v589 = vpack.c.b16 %v578, %v577
    %v590 = vpack.c.b16 %v580, %v579
    %v591 = vpack.c.b16 %v582, %v581
    %v592 = vpack.c.b16 %v584, %v583
    %601 = vmatprep.subr.bf16.mxu0 0
    %602 = vmatpush1.bf16.msra.mxu0 %v585
    %603 = vmatprep.subr.bf16.mxu0 0
    %604 = vmatpush1.bf16.msra.mxu0 %v586
    %605 = vmatprep.subr.bf16.mxu0 0
    %606 = vmatpush1.bf16.msra.mxu0 %v587
    %607 = vmatprep.subr.bf16.mxu0 0
    %608 = vmatpush1.bf16.msra.mxu0 %v588
    %609 = vmatprep.subr.bf16.mxu0 0
    %610 = vmatpush1.bf16.msra.mxu0 %v589
    %611 = vmatprep.subr.bf16.mxu0 0
    %612 = vmatpush1.bf16.msra.mxu0 %v590
    %613 = vmatprep.subr.bf16.mxu0 0
    %614 = vmatpush1.bf16.msra.mxu0 %v591
    %615 = vmatprep.subr.bf16.mxu0 0
    %616 = vmatpush1.bf16.msra.mxu0 %v592
    %617 = vmatprep.subr.bf16.mxu0 0
    %618 = vmatpush1.bf16.msra.mxu0 0
    %619 = vmatprep.subr.bf16.mxu0 0
    %620 = vmatpush1.bf16.msra.mxu0 0
    %621 = vmatprep.subr.bf16.mxu0 0
    %622 = vmatpush1.bf16.msra.mxu0 0
    %623 = vmatprep.subr.bf16.mxu0 0
    %624 = vmatpush1.bf16.msra.mxu0 0
    %625 = vmatprep.subr.bf16.mxu0 0
    %626 = vmatpush1.bf16.msra.mxu0 0
    %627 = vmatprep.subr.bf16.mxu0 0
    %628 = vmatpush1.bf16.msra.mxu0 0
    %629 = vmatprep.subr.bf16.mxu0 0
    %630 = vmatpush1.bf16.msra.mxu0 0
    %631 = vmatprep.subr.bf16.mxu0 0
    %632 = vmatpush1.bf16.msra.mxu0 0
    %633 = vmatprep.mubr.bf16.mxu0 0
    %634 = vmatmul.mubr.bf16.gmra.mrb[0].mxu0 %v288
    %v635 = vpop.f32.mrb[0].mxu0
    %v636 = vadd.f32 %v551, %v635
    %v637 = vpop.f32.mrb[0].mxu0
    %v638 = vpop.f32.mrb[0].mxu0
    %v639 = vadd.f32 %v551, %v638
    %v640 = vpop.f32.mrb[0].mxu0
    %641 = vmatprep.mubr.bf16.mxu0 0
    %642 = vmatmul.mubr.bf16.gmra.mrb[0].mxu0 %v289
    %v643 = vpop.f32.mrb[0].mxu0
    %v644 = vadd.f32 %v551, %v643
    %v645 = vpop.f32.mrb[0].mxu0
    %v646 = vpop.f32.mrb[0].mxu0
    %v647 = vadd.f32 %v551, %v646
    %v648 = vpop.f32.mrb[0].mxu0
    %649 = vdwg.mxu0
    %v650 = vpack.c.bf16 %v399, %v396
    %v651 = vpack.c.bf16 %v407, %v404
    %v652 = vpack.c.bf16 %v519, %v516
    %v653 = vpack.c.bf16 %v527, %v524
    %vm654 = vcmask 261120
    %v656 = vsel %vm654, %v650, 0
    %v659 = vsel %vm654, %v652, 0
    %661 = vmatprep.subr.bf16.mxu0 0
    %662 = vmatpush1.bf16.xpose.msra.mxu0 %v659
    %663 = vmatprep.subr.bf16.mxu0 0
    %664 = vmatpush1.bf16.xpose.msra.mxu0 0
    %665 = vmatprep.subr.bf16.mxu0 0
    %666 = vmatpush1.bf16.xpose.msra.mxu0 0
    %667 = vmatprep.subr.bf16.mxu0 0
    %668 = vmatpush1.bf16.xpose.msra.mxu0 0
    %669 = vmatprep.subr.bf16.mxu0 0
    %670 = vmatpush1.bf16.xpose.msra.mxu0 0
    %671 = vmatprep.subr.bf16.mxu0 0
    %672 = vmatpush1.bf16.xpose.msra.mxu0 0
    %673 = vmatprep.subr.bf16.mxu0 0
    %674 = vmatpush1.bf16.xpose.msra.mxu0 0
    %675 = vmatprep.subr.bf16.mxu0 0
    %676 = vmatpush1.bf16.xpose.msra.mxu0 0
    %677 = vmatprep.subr.bf16.mxu0 0
    %678 = vmatpush1.bf16.xpose.msra.mxu0 0
    %679 = vmatprep.subr.bf16.mxu0 0
    %680 = vmatpush1.bf16.xpose.msra.mxu0 0
    %681 = vmatprep.subr.bf16.mxu0 0
    %682 = vmatpush1.bf16.xpose.msra.mxu0 0
    %683 = vmatprep.subr.bf16.mxu0 0
    %684 = vmatpush1.bf16.xpose.msra.mxu0 0
    %685 = vmatprep.subr.bf16.mxu0 0
    %686 = vmatpush1.bf16.xpose.msra.mxu0 0
    %687 = vmatprep.subr.bf16.mxu0 0
    %688 = vmatpush1.bf16.xpose.msra.mxu0 0
    %689 = vmatprep.subr.bf16.mxu0 0
    %690 = vmatpush1.bf16.xpose.msra.mxu0 0
    %691 = vmatprep.subr.bf16.mxu0 0
    %692 = vmatpush1.bf16.xpose.msra.mxu0 0
    %693 = vmatprep.mubr.bf16.mxu0 0
    %694 = vmatmul.mubr.bf16.gmra.mrb[0].mxu0 %v656
    %v695 = vpop.f32.mrb[0].mxu0
    %v696 = vadd.f32 0.0, %v695
    %v697 = vpop.f32.mrb[0].mxu0
    %v698 = vpop.f32.mrb[0].mxu0
    %v699 = vadd.f32 0.0, %v698
    %v700 = vpop.f32.mrb[0].mxu0
    %701 = vdwg.mxu0
    %v703 = vsel %vm654, %v651, 0
    %v706 = vsel %vm654, %v653, 0
    %708 = vmatprep.subr.bf16.mxu0 0
    %709 = vmatpush1.bf16.xpose.msra.mxu0 %v706
    %710 = vmatprep.subr.bf16.mxu0 0
    %711 = vmatpush1.bf16.xpose.msra.mxu0 0
    %712 = vmatprep.subr.bf16.mxu0 0
    %713 = vmatpush1.bf16.xpose.msra.mxu0 0
    %714 = vmatprep.subr.bf16.mxu0 0
    %715 = vmatpush1.bf16.xpose.msra.mxu0 0
    %716 = vmatprep.subr.bf16.mxu0 0
    %717 = vmatpush1.bf16.xpose.msra.mxu0 0
    %718 = vmatprep.subr.bf16.mxu0 0
    %719 = vmatpush1.bf16.xpose.msra.mxu0 0
    %720 = vmatprep.subr.bf16.mxu0 0
    %721 = vmatpush1.bf16.xpose.msra.mxu0 0
    %722 = vmatprep.subr.bf16.mxu0 0
    %723 = vmatpush1.bf16.xpose.msra.mxu0 0
    %724 = vmatprep.subr.bf16.mxu0 0
    %725 = vmatpush1.bf16.xpose.msra.mxu0 0
    %726 = vmatprep.subr.bf16.mxu0 0
    %727 = vmatpush1.bf16.xpose.msra.mxu0 0
    %728 = vmatprep.subr.bf16.mxu0 0
    %729 = vmatpush1.bf16.xpose.msra.mxu0 0
    %730 = vmatprep.subr.bf16.mxu0 0
    %731 = vmatpush1.bf16.xpose.msra.mxu0 0
    %732 = vmatprep.subr.bf16.mxu0 0
    %733 = vmatpush1.bf16.xpose.msra.mxu0 0
    %734 = vmatprep.subr.bf16.mxu0 0
    %735 = vmatpush1.bf16.xpose.msra.mxu0 0
    %736 = vmatprep.subr.bf16.mxu0 0
    %737 = vmatpush1.bf16.xpose.msra.mxu0 0
    %738 = vmatprep.subr.bf16.mxu0 0
    %739 = vmatpush1.bf16.xpose.msra.mxu0 0
    %740 = vmatprep.mubr.bf16.mxu0 0
    %741 = vmatmul.mubr.bf16.gmra.mrb[0].mxu0 %v703
    %v742 = vpop.f32.mrb[0].mxu0
    %v743 = vadd.f32 0.0, %v742
    %v744 = vpop.f32.mrb[0].mxu0
    %v745 = vpop.f32.mrb[0].mxu0
    %v746 = vadd.f32 0.0, %v745
    %v747 = vpop.f32.mrb[0].mxu0
    %748 = vdwg.mxu0
    %v749 = vmul.f32 %v696, 0.17677669
    %v750 = vmul.f32 %v699, 0.17677669
    %v751 = vmul.f32 %v743, 0.17677669
    %v752 = vmul.f32 %v746, 0.17677669
    %vm753 = vcmask 130048
    %v754 = vsel %vm753, %v749, -inf
    %755 = vmax.xlane.f32.xlu0 %v754
    %v756 = vpop.xlane.xlu0 %755
    %v757 = vsel %vm753, %v750, -inf
    %758 = vmax.xlane.f32.xlu0 %v757
    %v759 = vpop.xlane.xlu0 %758
    %v760 = vsel %vm753, %v751, -inf
    %761 = vmax.xlane.f32.xlu0 %v760
    %v762 = vpop.xlane.xlu0 %761
    %v763 = vsel %vm753, %v752, -inf
    %764 = vmax.xlane.f32.xlu0 %v763
    %v765 = vpop.xlane.xlu0 %764
    %v766 = vsub.f32 %v749, %v756
    %v767 = vsub.f32 %v750, %v759
    %v768 = vsub.f32 %v751, %v762
    %v769 = vsub.f32 %v752, %v765
    %v770 = vmul.f32 %v766, 1.442695
    %v771 = vpow.pop %v770
    %v772 = vmul.f32 %v767, 1.442695
    %v773 = vpow.pop %v772
    %v774 = vmul.f32 %v768, 1.442695
    %v775 = vpow.pop %v774
    %v776 = vmul.f32 %v769, 1.442695
    %v777 = vpow.pop %v776
    %v778 = vsel %vm753, %v771, 0.0
    %779 = vadd.xlane.f32.xlu0 %v778
    %v780 = vpop.xlane.xlu0 %779
    %v781 = vsel %vm753, %v773, 0.0
    %782 = vadd.xlane.f32.xlu0 %v781
    %v783 = vpop.xlane.xlu0 %782
    %v784 = vsel %vm753, %v775, 0.0
    %785 = vadd.xlane.f32.xlu0 %v784
    %v786 = vpop.xlane.xlu0 %785
    %v787 = vsel %vm753, %v777, 0.0
    %788 = vadd.xlane.f32.xlu0 %v787
    %v789 = vpop.xlane.xlu0 %788
    %v790 = vrcp.pop %v780
    %v791 = vrcp.pop %v783
    %v792 = vrcp.pop %v786
    %v793 = vrcp.pop %v789
    %v794 = vmul.f32 %v771, %v790
    %v795 = vmul.f32 %v773, %v791
    %v796 = vmul.f32 %v775, %v792
    %v797 = vmul.f32 %v777, %v793
    %v798 = vpack.c.bf16 %v795, %v794
    %v799 = vpack.c.bf16 %v797, %v796
    %v800 = vpack.c.bf16 %v639, %v636
    %v801 = vpack.c.bf16 %v647, %v644
    %v803 = vsel %vm753, %v798, 0
    %805 = vmatprep.subr.bf16.mxu0 0
    %806 = vmatpush1.bf16.msra.mxu0 %v800
    %807 = vmatprep.subr.bf16.mxu0 0
    %808 = vmatpush1.bf16.msra.mxu0 0
    %809 = vmatprep.subr.bf16.mxu0 0
    %810 = vmatpush1.bf16.msra.mxu0 0
    %811 = vmatprep.subr.bf16.mxu0 0
    %812 = vmatpush1.bf16.msra.mxu0 0
    %813 = vmatprep.subr.bf16.mxu0 0
    %814 = vmatpush1.bf16.msra.mxu0 0
    %815 = vmatprep.subr.bf16.mxu0 0
    %816 = vmatpush1.bf16.msra.mxu0 0
    %817 = vmatprep.subr.bf16.mxu0 0
    %818 = vmatpush1.bf16.msra.mxu0 0
    %819 = vmatprep.subr.bf16.mxu0 0
    %820 = vmatpush1.bf16.msra.mxu0 0
    %821 = vmatprep.subr.bf16.mxu0 0
    %822 = vmatpush1.bf16.msra.mxu0 0
    %823 = vmatprep.subr.bf16.mxu0 0
    %824 = vmatpush1.bf16.msra.mxu0 0
    %825 = vmatprep.subr.bf16.mxu0 0
    %826 = vmatpush1.bf16.msra.mxu0 0
    %827 = vmatprep.subr.bf16.mxu0 0
    %828 = vmatpush1.bf16.msra.mxu0 0
    %829 = vmatprep.subr.bf16.mxu0 0
    %830 = vmatpush1.bf16.msra.mxu0 0
    %831 = vmatprep.subr.bf16.mxu0 0
    %832 = vmatpush1.bf16.msra.mxu0 0
    %833 = vmatprep.subr.bf16.mxu0 0
    %834 = vmatpush1.bf16.msra.mxu0 0
    %835 = vmatprep.subr.bf16.mxu0 0
    %836 = vmatpush1.bf16.msra.mxu0 0
    %837 = vmatprep.mubr.bf16.mxu0 0
    %838 = vmatmul.mubr.bf16.gmra.mrb[0].mxu0 %v803
    %v839 = vpop.f32.mrb[0].mxu0
    %v840 = vadd.f32 0.0, %v839
    %v841 = vpop.f32.mrb[0].mxu0
    %v842 = vpop.f32.mrb[0].mxu0
    %v843 = vadd.f32 0.0, %v842
    %v844 = vpop.f32.mrb[0].mxu0
    %845 = vdwg.mxu0
    %v847 = vsel %vm753, %v799, 0
    %849 = vmatprep.subr.bf16.mxu0 0
    %850 = vmatpush1.bf16.msra.mxu0 %v801
    %851 = vmatprep.subr.bf16.mxu0 0
    %852 = vmatpush1.bf16.msra.mxu0 0
    %853 = vmatprep.subr.bf16.mxu0 0
    %854 = vmatpush1.bf16.msra.mxu0 0
    %855 = vmatprep.subr.bf16.mxu0 0
    %856 = vmatpush1.bf16.msra.mxu0 0
    %857 = vmatprep.subr.bf16.mxu0 0
    %858 = vmatpush1.bf16.msra.mxu0 0
    %859 = vmatprep.subr.bf16.mxu0 0
    %860 = vmatpush1.bf16.msra.mxu0 0
    %861 = vmatprep.subr.bf16.mxu0 0
    %862 = vmatpush1.bf16.msra.mxu0 0
    %863 = vmatprep.subr.bf16.mxu0 0
    %864 = vmatpush1.bf16.msra.mxu0 0
    %865 = vmatprep.subr.bf16.mxu0 0
    %866 = vmatpush1.bf16.msra.mxu0 0
    %867 = vmatprep.subr.bf16.mxu0 0
    %868 = vmatpush1.bf16.msra.mxu0 0
    %869 = vmatprep.subr.bf16.mxu0 0
    %870 = vmatpush1.bf16.msra.mxu0 0
    %871 = vmatprep.subr.bf16.mxu0 0
    %872 = vmatpush1.bf16.msra.mxu0 0
    %873 = vmatprep.subr.bf16.mxu0 0
    %874 = vmatpush1.bf16.msra.mxu0 0
    %875 = vmatprep.subr.bf16.mxu0 0
    %876 = vmatpush1.bf16.msra.mxu0 0
    %877 = vmatprep.subr.bf16.mxu0 0
    %878 = vmatpush1.bf16.msra.mxu0 0
    %879 = vmatprep.subr.bf16.mxu0 0
    %880 = vmatpush1.bf16.msra.mxu0 0
    %881 = vmatprep.mubr.bf16.mxu0 0
    %882 = vmatmul.mubr.bf16.gmra.mrb[0].mxu0 %v847
    %v883 = vpop.f32.mrb[0].mxu0
    %v884 = vadd.f32 0.0, %v883
    %v885 = vpop.f32.mrb[0].mxu0
    %v886 = vpop.f32.mrb[0].mxu0
    %v887 = vadd.f32 0.0, %v886
    %v888 = vpop.f32.mrb[0].mxu0
    %889 = vdwg.mxu0
    %v890 = vpack.c.bf16 %v843, %v840
    %v891 = vpack.c.bf16 %v887, %v884
    %v892 = vld [vmem:[%s12] sm:$0xf]
    %v893 = vld [vmem:[%s12 + $0x4] sm:$0xf]
    %v894 = vld [vmem:[%s12 + $0x8] sm:$0xf]
    %v895 = vld [vmem:[%s12 + $0xc] sm:$0xf]
    %s896 = scalar_lea.vmem %s6, 64
    %v897 = vld [vmem:[%s896] sm:$0xf]
    %v898 = vld [vmem:[%s896 + $0x4] sm:$0xf]
    %v899 = vld [vmem:[%s896 + $0x8] sm:$0xf]
    %v900 = vld [vmem:[%s896 + $0xc] sm:$0xf]
    %v901 = vld [vmem:[%s896 + $0x10] sm:$0xf]
    %v902 = vld [vmem:[%s896 + $0x14] sm:$0xf]
    %v903 = vld [vmem:[%s896 + $0x18] sm:$0xf]
    %v904 = vld [vmem:[%s896 + $0x1c] sm:$0xf]
    %v905 = vld [vmem:[%s896 + $0x20] sm:$0xf]
    %v906 = vld [vmem:[%s896 + $0x24] sm:$0xf]
    %v907 = vld [vmem:[%s896 + $0x28] sm:$0xf]
    %v908 = vld [vmem:[%s896 + $0x2c] sm:$0xf]
    %v909 = vld [vmem:[%s896 + $0x30] sm:$0xf]
    %v910 = vld [vmem:[%s896 + $0x34] sm:$0xf]
    %v911 = vld [vmem:[%s896 + $0x38] sm:$0xf]
    %v912 = vld [vmem:[%s896 + $0x3c] sm:$0xf]
    %s913 = scalar_lea.vmem %s7, 1
    %v914 = vld [vmem:[%s913] sm:$0x1]
    %v916 = vlaneseq
    %v917 = vshrl.u32 %v916, 7
    %v918 = vsub.s32 0, %v917
    %v919 = vrot.slane %v914, %v918
    %v937 = vunpack.c.l.b16 %v897
    %v938 = vunpack.c.l.b16 %v898
    %v939 = vunpack.c.l.b16 %v899
    %v940 = vunpack.c.l.b16 %v900
    %v941 = vunpack.c.l.b16 %v901
    %v942 = vunpack.c.l.b16 %v902
    %v943 = vunpack.c.l.b16 %v903
    %v944 = vunpack.c.l.b16 %v904
    %v945 = vunpack.c.l.b16 %v905
    %v946 = vunpack.c.l.b16 %v906
    %v947 = vunpack.c.l.b16 %v907
    %v948 = vunpack.c.l.b16 %v908
    %v949 = vunpack.c.l.b16 %v909
    %v950 = vunpack.c.l.b16 %v910
    %v951 = vunpack.c.l.b16 %v911
    %v952 = vunpack.c.l.b16 %v912
    %v953 = vpack.c.b16 %v938, %v937
    %v954 = vpack.c.b16 %v940, %v939
    %v955 = vpack.c.b16 %v942, %v941
    %v956 = vpack.c.b16 %v944, %v943
    %v957 = vpack.c.b16 %v946, %v945
    %v958 = vpack.c.b16 %v948, %v947
    %v959 = vpack.c.b16 %v950, %v949
    %v960 = vpack.c.b16 %v952, %v951
    %969 = vmatprep.subr.bf16.mxu0 0
    %970 = vmatpush1.bf16.msra.mxu0 %v953
    %971 = vmatprep.subr.bf16.mxu0 0
    %972 = vmatpush1.bf16.msra.mxu0 %v954
    %973 = vmatprep.subr.bf16.mxu0 0
    %974 = vmatpush1.bf16.msra.mxu0 %v955
    %975 = vmatprep.subr.bf16.mxu0 0
    %976 = vmatpush1.bf16.msra.mxu0 %v956
    %977 = vmatprep.subr.bf16.mxu0 0
    %978 = vmatpush1.bf16.msra.mxu0 %v957
    %979 = vmatprep.subr.bf16.mxu0 0
    %980 = vmatpush1.bf16.msra.mxu0 %v958
    %981 = vmatprep.subr.bf16.mxu0 0
    %982 = vmatpush1.bf16.msra.mxu0 %v959
    %983 = vmatprep.subr.bf16.mxu0 0
    %984 = vmatpush1.bf16.msra.mxu0 %v960
    %985 = vmatprep.subr.bf16.mxu0 0
    %986 = vmatpush1.bf16.msra.mxu0 0
    %987 = vmatprep.subr.bf16.mxu0 0
    %988 = vmatpush1.bf16.msra.mxu0 0
    %989 = vmatprep.subr.bf16.mxu0 0
    %990 = vmatpush1.bf16.msra.mxu0 0
    %991 = vmatprep.subr.bf16.mxu0 0
    %992 = vmatpush1.bf16.msra.mxu0 0
    %993 = vmatprep.subr.bf16.mxu0 0
    %994 = vmatpush1.bf16.msra.mxu0 0
    %995 = vmatprep.subr.bf16.mxu0 0
    %996 = vmatpush1.bf16.msra.mxu0 0
    %997 = vmatprep.subr.bf16.mxu0 0
    %998 = vmatpush1.bf16.msra.mxu0 0
    %999 = vmatprep.subr.bf16.mxu0 0
    %1000 = vmatpush1.bf16.msra.mxu0 0
    %1001 = vmatprep.mubr.bf16.mxu0 0
    %1002 = vmatmul.mubr.bf16.gmra.mrb[0].mxu0 %v288
    %v1003 = vpop.f32.mrb[0].mxu0
    %v1004 = vadd.f32 %v919, %v1003
    %v1005 = vpop.f32.mrb[0].mxu0
    %v1006 = vpop.f32.mrb[0].mxu0
    %v1007 = vadd.f32 %v919, %v1006
    %v1008 = vpop.f32.mrb[0].mxu0
    %1009 = vmatprep.mubr.bf16.mxu0 0
    %1010 = vmatmul.mubr.bf16.gmra.mrb[0].mxu0 %v289
    %v1011 = vpop.f32.mrb[0].mxu0
    %v1012 = vadd.f32 %v919, %v1011
    %v1013 = vpop.f32.mrb[0].mxu0
    %v1014 = vpop.f32.mrb[0].mxu0
    %v1015 = vadd.f32 %v919, %v1014
    %v1016 = vpop.f32.mrb[0].mxu0
    %1017 = vdwg.mxu0
    %s1018 = scalar_lea.vmem %s8, 64
    %v1019 = vld [vmem:[%s1018] sm:$0xf]
    %v1020 = vld [vmem:[%s1018 + $0x4] sm:$0xf]
    %v1021 = vld [vmem:[%s1018 + $0x8] sm:$0xf]
    %v1022 = vld [vmem:[%s1018 + $0xc] sm:$0xf]
    %v1023 = vld [vmem:[%s1018 + $0x10] sm:$0xf]
    %v1024 = vld [vmem:[%s1018 + $0x14] sm:$0xf]
    %v1025 = vld [vmem:[%s1018 + $0x18] sm:$0xf]
    %v1026 = vld [vmem:[%s1018 + $0x1c] sm:$0xf]
    %v1027 = vld [vmem:[%s1018 + $0x20] sm:$0xf]
    %v1028 = vld [vmem:[%s1018 + $0x24] sm:$0xf]
    %v1029 = vld [vmem:[%s1018 + $0x28] sm:$0xf]
    %v1030 = vld [vmem:[%s1018 + $0x2c] sm:$0xf]
    %v1031 = vld [vmem:[%s1018 + $0x30] sm:$0xf]
    %v1032 = vld [vmem:[%s1018 + $0x34] sm:$0xf]
    %v1033 = vld [vmem:[%s1018 + $0x38] sm:$0xf]
    %v1034 = vld [vmem:[%s1018 + $0x3c] sm:$0xf]
    %s1035 = scalar_lea.vmem %s9, 1
    %v1036 = vld [vmem:[%s1035] sm:$0x1]
    %v1038 = vlaneseq
    %v1039 = vshrl.u32 %v1038, 7
    %v1040 = vsub.s32 0, %v1039
    %v1041 = vrot.slane %v1036, %v1040
    %v1059 = vunpack.c.l.b16 %v1019
    %v1060 = vunpack.c.l.b16 %v1020
    %v1061 = vunpack.c.l.b16 %v1021
    %v1062 = vunpack.c.l.b16 %v1022
    %v1063 = vunpack.c.l.b16 %v1023
    %v1064 = vunpack.c.l.b16 %v1024
    %v1065 = vunpack.c.l.b16 %v1025
    %v1066 = vunpack.c.l.b16 %v1026
    %v1067 = vunpack.c.l.b16 %v1027
    %v1068 = vunpack.c.l.b16 %v1028
    %v1069 = vunpack.c.l.b16 %v1029
    %v1070 = vunpack.c.l.b16 %v1030
    %v1071 = vunpack.c.l.b16 %v1031
    %v1072 = vunpack.c.l.b16 %v1032
    %v1073 = vunpack.c.l.b16 %v1033
    %v1074 = vunpack.c.l.b16 %v1034
    %v1075 = vpack.c.b16 %v1060, %v1059
    %v1076 = vpack.c.b16 %v1062, %v1061
    %v1077 = vpack.c.b16 %v1064, %v1063
    %v1078 = vpack.c.b16 %v1066, %v1065
    %v1079 = vpack.c.b16 %v1068, %v1067
    %v1080 = vpack.c.b16 %v1070, %v1069
    %v1081 = vpack.c.b16 %v1072, %v1071
    %v1082 = vpack.c.b16 %v1074, %v1073
    %1091 = vmatprep.subr.bf16.mxu0 0
    %1092 = vmatpush1.bf16.msra.mxu0 %v1075
    %1093 = vmatprep.subr.bf16.mxu0 0
    %1094 = vmatpush1.bf16.msra.mxu0 %v1076
    %1095 = vmatprep.subr.bf16.mxu0 0
    %1096 = vmatpush1.bf16.msra.mxu0 %v1077
    %1097 = vmatprep.subr.bf16.mxu0 0
    %1098 = vmatpush1.bf16.msra.mxu0 %v1078
    %1099 = vmatprep.subr.bf16.mxu0 0
    %1100 = vmatpush1.bf16.msra.mxu0 %v1079
    %1101 = vmatprep.subr.bf16.mxu0 0
    %1102 = vmatpush1.bf16.msra.mxu0 %v1080
    %1103 = vmatprep.subr.bf16.mxu0 0
    %1104 = vmatpush1.bf16.msra.mxu0 %v1081
    %1105 = vmatprep.subr.bf16.mxu0 0
    %1106 = vmatpush1.bf16.msra.mxu0 %v1082
    %1107 = vmatprep.subr.bf16.mxu0 0
    %1108 = vmatpush1.bf16.msra.mxu0 0
    %1109 = vmatprep.subr.bf16.mxu0 0
    %1110 = vmatpush1.bf16.msra.mxu0 0
    %1111 = vmatprep.subr.bf16.mxu0 0
    %1112 = vmatpush1.bf16.msra.mxu0 0
    %1113 = vmatprep.subr.bf16.mxu0 0
    %1114 = vmatpush1.bf16.msra.mxu0 0
    %1115 = vmatprep.subr.bf16.mxu0 0
    %1116 = vmatpush1.bf16.msra.mxu0 0
    %1117 = vmatprep.subr.bf16.mxu0 0
    %1118 = vmatpush1.bf16.msra.mxu0 0
    %1119 = vmatprep.subr.bf16.mxu0 0
    %1120 = vmatpush1.bf16.msra.mxu0 0
    %1121 = vmatprep.subr.bf16.mxu0 0
    %1122 = vmatpush1.bf16.msra.mxu0 0
    %1123 = vmatprep.mubr.bf16.mxu0 0
    %1124 = vmatmul.mubr.bf16.gmra.mrb[0].mxu0 %v288
    %v1125 = vpop.f32.mrb[0].mxu0
    %v1126 = vadd.f32 %v1041, %v1125
    %v1127 = vpop.f32.mrb[0].mxu0
    %v1128 = vpop.f32.mrb[0].mxu0
    %v1129 = vadd.f32 %v1041, %v1128
    %v1130 = vpop.f32.mrb[0].mxu0
    %1131 = vmatprep.mubr.bf16.mxu0 0
    %1132 = vmatmul.mubr.bf16.gmra.mrb[0].mxu0 %v289
    %v1133 = vpop.f32.mrb[0].mxu0
    %v1134 = vadd.f32 %v1041, %v1133
    %v1135 = vpop.f32.mrb[0].mxu0
    %v1136 = vpop.f32.mrb[0].mxu0
    %v1137 = vadd.f32 %v1041, %v1136
    %v1138 = vpop.f32.mrb[0].mxu0
    %1139 = vdwg.mxu0
    %s1140 = scalar_lea.vmem %s10, 64
    %v1141 = vld [vmem:[%s1140] sm:$0xf]
    %v1142 = vld [vmem:[%s1140 + $0x4] sm:$0xf]
    %v1143 = vld [vmem:[%s1140 + $0x8] sm:$0xf]
    %v1144 = vld [vmem:[%s1140 + $0xc] sm:$0xf]
    %v1145 = vld [vmem:[%s1140 + $0x10] sm:$0xf]
    %v1146 = vld [vmem:[%s1140 + $0x14] sm:$0xf]
    %v1147 = vld [vmem:[%s1140 + $0x18] sm:$0xf]
    %v1148 = vld [vmem:[%s1140 + $0x1c] sm:$0xf]
    %v1149 = vld [vmem:[%s1140 + $0x20] sm:$0xf]
    %v1150 = vld [vmem:[%s1140 + $0x24] sm:$0xf]
    %v1151 = vld [vmem:[%s1140 + $0x28] sm:$0xf]
    %v1152 = vld [vmem:[%s1140 + $0x2c] sm:$0xf]
    %v1153 = vld [vmem:[%s1140 + $0x30] sm:$0xf]
    %v1154 = vld [vmem:[%s1140 + $0x34] sm:$0xf]
    %v1155 = vld [vmem:[%s1140 + $0x38] sm:$0xf]
    %v1156 = vld [vmem:[%s1140 + $0x3c] sm:$0xf]
    %s1157 = scalar_lea.vmem %s11, 1
    %v1158 = vld [vmem:[%s1157] sm:$0x1]
    %v1160 = vlaneseq
    %v1161 = vshrl.u32 %v1160, 7
    %v1162 = vsub.s32 0, %v1161
    %v1163 = vrot.slane %v1158, %v1162
    %v1181 = vunpack.c.l.b16 %v1141
    %v1182 = vunpack.c.l.b16 %v1142
    %v1183 = vunpack.c.l.b16 %v1143
    %v1184 = vunpack.c.l.b16 %v1144
    %v1185 = vunpack.c.l.b16 %v1145
    %v1186 = vunpack.c.l.b16 %v1146
    %v1187 = vunpack.c.l.b16 %v1147
    %v1188 = vunpack.c.l.b16 %v1148
    %v1189 = vunpack.c.l.b16 %v1149
    %v1190 = vunpack.c.l.b16 %v1150
    %v1191 = vunpack.c.l.b16 %v1151
    %v1192 = vunpack.c.l.b16 %v1152
    %v1193 = vunpack.c.l.b16 %v1153
    %v1194 = vunpack.c.l.b16 %v1154
    %v1195 = vunpack.c.l.b16 %v1155
    %v1196 = vunpack.c.l.b16 %v1156
    %v1197 = vpack.c.b16 %v1182, %v1181
    %v1198 = vpack.c.b16 %v1184, %v1183
    %v1199 = vpack.c.b16 %v1186, %v1185
    %v1200 = vpack.c.b16 %v1188, %v1187
    %v1201 = vpack.c.b16 %v1190, %v1189
    %v1202 = vpack.c.b16 %v1192, %v1191
    %v1203 = vpack.c.b16 %v1194, %v1193
    %v1204 = vpack.c.b16 %v1196, %v1195
    %1213 = vmatprep.subr.bf16.mxu0 0
    %1214 = vmatpush1.bf16.msra.mxu0 %v1197
    %1215 = vmatprep.subr.bf16.mxu0 0
    %1216 = vmatpush1.bf16.msra.mxu0 %v1198
    %1217 = vmatprep.subr.bf16.mxu0 0
    %1218 = vmatpush1.bf16.msra.mxu0 %v1199
    %1219 = vmatprep.subr.bf16.mxu0 0
    %1220 = vmatpush1.bf16.msra.mxu0 %v1200
    %1221 = vmatprep.subr.bf16.mxu0 0
    %1222 = vmatpush1.bf16.msra.mxu0 %v1201
    %1223 = vmatprep.subr.bf16.mxu0 0
    %1224 = vmatpush1.bf16.msra.mxu0 %v1202
    %1225 = vmatprep.subr.bf16.mxu0 0
    %1226 = vmatpush1.bf16.msra.mxu0 %v1203
    %1227 = vmatprep.subr.bf16.mxu0 0
    %1228 = vmatpush1.bf16.msra.mxu0 %v1204
    %1229 = vmatprep.subr.bf16.mxu0 0
    %1230 = vmatpush1.bf16.msra.mxu0 0
    %1231 = vmatprep.subr.bf16.mxu0 0
    %1232 = vmatpush1.bf16.msra.mxu0 0
    %1233 = vmatprep.subr.bf16.mxu0 0
    %1234 = vmatpush1.bf16.msra.mxu0 0
    %1235 = vmatprep.subr.bf16.mxu0 0
    %1236 = vmatpush1.bf16.msra.mxu0 0
    %1237 = vmatprep.subr.bf16.mxu0 0
    %1238 = vmatpush1.bf16.msra.mxu0 0
    %1239 = vmatprep.subr.bf16.mxu0 0
    %1240 = vmatpush1.bf16.msra.mxu0 0
    %1241 = vmatprep.subr.bf16.mxu0 0
    %1242 = vmatpush1.bf16.msra.mxu0 0
    %1243 = vmatprep.subr.bf16.mxu0 0
    %1244 = vmatpush1.bf16.msra.mxu0 0
    %1245 = vmatprep.mubr.bf16.mxu0 0
    %1246 = vmatmul.mubr.bf16.gmra.mrb[0].mxu0 %v288
    %v1247 = vpop.f32.mrb[0].mxu0
    %v1248 = vadd.f32 %v1163, %v1247
    %v1249 = vpop.f32.mrb[0].mxu0
    %v1250 = vpop.f32.mrb[0].mxu0
    %v1251 = vadd.f32 %v1163, %v1250
    %v1252 = vpop.f32.mrb[0].mxu0
    %1253 = vmatprep.mubr.bf16.mxu0 0
    %1254 = vmatmul.mubr.bf16.gmra.mrb[0].mxu0 %v289
    %v1255 = vpop.f32.mrb[0].mxu0
    %v1256 = vadd.f32 %v1163, %v1255
    %v1257 = vpop.f32.mrb[0].mxu0
    %v1258 = vpop.f32.mrb[0].mxu0
    %v1259 = vadd.f32 %v1163, %v1258
    %v1260 = vpop.f32.mrb[0].mxu0
    %1261 = vdwg.mxu0
    %v1262 = vpack.c.bf16 %v1007, %v1004
    %v1263 = vpack.c.bf16 %v1015, %v1012
    %v1264 = vpack.c.bf16 %v1129, %v1126
    %v1265 = vpack.c.bf16 %v1137, %v1134
    %v1267 = vsel %vm654, %v1262, 0
    %v1270 = vsel %vm654, %v1264, 0
    %1272 = vmatprep.subr.bf16.mxu0 0
    %1273 = vmatpush1.bf16.xpose.msra.mxu0 %v1270
    %1274 = vmatprep.subr.bf16.mxu0 0
    %1275 = vmatpush1.bf16.xpose.msra.mxu0 0
    %1276 = vmatprep.subr.bf16.mxu0 0
    %1277 = vmatpush1.bf16.xpose.msra.mxu0 0
    %1278 = vmatprep.subr.bf16.mxu0 0
    %1279 = vmatpush1.bf16.xpose.msra.mxu0 0
    %1280 = vmatprep.subr.bf16.mxu0 0
    %1281 = vmatpush1.bf16.xpose.msra.mxu0 0
    %1282 = vmatprep.subr.bf16.mxu0 0
    %1283 = vmatpush1.bf16.xpose.msra.mxu0 0
    %1284 = vmatprep.subr.bf16.mxu0 0
    %1285 = vmatpush1.bf16.xpose.msra.mxu0 0
    %1286 = vmatprep.subr.bf16.mxu0 0
    %1287 = vmatpush1.bf16.xpose.msra.mxu0 0
    %1288 = vmatprep.subr.bf16.mxu0 0
    %1289 = vmatpush1.bf16.xpose.msra.mxu0 0
    %1290 = vmatprep.subr.bf16.mxu0 0
    %1291 = vmatpush1.bf16.xpose.msra.mxu0 0
    %1292 = vmatprep.subr.bf16.mxu0 0
    %1293 = vmatpush1.bf16.xpose.msra.mxu0 0
    %1294 = vmatprep.subr.bf16.mxu0 0
    %1295 = vmatpush1.bf16.xpose.msra.mxu0 0
    %1296 = vmatprep.subr.bf16.mxu0 0
    %1297 = vmatpush1.bf16.xpose.msra.mxu0 0
    %1298 = vmatprep.subr.bf16.mxu0 0
    %1299 = vmatpush1.bf16.xpose.msra.mxu0 0
    %1300 = vmatprep.subr.bf16.mxu0 0
    %1301 = vmatpush1.bf16.xpose.msra.mxu0 0
    %1302 = vmatprep.subr.bf16.mxu0 0
    %1303 = vmatpush1.bf16.xpose.msra.mxu0 0
    %1304 = vmatprep.mubr.bf16.mxu0 0
    %1305 = vmatmul.mubr.bf16.gmra.mrb[0].mxu0 %v1267
    %v1306 = vpop.f32.mrb[0].mxu0
    %v1307 = vadd.f32 0.0, %v1306
    %v1308 = vpop.f32.mrb[0].mxu0
    %v1309 = vpop.f32.mrb[0].mxu0
    %v1310 = vadd.f32 0.0, %v1309
    %v1311 = vpop.f32.mrb[0].mxu0
    %1312 = vdwg.mxu0
    %v1314 = vsel %vm654, %v1263, 0
    %v1317 = vsel %vm654, %v1265, 0
    %1319 = vmatprep.subr.bf16.mxu0 0
    %1320 = vmatpush1.bf16.xpose.msra.mxu0 %v1317
    %1321 = vmatprep.subr.bf16.mxu0 0
    %1322 = vmatpush1.bf16.xpose.msra.mxu0 0
    %1323 = vmatprep.subr.bf16.mxu0 0
    %1324 = vmatpush1.bf16.xpose.msra.mxu0 0
    %1325 = vmatprep.subr.bf16.mxu0 0
    %1326 = vmatpush1.bf16.xpose.msra.mxu0 0
    %1327 = vmatprep.subr.bf16.mxu0 0
    %1328 = vmatpush1.bf16.xpose.msra.mxu0 0
    %1329 = vmatprep.subr.bf16.mxu0 0
    %1330 = vmatpush1.bf16.xpose.msra.mxu0 0
    %1331 = vmatprep.subr.bf16.mxu0 0
    %1332 = vmatpush1.bf16.xpose.msra.mxu0 0
    %1333 = vmatprep.subr.bf16.mxu0 0
    %1334 = vmatpush1.bf16.xpose.msra.mxu0 0
    %1335 = vmatprep.subr.bf16.mxu0 0
    %1336 = vmatpush1.bf16.xpose.msra.mxu0 0
    %1337 = vmatprep.subr.bf16.mxu0 0
    %1338 = vmatpush1.bf16.xpose.msra.mxu0 0
    %1339 = vmatprep.subr.bf16.mxu0 0
    %1340 = vmatpush1.bf16.xpose.msra.mxu0 0
    %1341 = vmatprep.subr.bf16.mxu0 0
    %1342 = vmatpush1.bf16.xpose.msra.mxu0 0
    %1343 = vmatprep.subr.bf16.mxu0 0
    %1344 = vmatpush1.bf16.xpose.msra.mxu0 0
    %1345 = vmatprep.subr.bf16.mxu0 0
    %1346 = vmatpush1.bf16.xpose.msra.mxu0 0
    %1347 = vmatprep.subr.bf16.mxu0 0
    %1348 = vmatpush1.bf16.xpose.msra.mxu0 0
    %1349 = vmatprep.subr.bf16.mxu0 0
    %1350 = vmatpush1.bf16.xpose.msra.mxu0 0
    %1351 = vmatprep.mubr.bf16.mxu0 0
    %1352 = vmatmul.mubr.bf16.gmra.mrb[0].mxu0 %v1314
    %v1353 = vpop.f32.mrb[0].mxu0
    %v1354 = vadd.f32 0.0, %v1353
    %v1355 = vpop.f32.mrb[0].mxu0
    %v1356 = vpop.f32.mrb[0].mxu0
    %v1357 = vadd.f32 0.0, %v1356
    %v1358 = vpop.f32.mrb[0].mxu0
    %1359 = vdwg.mxu0
    %v1360 = vmul.f32 %v1307, 0.17677669
    %v1361 = vmul.f32 %v1310, 0.17677669
    %v1362 = vmul.f32 %v1354, 0.17677669
    %v1363 = vmul.f32 %v1357, 0.17677669
    %v1364 = vsel %vm753, %v1360, -inf
    %1365 = vmax.xlane.f32.xlu0 %v1364
    %v1366 = vpop.xlane.xlu0 %1365
    %v1367 = vsel %vm753, %v1361, -inf
    %1368 = vmax.xlane.f32.xlu0 %v1367
    %v1369 = vpop.xlane.xlu0 %1368
    %v1370 = vsel %vm753, %v1362, -inf
    %1371 = vmax.xlane.f32.xlu0 %v1370
    %v1372 = vpop.xlane.xlu0 %1371
    %v1373 = vsel %vm753, %v1363, -inf
    %1374 = vmax.xlane.f32.xlu0 %v1373
    %v1375 = vpop.xlane.xlu0 %1374
    %v1376 = vsub.f32 %v1360, %v1366
    %v1377 = vsub.f32 %v1361, %v1369
    %v1378 = vsub.f32 %v1362, %v1372
    %v1379 = vsub.f32 %v1363, %v1375
    %v1380 = vmul.f32 %v1376, 1.442695
    %v1381 = vpow.pop %v1380
    %v1382 = vmul.f32 %v1377, 1.442695
    %v1383 = vpow.pop %v1382
    %v1384 = vmul.f32 %v1378, 1.442695
    %v1385 = vpow.pop %v1384
    %v1386 = vmul.f32 %v1379, 1.442695
    %v1387 = vpow.pop %v1386
    %v1388 = vsel %vm753, %v1381, 0.0
    %1389 = vadd.xlane.f32.xlu0 %v1388
    %v1390 = vpop.xlane.xlu0 %1389
    %v1391 = vsel %vm753, %v1383, 0.0
    %1392 = vadd.xlane.f32.xlu0 %v1391
    %v1393 = vpop.xlane.xlu0 %1392
    %v1394 = vsel %vm753, %v1385, 0.0
    %1395 = vadd.xlane.f32.xlu0 %v1394
    %v1396 = vpop.xlane.xlu0 %1395
    %v1397 = vsel %vm753, %v1387, 0.0
    %1398 = vadd.xlane.f32.xlu0 %v1397
    %v1399 = vpop.xlane.xlu0 %1398
    %v1400 = vrcp.pop %v1390
    %v1401 = vrcp.pop %v1393
    %v1402 = vrcp.pop %v1396
    %v1403 = vrcp.pop %v1399
    %v1404 = vmul.f32 %v1381, %v1400
    %v1405 = vmul.f32 %v1383, %v1401
    %v1406 = vmul.f32 %v1385, %v1402
    %v1407 = vmul.f32 %v1387, %v1403
    %v1408 = vpack.c.bf16 %v1405, %v1404
    %v1409 = vpack.c.bf16 %v1407, %v1406
    %v1410 = vpack.c.bf16 %v1251, %v1248
    %v1411 = vpack.c.bf16 %v1259, %v1256
    %v1413 = vsel %vm753, %v1408, 0
    %1415 = vmatprep.subr.bf16.mxu0 0
    %1416 = vmatpush1.bf16.msra.mxu0 %v1410
    %1417 = vmatprep.subr.bf16.mxu0 0
    %1418 = vmatpush1.bf16.msra.mxu0 0
    %1419 = vmatprep.subr.bf16.mxu0 0
    %1420 = vmatpush1.bf16.msra.mxu0 0
    %1421 = vmatprep.subr.bf16.mxu0 0
    %1422 = vmatpush1.bf16.msra.mxu0 0
    %1423 = vmatprep.subr.bf16.mxu0 0
    %1424 = vmatpush1.bf16.msra.mxu0 0
    %1425 = vmatprep.subr.bf16.mxu0 0
    %1426 = vmatpush1.bf16.msra.mxu0 0
    %1427 = vmatprep.subr.bf16.mxu0 0
    %1428 = vmatpush1.bf16.msra.mxu0 0
    %1429 = vmatprep.subr.bf16.mxu0 0
    %1430 = vmatpush1.bf16.msra.mxu0 0
    %1431 = vmatprep.subr.bf16.mxu0 0
    %1432 = vmatpush1.bf16.msra.mxu0 0
    %1433 = vmatprep.subr.bf16.mxu0 0
    %1434 = vmatpush1.bf16.msra.mxu0 0
    %1435 = vmatprep.subr.bf16.mxu0 0
    %1436 = vmatpush1.bf16.msra.mxu0 0
    %1437 = vmatprep.subr.bf16.mxu0 0
    %1438 = vmatpush1.bf16.msra.mxu0 0
    %1439 = vmatprep.subr.bf16.mxu0 0
    %1440 = vmatpush1.bf16.msra.mxu0 0
    %1441 = vmatprep.subr.bf16.mxu0 0
    %1442 = vmatpush1.bf16.msra.mxu0 0
    %1443 = vmatprep.subr.bf16.mxu0 0
    %1444 = vmatpush1.bf16.msra.mxu0 0
    %1445 = vmatprep.subr.bf16.mxu0 0
    %1446 = vmatpush1.bf16.msra.mxu0 0
    %1447 = vmatprep.mubr.bf16.mxu0 0
    %1448 = vmatmul.mubr.bf16.gmra.mrb[0].mxu0 %v1413
    %v1449 = vpop.f32.mrb[0].mxu0
    %v1450 = vadd.f32 0.0, %v1449
    %v1451 = vpop.f32.mrb[0].mxu0
    %v1452 = vpop.f32.mrb[0].mxu0
    %v1453 = vadd.f32 0.0, %v1452
    %v1454 = vpop.f32.mrb[0].mxu0
    %1455 = vdwg.mxu0
    %v1457 = vsel %vm753, %v1409, 0
    %1459 = vmatprep.subr.bf16.mxu0 0
    %1460 = vmatpush1.bf16.msra.mxu0 %v1411
    %1461 = vmatprep.subr.bf16.mxu0 0
    %1462 = vmatpush1.bf16.msra.mxu0 0
    %1463 = vmatprep.subr.bf16.mxu0 0
    %1464 = vmatpush1.bf16.msra.mxu0 0
    %1465 = vmatprep.subr.bf16.mxu0 0
    %1466 = vmatpush1.bf16.msra.mxu0 0
    %1467 = vmatprep.subr.bf16.mxu0 0
    %1468 = vmatpush1.bf16.msra.mxu0 0
    %1469 = vmatprep.subr.bf16.mxu0 0
    %1470 = vmatpush1.bf16.msra.mxu0 0
    %1471 = vmatprep.subr.bf16.mxu0 0
    %1472 = vmatpush1.bf16.msra.mxu0 0
    %1473 = vmatprep.subr.bf16.mxu0 0
    %1474 = vmatpush1.bf16.msra.mxu0 0
    %1475 = vmatprep.subr.bf16.mxu0 0
    %1476 = vmatpush1.bf16.msra.mxu0 0
    %1477 = vmatprep.subr.bf16.mxu0 0
    %1478 = vmatpush1.bf16.msra.mxu0 0
    %1479 = vmatprep.subr.bf16.mxu0 0
    %1480 = vmatpush1.bf16.msra.mxu0 0
    %1481 = vmatprep.subr.bf16.mxu0 0
    %1482 = vmatpush1.bf16.msra.mxu0 0
    %1483 = vmatprep.subr.bf16.mxu0 0
    %1484 = vmatpush1.bf16.msra.mxu0 0
    %1485 = vmatprep.subr.bf16.mxu0 0
    %1486 = vmatpush1.bf16.msra.mxu0 0
    %1487 = vmatprep.subr.bf16.mxu0 0
    %1488 = vmatpush1.bf16.msra.mxu0 0
    %1489 = vmatprep.subr.bf16.mxu0 0
    %1490 = vmatpush1.bf16.msra.mxu0 0
    %1491 = vmatprep.mubr.bf16.mxu0 0
    %1492 = vmatmul.mubr.bf16.gmra.mrb[0].mxu0 %v1457
    %v1493 = vpop.f32.mrb[0].mxu0
    %v1494 = vadd.f32 0.0, %v1493
    %v1495 = vpop.f32.mrb[0].mxu0
    %v1496 = vpop.f32.mrb[0].mxu0
    %v1497 = vadd.f32 0.0, %v1496
    %v1498 = vpop.f32.mrb[0].mxu0
    %1499 = vdwg.mxu0
    %v1500 = vpack.c.bf16 %v1453, %v1450
    %v1501 = vpack.c.bf16 %v1497, %v1494
    %s1502 = scalar_lea.vmem %s12, 16
    %v1503 = vld [vmem:[%s1502] sm:$0xf]
    %v1504 = vld [vmem:[%s1502 + $0x4] sm:$0xf]
    %v1505 = vld [vmem:[%s1502 + $0x8] sm:$0xf]
    %v1506 = vld [vmem:[%s1502 + $0xc] sm:$0xf]
    %v1511 = vunpack.c.l.b16 %v1503
    %v1512 = vunpack.c.l.b16 %v1504
    %v1513 = vunpack.c.l.b16 %v1505
    %v1514 = vunpack.c.l.b16 %v1506
    %v1515 = vpack.c.b16 %v1512, %v1511
    %v1516 = vpack.c.b16 %v1514, %v1513
    %v1520 = vsel %vm654, %v1500, 0
    %v1523 = vsel %vm654, %v1501, 0
    %1525 = vmatprep.subr.bf16.mxu0 0
    %1526 = vmatpush1.bf16.msra.mxu0 %v1515
    %1527 = vmatprep.subr.bf16.mxu0 0
    %1528 = vmatpush1.bf16.msra.mxu0 %v1516
    %1529 = vmatprep.subr.bf16.mxu0 0
    %1530 = vmatpush1.bf16.msra.mxu0 0
    %1531 = vmatprep.subr.bf16.mxu0 0
    %1532 = vmatpush1.bf16.msra.mxu0 0
    %1533 = vmatprep.subr.bf16.mxu0 0
    %1534 = vmatpush1.bf16.msra.mxu0 0
    %1535 = vmatprep.subr.bf16.mxu0 0
    %1536 = vmatpush1.bf16.msra.mxu0 0
    %1537 = vmatprep.subr.bf16.mxu0 0
    %1538 = vmatpush1.bf16.msra.mxu0 0
    %1539 = vmatprep.subr.bf16.mxu0 0
    %1540 = vmatpush1.bf16.msra.mxu0 0
    %1541 = vmatprep.subr.bf16.mxu0 0
    %1542 = vmatpush1.bf16.msra.mxu0 0
    %1543 = vmatprep.subr.bf16.mxu0 0
    %1544 = vmatpush1.bf16.msra.mxu0 0
    %1545 = vmatprep.subr.bf16.mxu0 0
    %1546 = vmatpush1.bf16.msra.mxu0 0
    %1547 = vmatprep.subr.bf16.mxu0 0
    %1548 = vmatpush1.bf16.msra.mxu0 0
    %1549 = vmatprep.subr.bf16.mxu0 0
    %1550 = vmatpush1.bf16.msra.mxu0 0
    %1551 = vmatprep.subr.bf16.mxu0 0
    %1552 = vmatpush1.bf16.msra.mxu0 0
    %1553 = vmatprep.subr.bf16.mxu0 0
    %1554 = vmatpush1.bf16.msra.mxu0 0
    %1555 = vmatprep.subr.bf16.mxu0 0
    %1556 = vmatpush1.bf16.msra.mxu0 0
    %1557 = vmatprep.mubr.bf16.mxu0 0
    %1558 = vmatmul.mubr.bf16.gmra.mrb[0].mxu0 %v1520
    %v1559 = vpop.f32.mrb[0].mxu0
    %v1560 = vadd.f32 0.0, %v1559
    %v1561 = vpop.f32.mrb[0].mxu0
    %v1562 = vpop.f32.mrb[0].mxu0
    %v1563 = vadd.f32 0.0, %v1562
    %v1564 = vpop.f32.mrb[0].mxu0
    %1565 = vmatprep.mubr.bf16.mxu0 0
    %1566 = vmatmul.mubr.bf16.gmra.mrb[0].mxu0 %v1523
    %v1567 = vpop.f32.mrb[0].mxu0
    %v1568 = vadd.f32 0.0, %v1567
    %v1569 = vpop.f32.mrb[0].mxu0
    %v1570 = vpop.f32.mrb[0].mxu0
    %v1571 = vadd.f32 0.0, %v1570
    %v1572 = vpop.f32.mrb[0].mxu0
    %1573 = vdwg.mxu0
    %v1578 = vunpack.c.l.b16 %v892
    %v1579 = vunpack.c.l.b16 %v893
    %v1580 = vunpack.c.l.b16 %v894
    %v1581 = vunpack.c.l.b16 %v895
    %v1582 = vpack.c.b16 %v1579, %v1578
    %v1583 = vpack.c.b16 %v1581, %v1580
    %v1587 = vsel %vm654, %v890, 0
    %v1590 = vsel %vm654, %v891, 0
    %1592 = vmatprep.subr.bf16.mxu0 0
    %1593 = vmatpush1.bf16.msra.mxu0 %v1582
    %1594 = vmatprep.subr.bf16.mxu0 0
    %1595 = vmatpush1.bf16.msra.mxu0 %v1583
    %1596 = vmatprep.subr.bf16.mxu0 0
    %1597 = vmatpush1.bf16.msra.mxu0 0
    %1598 = vmatprep.subr.bf16.mxu0 0
    %1599 = vmatpush1.bf16.msra.mxu0 0
    %1600 = vmatprep.subr.bf16.mxu0 0
    %1601 = vmatpush1.bf16.msra.mxu0 0
    %1602 = vmatprep.subr.bf16.mxu0 0
    %1603 = vmatpush1.bf16.msra.mxu0 0
    %1604 = vmatprep.subr.bf16.mxu0 0
    %1605 = vmatpush1.bf16.msra.mxu0 0
    %1606 = vmatprep.subr.bf16.mxu0 0
    %1607 = vmatpush1.bf16.msra.mxu0 0
    %1608 = vmatprep.subr.bf16.mxu0 0
    %1609 = vmatpush1.bf16.msra.mxu0 0
    %1610 = vmatprep.subr.bf16.mxu0 0
    %1611 = vmatpush1.bf16.msra.mxu0 0
    %1612 = vmatprep.subr.bf16.mxu0 0
    %1613 = vmatpush1.bf16.msra.mxu0 0
    %1614 = vmatprep.subr.bf16.mxu0 0
    %1615 = vmatpush1.bf16.msra.mxu0 0
    %1616 = vmatprep.subr.bf16.mxu0 0
    %1617 = vmatpush1.bf16.msra.mxu0 0
    %1618 = vmatprep.subr.bf16.mxu0 0
    %1619 = vmatpush1.bf16.msra.mxu0 0
    %1620 = vmatprep.subr.bf16.mxu0 0
    %1621 = vmatpush1.bf16.msra.mxu0 0
    %1622 = vmatprep.subr.bf16.mxu0 0
    %1623 = vmatpush1.bf16.msra.mxu0 0
    %1624 = vmatprep.mubr.bf16.mxu0 0
    %1625 = vmatmul.mubr.bf16.gmra.mrb[0].mxu0 %v1587
    %v1626 = vpop.f32.mrb[0].mxu0
    %v1627 = vadd.f32 %v1560, %v1626
    %v1628 = vpop.f32.mrb[0].mxu0
    %v1629 = vpop.f32.mrb[0].mxu0
    %v1630 = vadd.f32 %v1563, %v1629
    %v1631 = vpop.f32.mrb[0].mxu0
    %1632 = vmatprep.mubr.bf16.mxu0 0
    %1633 = vmatmul.mubr.bf16.gmra.mrb[0].mxu0 %v1590
    %v1634 = vpop.f32.mrb[0].mxu0
    %v1635 = vadd.f32 %v1568, %v1634
    %v1636 = vpop.f32.mrb[0].mxu0
    %v1637 = vpop.f32.mrb[0].mxu0
    %v1638 = vadd.f32 %v1571, %v1637
    %v1639 = vpop.f32.mrb[0].mxu0
    %1640 = vdwg.mxu0
    %s1641 = scalar_lea.vmem %s6, 128
    %v1642 = vld [vmem:[%s1641] sm:$0xf]
    %v1643 = vld [vmem:[%s1641 + $0x4] sm:$0xf]
    %v1644 = vld [vmem:[%s1641 + $0x8] sm:$0xf]
    %v1645 = vld [vmem:[%s1641 + $0xc] sm:$0xf]
    %v1646 = vld [vmem:[%s1641 + $0x10] sm:$0xf]
    %v1647 = vld [vmem:[%s1641 + $0x14] sm:$0xf]
    %v1648 = vld [vmem:[%s1641 + $0x18] sm:$0xf]
    %v1649 = vld [vmem:[%s1641 + $0x1c] sm:$0xf]
    %v1650 = vld [vmem:[%s1641 + $0x20] sm:$0xf]
    %v1651 = vld [vmem:[%s1641 + $0x24] sm:$0xf]
    %v1652 = vld [vmem:[%s1641 + $0x28] sm:$0xf]
    %v1653 = vld [vmem:[%s1641 + $0x2c] sm:$0xf]
    %v1654 = vld [vmem:[%s1641 + $0x30] sm:$0xf]
    %v1655 = vld [vmem:[%s1641 + $0x34] sm:$0xf]
    %v1656 = vld [vmem:[%s1641 + $0x38] sm:$0xf]
    %v1657 = vld [vmem:[%s1641 + $0x3c] sm:$0xf]
    %s1658 = scalar_lea.vmem %s7, 2
    %v1659 = vld [vmem:[%s1658] sm:$0x1]
    %v1661 = vlaneseq
    %v1662 = vshrl.u32 %v1661, 7
    %v1663 = vsub.s32 0, %v1662
    %v1664 = vrot.slane %v1659, %v1663
    %v1682 = vunpack.c.l.b16 %v1642
    %v1683 = vunpack.c.l.b16 %v1643
    %v1684 = vunpack.c.l.b16 %v1644
    %v1685 = vunpack.c.l.b16 %v1645
    %v1686 = vunpack.c.l.b16 %v1646
    %v1687 = vunpack.c.l.b16 %v1647
    %v1688 = vunpack.c.l.b16 %v1648
    %v1689 = vunpack.c.l.b16 %v1649
    %v1690 = vunpack.c.l.b16 %v1650
    %v1691 = vunpack.c.l.b16 %v1651
    %v1692 = vunpack.c.l.b16 %v1652
    %v1693 = vunpack.c.l.b16 %v1653
    %v1694 = vunpack.c.l.b16 %v1654
    %v1695 = vunpack.c.l.b16 %v1655
    %v1696 = vunpack.c.l.b16 %v1656
    %v1697 = vunpack.c.l.b16 %v1657
    %v1698 = vpack.c.b16 %v1683, %v1682
    %v1699 = vpack.c.b16 %v1685, %v1684
    %v1700 = vpack.c.b16 %v1687, %v1686
    %v1701 = vpack.c.b16 %v1689, %v1688
    %v1702 = vpack.c.b16 %v1691, %v1690
    %v1703 = vpack.c.b16 %v1693, %v1692
    %v1704 = vpack.c.b16 %v1695, %v1694
    %v1705 = vpack.c.b16 %v1697, %v1696
    %1714 = vmatprep.subr.bf16.mxu0 0
    %1715 = vmatpush1.bf16.msra.mxu0 %v1698
    %1716 = vmatprep.subr.bf16.mxu0 0
    %1717 = vmatpush1.bf16.msra.mxu0 %v1699
    %1718 = vmatprep.subr.bf16.mxu0 0
    %1719 = vmatpush1.bf16.msra.mxu0 %v1700
    %1720 = vmatprep.subr.bf16.mxu0 0
    %1721 = vmatpush1.bf16.msra.mxu0 %v1701
    %1722 = vmatprep.subr.bf16.mxu0 0
    %1723 = vmatpush1.bf16.msra.mxu0 %v1702
    %1724 = vmatprep.subr.bf16.mxu0 0
    %1725 = vmatpush1.bf16.msra.mxu0 %v1703
    %1726 = vmatprep.subr.bf16.mxu0 0
    %1727 = vmatpush1.bf16.msra.mxu0 %v1704
    %1728 = vmatprep.subr.bf16.mxu0 0
    %1729 = vmatpush1.bf16.msra.mxu0 %v1705
    %1730 = vmatprep.subr.bf16.mxu0 0
    %1731 = vmatpush1.bf16.msra.mxu0 0
    %1732 = vmatprep.subr.bf16.mxu0 0
    %1733 = vmatpush1.bf16.msra.mxu0 0
    %1734 = vmatprep.subr.bf16.mxu0 0
    %1735 = vmatpush1.bf16.msra.mxu0 0
    %1736 = vmatprep.subr.bf16.mxu0 0
    %1737 = vmatpush1.bf16.msra.mxu0 0
    %1738 = vmatprep.subr.bf16.mxu0 0
    %1739 = vmatpush1.bf16.msra.mxu0 0
    %1740 = vmatprep.subr.bf16.mxu0 0
    %1741 = vmatpush1.bf16.msra.mxu0 0
    %1742 = vmatprep.subr.bf16.mxu0 0
    %1743 = vmatpush1.bf16.msra.mxu0 0
    %1744 = vmatprep.subr.bf16.mxu0 0
    %1745 = vmatpush1.bf16.msra.mxu0 0
    %1746 = vmatprep.mubr.bf16.mxu0 0
    %1747 = vmatmul.mubr.bf16.gmra.mrb[0].mxu0 %v288
    %v1748 = vpop.f32.mrb[0].mxu0
    %v1749 = vadd.f32 %v1664, %v1748
    %v1750 = vpop.f32.mrb[0].mxu0
    %v1751 = vpop.f32.mrb[0].mxu0
    %v1752 = vadd.f32 %v1664, %v1751
    %v1753 = vpop.f32.mrb[0].mxu0
    %1754 = vmatprep.mubr.bf16.mxu0 0
    %1755 = vmatmul.mubr.bf16.gmra.mrb[0].mxu0 %v289
    %v1756 = vpop.f32.mrb[0].mxu0
    %v1757 = vadd.f32 %v1664, %v1756
    %v1758 = vpop.f32.mrb[0].mxu0
    %v1759 = vpop.f32.mrb[0].mxu0
    %v1760 = vadd.f32 %v1664, %v1759
    %v1761 = vpop.f32.mrb[0].mxu0
    %1762 = vdwg.mxu0
    %s1763 = scalar_lea.vmem %s8, 128
    %v1764 = vld [vmem:[%s1763] sm:$0xf]
    %v1765 = vld [vmem:[%s1763 + $0x4] sm:$0xf]
    %v1766 = vld [vmem:[%s1763 + $0x8] sm:$0xf]
    %v1767 = vld [vmem:[%s1763 + $0xc] sm:$0xf]
    %v1768 = vld [vmem:[%s1763 + $0x10] sm:$0xf]
    %v1769 = vld [vmem:[%s1763 + $0x14] sm:$0xf]
    %v1770 = vld [vmem:[%s1763 + $0x18] sm:$0xf]
    %v1771 = vld [vmem:[%s1763 + $0x1c] sm:$0xf]
    %v1772 = vld [vmem:[%s1763 + $0x20] sm:$0xf]
    %v1773 = vld [vmem:[%s1763 + $0x24] sm:$0xf]
    %v1774 = vld [vmem:[%s1763 + $0x28] sm:$0xf]
    %v1775 = vld [vmem:[%s1763 + $0x2c] sm:$0xf]
    %v1776 = vld [vmem:[%s1763 + $0x30] sm:$0xf]
    %v1777 = vld [vmem:[%s1763 + $0x34] sm:$0xf]
    %v1778 = vld [vmem:[%s1763 + $0x38] sm:$0xf]
    %v1779 = vld [vmem:[%s1763 + $0x3c] sm:$0xf]
    %s1780 = scalar_lea.vmem %s9, 2
    %v1781 = vld [vmem:[%s1780] sm:$0x1]
    %v1783 = vlaneseq
    %v1784 = vshrl.u32 %v1783, 7
    %v1785 = vsub.s32 0, %v1784
    %v1786 = vrot.slane %v1781, %v1785
    %v1804 = vunpack.c.l.b16 %v1764
    %v1805 = vunpack.c.l.b16 %v1765
    %v1806 = vunpack.c.l.b16 %v1766
    %v1807 = vunpack.c.l.b16 %v1767
    %v1808 = vunpack.c.l.b16 %v1768
    %v1809 = vunpack.c.l.b16 %v1769
    %v1810 = vunpack.c.l.b16 %v1770
    %v1811 = vunpack.c.l.b16 %v1771
    %v1812 = vunpack.c.l.b16 %v1772
    %v1813 = vunpack.c.l.b16 %v1773
    %v1814 = vunpack.c.l.b16 %v1774
    %v1815 = vunpack.c.l.b16 %v1775
    %v1816 = vunpack.c.l.b16 %v1776
    %v1817 = vunpack.c.l.b16 %v1777
    %v1818 = vunpack.c.l.b16 %v1778
    %v1819 = vunpack.c.l.b16 %v1779
    %v1820 = vpack.c.b16 %v1805, %v1804
    %v1821 = vpack.c.b16 %v1807, %v1806
    %v1822 = vpack.c.b16 %v1809, %v1808
    %v1823 = vpack.c.b16 %v1811, %v1810
    %v1824 = vpack.c.b16 %v1813, %v1812
    %v1825 = vpack.c.b16 %v1815, %v1814
    %v1826 = vpack.c.b16 %v1817, %v1816
    %v1827 = vpack.c.b16 %v1819, %v1818
    %1836 = vmatprep.subr.bf16.mxu0 0
    %1837 = vmatpush1.bf16.msra.mxu0 %v1820
    %1838 = vmatprep.subr.bf16.mxu0 0
    %1839 = vmatpush1.bf16.msra.mxu0 %v1821
    %1840 = vmatprep.subr.bf16.mxu0 0
    %1841 = vmatpush1.bf16.msra.mxu0 %v1822
    %1842 = vmatprep.subr.bf16.mxu0 0
    %1843 = vmatpush1.bf16.msra.mxu0 %v1823
    %1844 = vmatprep.subr.bf16.mxu0 0
    %1845 = vmatpush1.bf16.msra.mxu0 %v1824
    %1846 = vmatprep.subr.bf16.mxu0 0
    %1847 = vmatpush1.bf16.msra.mxu0 %v1825
    %1848 = vmatprep.subr.bf16.mxu0 0
    %1849 = vmatpush1.bf16.msra.mxu0 %v1826
    %1850 = vmatprep.subr.bf16.mxu0 0
    %1851 = vmatpush1.bf16.msra.mxu0 %v1827
    %1852 = vmatprep.subr.bf16.mxu0 0
    %1853 = vmatpush1.bf16.msra.mxu0 0
    %1854 = vmatprep.subr.bf16.mxu0 0
    %1855 = vmatpush1.bf16.msra.mxu0 0
    %1856 = vmatprep.subr.bf16.mxu0 0
    %1857 = vmatpush1.bf16.msra.mxu0 0
    %1858 = vmatprep.subr.bf16.mxu0 0
    %1859 = vmatpush1.bf16.msra.mxu0 0
    %1860 = vmatprep.subr.bf16.mxu0 0
    %1861 = vmatpush1.bf16.msra.mxu0 0
    %1862 = vmatprep.subr.bf16.mxu0 0
    %1863 = vmatpush1.bf16.msra.mxu0 0
    %1864 = vmatprep.subr.bf16.mxu0 0
    %1865 = vmatpush1.bf16.msra.mxu0 0
    %1866 = vmatprep.subr.bf16.mxu0 0
    %1867 = vmatpush1.bf16.msra.mxu0 0
    %1868 = vmatprep.mubr.bf16.mxu0 0
    %1869 = vmatmul.mubr.bf16.gmra.mrb[0].mxu0 %v288
    %v1870 = vpop.f32.mrb[0].mxu0
    %v1871 = vadd.f32 %v1786, %v1870
    %v1872 = vpop.f32.mrb[0].mxu0
    %v1873 = vpop.f32.mrb[0].mxu0
    %v1874 = vadd.f32 %v1786, %v1873
    %v1875 = vpop.f32.mrb[0].mxu0
    %1876 = vmatprep.mubr.bf16.mxu0 0
    %1877 = vmatmul.mubr.bf16.gmra.mrb[0].mxu0 %v289
    %v1878 = vpop.f32.mrb[0].mxu0
    %v1879 = vadd.f32 %v1786, %v1878
    %v1880 = vpop.f32.mrb[0].mxu0
    %v1881 = vpop.f32.mrb[0].mxu0
    %v1882 = vadd.f32 %v1786, %v1881
    %v1883 = vpop.f32.mrb[0].mxu0
    %1884 = vdwg.mxu0
    %s1885 = scalar_lea.vmem %s10, 128
    %v1886 = vld [vmem:[%s1885] sm:$0xf]
    %v1887 = vld [vmem:[%s1885 + $0x4] sm:$0xf]
    %v1888 = vld [vmem:[%s1885 + $0x8] sm:$0xf]
    %v1889 = vld [vmem:[%s1885 + $0xc] sm:$0xf]
    %v1890 = vld [vmem:[%s1885 + $0x10] sm:$0xf]
    %v1891 = vld [vmem:[%s1885 + $0x14] sm:$0xf]
    %v1892 = vld [vmem:[%s1885 + $0x18] sm:$0xf]
    %v1893 = vld [vmem:[%s1885 + $0x1c] sm:$0xf]
    %v1894 = vld [vmem:[%s1885 + $0x20] sm:$0xf]
    %v1895 = vld [vmem:[%s1885 + $0x24] sm:$0xf]
    %v1896 = vld [vmem:[%s1885 + $0x28] sm:$0xf]
    %v1897 = vld [vmem:[%s1885 + $0x2c] sm:$0xf]
    %v1898 = vld [vmem:[%s1885 + $0x30] sm:$0xf]
    %v1899 = vld [vmem:[%s1885 + $0x34] sm:$0xf]
    %v1900 = vld [vmem:[%s1885 + $0x38] sm:$0xf]
    %v1901 = vld [vmem:[%s1885 + $0x3c] sm:$0xf]
    %s1902 = scalar_lea.vmem %s11, 2
    %v1903 = vld [vmem:[%s1902] sm:$0x1]
    %v1905 = vlaneseq
    %v1906 = vshrl.u32 %v1905, 7
    %v1907 = vsub.s32 0, %v1906
    %v1908 = vrot.slane %v1903, %v1907
    %v1926 = vunpack.c.l.b16 %v1886
    %v1927 = vunpack.c.l.b16 %v1887
    %v1928 = vunpack.c.l.b16 %v1888
    %v1929 = vunpack.c.l.b16 %v1889
    %v1930 = vunpack.c.l.b16 %v1890
    %v1931 = vunpack.c.l.b16 %v1891
    %v1932 = vunpack.c.l.b16 %v1892
    %v1933 = vunpack.c.l.b16 %v1893
    %v1934 = vunpack.c.l.b16 %v1894
    %v1935 = vunpack.c.l.b16 %v1895
    %v1936 = vunpack.c.l.b16 %v1896
    %v1937 = vunpack.c.l.b16 %v1897
    %v1938 = vunpack.c.l.b16 %v1898
    %v1939 = vunpack.c.l.b16 %v1899
    %v1940 = vunpack.c.l.b16 %v1900
    %v1941 = vunpack.c.l.b16 %v1901
    %v1942 = vpack.c.b16 %v1927, %v1926
    %v1943 = vpack.c.b16 %v1929, %v1928
    %v1944 = vpack.c.b16 %v1931, %v1930
    %v1945 = vpack.c.b16 %v1933, %v1932
    %v1946 = vpack.c.b16 %v1935, %v1934
    %v1947 = vpack.c.b16 %v1937, %v1936
    %v1948 = vpack.c.b16 %v1939, %v1938
    %v1949 = vpack.c.b16 %v1941, %v1940
    %1958 = vmatprep.subr.bf16.mxu0 0
    %1959 = vmatpush1.bf16.msra.mxu0 %v1942
    %1960 = vmatprep.subr.bf16.mxu0 0
    %1961 = vmatpush1.bf16.msra.mxu0 %v1943
    %1962 = vmatprep.subr.bf16.mxu0 0
    %1963 = vmatpush1.bf16.msra.mxu0 %v1944
    %1964 = vmatprep.subr.bf16.mxu0 0
    %1965 = vmatpush1.bf16.msra.mxu0 %v1945
    %1966 = vmatprep.subr.bf16.mxu0 0
    %1967 = vmatpush1.bf16.msra.mxu0 %v1946
    %1968 = vmatprep.subr.bf16.mxu0 0
    %1969 = vmatpush1.bf16.msra.mxu0 %v1947
    %1970 = vmatprep.subr.bf16.mxu0 0
    %1971 = vmatpush1.bf16.msra.mxu0 %v1948
    %1972 = vmatprep.subr.bf16.mxu0 0
    %1973 = vmatpush1.bf16.msra.mxu0 %v1949
    %1974 = vmatprep.subr.bf16.mxu0 0
    %1975 = vmatpush1.bf16.msra.mxu0 0
    %1976 = vmatprep.subr.bf16.mxu0 0
    %1977 = vmatpush1.bf16.msra.mxu0 0
    %1978 = vmatprep.subr.bf16.mxu0 0
    %1979 = vmatpush1.bf16.msra.mxu0 0
    %1980 = vmatprep.subr.bf16.mxu0 0
    %1981 = vmatpush1.bf16.msra.mxu0 0
    %1982 = vmatprep.subr.bf16.mxu0 0
    %1983 = vmatpush1.bf16.msra.mxu0 0
    %1984 = vmatprep.subr.bf16.mxu0 0
    %1985 = vmatpush1.bf16.msra.mxu0 0
    %1986 = vmatprep.subr.bf16.mxu0 0
    %1987 = vmatpush1.bf16.msra.mxu0 0
    %1988 = vmatprep.subr.bf16.mxu0 0
    %1989 = vmatpush1.bf16.msra.mxu0 0
    %1990 = vmatprep.mubr.bf16.mxu0 0
    %1991 = vmatmul.mubr.bf16.gmra.mrb[0].mxu0 %v288
    %v1992 = vpop.f32.mrb[0].mxu0
    %v1993 = vadd.f32 %v1908, %v1992
    %v1994 = vpop.f32.mrb[0].mxu0
    %v1995 = vpop.f32.mrb[0].mxu0
    %v1996 = vadd.f32 %v1908, %v1995
    %v1997 = vpop.f32.mrb[0].mxu0
    %1998 = vmatprep.mubr.bf16.mxu0 0
    %1999 = vmatmul.mubr.bf16.gmra.mrb[0].mxu0 %v289
    %v2000 = vpop.f32.mrb[0].mxu0
    %v2001 = vadd.f32 %v1908, %v2000
    %v2002 = vpop.f32.mrb[0].mxu0
    %v2003 = vpop.f32.mrb[0].mxu0
    %v2004 = vadd.f32 %v1908, %v2003
    %v2005 = vpop.f32.mrb[0].mxu0
    %2006 = vdwg.mxu0
    %v2007 = vpack.c.bf16 %v1752, %v1749
    %v2008 = vpack.c.bf16 %v1760, %v1757
    %v2009 = vpack.c.bf16 %v1874, %v1871
    %v2010 = vpack.c.bf16 %v1882, %v1879
    %v2012 = vsel %vm654, %v2007, 0
    %v2015 = vsel %vm654, %v2009, 0
    %2017 = vmatprep.subr.bf16.mxu0 0
    %2018 = vmatpush1.bf16.xpose.msra.mxu0 %v2015
    %2019 = vmatprep.subr.bf16.mxu0 0
    %2020 = vmatpush1.bf16.xpose.msra.mxu0 0
    %2021 = vmatprep.subr.bf16.mxu0 0
    %2022 = vmatpush1.bf16.xpose.msra.mxu0 0
    %2023 = vmatprep.subr.bf16.mxu0 0
    %2024 = vmatpush1.bf16.xpose.msra.mxu0 0
    %2025 = vmatprep.subr.bf16.mxu0 0
    %2026 = vmatpush1.bf16.xpose.msra.mxu0 0
    %2027 = vmatprep.subr.bf16.mxu0 0
    %2028 = vmatpush1.bf16.xpose.msra.mxu0 0
    %2029 = vmatprep.subr.bf16.mxu0 0
    %2030 = vmatpush1.bf16.xpose.msra.mxu0 0
    %2031 = vmatprep.subr.bf16.mxu0 0
    %2032 = vmatpush1.bf16.xpose.msra.mxu0 0
    %2033 = vmatprep.subr.bf16.mxu0 0
    %2034 = vmatpush1.bf16.xpose.msra.mxu0 0
    %2035 = vmatprep.subr.bf16.mxu0 0
    %2036 = vmatpush1.bf16.xpose.msra.mxu0 0
    %2037 = vmatprep.subr.bf16.mxu0 0
    %2038 = vmatpush1.bf16.xpose.msra.mxu0 0
    %2039 = vmatprep.subr.bf16.mxu0 0
    %2040 = vmatpush1.bf16.xpose.msra.mxu0 0
    %2041 = vmatprep.subr.bf16.mxu0 0
    %2042 = vmatpush1.bf16.xpose.msra.mxu0 0
    %2043 = vmatprep.subr.bf16.mxu0 0
    %2044 = vmatpush1.bf16.xpose.msra.mxu0 0
    %2045 = vmatprep.subr.bf16.mxu0 0
    %2046 = vmatpush1.bf16.xpose.msra.mxu0 0
    %2047 = vmatprep.subr.bf16.mxu0 0
    %2048 = vmatpush1.bf16.xpose.msra.mxu0 0
    %2049 = vmatprep.mubr.bf16.mxu0 0
    %2050 = vmatmul.mubr.bf16.gmra.mrb[0].mxu0 %v2012
    %v2051 = vpop.f32.mrb[0].mxu0
    %v2052 = vadd.f32 0.0, %v2051
    %v2053 = vpop.f32.mrb[0].mxu0
    %v2054 = vpop.f32.mrb[0].mxu0
    %v2055 = vadd.f32 0.0, %v2054
    %v2056 = vpop.f32.mrb[0].mxu0
    %2057 = vdwg.mxu0
    %v2059 = vsel %vm654, %v2008, 0
    %v2062 = vsel %vm654, %v2010, 0
    %2064 = vmatprep.subr.bf16.mxu0 0
    %2065 = vmatpush1.bf16.xpose.msra.mxu0 %v2062
    %2066 = vmatprep.subr.bf16.mxu0 0
    %2067 = vmatpush1.bf16.xpose.msra.mxu0 0
    %2068 = vmatprep.subr.bf16.mxu0 0
    %2069 = vmatpush1.bf16.xpose.msra.mxu0 0
    %2070 = vmatprep.subr.bf16.mxu0 0
    %2071 = vmatpush1.bf16.xpose.msra.mxu0 0
    %2072 = vmatprep.subr.bf16.mxu0 0
    %2073 = vmatpush1.bf16.xpose.msra.mxu0 0
    %2074 = vmatprep.subr.bf16.mxu0 0
    %2075 = vmatpush1.bf16.xpose.msra.mxu0 0
    %2076 = vmatprep.subr.bf16.mxu0 0
    %2077 = vmatpush1.bf16.xpose.msra.mxu0 0
    %2078 = vmatprep.subr.bf16.mxu0 0
    %2079 = vmatpush1.bf16.xpose.msra.mxu0 0
    %2080 = vmatprep.subr.bf16.mxu0 0
    %2081 = vmatpush1.bf16.xpose.msra.mxu0 0
    %2082 = vmatprep.subr.bf16.mxu0 0
    %2083 = vmatpush1.bf16.xpose.msra.mxu0 0
    %2084 = vmatprep.subr.bf16.mxu0 0
    %2085 = vmatpush1.bf16.xpose.msra.mxu0 0
    %2086 = vmatprep.subr.bf16.mxu0 0
    %2087 = vmatpush1.bf16.xpose.msra.mxu0 0
    %2088 = vmatprep.subr.bf16.mxu0 0
    %2089 = vmatpush1.bf16.xpose.msra.mxu0 0
    %2090 = vmatprep.subr.bf16.mxu0 0
    %2091 = vmatpush1.bf16.xpose.msra.mxu0 0
    %2092 = vmatprep.subr.bf16.mxu0 0
    %2093 = vmatpush1.bf16.xpose.msra.mxu0 0
    %2094 = vmatprep.subr.bf16.mxu0 0
    %2095 = vmatpush1.bf16.xpose.msra.mxu0 0
    %2096 = vmatprep.mubr.bf16.mxu0 0
    %2097 = vmatmul.mubr.bf16.gmra.mrb[0].mxu0 %v2059
    %v2098 = vpop.f32.mrb[0].mxu0
    %v2099 = vadd.f32 0.0, %v2098
    %v2100 = vpop.f32.mrb[0].mxu0
    %v2101 = vpop.f32.mrb[0].mxu0
    %v2102 = vadd.f32 0.0, %v2101
    %v2103 = vpop.f32.mrb[0].mxu0
    %2104 = vdwg.mxu0
    %v2105 = vmul.f32 %v2052, 0.17677669
    %v2106 = vmul.f32 %v2055, 0.17677669
    %v2107 = vmul.f32 %v2099, 0.17677669
    %v2108 = vmul.f32 %v2102, 0.17677669
    %v2109 = vsel %vm753, %v2105, -inf
    %2110 = vmax.xlane.f32.xlu0 %v2109
    %v2111 = vpop.xlane.xlu0 %2110
    %v2112 = vsel %vm753, %v2106, -inf
    %2113 = vmax.xlane.f32.xlu0 %v2112
    %v2114 = vpop.xlane.xlu0 %2113
    %v2115 = vsel %vm753, %v2107, -inf
    %2116 = vmax.xlane.f32.xlu0 %v2115
    %v2117 = vpop.xlane.xlu0 %2116
    %v2118 = vsel %vm753, %v2108, -inf
    %2119 = vmax.xlane.f32.xlu0 %v2118
    %v2120 = vpop.xlane.xlu0 %2119
    %v2121 = vsub.f32 %v2105, %v2111
    %v2122 = vsub.f32 %v2106, %v2114
    %v2123 = vsub.f32 %v2107, %v2117
    %v2124 = vsub.f32 %v2108, %v2120
    %v2125 = vmul.f32 %v2121, 1.442695
    %v2126 = vpow.pop %v2125
    %v2127 = vmul.f32 %v2122, 1.442695
    %v2128 = vpow.pop %v2127
    %v2129 = vmul.f32 %v2123, 1.442695
    %v2130 = vpow.pop %v2129
    %v2131 = vmul.f32 %v2124, 1.442695
    %v2132 = vpow.pop %v2131
    %v2133 = vsel %vm753, %v2126, 0.0
    %2134 = vadd.xlane.f32.xlu0 %v2133
    %v2135 = vpop.xlane.xlu0 %2134
    %v2136 = vsel %vm753, %v2128, 0.0
    %2137 = vadd.xlane.f32.xlu0 %v2136
    %v2138 = vpop.xlane.xlu0 %2137
    %v2139 = vsel %vm753, %v2130, 0.0
    %2140 = vadd.xlane.f32.xlu0 %v2139
    %v2141 = vpop.xlane.xlu0 %2140
    %v2142 = vsel %vm753, %v2132, 0.0
    %2143 = vadd.xlane.f32.xlu0 %v2142
    %v2144 = vpop.xlane.xlu0 %2143
    %v2145 = vrcp.pop %v2135
    %v2146 = vrcp.pop %v2138
    %v2147 = vrcp.pop %v2141
    %v2148 = vrcp.pop %v2144
    %v2149 = vmul.f32 %v2126, %v2145
    %v2150 = vmul.f32 %v2128, %v2146
    %v2151 = vmul.f32 %v2130, %v2147
    %v2152 = vmul.f32 %v2132, %v2148
    %v2153 = vpack.c.bf16 %v2150, %v2149
    %v2154 = vpack.c.bf16 %v2152, %v2151
    %v2155 = vpack.c.bf16 %v1996, %v1993
    %v2156 = vpack.c.bf16 %v2004, %v2001
    %v2158 = vsel %vm753, %v2153, 0
    %2160 = vmatprep.subr.bf16.mxu0 0
    %2161 = vmatpush1.bf16.msra.mxu0 %v2155
    %2162 = vmatprep.subr.bf16.mxu0 0
    %2163 = vmatpush1.bf16.msra.mxu0 0
    %2164 = vmatprep.subr.bf16.mxu0 0
    %2165 = vmatpush1.bf16.msra.mxu0 0
    %2166 = vmatprep.subr.bf16.mxu0 0
    %2167 = vmatpush1.bf16.msra.mxu0 0
    %2168 = vmatprep.subr.bf16.mxu0 0
    %2169 = vmatpush1.bf16.msra.mxu0 0
    %2170 = vmatprep.subr.bf16.mxu0 0
    %2171 = vmatpush1.bf16.msra.mxu0 0
    %2172 = vmatprep.subr.bf16.mxu0 0
    %2173 = vmatpush1.bf16.msra.mxu0 0
    %2174 = vmatprep.subr.bf16.mxu0 0
    %2175 = vmatpush1.bf16.msra.mxu0 0
    %2176 = vmatprep.subr.bf16.mxu0 0
    %2177 = vmatpush1.bf16.msra.mxu0 0
    %2178 = vmatprep.subr.bf16.mxu0 0
    %2179 = vmatpush1.bf16.msra.mxu0 0
    %2180 = vmatprep.subr.bf16.mxu0 0
    %2181 = vmatpush1.bf16.msra.mxu0 0
    %2182 = vmatprep.subr.bf16.mxu0 0
    %2183 = vmatpush1.bf16.msra.mxu0 0
    %2184 = vmatprep.subr.bf16.mxu0 0
    %2185 = vmatpush1.bf16.msra.mxu0 0
    %2186 = vmatprep.subr.bf16.mxu0 0
    %2187 = vmatpush1.bf16.msra.mxu0 0
    %2188 = vmatprep.subr.bf16.mxu0 0
    %2189 = vmatpush1.bf16.msra.mxu0 0
    %2190 = vmatprep.subr.bf16.mxu0 0
    %2191 = vmatpush1.bf16.msra.mxu0 0
    %2192 = vmatprep.mubr.bf16.mxu0 0
    %2193 = vmatmul.mubr.bf16.gmra.mrb[0].mxu0 %v2158
    %v2194 = vpop.f32.mrb[0].mxu0
    %v2195 = vadd.f32 0.0, %v2194
    %v2196 = vpop.f32.mrb[0].mxu0
    %v2197 = vpop.f32.mrb[0].mxu0
    %v2198 = vadd.f32 0.0, %v2197
    %v2199 = vpop.f32.mrb[0].mxu0
    %2200 = vdwg.mxu0
    %v2202 = vsel %vm753, %v2154, 0
    %2204 = vmatprep.subr.bf16.mxu0 0
    %2205 = vmatpush1.bf16.msra.mxu0 %v2156
    %2206 = vmatprep.subr.bf16.mxu0 0
    %2207 = vmatpush1.bf16.msra.mxu0 0
    %2208 = vmatprep.subr.bf16.mxu0 0
    %2209 = vmatpush1.bf16.msra.mxu0 0
    %2210 = vmatprep.subr.bf16.mxu0 0
    %2211 = vmatpush1.bf16.msra.mxu0 0
    %2212 = vmatprep.subr.bf16.mxu0 0
    %2213 = vmatpush1.bf16.msra.mxu0 0
    %2214 = vmatprep.subr.bf16.mxu0 0
    %2215 = vmatpush1.bf16.msra.mxu0 0
    %2216 = vmatprep.subr.bf16.mxu0 0
    %2217 = vmatpush1.bf16.msra.mxu0 0
    %2218 = vmatprep.subr.bf16.mxu0 0
    %2219 = vmatpush1.bf16.msra.mxu0 0
    %2220 = vmatprep.subr.bf16.mxu0 0
    %2221 = vmatpush1.bf16.msra.mxu0 0
    %2222 = vmatprep.subr.bf16.mxu0 0
    %2223 = vmatpush1.bf16.msra.mxu0 0
    %2224 = vmatprep.subr.bf16.mxu0 0
    %2225 = vmatpush1.bf16.msra.mxu0 0
    %2226 = vmatprep.subr.bf16.mxu0 0
    %2227 = vmatpush1.bf16.msra.mxu0 0
    %2228 = vmatprep.subr.bf16.mxu0 0
    %2229 = vmatpush1.bf16.msra.mxu0 0
    %2230 = vmatprep.subr.bf16.mxu0 0
    %2231 = vmatpush1.bf16.msra.mxu0 0
    %2232 = vmatprep.subr.bf16.mxu0 0
    %2233 = vmatpush1.bf16.msra.mxu0 0
    %2234 = vmatprep.subr.bf16.mxu0 0
    %2235 = vmatpush1.bf16.msra.mxu0 0
    %2236 = vmatprep.mubr.bf16.mxu0 0
    %2237 = vmatmul.mubr.bf16.gmra.mrb[0].mxu0 %v2202
    %v2238 = vpop.f32.mrb[0].mxu0
    %v2239 = vadd.f32 0.0, %v2238
    %v2240 = vpop.f32.mrb[0].mxu0
    %v2241 = vpop.f32.mrb[0].mxu0
    %v2242 = vadd.f32 0.0, %v2241
    %v2243 = vpop.f32.mrb[0].mxu0
    %2244 = vdwg.mxu0
    %v2245 = vpack.c.bf16 %v2198, %v2195
    %v2246 = vpack.c.bf16 %v2242, %v2239
    %s2247 = scalar_lea.vmem %s12, 32
    %v2248 = vld [vmem:[%s2247] sm:$0xf]
    %v2249 = vld [vmem:[%s2247 + $0x4] sm:$0xf]
    %v2250 = vld [vmem:[%s2247 + $0x8] sm:$0xf]
    %v2251 = vld [vmem:[%s2247 + $0xc] sm:$0xf]
    %v2256 = vunpack.c.l.b16 %v2248
    %v2257 = vunpack.c.l.b16 %v2249
    %v2258 = vunpack.c.l.b16 %v2250
    %v2259 = vunpack.c.l.b16 %v2251
    %v2260 = vpack.c.b16 %v2257, %v2256
    %v2261 = vpack.c.b16 %v2259, %v2258
    %v2265 = vsel %vm654, %v2245, 0
    %v2268 = vsel %vm654, %v2246, 0
    %2270 = vmatprep.subr.bf16.mxu0 0
    %2271 = vmatpush1.bf16.msra.mxu0 %v2260
    %2272 = vmatprep.subr.bf16.mxu0 0
    %2273 = vmatpush1.bf16.msra.mxu0 %v2261
    %2274 = vmatprep.subr.bf16.mxu0 0
    %2275 = vmatpush1.bf16.msra.mxu0 0
    %2276 = vmatprep.subr.bf16.mxu0 0
    %2277 = vmatpush1.bf16.msra.mxu0 0
    %2278 = vmatprep.subr.bf16.mxu0 0
    %2279 = vmatpush1.bf16.msra.mxu0 0
    %2280 = vmatprep.subr.bf16.mxu0 0
    %2281 = vmatpush1.bf16.msra.mxu0 0
    %2282 = vmatprep.subr.bf16.mxu0 0
    %2283 = vmatpush1.bf16.msra.mxu0 0
    %2284 = vmatprep.subr.bf16.mxu0 0
    %2285 = vmatpush1.bf16.msra.mxu0 0
    %2286 = vmatprep.subr.bf16.mxu0 0
    %2287 = vmatpush1.bf16.msra.mxu0 0
    %2288 = vmatprep.subr.bf16.mxu0 0
    %2289 = vmatpush1.bf16.msra.mxu0 0
    %2290 = vmatprep.subr.bf16.mxu0 0
    %2291 = vmatpush1.bf16.msra.mxu0 0
    %2292 = vmatprep.subr.bf16.mxu0 0
    %2293 = vmatpush1.bf16.msra.mxu0 0
    %2294 = vmatprep.subr.bf16.mxu0 0
    %2295 = vmatpush1.bf16.msra.mxu0 0
    %2296 = vmatprep.subr.bf16.mxu0 0
    %2297 = vmatpush1.bf16.msra.mxu0 0
    %2298 = vmatprep.subr.bf16.mxu0 0
    %2299 = vmatpush1.bf16.msra.mxu0 0
    %2300 = vmatprep.subr.bf16.mxu0 0
    %2301 = vmatpush1.bf16.msra.mxu0 0
    %2302 = vmatprep.mubr.bf16.mxu0 0
    %2303 = vmatmul.mubr.bf16.gmra.mrb[0].mxu0 %v2265
    %v2304 = vpop.f32.mrb[0].mxu0
    %v2305 = vadd.f32 0.0, %v2304
    %v2306 = vpop.f32.mrb[0].mxu0
    %v2307 = vpop.f32.mrb[0].mxu0
    %v2308 = vadd.f32 0.0, %v2307
    %v2309 = vpop.f32.mrb[0].mxu0
    %2310 = vmatprep.mubr.bf16.mxu0 0
    %2311 = vmatmul.mubr.bf16.gmra.mrb[0].mxu0 %v2268
    %v2312 = vpop.f32.mrb[0].mxu0
    %v2313 = vadd.f32 0.0, %v2312
    %v2314 = vpop.f32.mrb[0].mxu0
    %v2315 = vpop.f32.mrb[0].mxu0
    %v2316 = vadd.f32 0.0, %v2315
    %v2317 = vpop.f32.mrb[0].mxu0
    %2318 = vdwg.mxu0
    %v2319 = vadd.f32 %v1627, %v2305
    %v2320 = vadd.f32 %v1630, %v2308
    %v2321 = vadd.f32 %v1635, %v2313
    %v2322 = vadd.f32 %v1638, %v2316
    %v2323 = vadd.f32 %v214, %v2319
    %v2324 = vadd.f32 %v215, %v2320
    %v2325 = vadd.f32 %v216, %v2321
    %v2326 = vadd.f32 %v217, %v2322
    %v2327 = vld [vmem:[%s13] sm:$0x1]
    %v2329 = vlaneseq
    %v2330 = vshrl.u32 %v2329, 7
    %v2331 = vsub.s32 0, %v2330
    %v2332 = vrot.slane %v2327, %v2331
    %v2334 = vadd.f32 %v2323, %v2332
    %v2335 = vadd.f32 %v2324, %v2332
    %v2336 = vadd.f32 %v2325, %v2332
    %v2337 = vadd.f32 %v2326, %v2332
    %v2338 = vld [vmem:[%s14] sm:$0x1]
    %v2339 = vld [vmem:[%s15] sm:$0x1]
    %2340 = vadd.xlane.f32.xlu0 %v2334
    %v2341 = vpop.xlane.xlu0 %2340
    %2342 = vadd.xlane.f32.xlu0 %v2335
    %v2343 = vpop.xlane.xlu0 %2342
    %2344 = vadd.xlane.f32.xlu0 %v2336
    %v2345 = vpop.xlane.xlu0 %2344
    %2346 = vadd.xlane.f32.xlu0 %v2337
    %v2347 = vpop.xlane.xlu0 %2346
    %v2348 = vmul.f32 %v2341, 0.010416667
    %v2349 = vmul.f32 %v2343, 0.010416667
    %v2350 = vmul.f32 %v2345, 0.010416667
    %v2351 = vmul.f32 %v2347, 0.010416667
    %v2352 = vsub.f32 %v2334, %v2348
    %v2353 = vsub.f32 %v2335, %v2349
    %v2354 = vsub.f32 %v2336, %v2350
    %v2355 = vsub.f32 %v2337, %v2351
    %v2356 = vmul.f32 %v2352, %v83
    %v2357 = vmul.f32 %v2353, %v83
    %v2358 = vmul.f32 %v2354, %v83
    %v2359 = vmul.f32 %v2355, %v83
    %v2360 = vmul.f32 %v2356, %v2356
    %v2361 = vmul.f32 %v2357, %v2357
    %v2362 = vmul.f32 %v2358, %v2358
    %v2363 = vmul.f32 %v2359, %v2359
    %2364 = vadd.xlane.f32.xlu0 %v2360
    %v2365 = vpop.xlane.xlu0 %2364
    %2366 = vadd.xlane.f32.xlu0 %v2361
    %v2367 = vpop.xlane.xlu0 %2366
    %2368 = vadd.xlane.f32.xlu0 %v2362
    %v2369 = vpop.xlane.xlu0 %2368
    %2370 = vadd.xlane.f32.xlu0 %v2363
    %v2371 = vpop.xlane.xlu0 %2370
    %v2372 = vmul.f32 %v2365, 0.010416667
    %v2373 = vmul.f32 %v2367, 0.010416667
    %v2374 = vmul.f32 %v2369, 0.010416667
    %v2375 = vmul.f32 %v2371, 0.010416667
    %v2376 = vadd.f32 %v2372, 1e-05
    %v2377 = vadd.f32 %v2373, 1e-05
    %v2378 = vadd.f32 %v2374, 1e-05
    %v2379 = vadd.f32 %v2375, 1e-05
    %v2380 = vrsqrt.pop %v2376
    %v2381 = vrsqrt.pop %v2377
    %v2382 = vrsqrt.pop %v2378
    %v2383 = vrsqrt.pop %v2379
    %v2384 = vmul.f32 %v2352, %v2380
    %v2385 = vmul.f32 %v2353, %v2381
    %v2386 = vmul.f32 %v2354, %v2382
    %v2387 = vmul.f32 %v2355, %v2383
    %v2389 = vlaneseq
    %v2390 = vshrl.u32 %v2389, 7
    %v2391 = vsub.s32 0, %v2390
    %v2392 = vrot.slane %v2338, %v2391
    %v2394 = vmul.f32 %v2384, %v2392
    %v2395 = vmul.f32 %v2385, %v2392
    %v2396 = vmul.f32 %v2386, %v2392
    %v2397 = vmul.f32 %v2387, %v2392
    %v2399 = vlaneseq
    %v2400 = vshrl.u32 %v2399, 7
    %v2401 = vsub.s32 0, %v2400
    %v2402 = vrot.slane %v2339, %v2401
    %v2404 = vadd.f32 %v2394, %v2402
    %v2405 = vadd.f32 %v2395, %v2402
    %v2406 = vadd.f32 %v2396, %v2402
    %v2407 = vadd.f32 %v2397, %v2402
    %v2408 = vld [vmem:[%s16] sm:$0xff]
    %v2409 = vld [vmem:[%s16 + $0x8] sm:$0xf]
    %v2410 = vld [vmem:[%s16 + $0xc] sm:$0xff]
    %v2411 = vld [vmem:[%s16 + $0x14] sm:$0xf]
    %v2412 = vld [vmem:[%s16 + $0x18] sm:$0xff]
    %v2413 = vld [vmem:[%s16 + $0x20] sm:$0xf]
    %v2414 = vld [vmem:[%s16 + $0x24] sm:$0xff]
    %v2415 = vld [vmem:[%s16 + $0x2c] sm:$0xf]
    %v2416 = vld [vmem:[%s16 + $0x30] sm:$0xff]
    %v2417 = vld [vmem:[%s16 + $0x38] sm:$0xf]
    %v2418 = vld [vmem:[%s16 + $0x3c] sm:$0xff]
    %v2419 = vld [vmem:[%s16 + $0x44] sm:$0xf]
    %v2420 = vld [vmem:[%s16 + $0x48] sm:$0xff]
    %v2421 = vld [vmem:[%s16 + $0x50] sm:$0xf]
    %v2422 = vld [vmem:[%s16 + $0x54] sm:$0xff]
    %v2423 = vld [vmem:[%s16 + $0x5c] sm:$0xf]
    %v2424 = vld [vmem:[%s16 + $0x60] sm:$0xff]
    %v2425 = vld [vmem:[%s16 + $0x68] sm:$0xf]
    %v2426 = vld [vmem:[%s16 + $0x6c] sm:$0xff]
    %v2427 = vld [vmem:[%s16 + $0x74] sm:$0xf]
    %v2428 = vld [vmem:[%s16 + $0x78] sm:$0xff]
    %v2429 = vld [vmem:[%s16 + $0x80] sm:$0xf]
    %v2430 = vld [vmem:[%s16 + $0x84] sm:$0xff]
    %v2431 = vld [vmem:[%s16 + $0x8c] sm:$0xf]
    %v2432 = vld [vmem:[%s16 + $0x90] sm:$0xff]
    %v2433 = vld [vmem:[%s16 + $0x98] sm:$0xf]
    %v2434 = vld [vmem:[%s16 + $0x9c] sm:$0xff]
    %v2435 = vld [vmem:[%s16 + $0xa4] sm:$0xf]
    %v2436 = vld [vmem:[%s16 + $0xa8] sm:$0xff]
    %v2437 = vld [vmem:[%s16 + $0xb0] sm:$0xf]
    %v2438 = vld [vmem:[%s16 + $0xb4] sm:$0xff]
    %v2439 = vld [vmem:[%s16 + $0xbc] sm:$0xf]
    %v2440 = vpack.c.bf16 %v2405, %v2404
    %v2441 = vpack.c.bf16 %v2407, %v2406
    %v2442 = vld [vmem:[%s17] sm:$0x7]
    %v2444 = vlaneseq
    %v2445 = vshrl.u32 %v2444, 7
    %v2446 = vsub.s32 0, %v2445
    %v2447 = vrot.slane %v2442, %v2446
    %v2448 = vlaneseq
    %v2449 = vshrl.u32 %v2448, 7
    %v2450 = vsub.s32 1, %v2449
    %v2451 = vrot.slane %v2442, %v2450
    %v2452 = vlaneseq
    %v2453 = vshrl.u32 %v2452, 7
    %v2454 = vsub.s32 2, %v2453
    %v2455 = vrot.slane %v2442, %v2454
    %v2491 = vunpack.c.l.b16 %v2408
    %v2492 = vunpack.c.h.b16 %v2408
    %v2493 = vunpack.c.l.b16 %v2409
    %v2494 = vunpack.c.l.b16 %v2410
    %v2495 = vunpack.c.h.b16 %v2410
    %v2496 = vunpack.c.l.b16 %v2411
    %v2497 = vunpack.c.l.b16 %v2412
    %v2498 = vunpack.c.h.b16 %v2412
    %v2499 = vunpack.c.l.b16 %v2413
    %v2500 = vunpack.c.l.b16 %v2414
    %v2501 = vunpack.c.h.b16 %v2414
    %v2502 = vunpack.c.l.b16 %v2415
    %v2503 = vunpack.c.l.b16 %v2416
    %v2504 = vunpack.c.h.b16 %v2416
    %v2505 = vunpack.c.l.b16 %v2417
    %v2506 = vunpack.c.l.b16 %v2418
    %v2507 = vunpack.c.h.b16 %v2418
    %v2508 = vunpack.c.l.b16 %v2419
    %v2509 = vunpack.c.l.b16 %v2420
    %v2510 = vunpack.c.h.b16 %v2420
    %v2511 = vunpack.c.l.b16 %v2421
    %v2512 = vunpack.c.l.b16 %v2422
    %v2513 = vunpack.c.h.b16 %v2422
    %v2514 = vunpack.c.l.b16 %v2423
    %v2515 = vunpack.c.l.b16 %v2424
    %v2516 = vunpack.c.h.b16 %v2424
    %v2517 = vunpack.c.l.b16 %v2425
    %v2518 = vunpack.c.l.b16 %v2426
    %v2519 = vunpack.c.h.b16 %v2426
    %v2520 = vunpack.c.l.b16 %v2427
    %v2521 = vunpack.c.l.b16 %v2428
    %v2522 = vunpack.c.h.b16 %v2428
    %v2523 = vunpack.c.l.b16 %v2429
    %v2524 = vunpack.c.l.b16 %v2430
    %v2525 = vunpack.c.h.b16 %v2430
    %v2526 = vunpack.c.l.b16 %v2431
    %v2527 = vunpack.c.l.b16 %v2432
    %v2528 = vunpack.c.h.b16 %v2432
    %v2529 = vunpack.c.l.b16 %v2433
    %v2530 = vunpack.c.l.b16 %v2434
    %v2531 = vunpack.c.h.b16 %v2434
    %v2532 = vunpack.c.l.b16 %v2435
    %v2533 = vunpack.c.l.b16 %v2436
    %v2534 = vunpack.c.h.b16 %v2436
    %v2535 = vunpack.c.l.b16 %v2437
    %v2536 = vunpack.c.l.b16 %v2438
    %v2537 = vunpack.c.h.b16 %v2438
    %v2538 = vunpack.c.l.b16 %v2439
    %v2539 = vpack.c.b16 %v2494, %v2491
    %v2540 = vpack.c.b16 %v2495, %v2492
    %v2541 = vpack.c.b16 %v2496, %v2493
    %v2542 = vpack.c.b16 %v2500, %v2497
    %v2543 = vpack.c.b16 %v2501, %v2498
    %v2544 = vpack.c.b16 %v2502, %v2499
    %v2545 = vpack.c.b16 %v2506, %v2503
    %v2546 = vpack.c.b16 %v2507, %v2504
    %v2547 = vpack.c.b16 %v2508, %v2505
    %v2548 = vpack.c.b16 %v2512, %v2509
    %v2549 = vpack.c.b16 %v2513, %v2510
    %v2550 = vpack.c.b16 %v2514, %v2511
    %v2551 = vpack.c.b16 %v2518, %v2515
    %v2552 = vpack.c.b16 %v2519, %v2516
    %v2553 = vpack.c.b16 %v2520, %v2517
    %v2554 = vpack.c.b16 %v2524, %v2521
    %v2555 = vpack.c.b16 %v2525, %v2522
    %v2556 = vpack.c.b16 %v2526, %v2523
    %v2557 = vpack.c.b16 %v2530, %v2527
    %v2558 = vpack.c.b16 %v2531, %v2528
    %v2559 = vpack.c.b16 %v2532, %v2529
    %v2560 = vpack.c.b16 %v2536, %v2533
    %v2561 = vpack.c.b16 %v2537, %v2534
    %v2562 = vpack.c.b16 %v2538, %v2535
    %2587 = vmatprep.subr.bf16.mxu0 %v2540
    %2588 = vmatpush1.bf16.msra.mxu0 %v2539
    %2589 = vmatprep.subr.bf16.mxu0 %v2543
    %2590 = vmatpush1.bf16.msra.mxu0 %v2542
    %2591 = vmatprep.subr.bf16.mxu0 %v2546
    %2592 = vmatpush1.bf16.msra.mxu0 %v2545
    %2593 = vmatprep.subr.bf16.mxu0 %v2549
    %2594 = vmatpush1.bf16.msra.mxu0 %v2548
    %2595 = vmatprep.subr.bf16.mxu0 %v2552
    %2596 = vmatpush1.bf16.msra.mxu0 %v2551
    %2597 = vmatprep.subr.bf16.mxu0 %v2555
    %2598 = vmatpush1.bf16.msra.mxu0 %v2554
    %2599 = vmatprep.subr.bf16.mxu0 %v2558
    %2600 = vmatpush1.bf16.msra.mxu0 %v2557
    %2601 = vmatprep.subr.bf16.mxu0 %v2561
    %2602 = vmatpush1.bf16.msra.mxu0 %v2560
    %2603 = vmatprep.subr.bf16.mxu0 0
    %2604 = vmatpush1.bf16.msra.mxu0 0
    %2605 = vmatprep.subr.bf16.mxu0 0
    %2606 = vmatpush1.bf16.msra.mxu0 0
    %2607 = vmatprep.subr.bf16.mxu0 0
    %2608 = vmatpush1.bf16.msra.mxu0 0
    %2609 = vmatprep.subr.bf16.mxu0 0
    %2610 = vmatpush1.bf16.msra.mxu0 0
    %2611 = vmatprep.subr.bf16.mxu0 0
    %2612 = vmatpush1.bf16.msra.mxu0 0
    %2613 = vmatprep.subr.bf16.mxu0 0
    %2614 = vmatpush1.bf16.msra.mxu0 0
    %2615 = vmatprep.subr.bf16.mxu0 0
    %2616 = vmatpush1.bf16.msra.mxu0 0
    %2617 = vmatprep.subr.bf16.mxu0 0
    %2618 = vmatpush1.bf16.msra.mxu0 0
    %2619 = vmatprep.mubr.bf16.mxu0 0
    %2620 = vmatmul.mubr.bf16.gmra.mrb[0].mxu0 %v2440
    %v2621 = vpop.f32.mrb[0].mxu0
    %v2622 = vadd.f32 %v2447, %v2621
    %v2623 = vpop.f32.mrb[0].mxu0
    %v2624 = vadd.f32 %v2451, %v2623
    %v2625 = vpop.f32.mrb[0].mxu0
    %v2626 = vadd.f32 %v2447, %v2625
    %v2627 = vpop.f32.mrb[0].mxu0
    %v2628 = vadd.f32 %v2451, %v2627
    %2629 = vmatprep.mubr.bf16.mxu0 0
    %2630 = vmatmul.mubr.bf16.gmra.mrb[0].mxu0 %v2441
    %v2631 = vpop.f32.mrb[0].mxu0
    %v2632 = vadd.f32 %v2447, %v2631
    %v2633 = vpop.f32.mrb[0].mxu0
    %v2634 = vadd.f32 %v2451, %v2633
    %v2635 = vpop.f32.mrb[0].mxu0
    %v2636 = vadd.f32 %v2447, %v2635
    %v2637 = vpop.f32.mrb[0].mxu0
    %v2638 = vadd.f32 %v2451, %v2637
    %2639 = vdwg.mxu0
    %2640 = vmatprep.subr.bf16.mxu0 0
    %2641 = vmatpush1.bf16.msra.mxu0 %v2541
    %2642 = vmatprep.subr.bf16.mxu0 0
    %2643 = vmatpush1.bf16.msra.mxu0 %v2544
    %2644 = vmatprep.subr.bf16.mxu0 0
    %2645 = vmatpush1.bf16.msra.mxu0 %v2547
    %2646 = vmatprep.subr.bf16.mxu0 0
    %2647 = vmatpush1.bf16.msra.mxu0 %v2550
    %2648 = vmatprep.subr.bf16.mxu0 0
    %2649 = vmatpush1.bf16.msra.mxu0 %v2553
    %2650 = vmatprep.subr.bf16.mxu0 0
    %2651 = vmatpush1.bf16.msra.mxu0 %v2556
    %2652 = vmatprep.subr.bf16.mxu0 0
    %2653 = vmatpush1.bf16.msra.mxu0 %v2559
    %2654 = vmatprep.subr.bf16.mxu0 0
    %2655 = vmatpush1.bf16.msra.mxu0 %v2562
    %2656 = vmatprep.subr.bf16.mxu0 0
    %2657 = vmatpush1.bf16.msra.mxu0 0
    %2658 = vmatprep.subr.bf16.mxu0 0
    %2659 = vmatpush1.bf16.msra.mxu0 0
    %2660 = vmatprep.subr.bf16.mxu0 0
    %2661 = vmatpush1.bf16.msra.mxu0 0
    %2662 = vmatprep.subr.bf16.mxu0 0
    %2663 = vmatpush1.bf16.msra.mxu0 0
    %2664 = vmatprep.subr.bf16.mxu0 0
    %2665 = vmatpush1.bf16.msra.mxu0 0
    %2666 = vmatprep.subr.bf16.mxu0 0
    %2667 = vmatpush1.bf16.msra.mxu0 0
    %2668 = vmatprep.subr.bf16.mxu0 0
    %2669 = vmatpush1.bf16.msra.mxu0 0
    %2670 = vmatprep.subr.bf16.mxu0 0
    %2671 = vmatpush1.bf16.msra.mxu0 0
    %2672 = vmatprep.mubr.bf16.mxu0 0
    %2673 = vmatmul.mubr.bf16.gmra.mrb[0].mxu0 %v2440
    %v2674 = vpop.f32.mrb[0].mxu0
    %v2675 = vadd.f32 %v2455, %v2674
    %v2676 = vpop.f32.mrb[0].mxu0
    %v2677 = vpop.f32.mrb[0].mxu0
    %v2678 = vadd.f32 %v2455, %v2677
    %v2679 = vpop.f32.mrb[0].mxu0
    %2680 = vmatprep.mubr.bf16.mxu0 0
    %2681 = vmatmul.mubr.bf16.gmra.mrb[0].mxu0 %v2441
    %v2682 = vpop.f32.mrb[0].mxu0
    %v2683 = vadd.f32 %v2455, %v2682
    %v2684 = vpop.f32.mrb[0].mxu0
    %v2685 = vpop.f32.mrb[0].mxu0
    %v2686 = vadd.f32 %v2455, %v2685
    %v2687 = vpop.f32.mrb[0].mxu0
    %2688 = vdwg.mxu0
    %v2689 = vmul.f32 %v2622, 0.5
    %v2690 = vmul.f32 %v2624, 0.5
    %v2691 = vmul.f32 %v2675, 0.5
    %v2692 = vmul.f32 %v2626, 0.5
    %v2693 = vmul.f32 %v2628, 0.5
    %v2694 = vmul.f32 %v2678, 0.5
    %v2695 = vmul.f32 %v2632, 0.5
    %v2696 = vmul.f32 %v2634, 0.5
    %v2697 = vmul.f32 %v2683, 0.5
    %v2698 = vmul.f32 %v2636, 0.5
    %v2699 = vmul.f32 %v2638, 0.5
    %v2700 = vmul.f32 %v2686, 0.5
    %v2701 = vmul.f32 %v2622, 0.044715
    %v2702 = vmul.f32 %v2624, 0.044715
    %v2703 = vmul.f32 %v2675, 0.044715
    %v2704 = vmul.f32 %v2626, 0.044715
    %v2705 = vmul.f32 %v2628, 0.044715
    %v2706 = vmul.f32 %v2678, 0.044715
    %v2707 = vmul.f32 %v2632, 0.044715
    %v2708 = vmul.f32 %v2634, 0.044715
    %v2709 = vmul.f32 %v2683, 0.044715
    %v2710 = vmul.f32 %v2636, 0.044715
    %v2711 = vmul.f32 %v2638, 0.044715
    %v2712 = vmul.f32 %v2686, 0.044715
    %v2713 = vmul.f32 %v2701, %v2622
    %v2714 = vmul.f32 %v2702, %v2624
    %v2715 = vmul.f32 %v2703, %v2675
    %v2716 = vmul.f32 %v2704, %v2626
    %v2717 = vmul.f32 %v2705, %v2628
    %v2718 = vmul.f32 %v2706, %v2678
    %v2719 = vmul.f32 %v2707, %v2632
    %v2720 = vmul.f32 %v2708, %v2634
    %v2721 = vmul.f32 %v2709, %v2683
    %v2722 = vmul.f32 %v2710, %v2636
    %v2723 = vmul.f32 %v2711, %v2638
    %v2724 = vmul.f32 %v2712, %v2686
    %v2725 = vmul.f32 %v2713, %v2622
    %v2726 = vmul.f32 %v2714, %v2624
    %v2727 = vmul.f32 %v2715, %v2675
    %v2728 = vmul.f32 %v2716, %v2626
    %v2729 = vmul.f32 %v2717, %v2628
    %v2730 = vmul.f32 %v2718, %v2678
    %v2731 = vmul.f32 %v2719, %v2632
    %v2732 = vmul.f32 %v2720, %v2634
    %v2733 = vmul.f32 %v2721, %v2683
    %v2734 = vmul.f32 %v2722, %v2636
    %v2735 = vmul.f32 %v2723, %v2638
    %v2736 = vmul.f32 %v2724, %v2686
    %v2737 = vadd.f32 %v2622, %v2725
    %v2738 = vadd.f32 %v2624, %v2726
    %v2739 = vadd.f32 %v2675, %v2727
    %v2740 = vadd.f32 %v2626, %v2728
    %v2741 = vadd.f32 %v2628, %v2729
    %v2742 = vadd.f32 %v2678, %v2730
    %v2743 = vadd.f32 %v2632, %v2731
    %v2744 = vadd.f32 %v2634, %v2732
    %v2745 = vadd.f32 %v2683, %v2733
    %v2746 = vadd.f32 %v2636, %v2734
    %v2747 = vadd.f32 %v2638, %v2735
    %v2748 = vadd.f32 %v2686, %v2736
    %v2749 = vmul.f32 %v2737, 0.7978846
    %v2750 = vmul.f32 %v2738, 0.7978846
    %v2751 = vmul.f32 %v2739, 0.7978846
    %v2752 = vmul.f32 %v2740, 0.7978846
    %v2753 = vmul.f32 %v2741, 0.7978846
    %v2754 = vmul.f32 %v2742, 0.7978846
    %v2755 = vmul.f32 %v2743, 0.7978846
    %v2756 = vmul.f32 %v2744, 0.7978846
    %v2757 = vmul.f32 %v2745, 0.7978846
    %v2758 = vmul.f32 %v2746, 0.7978846
    %v2759 = vmul.f32 %v2747, 0.7978846
    %v2760 = vmul.f32 %v2748, 0.7978846
    %v2761 = vtanh.pop %v2749
    %v2762 = vtanh.pop %v2750
    %v2763 = vtanh.pop %v2751
    %v2764 = vtanh.pop %v2752
    %v2765 = vtanh.pop %v2753
    %v2766 = vtanh.pop %v2754
    %v2767 = vtanh.pop %v2755
    %v2768 = vtanh.pop %v2756
    %v2769 = vtanh.pop %v2757
    %v2770 = vtanh.pop %v2758
    %v2771 = vtanh.pop %v2759
    %v2772 = vtanh.pop %v2760
    %v2773 = vadd.f32 %v2761, 1.0
    %v2774 = vadd.f32 %v2762, 1.0
    %v2775 = vadd.f32 %v2763, 1.0
    %v2776 = vadd.f32 %v2764, 1.0
    %v2777 = vadd.f32 %v2765, 1.0
    %v2778 = vadd.f32 %v2766, 1.0
    %v2779 = vadd.f32 %v2767, 1.0
    %v2780 = vadd.f32 %v2768, 1.0
    %v2781 = vadd.f32 %v2769, 1.0
    %v2782 = vadd.f32 %v2770, 1.0
    %v2783 = vadd.f32 %v2771, 1.0
    %v2784 = vadd.f32 %v2772, 1.0
    %v2785 = vmul.f32 %v2689, %v2773
    %v2786 = vmul.f32 %v2690, %v2774
    %v2787 = vmul.f32 %v2691, %v2775
    %v2788 = vmul.f32 %v2692, %v2776
    %v2789 = vmul.f32 %v2693, %v2777
    %v2790 = vmul.f32 %v2694, %v2778
    %v2791 = vmul.f32 %v2695, %v2779
    %v2792 = vmul.f32 %v2696, %v2780
    %v2793 = vmul.f32 %v2697, %v2781
    %v2794 = vmul.f32 %v2698, %v2782
    %v2795 = vmul.f32 %v2699, %v2783
    %v2796 = vmul.f32 %v2700, %v2784
    %v2797 = vld [vmem:[%s18] sm:$0xf]
    %v2798 = vld [vmem:[%s18 + $0x4] sm:$0xf]
    %v2799 = vld [vmem:[%s18 + $0x8] sm:$0xf]
    %v2800 = vld [vmem:[%s18 + $0xc] sm:$0xf]
    %v2801 = vld [vmem:[%s18 + $0x10] sm:$0xf]
    %v2802 = vld [vmem:[%s18 + $0x14] sm:$0xf]
    %v2803 = vld [vmem:[%s18 + $0x18] sm:$0xf]
    %v2804 = vld [vmem:[%s18 + $0x1c] sm:$0xf]
    %v2805 = vld [vmem:[%s18 + $0x20] sm:$0xf]
    %v2806 = vld [vmem:[%s18 + $0x24] sm:$0xf]
    %v2807 = vld [vmem:[%s18 + $0x28] sm:$0xf]
    %v2808 = vld [vmem:[%s18 + $0x2c] sm:$0xf]
    %v2809 = vld [vmem:[%s18 + $0x30] sm:$0xf]
    %v2810 = vld [vmem:[%s18 + $0x34] sm:$0xf]
    %v2811 = vld [vmem:[%s18 + $0x38] sm:$0xf]
    %v2812 = vld [vmem:[%s18 + $0x3c] sm:$0xf]
    %v2813 = vld [vmem:[%s18 + $0x40] sm:$0xf]
    %v2814 = vld [vmem:[%s18 + $0x44] sm:$0xf]
    %v2815 = vld [vmem:[%s18 + $0x48] sm:$0xf]
    %v2816 = vld [vmem:[%s18 + $0x4c] sm:$0xf]
    %v2817 = vld [vmem:[%s18 + $0x50] sm:$0xf]
    %v2818 = vld [vmem:[%s18 + $0x54] sm:$0xf]
    %v2819 = vld [vmem:[%s18 + $0x58] sm:$0xf]
    %v2820 = vld [vmem:[%s18 + $0x5c] sm:$0xf]
    %v2821 = vld [vmem:[%s18 + $0x60] sm:$0xf]
    %v2822 = vld [vmem:[%s18 + $0x64] sm:$0xf]
    %v2823 = vld [vmem:[%s18 + $0x68] sm:$0xf]
    %v2824 = vld [vmem:[%s18 + $0x6c] sm:$0xf]
    %v2825 = vld [vmem:[%s18 + $0x70] sm:$0xf]
    %v2826 = vld [vmem:[%s18 + $0x74] sm:$0xf]
    %v2827 = vld [vmem:[%s18 + $0x78] sm:$0xf]
    %v2828 = vld [vmem:[%s18 + $0x7c] sm:$0xf]
    %v2829 = vld [vmem:[%s18 + $0x80] sm:$0xf]
    %v2830 = vld [vmem:[%s18 + $0x84] sm:$0xf]
    %v2831 = vld [vmem:[%s18 + $0x88] sm:$0xf]
    %v2832 = vld [vmem:[%s18 + $0x8c] sm:$0xf]
    %v2833 = vld [vmem:[%s18 + $0x90] sm:$0xf]
    %v2834 = vld [vmem:[%s18 + $0x94] sm:$0xf]
    %v2835 = vld [vmem:[%s18 + $0x98] sm:$0xf]
    %v2836 = vld [vmem:[%s18 + $0x9c] sm:$0xf]
    %v2837 = vld [vmem:[%s18 + $0xa0] sm:$0xf]
    %v2838 = vld [vmem:[%s18 + $0xa4] sm:$0xf]
    %v2839 = vld [vmem:[%s18 + $0xa8] sm:$0xf]
    %v2840 = vld [vmem:[%s18 + $0xac] sm:$0xf]
    %v2841 = vld [vmem:[%s18 + $0xb0] sm:$0xf]
    %v2842 = vld [vmem:[%s18 + $0xb4] sm:$0xf]
    %v2843 = vld [vmem:[%s18 + $0xb8] sm:$0xf]
    %v2844 = vld [vmem:[%s18 + $0xbc] sm:$0xf]
    %v2845 = vpack.c.bf16 %v2788, %v2785
    %v2846 = vpack.c.bf16 %v2789, %v2786
    %v2847 = vpack.c.bf16 %v2790, %v2787
    %v2848 = vpack.c.bf16 %v2794, %v2791
    %v2849 = vpack.c.bf16 %v2795, %v2792
    %v2850 = vpack.c.bf16 %v2796, %v2793
    %v2899 = vunpack.c.l.b16 %v2797
    %v2900 = vunpack.c.l.b16 %v2798
    %v2901 = vunpack.c.l.b16 %v2799
    %v2902 = vunpack.c.l.b16 %v2800
    %v2903 = vunpack.c.l.b16 %v2801
    %v2904 = vunpack.c.l.b16 %v2802
    %v2905 = vunpack.c.l.b16 %v2803
    %v2906 = vunpack.c.l.b16 %v2804
    %v2907 = vunpack.c.l.b16 %v2805
    %v2908 = vunpack.c.l.b16 %v2806
    %v2909 = vunpack.c.l.b16 %v2807
    %v2910 = vunpack.c.l.b16 %v2808
    %v2911 = vunpack.c.l.b16 %v2809
    %v2912 = vunpack.c.l.b16 %v2810
    %v2913 = vunpack.c.l.b16 %v2811
    %v2914 = vunpack.c.l.b16 %v2812
    %v2915 = vunpack.c.l.b16 %v2813
    %v2916 = vunpack.c.l.b16 %v2814
    %v2917 = vunpack.c.l.b16 %v2815
    %v2918 = vunpack.c.l.b16 %v2816
    %v2919 = vunpack.c.l.b16 %v2817
    %v2920 = vunpack.c.l.b16 %v2818
    %v2921 = vunpack.c.l.b16 %v2819
    %v2922 = vunpack.c.l.b16 %v2820
    %v2923 = vunpack.c.l.b16 %v2821
    %v2924 = vunpack.c.l.b16 %v2822
    %v2925 = vunpack.c.l.b16 %v2823
    %v2926 = vunpack.c.l.b16 %v2824
    %v2927 = vunpack.c.l.b16 %v2825
    %v2928 = vunpack.c.l.b16 %v2826
    %v2929 = vunpack.c.l.b16 %v2827
    %v2930 = vunpack.c.l.b16 %v2828
    %v2931 = vunpack.c.l.b16 %v2829
    %v2932 = vunpack.c.l.b16 %v2830
    %v2933 = vunpack.c.l.b16 %v2831
    %v2934 = vunpack.c.l.b16 %v2832
    %v2935 = vunpack.c.l.b16 %v2833
    %v2936 = vunpack.c.l.b16 %v2834
    %v2937 = vunpack.c.l.b16 %v2835
    %v2938 = vunpack.c.l.b16 %v2836
    %v2939 = vunpack.c.l.b16 %v2837
    %v2940 = vunpack.c.l.b16 %v2838
    %v2941 = vunpack.c.l.b16 %v2839
    %v2942 = vunpack.c.l.b16 %v2840
    %v2943 = vunpack.c.l.b16 %v2841
    %v2944 = vunpack.c.l.b16 %v2842
    %v2945 = vunpack.c.l.b16 %v2843
    %v2946 = vunpack.c.l.b16 %v2844
    %v2947 = vpack.c.b16 %v2900, %v2899
    %v2948 = vpack.c.b16 %v2902, %v2901
    %v2949 = vpack.c.b16 %v2904, %v2903
    %v2950 = vpack.c.b16 %v2906, %v2905
    %v2951 = vpack.c.b16 %v2908, %v2907
    %v2952 = vpack.c.b16 %v2910, %v2909
    %v2953 = vpack.c.b16 %v2912, %v2911
    %v2954 = vpack.c.b16 %v2914, %v2913
    %v2955 = vpack.c.b16 %v2916, %v2915
    %v2956 = vpack.c.b16 %v2918, %v2917
    %v2957 = vpack.c.b16 %v2920, %v2919
    %v2958 = vpack.c.b16 %v2922, %v2921
    %v2959 = vpack.c.b16 %v2924, %v2923
    %v2960 = vpack.c.b16 %v2926, %v2925
    %v2961 = vpack.c.b16 %v2928, %v2927
    %v2962 = vpack.c.b16 %v2930, %v2929
    %v2963 = vpack.c.b16 %v2932, %v2931
    %v2964 = vpack.c.b16 %v2934, %v2933
    %v2965 = vpack.c.b16 %v2936, %v2935
    %v2966 = vpack.c.b16 %v2938, %v2937
    %v2967 = vpack.c.b16 %v2940, %v2939
    %v2968 = vpack.c.b16 %v2942, %v2941
    %v2969 = vpack.c.b16 %v2944, %v2943
    %v2970 = vpack.c.b16 %v2946, %v2945
    %2995 = vmatprep.subr.bf16.mxu0 0
    %2996 = vmatpush1.bf16.msra.mxu0 %v2947
    %2997 = vmatprep.subr.bf16.mxu0 0
    %2998 = vmatpush1.bf16.msra.mxu0 %v2948
    %2999 = vmatprep.subr.bf16.mxu0 0
    %3000 = vmatpush1.bf16.msra.mxu0 %v2949
    %3001 = vmatprep.subr.bf16.mxu0 0
    %3002 = vmatpush1.bf16.msra.mxu0 %v2950
    %3003 = vmatprep.subr.bf16.mxu0 0
    %3004 = vmatpush1.bf16.msra.mxu0 %v2951
    %3005 = vmatprep.subr.bf16.mxu0 0
    %3006 = vmatpush1.bf16.msra.mxu0 %v2952
    %3007 = vmatprep.subr.bf16.mxu0 0
    %3008 = vmatpush1.bf16.msra.mxu0 %v2953
    %3009 = vmatprep.subr.bf16.mxu0 0
    %3010 = vmatpush1.bf16.msra.mxu0 %v2954
    %3011 = vmatprep.subr.bf16.mxu0 0
    %3012 = vmatpush1.bf16.msra.mxu0 %v2955
    %3013 = vmatprep.subr.bf16.mxu0 0
    %3014 = vmatpush1.bf16.msra.mxu0 %v2956
    %3015 = vmatprep.subr.bf16.mxu0 0
    %3016 = vmatpush1.bf16.msra.mxu0 %v2957
    %3017 = vmatprep.subr.bf16.mxu0 0
    %3018 = vmatpush1.bf16.msra.mxu0 %v2958
    %3019 = vmatprep.subr.bf16.mxu0 0
    %3020 = vmatpush1.bf16.msra.mxu0 %v2959
    %3021 = vmatprep.subr.bf16.mxu0 0
    %3022 = vmatpush1.bf16.msra.mxu0 %v2960
    %3023 = vmatprep.subr.bf16.mxu0 0
    %3024 = vmatpush1.bf16.msra.mxu0 %v2961
    %3025 = vmatprep.subr.bf16.mxu0 0
    %3026 = vmatpush1.bf16.msra.mxu0 %v2962
    %3027 = vmatprep.mubr.bf16.mxu0 %v2846
    %3028 = vmatmul.mubr.bf16.gmra.mrb[0].mxu0 %v2845
    %v3029 = vpop.f32.mrb[0].mxu0
    %v3030 = vadd.f32 0.0, %v3029
    %v3031 = vpop.f32.mrb[0].mxu0
    %v3032 = vpop.f32.mrb[0].mxu0
    %v3033 = vadd.f32 0.0, %v3032
    %v3034 = vpop.f32.mrb[0].mxu0
    %3035 = vmatprep.mubr.bf16.mxu0 %v2849
    %3036 = vmatmul.mubr.bf16.gmra.mrb[0].mxu0 %v2848
    %v3037 = vpop.f32.mrb[0].mxu0
    %v3038 = vadd.f32 0.0, %v3037
    %v3039 = vpop.f32.mrb[0].mxu0
    %v3040 = vpop.f32.mrb[0].mxu0
    %v3041 = vadd.f32 0.0, %v3040
    %v3042 = vpop.f32.mrb[0].mxu0
    %3043 = vdwg.mxu0
    %3044 = vmatprep.subr.bf16.mxu0 0
    %3045 = vmatpush1.bf16.msra.mxu0 %v2963
    %3046 = vmatprep.subr.bf16.mxu0 0
    %3047 = vmatpush1.bf16.msra.mxu0 %v2964
    %3048 = vmatprep.subr.bf16.mxu0 0
    %3049 = vmatpush1.bf16.msra.mxu0 %v2965
    %3050 = vmatprep.subr.bf16.mxu0 0
    %3051 = vmatpush1.bf16.msra.mxu0 %v2966
    %3052 = vmatprep.subr.bf16.mxu0 0
    %3053 = vmatpush1.bf16.msra.mxu0 %v2967
    %3054 = vmatprep.subr.bf16.mxu0 0
    %3055 = vmatpush1.bf16.msra.mxu0 %v2968
    %3056 = vmatprep.subr.bf16.mxu0 0
    %3057 = vmatpush1.bf16.msra.mxu0 %v2969
    %3058 = vmatprep.subr.bf16.mxu0 0
    %3059 = vmatpush1.bf16.msra.mxu0 %v2970
    %3060 = vmatprep.subr.bf16.mxu0 0
    %3061 = vmatpush1.bf16.msra.mxu0 0
    %3062 = vmatprep.subr.bf16.mxu0 0
    %3063 = vmatpush1.bf16.msra.mxu0 0
    %3064 = vmatprep.subr.bf16.mxu0 0
    %3065 = vmatpush1.bf16.msra.mxu0 0
    %3066 = vmatprep.subr.bf16.mxu0 0
    %3067 = vmatpush1.bf16.msra.mxu0 0
    %3068 = vmatprep.subr.bf16.mxu0 0
    %3069 = vmatpush1.bf16.msra.mxu0 0
    %3070 = vmatprep.subr.bf16.mxu0 0
    %3071 = vmatpush1.bf16.msra.mxu0 0
    %3072 = vmatprep.subr.bf16.mxu0 0
    %3073 = vmatpush1.bf16.msra.mxu0 0
    %3074 = vmatprep.subr.bf16.mxu0 0
    %3075 = vmatpush1.bf16.msra.mxu0 0
    %3076 = vmatprep.mubr.bf16.mxu0 0
    %3077 = vmatmul.mubr.bf16.gmra.mrb[0].mxu0 %v2847
    %v3078 = vpop.f32.mrb[0].mxu0
    %v3079 = vadd.f32 %v3030, %v3078
    %v3080 = vpop.f32.mrb[0].mxu0
    %v3081 = vpop.f32.mrb[0].mxu0
    %v3082 = vadd.f32 %v3033, %v3081
    %v3083 = vpop.f32.mrb[0].mxu0
    %3084 = vmatprep.mubr.bf16.mxu0 0
    %3085 = vmatmul.mubr.bf16.gmra.mrb[0].mxu0 %v2850
    %v3086 = vpop.f32.mrb[0].mxu0
    %v3087 = vadd.f32 %v3038, %v3086
    %v3088 = vpop.f32.mrb[0].mxu0
    %v3089 = vpop.f32.mrb[0].mxu0
    %v3090 = vadd.f32 %v3041, %v3089
    %v3091 = vpop.f32.mrb[0].mxu0
    %3092 = vdwg.mxu0
    %v3093 = vadd.f32 %v2334, %v3079
    %v3094 = vadd.f32 %v2335, %v3082
    %v3095 = vadd.f32 %v2336, %v3087
    %v3096 = vadd.f32 %v2337, %v3090
    %v3097 = vld [vmem:[%s19] sm:$0x1]
    %v3099 = vlaneseq
    %v3100 = vshrl.u32 %v3099, 7
    %v3101 = vsub.s32 0, %v3100
    %v3102 = vrot.slane %v3097, %v3101
    %v3104 = vadd.f32 %v3093, %v3102
    %v3105 = vadd.f32 %v3094, %v3102
    %v3106 = vadd.f32 %v3095, %v3102
    %v3107 = vadd.f32 %v3096, %v3102
    %s3108 = scalar_lea.vmem %s4, 1
    %v3109 = vld [vmem:[%s3108] sm:$0x1]
    %s3110 = scalar_lea.vmem %s5, 1
    %v3111 = vld [vmem:[%s3110] sm:$0x1]
    %3112 = vadd.xlane.f32.xlu0 %v3104
    %v3113 = vpop.xlane.xlu0 %3112
    %3114 = vadd.xlane.f32.xlu0 %v3105
    %v3115 = vpop.xlane.xlu0 %3114
    %3116 = vadd.xlane.f32.xlu0 %v3106
    %v3117 = vpop.xlane.xlu0 %3116
    %3118 = vadd.xlane.f32.xlu0 %v3107
    %v3119 = vpop.xlane.xlu0 %3118
    %v3120 = vmul.f32 %v3113, 0.010416667
    %v3121 = vmul.f32 %v3115, 0.010416667
    %v3122 = vmul.f32 %v3117, 0.010416667
    %v3123 = vmul.f32 %v3119, 0.010416667
    %v3124 = vsub.f32 %v3104, %v3120
    %v3125 = vsub.f32 %v3105, %v3121
    %v3126 = vsub.f32 %v3106, %v3122
    %v3127 = vsub.f32 %v3107, %v3123
    %v3128 = vmul.f32 %v3124, %v83
    %v3129 = vmul.f32 %v3125, %v83
    %v3130 = vmul.f32 %v3126, %v83
    %v3131 = vmul.f32 %v3127, %v83
    %v3132 = vmul.f32 %v3128, %v3128
    %v3133 = vmul.f32 %v3129, %v3129
    %v3134 = vmul.f32 %v3130, %v3130
    %v3135 = vmul.f32 %v3131, %v3131
    %3136 = vadd.xlane.f32.xlu0 %v3132
    %v3137 = vpop.xlane.xlu0 %3136
    %3138 = vadd.xlane.f32.xlu0 %v3133
    %v3139 = vpop.xlane.xlu0 %3138
    %3140 = vadd.xlane.f32.xlu0 %v3134
    %v3141 = vpop.xlane.xlu0 %3140
    %3142 = vadd.xlane.f32.xlu0 %v3135
    %v3143 = vpop.xlane.xlu0 %3142
    %v3144 = vmul.f32 %v3137, 0.010416667
    %v3145 = vmul.f32 %v3139, 0.010416667
    %v3146 = vmul.f32 %v3141, 0.010416667
    %v3147 = vmul.f32 %v3143, 0.010416667
    %v3148 = vadd.f32 %v3144, 1e-05
    %v3149 = vadd.f32 %v3145, 1e-05
    %v3150 = vadd.f32 %v3146, 1e-05
    %v3151 = vadd.f32 %v3147, 1e-05
    %v3152 = vrsqrt.pop %v3148
    %v3153 = vrsqrt.pop %v3149
    %v3154 = vrsqrt.pop %v3150
    %v3155 = vrsqrt.pop %v3151
    %v3156 = vmul.f32 %v3124, %v3152
    %v3157 = vmul.f32 %v3125, %v3153
    %v3158 = vmul.f32 %v3126, %v3154
    %v3159 = vmul.f32 %v3127, %v3155
    %v3161 = vlaneseq
    %v3162 = vshrl.u32 %v3161, 7
    %v3163 = vsub.s32 0, %v3162
    %v3164 = vrot.slane %v3109, %v3163
    %v3166 = vmul.f32 %v3156, %v3164
    %v3167 = vmul.f32 %v3157, %v3164
    %v3168 = vmul.f32 %v3158, %v3164
    %v3169 = vmul.f32 %v3159, %v3164
    %v3171 = vlaneseq
    %v3172 = vshrl.u32 %v3171, 7
    %v3173 = vsub.s32 0, %v3172
    %v3174 = vrot.slane %v3111, %v3173
    %v3176 = vadd.f32 %v3166, %v3174
    %v3177 = vadd.f32 %v3167, %v3174
    %v3178 = vadd.f32 %v3168, %v3174
    %v3179 = vadd.f32 %v3169, %v3174
    %v3180 = vpack.c.bf16 %v3177, %v3176
    %v3181 = vpack.c.bf16 %v3179, %v3178
    %s3182 = scalar_lea.vmem %s6, 192
    %v3183 = vld [vmem:[%s3182] sm:$0xf]
    %v3184 = vld [vmem:[%s3182 + $0x4] sm:$0xf]
    %v3185 = vld [vmem:[%s3182 + $0x8] sm:$0xf]
    %v3186 = vld [vmem:[%s3182 + $0xc] sm:$0xf]
    %v3187 = vld [vmem:[%s3182 + $0x10] sm:$0xf]
    %v3188 = vld [vmem:[%s3182 + $0x14] sm:$0xf]
    %v3189 = vld [vmem:[%s3182 + $0x18] sm:$0xf]
    %v3190 = vld [vmem:[%s3182 + $0x1c] sm:$0xf]
    %v3191 = vld [vmem:[%s3182 + $0x20] sm:$0xf]
    %v3192 = vld [vmem:[%s3182 + $0x24] sm:$0xf]
    %v3193 = vld [vmem:[%s3182 + $0x28] sm:$0xf]
    %v3194 = vld [vmem:[%s3182 + $0x2c] sm:$0xf]
    %v3195 = vld [vmem:[%s3182 + $0x30] sm:$0xf]
    %v3196 = vld [vmem:[%s3182 + $0x34] sm:$0xf]
    %v3197 = vld [vmem:[%s3182 + $0x38] sm:$0xf]
    %v3198 = vld [vmem:[%s3182 + $0x3c] sm:$0xf]
    %s3199 = scalar_lea.vmem %s7, 3
    %v3200 = vld [vmem:[%s3199] sm:$0x1]
    %v3202 = vlaneseq
    %v3203 = vshrl.u32 %v3202, 7
    %v3204 = vsub.s32 0, %v3203
    %v3205 = vrot.slane %v3200, %v3204
    %v3223 = vunpack.c.l.b16 %v3183
    %v3224 = vunpack.c.l.b16 %v3184
    %v3225 = vunpack.c.l.b16 %v3185
    %v3226 = vunpack.c.l.b16 %v3186
    %v3227 = vunpack.c.l.b16 %v3187
    %v3228 = vunpack.c.l.b16 %v3188
    %v3229 = vunpack.c.l.b16 %v3189
    %v3230 = vunpack.c.l.b16 %v3190
    %v3231 = vunpack.c.l.b16 %v3191
    %v3232 = vunpack.c.l.b16 %v3192
    %v3233 = vunpack.c.l.b16 %v3193
    %v3234 = vunpack.c.l.b16 %v3194
    %v3235 = vunpack.c.l.b16 %v3195
    %v3236 = vunpack.c.l.b16 %v3196
    %v3237 = vunpack.c.l.b16 %v3197
    %v3238 = vunpack.c.l.b16 %v3198
    %v3239 = vpack.c.b16 %v3224, %v3223
    %v3240 = vpack.c.b16 %v3226, %v3225
    %v3241 = vpack.c.b16 %v3228, %v3227
    %v3242 = vpack.c.b16 %v3230, %v3229
    %v3243 = vpack.c.b16 %v3232, %v3231
    %v3244 = vpack.c.b16 %v3234, %v3233
    %v3245 = vpack.c.b16 %v3236, %v3235
    %v3246 = vpack.c.b16 %v3238, %v3237
    %3255 = vmatprep.subr.bf16.mxu0 0
    %3256 = vmatpush1.bf16.msra.mxu0 %v3239
    %3257 = vmatprep.subr.bf16.mxu0 0
    %3258 = vmatpush1.bf16.msra.mxu0 %v3240
    %3259 = vmatprep.subr.bf16.mxu0 0
    %3260 = vmatpush1.bf16.msra.mxu0 %v3241
    %3261 = vmatprep.subr.bf16.mxu0 0
    %3262 = vmatpush1.bf16.msra.mxu0 %v3242
    %3263 = vmatprep.subr.bf16.mxu0 0
    %3264 = vmatpush1.bf16.msra.mxu0 %v3243
    %3265 = vmatprep.subr.bf16.mxu0 0
    %3266 = vmatpush1.bf16.msra.mxu0 %v3244
    %3267 = vmatprep.subr.bf16.mxu0 0
    %3268 = vmatpush1.bf16.msra.mxu0 %v3245
    %3269 = vmatprep.subr.bf16.mxu0 0
    %3270 = vmatpush1.bf16.msra.mxu0 %v3246
    %3271 = vmatprep.subr.bf16.mxu0 0
    %3272 = vmatpush1.bf16.msra.mxu0 0
    %3273 = vmatprep.subr.bf16.mxu0 0
    %3274 = vmatpush1.bf16.msra.mxu0 0
    %3275 = vmatprep.subr.bf16.mxu0 0
    %3276 = vmatpush1.bf16.msra.mxu0 0
    %3277 = vmatprep.subr.bf16.mxu0 0
    %3278 = vmatpush1.bf16.msra.mxu0 0
    %3279 = vmatprep.subr.bf16.mxu0 0
    %3280 = vmatpush1.bf16.msra.mxu0 0
    %3281 = vmatprep.subr.bf16.mxu0 0
    %3282 = vmatpush1.bf16.msra.mxu0 0
    %3283 = vmatprep.subr.bf16.mxu0 0
    %3284 = vmatpush1.bf16.msra.mxu0 0
    %3285 = vmatprep.subr.bf16.mxu0 0
    %3286 = vmatpush1.bf16.msra.mxu0 0
    %3287 = vmatprep.mubr.bf16.mxu0 0
    %3288 = vmatmul.mubr.bf16.gmra.mrb[0].mxu0 %v3180
    %v3289 = vpop.f32.mrb[0].mxu0
    %v3290 = vadd.f32 %v3205, %v3289
    %v3291 = vpop.f32.mrb[0].mxu0
    %v3292 = vpop.f32.mrb[0].mxu0
    %v3293 = vadd.f32 %v3205, %v3292
    %v3294 = vpop.f32.mrb[0].mxu0
    %3295 = vmatprep.mubr.bf16.mxu0 0
    %3296 = vmatmul.mubr.bf16.gmra.mrb[0].mxu0 %v3181
    %v3297 = vpop.f32.mrb[0].mxu0
    %v3298 = vadd.f32 %v3205, %v3297
    %v3299 = vpop.f32.mrb[0].mxu0
    %v3300 = vpop.f32.mrb[0].mxu0
    %v3301 = vadd.f32 %v3205, %v3300
    %v3302 = vpop.f32.mrb[0].mxu0
    %3303 = vdwg.mxu0
    %s3304 = scalar_lea.vmem %s8, 192
    %v3305 = vld [vmem:[%s3304] sm:$0xf]
    %v3306 = vld [vmem:[%s3304 + $0x4] sm:$0xf]
    %v3307 = vld [vmem:[%s3304 + $0x8] sm:$0xf]
    %v3308 = vld [vmem:[%s3304 + $0xc] sm:$0xf]
    %v3309 = vld [vmem:[%s3304 + $0x10] sm:$0xf]
    %v3310 = vld [vmem:[%s3304 + $0x14] sm:$0xf]
    %v3311 = vld [vmem:[%s3304 + $0x18] sm:$0xf]
    %v3312 = vld [vmem:[%s3304 + $0x1c] sm:$0xf]
    %v3313 = vld [vmem:[%s3304 + $0x20] sm:$0xf]
    %v3314 = vld [vmem:[%s3304 + $0x24] sm:$0xf]
    %v3315 = vld [vmem:[%s3304 + $0x28] sm:$0xf]
    %v3316 = vld [vmem:[%s3304 + $0x2c] sm:$0xf]
    %v3317 = vld [vmem:[%s3304 + $0x30] sm:$0xf]
    %v3318 = vld [vmem:[%s3304 + $0x34] sm:$0xf]
    %v3319 = vld [vmem:[%s3304 + $0x38] sm:$0xf]
    %v3320 = vld [vmem:[%s3304 + $0x3c] sm:$0xf]
    %s3321 = scalar_lea.vmem %s9, 3
    %v3322 = vld [vmem:[%s3321] sm:$0x1]
    %v3324 = vlaneseq
    %v3325 = vshrl.u32 %v3324, 7
    %v3326 = vsub.s32 0, %v3325
    %v3327 = vrot.slane %v3322, %v3326
    %v3345 = vunpack.c.l.b16 %v3305
    %v3346 = vunpack.c.l.b16 %v3306
    %v3347 = vunpack.c.l.b16 %v3307
    %v3348 = vunpack.c.l.b16 %v3308
    %v3349 = vunpack.c.l.b16 %v3309
    %v3350 = vunpack.c.l.b16 %v3310
    %v3351 = vunpack.c.l.b16 %v3311
    %v3352 = vunpack.c.l.b16 %v3312
    %v3353 = vunpack.c.l.b16 %v3313
    %v3354 = vunpack.c.l.b16 %v3314
    %v3355 = vunpack.c.l.b16 %v3315
    %v3356 = vunpack.c.l.b16 %v3316
    %v3357 = vunpack.c.l.b16 %v3317
    %v3358 = vunpack.c.l.b16 %v3318
    %v3359 = vunpack.c.l.b16 %v3319
    %v3360 = vunpack.c.l.b16 %v3320
    %v3361 = vpack.c.b16 %v3346, %v3345
    %v3362 = vpack.c.b16 %v3348, %v3347
    %v3363 = vpack.c.b16 %v3350, %v3349
    %v3364 = vpack.c.b16 %v3352, %v3351
    %v3365 = vpack.c.b16 %v3354, %v3353
    %v3366 = vpack.c.b16 %v3356, %v3355
    %v3367 = vpack.c.b16 %v3358, %v3357
    %v3368 = vpack.c.b16 %v3360, %v3359
    %3377 = vmatprep.subr.bf16.mxu0 0
    %3378 = vmatpush1.bf16.msra.mxu0 %v3361
    %3379 = vmatprep.subr.bf16.mxu0 0
    %3380 = vmatpush1.bf16.msra.mxu0 %v3362
    %3381 = vmatprep.subr.bf16.mxu0 0
    %3382 = vmatpush1.bf16.msra.mxu0 %v3363
    %3383 = vmatprep.subr.bf16.mxu0 0
    %3384 = vmatpush1.bf16.msra.mxu0 %v3364
    %3385 = vmatprep.subr.bf16.mxu0 0
    %3386 = vmatpush1.bf16.msra.mxu0 %v3365
    %3387 = vmatprep.subr.bf16.mxu0 0
    %3388 = vmatpush1.bf16.msra.mxu0 %v3366
    %3389 = vmatprep.subr.bf16.mxu0 0
    %3390 = vmatpush1.bf16.msra.mxu0 %v3367
    %3391 = vmatprep.subr.bf16.mxu0 0
    %3392 = vmatpush1.bf16.msra.mxu0 %v3368
    %3393 = vmatprep.subr.bf16.mxu0 0
    %3394 = vmatpush1.bf16.msra.mxu0 0
    %3395 = vmatprep.subr.bf16.mxu0 0
    %3396 = vmatpush1.bf16.msra.mxu0 0
    %3397 = vmatprep.subr.bf16.mxu0 0
    %3398 = vmatpush1.bf16.msra.mxu0 0
    %3399 = vmatprep.subr.bf16.mxu0 0
    %3400 = vmatpush1.bf16.msra.mxu0 0
    %3401 = vmatprep.subr.bf16.mxu0 0
    %3402 = vmatpush1.bf16.msra.mxu0 0
    %3403 = vmatprep.subr.bf16.mxu0 0
    %3404 = vmatpush1.bf16.msra.mxu0 0
    %3405 = vmatprep.subr.bf16.mxu0 0
    %3406 = vmatpush1.bf16.msra.mxu0 0
    %3407 = vmatprep.subr.bf16.mxu0 0
    %3408 = vmatpush1.bf16.msra.mxu0 0
    %3409 = vmatprep.mubr.bf16.mxu0 0
    %3410 = vmatmul.mubr.bf16.gmra.mrb[0].mxu0 %v3180
    %v3411 = vpop.f32.mrb[0].mxu0
    %v3412 = vadd.f32 %v3327, %v3411
    %v3413 = vpop.f32.mrb[0].mxu0
    %v3414 = vpop.f32.mrb[0].mxu0
    %v3415 = vadd.f32 %v3327, %v3414
    %v3416 = vpop.f32.mrb[0].mxu0
    %3417 = vmatprep.mubr.bf16.mxu0 0
    %3418 = vmatmul.mubr.bf16.gmra.mrb[0].mxu0 %v3181
    %v3419 = vpop.f32.mrb[0].mxu0
    %v3420 = vadd.f32 %v3327, %v3419
    %v3421 = vpop.f32.mrb[0].mxu0
    %v3422 = vpop.f32.mrb[0].mxu0
    %v3423 = vadd.f32 %v3327, %v3422
    %v3424 = vpop.f32.mrb[0].mxu0
    %3425 = vdwg.mxu0
    %s3426 = scalar_lea.vmem %s10, 192
    %v3427 = vld [vmem:[%s3426] sm:$0xf]
    %v3428 = vld [vmem:[%s3426 + $0x4] sm:$0xf]
    %v3429 = vld [vmem:[%s3426 + $0x8] sm:$0xf]
    %v3430 = vld [vmem:[%s3426 + $0xc] sm:$0xf]
    %v3431 = vld [vmem:[%s3426 + $0x10] sm:$0xf]
    %v3432 = vld [vmem:[%s3426 + $0x14] sm:$0xf]
    %v3433 = vld [vmem:[%s3426 + $0x18] sm:$0xf]
    %v3434 = vld [vmem:[%s3426 + $0x1c] sm:$0xf]
    %v3435 = vld [vmem:[%s3426 + $0x20] sm:$0xf]
    %v3436 = vld [vmem:[%s3426 + $0x24] sm:$0xf]
    %v3437 = vld [vmem:[%s3426 + $0x28] sm:$0xf]
    %v3438 = vld [vmem:[%s3426 + $0x2c] sm:$0xf]
    %v3439 = vld [vmem:[%s3426 + $0x30] sm:$0xf]
    %v3440 = vld [vmem:[%s3426 + $0x34] sm:$0xf]
    %v3441 = vld [vmem:[%s3426 + $0x38] sm:$0xf]
    %v3442 = vld [vmem:[%s3426 + $0x3c] sm:$0xf]
    %s3443 = scalar_lea.vmem %s11, 3
    %v3444 = vld [vmem:[%s3443] sm:$0x1]
    %v3446 = vlaneseq
    %v3447 = vshrl.u32 %v3446, 7
    %v3448 = vsub.s32 0, %v3447
    %v3449 = vrot.slane %v3444, %v3448
    %v3467 = vunpack.c.l.b16 %v3427
    %v3468 = vunpack.c.l.b16 %v3428
    %v3469 = vunpack.c.l.b16 %v3429
    %v3470 = vunpack.c.l.b16 %v3430
    %v3471 = vunpack.c.l.b16 %v3431
    %v3472 = vunpack.c.l.b16 %v3432
    %v3473 = vunpack.c.l.b16 %v3433
    %v3474 = vunpack.c.l.b16 %v3434
    %v3475 = vunpack.c.l.b16 %v3435
    %v3476 = vunpack.c.l.b16 %v3436
    %v3477 = vunpack.c.l.b16 %v3437
    %v3478 = vunpack.c.l.b16 %v3438
    %v3479 = vunpack.c.l.b16 %v3439
    %v3480 = vunpack.c.l.b16 %v3440
    %v3481 = vunpack.c.l.b16 %v3441
    %v3482 = vunpack.c.l.b16 %v3442
    %v3483 = vpack.c.b16 %v3468, %v3467
    %v3484 = vpack.c.b16 %v3470, %v3469
    %v3485 = vpack.c.b16 %v3472, %v3471
    %v3486 = vpack.c.b16 %v3474, %v3473
    %v3487 = vpack.c.b16 %v3476, %v3475
    %v3488 = vpack.c.b16 %v3478, %v3477
    %v3489 = vpack.c.b16 %v3480, %v3479
    %v3490 = vpack.c.b16 %v3482, %v3481
    %3499 = vmatprep.subr.bf16.mxu0 0
    %3500 = vmatpush1.bf16.msra.mxu0 %v3483
    %3501 = vmatprep.subr.bf16.mxu0 0
    %3502 = vmatpush1.bf16.msra.mxu0 %v3484
    %3503 = vmatprep.subr.bf16.mxu0 0
    %3504 = vmatpush1.bf16.msra.mxu0 %v3485
    %3505 = vmatprep.subr.bf16.mxu0 0
    %3506 = vmatpush1.bf16.msra.mxu0 %v3486
    %3507 = vmatprep.subr.bf16.mxu0 0
    %3508 = vmatpush1.bf16.msra.mxu0 %v3487
    %3509 = vmatprep.subr.bf16.mxu0 0
    %3510 = vmatpush1.bf16.msra.mxu0 %v3488
    %3511 = vmatprep.subr.bf16.mxu0 0
    %3512 = vmatpush1.bf16.msra.mxu0 %v3489
    %3513 = vmatprep.subr.bf16.mxu0 0
    %3514 = vmatpush1.bf16.msra.mxu0 %v3490
    %3515 = vmatprep.subr.bf16.mxu0 0
    %3516 = vmatpush1.bf16.msra.mxu0 0
    %3517 = vmatprep.subr.bf16.mxu0 0
    %3518 = vmatpush1.bf16.msra.mxu0 0
    %3519 = vmatprep.subr.bf16.mxu0 0
    %3520 = vmatpush1.bf16.msra.mxu0 0
    %3521 = vmatprep.subr.bf16.mxu0 0
    %3522 = vmatpush1.bf16.msra.mxu0 0
    %3523 = vmatprep.subr.bf16.mxu0 0
    %3524 = vmatpush1.bf16.msra.mxu0 0
    %3525 = vmatprep.subr.bf16.mxu0 0
    %3526 = vmatpush1.bf16.msra.mxu0 0
    %3527 = vmatprep.subr.bf16.mxu0 0
    %3528 = vmatpush1.bf16.msra.mxu0 0
    %3529 = vmatprep.subr.bf16.mxu0 0
    %3530 = vmatpush1.bf16.msra.mxu0 0
    %3531 = vmatprep.mubr.bf16.mxu0 0
    %3532 = vmatmul.mubr.bf16.gmra.mrb[0].mxu0 %v3180
    %v3533 = vpop.f32.mrb[0].mxu0
    %v3534 = vadd.f32 %v3449, %v3533
    %v3535 = vpop.f32.mrb[0].mxu0
    %v3536 = vpop.f32.mrb[0].mxu0
    %v3537 = vadd.f32 %v3449, %v3536
    %v3538 = vpop.f32.mrb[0].mxu0
    %3539 = vmatprep.mubr.bf16.mxu0 0
    %3540 = vmatmul.mubr.bf16.gmra.mrb[0].mxu0 %v3181
    %v3541 = vpop.f32.mrb[0].mxu0
    %v3542 = vadd.f32 %v3449, %v3541
    %v3543 = vpop.f32.mrb[0].mxu0
    %v3544 = vpop.f32.mrb[0].mxu0
    %v3545 = vadd.f32 %v3449, %v3544
    %v3546 = vpop.f32.mrb[0].mxu0
    %3547 = vdwg.mxu0
    %v3548 = vpack.c.bf16 %v3293, %v3290
    %v3549 = vpack.c.bf16 %v3301, %v3298
    %v3550 = vpack.c.bf16 %v3415, %v3412
    %v3551 = vpack.c.bf16 %v3423, %v3420
    %v3553 = vsel %vm654, %v3548, 0
    %v3556 = vsel %vm654, %v3550, 0
    %3558 = vmatprep.subr.bf16.mxu0 0
    %3559 = vmatpush1.bf16.xpose.msra.mxu0 %v3556
    %3560 = vmatprep.subr.bf16.mxu0 0
    %3561 = vmatpush1.bf16.xpose.msra.mxu0 0
    %3562 = vmatprep.subr.bf16.mxu0 0
    %3563 = vmatpush1.bf16.xpose.msra.mxu0 0
    %3564 = vmatprep.subr.bf16.mxu0 0
    %3565 = vmatpush1.bf16.xpose.msra.mxu0 0
    %3566 = vmatprep.subr.bf16.mxu0 0
    %3567 = vmatpush1.bf16.xpose.msra.mxu0 0
    %3568 = vmatprep.subr.bf16.mxu0 0
    %3569 = vmatpush1.bf16.xpose.msra.mxu0 0
    %3570 = vmatprep.subr.bf16.mxu0 0
    %3571 = vmatpush1.bf16.xpose.msra.mxu0 0
    %3572 = vmatprep.subr.bf16.mxu0 0
    %3573 = vmatpush1.bf16.xpose.msra.mxu0 0
    %3574 = vmatprep.subr.bf16.mxu0 0
    %3575 = vmatpush1.bf16.xpose.msra.mxu0 0
    %3576 = vmatprep.subr.bf16.mxu0 0
    %3577 = vmatpush1.bf16.xpose.msra.mxu0 0
    %3578 = vmatprep.subr.bf16.mxu0 0
    %3579 = vmatpush1.bf16.xpose.msra.mxu0 0
    %3580 = vmatprep.subr.bf16.mxu0 0
    %3581 = vmatpush1.bf16.xpose.msra.mxu0 0
    %3582 = vmatprep.subr.bf16.mxu0 0
    %3583 = vmatpush1.bf16.xpose.msra.mxu0 0
    %3584 = vmatprep.subr.bf16.mxu0 0
    %3585 = vmatpush1.bf16.xpose.msra.mxu0 0
    %3586 = vmatprep.subr.bf16.mxu0 0
    %3587 = vmatpush1.bf16.xpose.msra.mxu0 0
    %3588 = vmatprep.subr.bf16.mxu0 0
    %3589 = vmatpush1.bf16.xpose.msra.mxu0 0
    %3590 = vmatprep.mubr.bf16.mxu0 0
    %3591 = vmatmul.mubr.bf16.gmra.mrb[0].mxu0 %v3553
    %v3592 = vpop.f32.mrb[0].mxu0
    %v3593 = vadd.f32 0.0, %v3592
    %v3594 = vpop.f32.mrb[0].mxu0
    %v3595 = vpop.f32.mrb[0].mxu0
    %v3596 = vadd.f32 0.0, %v3595
    %v3597 = vpop.f32.mrb[0].mxu0
    %3598 = vdwg.mxu0
    %v3600 = vsel %vm654, %v3549, 0
    %v3603 = vsel %vm654, %v3551, 0
    %3605 = vmatprep.subr.bf16.mxu0 0
    %3606 = vmatpush1.bf16.xpose.msra.mxu0 %v3603
    %3607 = vmatprep.subr.bf16.mxu0 0
    %3608 = vmatpush1.bf16.xpose.msra.mxu0 0
    %3609 = vmatprep.subr.bf16.mxu0 0
    %3610 = vmatpush1.bf16.xpose.msra.mxu0 0
    %3611 = vmatprep.subr.bf16.mxu0 0
    %3612 = vmatpush1.bf16.xpose.msra.mxu0 0
    %3613 = vmatprep.subr.bf16.mxu0 0
    %3614 = vmatpush1.bf16.xpose.msra.mxu0 0
    %3615 = vmatprep.subr.bf16.mxu0 0
    %3616 = vmatpush1.bf16.xpose.msra.mxu0 0
    %3617 = vmatprep.subr.bf16.mxu0 0
    %3618 = vmatpush1.bf16.xpose.msra.mxu0 0
    %3619 = vmatprep.subr.bf16.mxu0 0
    %3620 = vmatpush1.bf16.xpose.msra.mxu0 0
    %3621 = vmatprep.subr.bf16.mxu0 0
    %3622 = vmatpush1.bf16.xpose.msra.mxu0 0
    %3623 = vmatprep.subr.bf16.mxu0 0
    %3624 = vmatpush1.bf16.xpose.msra.mxu0 0
    %3625 = vmatprep.subr.bf16.mxu0 0
    %3626 = vmatpush1.bf16.xpose.msra.mxu0 0
    %3627 = vmatprep.subr.bf16.mxu0 0
    %3628 = vmatpush1.bf16.xpose.msra.mxu0 0
    %3629 = vmatprep.subr.bf16.mxu0 0
    %3630 = vmatpush1.bf16.xpose.msra.mxu0 0
    %3631 = vmatprep.subr.bf16.mxu0 0
    %3632 = vmatpush1.bf16.xpose.msra.mxu0 0
    %3633 = vmatprep.subr.bf16.mxu0 0
    %3634 = vmatpush1.bf16.xpose.msra.mxu0 0
    %3635 = vmatprep.subr.bf16.mxu0 0
    %3636 = vmatpush1.bf16.xpose.msra.mxu0 0
    %3637 = vmatprep.mubr.bf16.mxu0 0
    %3638 = vmatmul.mubr.bf16.gmra.mrb[0].mxu0 %v3600
    %v3639 = vpop.f32.mrb[0].mxu0
    %v3640 = vadd.f32 0.0, %v3639
    %v3641 = vpop.f32.mrb[0].mxu0
    %v3642 = vpop.f32.mrb[0].mxu0
    %v3643 = vadd.f32 0.0, %v3642
    %v3644 = vpop.f32.mrb[0].mxu0
    %3645 = vdwg.mxu0
    %v3646 = vmul.f32 %v3593, 0.17677669
    %v3647 = vmul.f32 %v3596, 0.17677669
    %v3648 = vmul.f32 %v3640, 0.17677669
    %v3649 = vmul.f32 %v3643, 0.17677669
    %v3650 = vsel %vm753, %v3646, -inf
    %3651 = vmax.xlane.f32.xlu0 %v3650
    %v3652 = vpop.xlane.xlu0 %3651
    %v3653 = vsel %vm753, %v3647, -inf
    %3654 = vmax.xlane.f32.xlu0 %v3653
    %v3655 = vpop.xlane.xlu0 %3654
    %v3656 = vsel %vm753, %v3648, -inf
    %3657 = vmax.xlane.f32.xlu0 %v3656
    %v3658 = vpop.xlane.xlu0 %3657
    %v3659 = vsel %vm753, %v3649, -inf
    %3660 = vmax.xlane.f32.xlu0 %v3659
    %v3661 = vpop.xlane.xlu0 %3660
    %v3662 = vsub.f32 %v3646, %v3652
    %v3663 = vsub.f32 %v3647, %v3655
    %v3664 = vsub.f32 %v3648, %v3658
    %v3665 = vsub.f32 %v3649, %v3661
    %v3666 = vmul.f32 %v3662, 1.442695
    %v3667 = vpow.pop %v3666
    %v3668 = vmul.f32 %v3663, 1.442695
    %v3669 = vpow.pop %v3668
    %v3670 = vmul.f32 %v3664, 1.442695
    %v3671 = vpow.pop %v3670
    %v3672 = vmul.f32 %v3665, 1.442695
    %v3673 = vpow.pop %v3672
    %v3674 = vsel %vm753, %v3667, 0.0
    %3675 = vadd.xlane.f32.xlu0 %v3674
    %v3676 = vpop.xlane.xlu0 %3675
    %v3677 = vsel %vm753, %v3669, 0.0
    %3678 = vadd.xlane.f32.xlu0 %v3677
    %v3679 = vpop.xlane.xlu0 %3678
    %v3680 = vsel %vm753, %v3671, 0.0
    %3681 = vadd.xlane.f32.xlu0 %v3680
    %v3682 = vpop.xlane.xlu0 %3681
    %v3683 = vsel %vm753, %v3673, 0.0
    %3684 = vadd.xlane.f32.xlu0 %v3683
    %v3685 = vpop.xlane.xlu0 %3684
    %v3686 = vrcp.pop %v3676
    %v3687 = vrcp.pop %v3679
    %v3688 = vrcp.pop %v3682
    %v3689 = vrcp.pop %v3685
    %v3690 = vmul.f32 %v3667, %v3686
    %v3691 = vmul.f32 %v3669, %v3687
    %v3692 = vmul.f32 %v3671, %v3688
    %v3693 = vmul.f32 %v3673, %v3689
    %v3694 = vpack.c.bf16 %v3691, %v3690
    %v3695 = vpack.c.bf16 %v3693, %v3692
    %v3696 = vpack.c.bf16 %v3537, %v3534
    %v3697 = vpack.c.bf16 %v3545, %v3542
    %v3699 = vsel %vm753, %v3694, 0
    %3701 = vmatprep.subr.bf16.mxu0 0
    %3702 = vmatpush1.bf16.msra.mxu0 %v3696
    %3703 = vmatprep.subr.bf16.mxu0 0
    %3704 = vmatpush1.bf16.msra.mxu0 0
    %3705 = vmatprep.subr.bf16.mxu0 0
    %3706 = vmatpush1.bf16.msra.mxu0 0
    %3707 = vmatprep.subr.bf16.mxu0 0
    %3708 = vmatpush1.bf16.msra.mxu0 0
    %3709 = vmatprep.subr.bf16.mxu0 0
    %3710 = vmatpush1.bf16.msra.mxu0 0
    %3711 = vmatprep.subr.bf16.mxu0 0
    %3712 = vmatpush1.bf16.msra.mxu0 0
    %3713 = vmatprep.subr.bf16.mxu0 0
    %3714 = vmatpush1.bf16.msra.mxu0 0
    %3715 = vmatprep.subr.bf16.mxu0 0
    %3716 = vmatpush1.bf16.msra.mxu0 0
    %3717 = vmatprep.subr.bf16.mxu0 0
    %3718 = vmatpush1.bf16.msra.mxu0 0
    %3719 = vmatprep.subr.bf16.mxu0 0
    %3720 = vmatpush1.bf16.msra.mxu0 0
    %3721 = vmatprep.subr.bf16.mxu0 0
    %3722 = vmatpush1.bf16.msra.mxu0 0
    %3723 = vmatprep.subr.bf16.mxu0 0
    %3724 = vmatpush1.bf16.msra.mxu0 0
    %3725 = vmatprep.subr.bf16.mxu0 0
    %3726 = vmatpush1.bf16.msra.mxu0 0
    %3727 = vmatprep.subr.bf16.mxu0 0
    %3728 = vmatpush1.bf16.msra.mxu0 0
    %3729 = vmatprep.subr.bf16.mxu0 0
    %3730 = vmatpush1.bf16.msra.mxu0 0
    %3731 = vmatprep.subr.bf16.mxu0 0
    %3732 = vmatpush1.bf16.msra.mxu0 0
    %3733 = vmatprep.mubr.bf16.mxu0 0
    %3734 = vmatmul.mubr.bf16.gmra.mrb[0].mxu0 %v3699
    %v3735 = vpop.f32.mrb[0].mxu0
    %v3736 = vadd.f32 0.0, %v3735
    %v3737 = vpop.f32.mrb[0].mxu0
    %v3738 = vpop.f32.mrb[0].mxu0
    %v3739 = vadd.f32 0.0, %v3738
    %v3740 = vpop.f32.mrb[0].mxu0
    %3741 = vdwg.mxu0
    %v3743 = vsel %vm753, %v3695, 0
    %3745 = vmatprep.subr.bf16.mxu0 0
    %3746 = vmatpush1.bf16.msra.mxu0 %v3697
    %3747 = vmatprep.subr.bf16.mxu0 0
    %3748 = vmatpush1.bf16.msra.mxu0 0
    %3749 = vmatprep.subr.bf16.mxu0 0
    %3750 = vmatpush1.bf16.msra.mxu0 0
    %3751 = vmatprep.subr.bf16.mxu0 0
    %3752 = vmatpush1.bf16.msra.mxu0 0
    %3753 = vmatprep.subr.bf16.mxu0 0
    %3754 = vmatpush1.bf16.msra.mxu0 0
    %3755 = vmatprep.subr.bf16.mxu0 0
    %3756 = vmatpush1.bf16.msra.mxu0 0
    %3757 = vmatprep.subr.bf16.mxu0 0
    %3758 = vmatpush1.bf16.msra.mxu0 0
    %3759 = vmatprep.subr.bf16.mxu0 0
    %3760 = vmatpush1.bf16.msra.mxu0 0
    %3761 = vmatprep.subr.bf16.mxu0 0
    %3762 = vmatpush1.bf16.msra.mxu0 0
    %3763 = vmatprep.subr.bf16.mxu0 0
    %3764 = vmatpush1.bf16.msra.mxu0 0
    %3765 = vmatprep.subr.bf16.mxu0 0
    %3766 = vmatpush1.bf16.msra.mxu0 0
    %3767 = vmatprep.subr.bf16.mxu0 0
    %3768 = vmatpush1.bf16.msra.mxu0 0
    %3769 = vmatprep.subr.bf16.mxu0 0
    %3770 = vmatpush1.bf16.msra.mxu0 0
    %3771 = vmatprep.subr.bf16.mxu0 0
    %3772 = vmatpush1.bf16.msra.mxu0 0
    %3773 = vmatprep.subr.bf16.mxu0 0
    %3774 = vmatpush1.bf16.msra.mxu0 0
    %3775 = vmatprep.subr.bf16.mxu0 0
    %3776 = vmatpush1.bf16.msra.mxu0 0
    %3777 = vmatprep.mubr.bf16.mxu0 0
    %3778 = vmatmul.mubr.bf16.gmra.mrb[0].mxu0 %v3743
    %v3779 = vpop.f32.mrb[0].mxu0
    %v3780 = vadd.f32 0.0, %v3779
    %v3781 = vpop.f32.mrb[0].mxu0
    %v3782 = vpop.f32.mrb[0].mxu0
    %v3783 = vadd.f32 0.0, %v3782
    %v3784 = vpop.f32.mrb[0].mxu0
    %3785 = vdwg.mxu0
    %v3786 = vpack.c.bf16 %v3739, %v3736
    %v3787 = vpack.c.bf16 %v3783, %v3780
    %s3788 = scalar_lea.vmem %s12, 48
    %v3789 = vld [vmem:[%s3788] sm:$0xf]
    %v3790 = vld [vmem:[%s3788 + $0x4] sm:$0xf]
    %v3791 = vld [vmem:[%s3788 + $0x8] sm:$0xf]
    %v3792 = vld [vmem:[%s3788 + $0xc] sm:$0xf]
    %s3793 = scalar_lea.vmem %s6, 256
    %v3794 = vld [vmem:[%s3793] sm:$0xf]
    %v3795 = vld [vmem:[%s3793 + $0x4] sm:$0xf]
    %v3796 = vld [vmem:[%s3793 + $0x8] sm:$0xf]
    %v3797 = vld [vmem:[%s3793 + $0xc] sm:$0xf]
    %v3798 = vld [vmem:[%s3793 + $0x10] sm:$0xf]
    %v3799 = vld [vmem:[%s3793 + $0x14] sm:$0xf]
    %v3800 = vld [vmem:[%s3793 + $0x18] sm:$0xf]
    %v3801 = vld [vmem:[%s3793 + $0x1c] sm:$0xf]
    %v3802 = vld [vmem:[%s3793 + $0x20] sm:$0xf]
    %v3803 = vld [vmem:[%s3793 + $0x24] sm:$0xf]
    %v3804 = vld [vmem:[%s3793 + $0x28] sm:$0xf]
    %v3805 = vld [vmem:[%s3793 + $0x2c] sm:$0xf]
    %v3806 = vld [vmem:[%s3793 + $0x30] sm:$0xf]
    %v3807 = vld [vmem:[%s3793 + $0x34] sm:$0xf]
    %v3808 = vld [vmem:[%s3793 + $0x38] sm:$0xf]
    %v3809 = vld [vmem:[%s3793 + $0x3c] sm:$0xf]
    %s3810 = scalar_lea.vmem %s7, 4
    %v3811 = vld [vmem:[%s3810] sm:$0x1]
    %v3813 = vlaneseq
    %v3814 = vshrl.u32 %v3813, 7
    %v3815 = vsub.s32 0, %v3814
    %v3816 = vrot.slane %v3811, %v3815
    %v3834 = vunpack.c.l.b16 %v3794
    %v3835 = vunpack.c.l.b16 %v3795
    %v3836 = vunpack.c.l.b16 %v3796
    %v3837 = vunpack.c.l.b16 %v3797
    %v3838 = vunpack.c.l.b16 %v3798
    %v3839 = vunpack.c.l.b16 %v3799
    %v3840 = vunpack.c.l.b16 %v3800
    %v3841 = vunpack.c.l.b16 %v3801
    %v3842 = vunpack.c.l.b16 %v3802
    %v3843 = vunpack.c.l.b16 %v3803
    %v3844 = vunpack.c.l.b16 %v3804
    %v3845 = vunpack.c.l.b16 %v3805
    %v3846 = vunpack.c.l.b16 %v3806
    %v3847 = vunpack.c.l.b16 %v3807
    %v3848 = vunpack.c.l.b16 %v3808
    %v3849 = vunpack.c.l.b16 %v3809
    %v3850 = vpack.c.b16 %v3835, %v3834
    %v3851 = vpack.c.b16 %v3837, %v3836
    %v3852 = vpack.c.b16 %v3839, %v3838
    %v3853 = vpack.c.b16 %v3841, %v3840
    %v3854 = vpack.c.b16 %v3843, %v3842
    %v3855 = vpack.c.b16 %v3845, %v3844
    %v3856 = vpack.c.b16 %v3847, %v3846
    %v3857 = vpack.c.b16 %v3849, %v3848
    %3866 = vmatprep.subr.bf16.mxu0 0
    %3867 = vmatpush1.bf16.msra.mxu0 %v3850
    %3868 = vmatprep.subr.bf16.mxu0 0
    %3869 = vmatpush1.bf16.msra.mxu0 %v3851
    %3870 = vmatprep.subr.bf16.mxu0 0
    %3871 = vmatpush1.bf16.msra.mxu0 %v3852
    %3872 = vmatprep.subr.bf16.mxu0 0
    %3873 = vmatpush1.bf16.msra.mxu0 %v3853
    %3874 = vmatprep.subr.bf16.mxu0 0
    %3875 = vmatpush1.bf16.msra.mxu0 %v3854
    %3876 = vmatprep.subr.bf16.mxu0 0
    %3877 = vmatpush1.bf16.msra.mxu0 %v3855
    %3878 = vmatprep.subr.bf16.mxu0 0
    %3879 = vmatpush1.bf16.msra.mxu0 %v3856
    %3880 = vmatprep.subr.bf16.mxu0 0
    %3881 = vmatpush1.bf16.msra.mxu0 %v3857
    %3882 = vmatprep.subr.bf16.mxu0 0
    %3883 = vmatpush1.bf16.msra.mxu0 0
    %3884 = vmatprep.subr.bf16.mxu0 0
    %3885 = vmatpush1.bf16.msra.mxu0 0
    %3886 = vmatprep.subr.bf16.mxu0 0
    %3887 = vmatpush1.bf16.msra.mxu0 0
    %3888 = vmatprep.subr.bf16.mxu0 0
    %3889 = vmatpush1.bf16.msra.mxu0 0
    %3890 = vmatprep.subr.bf16.mxu0 0
    %3891 = vmatpush1.bf16.msra.mxu0 0
    %3892 = vmatprep.subr.bf16.mxu0 0
    %3893 = vmatpush1.bf16.msra.mxu0 0
    %3894 = vmatprep.subr.bf16.mxu0 0
    %3895 = vmatpush1.bf16.msra.mxu0 0
    %3896 = vmatprep.subr.bf16.mxu0 0
    %3897 = vmatpush1.bf16.msra.mxu0 0
    %3898 = vmatprep.mubr.bf16.mxu0 0
    %3899 = vmatmul.mubr.bf16.gmra.mrb[0].mxu0 %v3180
    %v3900 = vpop.f32.mrb[0].mxu0
    %v3901 = vadd.f32 %v3816, %v3900
    %v3902 = vpop.f32.mrb[0].mxu0
    %v3903 = vpop.f32.mrb[0].mxu0
    %v3904 = vadd.f32 %v3816, %v3903
    %v3905 = vpop.f32.mrb[0].mxu0
    %3906 = vmatprep.mubr.bf16.mxu0 0
    %3907 = vmatmul.mubr.bf16.gmra.mrb[0].mxu0 %v3181
    %v3908 = vpop.f32.mrb[0].mxu0
    %v3909 = vadd.f32 %v3816, %v3908
    %v3910 = vpop.f32.mrb[0].mxu0
    %v3911 = vpop.f32.mrb[0].mxu0
    %v3912 = vadd.f32 %v3816, %v3911
    %v3913 = vpop.f32.mrb[0].mxu0
    %3914 = vdwg.mxu0
    %s3915 = scalar_lea.vmem %s8, 256
    %v3916 = vld [vmem:[%s3915] sm:$0xf]
    %v3917 = vld [vmem:[%s3915 + $0x4] sm:$0xf]
    %v3918 = vld [vmem:[%s3915 + $0x8] sm:$0xf]
    %v3919 = vld [vmem:[%s3915 + $0xc] sm:$0xf]
    %v3920 = vld [vmem:[%s3915 + $0x10] sm:$0xf]
    %v3921 = vld [vmem:[%s3915 + $0x14] sm:$0xf]
    %v3922 = vld [vmem:[%s3915 + $0x18] sm:$0xf]
    %v3923 = vld [vmem:[%s3915 + $0x1c] sm:$0xf]
    %v3924 = vld [vmem:[%s3915 + $0x20] sm:$0xf]
    %v3925 = vld [vmem:[%s3915 + $0x24] sm:$0xf]
    %v3926 = vld [vmem:[%s3915 + $0x28] sm:$0xf]
    %v3927 = vld [vmem:[%s3915 + $0x2c] sm:$0xf]
    %v3928 = vld [vmem:[%s3915 + $0x30] sm:$0xf]
    %v3929 = vld [vmem:[%s3915 + $0x34] sm:$0xf]
    %v3930 = vld [vmem:[%s3915 + $0x38] sm:$0xf]
    %v3931 = vld [vmem:[%s3915 + $0x3c] sm:$0xf]
    %s3932 = scalar_lea.vmem %s9, 4
    %v3933 = vld [vmem:[%s3932] sm:$0x1]
    %v3935 = vlaneseq
    %v3936 = vshrl.u32 %v3935, 7
    %v3937 = vsub.s32 0, %v3936
    %v3938 = vrot.slane %v3933, %v3937
    %v3956 = vunpack.c.l.b16 %v3916
    %v3957 = vunpack.c.l.b16 %v3917
    %v3958 = vunpack.c.l.b16 %v3918
    %v3959 = vunpack.c.l.b16 %v3919
    %v3960 = vunpack.c.l.b16 %v3920
    %v3961 = vunpack.c.l.b16 %v3921
    %v3962 = vunpack.c.l.b16 %v3922
    %v3963 = vunpack.c.l.b16 %v3923
    %v3964 = vunpack.c.l.b16 %v3924
    %v3965 = vunpack.c.l.b16 %v3925
    %v3966 = vunpack.c.l.b16 %v3926
    %v3967 = vunpack.c.l.b16 %v3927
    %v3968 = vunpack.c.l.b16 %v3928
    %v3969 = vunpack.c.l.b16 %v3929
    %v3970 = vunpack.c.l.b16 %v3930
    %v3971 = vunpack.c.l.b16 %v3931
    %v3972 = vpack.c.b16 %v3957, %v3956
    %v3973 = vpack.c.b16 %v3959, %v3958
    %v3974 = vpack.c.b16 %v3961, %v3960
    %v3975 = vpack.c.b16 %v3963, %v3962
    %v3976 = vpack.c.b16 %v3965, %v3964
    %v3977 = vpack.c.b16 %v3967, %v3966
    %v3978 = vpack.c.b16 %v3969, %v3968
    %v3979 = vpack.c.b16 %v3971, %v3970
    %3988 = vmatprep.subr.bf16.mxu0 0
    %3989 = vmatpush1.bf16.msra.mxu0 %v3972
    %3990 = vmatprep.subr.bf16.mxu0 0
    %3991 = vmatpush1.bf16.msra.mxu0 %v3973
    %3992 = vmatprep.subr.bf16.mxu0 0
    %3993 = vmatpush1.bf16.msra.mxu0 %v3974
    %3994 = vmatprep.subr.bf16.mxu0 0
    %3995 = vmatpush1.bf16.msra.mxu0 %v3975
    %3996 = vmatprep.subr.bf16.mxu0 0
    %3997 = vmatpush1.bf16.msra.mxu0 %v3976
    %3998 = vmatprep.subr.bf16.mxu0 0
    %3999 = vmatpush1.bf16.msra.mxu0 %v3977
    %4000 = vmatprep.subr.bf16.mxu0 0
    %4001 = vmatpush1.bf16.msra.mxu0 %v3978
    %4002 = vmatprep.subr.bf16.mxu0 0
    %4003 = vmatpush1.bf16.msra.mxu0 %v3979
    %4004 = vmatprep.subr.bf16.mxu0 0
    %4005 = vmatpush1.bf16.msra.mxu0 0
    %4006 = vmatprep.subr.bf16.mxu0 0
    %4007 = vmatpush1.bf16.msra.mxu0 0
    %4008 = vmatprep.subr.bf16.mxu0 0
    %4009 = vmatpush1.bf16.msra.mxu0 0
    %4010 = vmatprep.subr.bf16.mxu0 0
    %4011 = vmatpush1.bf16.msra.mxu0 0
    %4012 = vmatprep.subr.bf16.mxu0 0
    %4013 = vmatpush1.bf16.msra.mxu0 0
    %4014 = vmatprep.subr.bf16.mxu0 0
    %4015 = vmatpush1.bf16.msra.mxu0 0
    %4016 = vmatprep.subr.bf16.mxu0 0
    %4017 = vmatpush1.bf16.msra.mxu0 0
    %4018 = vmatprep.subr.bf16.mxu0 0
    %4019 = vmatpush1.bf16.msra.mxu0 0
    %4020 = vmatprep.mubr.bf16.mxu0 0
    %4021 = vmatmul.mubr.bf16.gmra.mrb[0].mxu0 %v3180
    %v4022 = vpop.f32.mrb[0].mxu0
    %v4023 = vadd.f32 %v3938, %v4022
    %v4024 = vpop.f32.mrb[0].mxu0
    %v4025 = vpop.f32.mrb[0].mxu0
    %v4026 = vadd.f32 %v3938, %v4025
    %v4027 = vpop.f32.mrb[0].mxu0
    %4028 = vmatprep.mubr.bf16.mxu0 0
    %4029 = vmatmul.mubr.bf16.gmra.mrb[0].mxu0 %v3181
    %v4030 = vpop.f32.mrb[0].mxu0
    %v4031 = vadd.f32 %v3938, %v4030
    %v4032 = vpop.f32.mrb[0].mxu0
    %v4033 = vpop.f32.mrb[0].mxu0
    %v4034 = vadd.f32 %v3938, %v4033
    %v4035 = vpop.f32.mrb[0].mxu0
    %4036 = vdwg.mxu0
    %s4037 = scalar_lea.vmem %s10, 256
    %v4038 = vld [vmem:[%s4037] sm:$0xf]
    %v4039 = vld [vmem:[%s4037 + $0x4] sm:$0xf]
    %v4040 = vld [vmem:[%s4037 + $0x8] sm:$0xf]
    %v4041 = vld [vmem:[%s4037 + $0xc] sm:$0xf]
    %v4042 = vld [vmem:[%s4037 + $0x10] sm:$0xf]
    %v4043 = vld [vmem:[%s4037 + $0x14] sm:$0xf]
    %v4044 = vld [vmem:[%s4037 + $0x18] sm:$0xf]
    %v4045 = vld [vmem:[%s4037 + $0x1c] sm:$0xf]
    %v4046 = vld [vmem:[%s4037 + $0x20] sm:$0xf]
    %v4047 = vld [vmem:[%s4037 + $0x24] sm:$0xf]
    %v4048 = vld [vmem:[%s4037 + $0x28] sm:$0xf]
    %v4049 = vld [vmem:[%s4037 + $0x2c] sm:$0xf]
    %v4050 = vld [vmem:[%s4037 + $0x30] sm:$0xf]
    %v4051 = vld [vmem:[%s4037 + $0x34] sm:$0xf]
    %v4052 = vld [vmem:[%s4037 + $0x38] sm:$0xf]
    %v4053 = vld [vmem:[%s4037 + $0x3c] sm:$0xf]
    %s4054 = scalar_lea.vmem %s11, 4
    %v4055 = vld [vmem:[%s4054] sm:$0x1]
    %v4057 = vlaneseq
    %v4058 = vshrl.u32 %v4057, 7
    %v4059 = vsub.s32 0, %v4058
    %v4060 = vrot.slane %v4055, %v4059
    %v4078 = vunpack.c.l.b16 %v4038
    %v4079 = vunpack.c.l.b16 %v4039
    %v4080 = vunpack.c.l.b16 %v4040
    %v4081 = vunpack.c.l.b16 %v4041
    %v4082 = vunpack.c.l.b16 %v4042
    %v4083 = vunpack.c.l.b16 %v4043
    %v4084 = vunpack.c.l.b16 %v4044
    %v4085 = vunpack.c.l.b16 %v4045
    %v4086 = vunpack.c.l.b16 %v4046
    %v4087 = vunpack.c.l.b16 %v4047
    %v4088 = vunpack.c.l.b16 %v4048
    %v4089 = vunpack.c.l.b16 %v4049
    %v4090 = vunpack.c.l.b16 %v4050
    %v4091 = vunpack.c.l.b16 %v4051
    %v4092 = vunpack.c.l.b16 %v4052
    %v4093 = vunpack.c.l.b16 %v4053
    %v4094 = vpack.c.b16 %v4079, %v4078
    %v4095 = vpack.c.b16 %v4081, %v4080
    %v4096 = vpack.c.b16 %v4083, %v4082
    %v4097 = vpack.c.b16 %v4085, %v4084
    %v4098 = vpack.c.b16 %v4087, %v4086
    %v4099 = vpack.c.b16 %v4089, %v4088
    %v4100 = vpack.c.b16 %v4091, %v4090
    %v4101 = vpack.c.b16 %v4093, %v4092
    %4110 = vmatprep.subr.bf16.mxu0 0
    %4111 = vmatpush1.bf16.msra.mxu0 %v4094
    %4112 = vmatprep.subr.bf16.mxu0 0
    %4113 = vmatpush1.bf16.msra.mxu0 %v4095
    %4114 = vmatprep.subr.bf16.mxu0 0
    %4115 = vmatpush1.bf16.msra.mxu0 %v4096
    %4116 = vmatprep.subr.bf16.mxu0 0
    %4117 = vmatpush1.bf16.msra.mxu0 %v4097
    %4118 = vmatprep.subr.bf16.mxu0 0
    %4119 = vmatpush1.bf16.msra.mxu0 %v4098
    %4120 = vmatprep.subr.bf16.mxu0 0
    %4121 = vmatpush1.bf16.msra.mxu0 %v4099
    %4122 = vmatprep.subr.bf16.mxu0 0
    %4123 = vmatpush1.bf16.msra.mxu0 %v4100
    %4124 = vmatprep.subr.bf16.mxu0 0
    %4125 = vmatpush1.bf16.msra.mxu0 %v4101
    %4126 = vmatprep.subr.bf16.mxu0 0
    %4127 = vmatpush1.bf16.msra.mxu0 0
    %4128 = vmatprep.subr.bf16.mxu0 0
    %4129 = vmatpush1.bf16.msra.mxu0 0
    %4130 = vmatprep.subr.bf16.mxu0 0
    %4131 = vmatpush1.bf16.msra.mxu0 0
    %4132 = vmatprep.subr.bf16.mxu0 0
    %4133 = vmatpush1.bf16.msra.mxu0 0
    %4134 = vmatprep.subr.bf16.mxu0 0
    %4135 = vmatpush1.bf16.msra.mxu0 0
    %4136 = vmatprep.subr.bf16.mxu0 0
    %4137 = vmatpush1.bf16.msra.mxu0 0
    %4138 = vmatprep.subr.bf16.mxu0 0
    %4139 = vmatpush1.bf16.msra.mxu0 0
    %4140 = vmatprep.subr.bf16.mxu0 0
    %4141 = vmatpush1.bf16.msra.mxu0 0
    %4142 = vmatprep.mubr.bf16.mxu0 0
    %4143 = vmatmul.mubr.bf16.gmra.mrb[0].mxu0 %v3180
    %v4144 = vpop.f32.mrb[0].mxu0
    %v4145 = vadd.f32 %v4060, %v4144
    %v4146 = vpop.f32.mrb[0].mxu0
    %v4147 = vpop.f32.mrb[0].mxu0
    %v4148 = vadd.f32 %v4060, %v4147
    %v4149 = vpop.f32.mrb[0].mxu0
    %4150 = vmatprep.mubr.bf16.mxu0 0
    %4151 = vmatmul.mubr.bf16.gmra.mrb[0].mxu0 %v3181
    %v4152 = vpop.f32.mrb[0].mxu0
    %v4153 = vadd.f32 %v4060, %v4152
    %v4154 = vpop.f32.mrb[0].mxu0
    %v4155 = vpop.f32.mrb[0].mxu0
    %v4156 = vadd.f32 %v4060, %v4155
    %v4157 = vpop.f32.mrb[0].mxu0
    %4158 = vdwg.mxu0
    %v4159 = vpack.c.bf16 %v3904, %v3901
    %v4160 = vpack.c.bf16 %v3912, %v3909
    %v4161 = vpack.c.bf16 %v4026, %v4023
    %v4162 = vpack.c.bf16 %v4034, %v4031
    %v4164 = vsel %vm654, %v4159, 0
    %v4167 = vsel %vm654, %v4161, 0
    %4169 = vmatprep.subr.bf16.mxu0 0
    %4170 = vmatpush1.bf16.xpose.msra.mxu0 %v4167
    %4171 = vmatprep.subr.bf16.mxu0 0
    %4172 = vmatpush1.bf16.xpose.msra.mxu0 0
    %4173 = vmatprep.subr.bf16.mxu0 0
    %4174 = vmatpush1.bf16.xpose.msra.mxu0 0
    %4175 = vmatprep.subr.bf16.mxu0 0
    %4176 = vmatpush1.bf16.xpose.msra.mxu0 0
    %4177 = vmatprep.subr.bf16.mxu0 0
    %4178 = vmatpush1.bf16.xpose.msra.mxu0 0
    %4179 = vmatprep.subr.bf16.mxu0 0
    %4180 = vmatpush1.bf16.xpose.msra.mxu0 0
    %4181 = vmatprep.subr.bf16.mxu0 0
    %4182 = vmatpush1.bf16.xpose.msra.mxu0 0
    %4183 = vmatprep.subr.bf16.mxu0 0
    %4184 = vmatpush1.bf16.xpose.msra.mxu0 0
    %4185 = vmatprep.subr.bf16.mxu0 0
    %4186 = vmatpush1.bf16.xpose.msra.mxu0 0
    %4187 = vmatprep.subr.bf16.mxu0 0
    %4188 = vmatpush1.bf16.xpose.msra.mxu0 0
    %4189 = vmatprep.subr.bf16.mxu0 0
    %4190 = vmatpush1.bf16.xpose.msra.mxu0 0
    %4191 = vmatprep.subr.bf16.mxu0 0
    %4192 = vmatpush1.bf16.xpose.msra.mxu0 0
    %4193 = vmatprep.subr.bf16.mxu0 0
    %4194 = vmatpush1.bf16.xpose.msra.mxu0 0
    %4195 = vmatprep.subr.bf16.mxu0 0
    %4196 = vmatpush1.bf16.xpose.msra.mxu0 0
    %4197 = vmatprep.subr.bf16.mxu0 0
    %4198 = vmatpush1.bf16.xpose.msra.mxu0 0
    %4199 = vmatprep.subr.bf16.mxu0 0
    %4200 = vmatpush1.bf16.xpose.msra.mxu0 0
    %4201 = vmatprep.mubr.bf16.mxu0 0
    %4202 = vmatmul.mubr.bf16.gmra.mrb[0].mxu0 %v4164
    %v4203 = vpop.f32.mrb[0].mxu0
    %v4204 = vadd.f32 0.0, %v4203
    %v4205 = vpop.f32.mrb[0].mxu0
    %v4206 = vpop.f32.mrb[0].mxu0
    %v4207 = vadd.f32 0.0, %v4206
    %v4208 = vpop.f32.mrb[0].mxu0
    %4209 = vdwg.mxu0
    %v4211 = vsel %vm654, %v4160, 0
    %v4214 = vsel %vm654, %v4162, 0
    %4216 = vmatprep.subr.bf16.mxu0 0
    %4217 = vmatpush1.bf16.xpose.msra.mxu0 %v4214
    %4218 = vmatprep.subr.bf16.mxu0 0
    %4219 = vmatpush1.bf16.xpose.msra.mxu0 0
    %4220 = vmatprep.subr.bf16.mxu0 0
    %4221 = vmatpush1.bf16.xpose.msra.mxu0 0
    %4222 = vmatprep.subr.bf16.mxu0 0
    %4223 = vmatpush1.bf16.xpose.msra.mxu0 0
    %4224 = vmatprep.subr.bf16.mxu0 0
    %4225 = vmatpush1.bf16.xpose.msra.mxu0 0
    %4226 = vmatprep.subr.bf16.mxu0 0
    %4227 = vmatpush1.bf16.xpose.msra.mxu0 0
    %4228 = vmatprep.subr.bf16.mxu0 0
    %4229 = vmatpush1.bf16.xpose.msra.mxu0 0
    %4230 = vmatprep.subr.bf16.mxu0 0
    %4231 = vmatpush1.bf16.xpose.msra.mxu0 0
    %4232 = vmatprep.subr.bf16.mxu0 0
    %4233 = vmatpush1.bf16.xpose.msra.mxu0 0
    %4234 = vmatprep.subr.bf16.mxu0 0
    %4235 = vmatpush1.bf16.xpose.msra.mxu0 0
    %4236 = vmatprep.subr.bf16.mxu0 0
    %4237 = vmatpush1.bf16.xpose.msra.mxu0 0
    %4238 = vmatprep.subr.bf16.mxu0 0
    %4239 = vmatpush1.bf16.xpose.msra.mxu0 0
    %4240 = vmatprep.subr.bf16.mxu0 0
    %4241 = vmatpush1.bf16.xpose.msra.mxu0 0
    %4242 = vmatprep.subr.bf16.mxu0 0
    %4243 = vmatpush1.bf16.xpose.msra.mxu0 0
    %4244 = vmatprep.subr.bf16.mxu0 0
    %4245 = vmatpush1.bf16.xpose.msra.mxu0 0
    %4246 = vmatprep.subr.bf16.mxu0 0
    %4247 = vmatpush1.bf16.xpose.msra.mxu0 0
    %4248 = vmatprep.mubr.bf16.mxu0 0
    %4249 = vmatmul.mubr.bf16.gmra.mrb[0].mxu0 %v4211
    %v4250 = vpop.f32.mrb[0].mxu0
    %v4251 = vadd.f32 0.0, %v4250
    %v4252 = vpop.f32.mrb[0].mxu0
    %v4253 = vpop.f32.mrb[0].mxu0
    %v4254 = vadd.f32 0.0, %v4253
    %v4255 = vpop.f32.mrb[0].mxu0
    %4256 = vdwg.mxu0
    %v4257 = vmul.f32 %v4204, 0.17677669
    %v4258 = vmul.f32 %v4207, 0.17677669
    %v4259 = vmul.f32 %v4251, 0.17677669
    %v4260 = vmul.f32 %v4254, 0.17677669
    %v4261 = vsel %vm753, %v4257, -inf
    %4262 = vmax.xlane.f32.xlu0 %v4261
    %v4263 = vpop.xlane.xlu0 %4262
    %v4264 = vsel %vm753, %v4258, -inf
    %4265 = vmax.xlane.f32.xlu0 %v4264
    %v4266 = vpop.xlane.xlu0 %4265
    %v4267 = vsel %vm753, %v4259, -inf
    %4268 = vmax.xlane.f32.xlu0 %v4267
    %v4269 = vpop.xlane.xlu0 %4268
    %v4270 = vsel %vm753, %v4260, -inf
    %4271 = vmax.xlane.f32.xlu0 %v4270
    %v4272 = vpop.xlane.xlu0 %4271
    %v4273 = vsub.f32 %v4257, %v4263
    %v4274 = vsub.f32 %v4258, %v4266
    %v4275 = vsub.f32 %v4259, %v4269
    %v4276 = vsub.f32 %v4260, %v4272
    %v4277 = vmul.f32 %v4273, 1.442695
    %v4278 = vpow.pop %v4277
    %v4279 = vmul.f32 %v4274, 1.442695
    %v4280 = vpow.pop %v4279
    %v4281 = vmul.f32 %v4275, 1.442695
    %v4282 = vpow.pop %v4281
    %v4283 = vmul.f32 %v4276, 1.442695
    %v4284 = vpow.pop %v4283
    %v4285 = vsel %vm753, %v4278, 0.0
    %4286 = vadd.xlane.f32.xlu0 %v4285
    %v4287 = vpop.xlane.xlu0 %4286
    %v4288 = vsel %vm753, %v4280, 0.0
    %4289 = vadd.xlane.f32.xlu0 %v4288
    %v4290 = vpop.xlane.xlu0 %4289
    %v4291 = vsel %vm753, %v4282, 0.0
    %4292 = vadd.xlane.f32.xlu0 %v4291
    %v4293 = vpop.xlane.xlu0 %4292
    %v4294 = vsel %vm753, %v4284, 0.0
    %4295 = vadd.xlane.f32.xlu0 %v4294
    %v4296 = vpop.xlane.xlu0 %4295
    %v4297 = vrcp.pop %v4287
    %v4298 = vrcp.pop %v4290
    %v4299 = vrcp.pop %v4293
    %v4300 = vrcp.pop %v4296
    %v4301 = vmul.f32 %v4278, %v4297
    %v4302 = vmul.f32 %v4280, %v4298
    %v4303 = vmul.f32 %v4282, %v4299
    %v4304 = vmul.f32 %v4284, %v4300
    %v4305 = vpack.c.bf16 %v4302, %v4301
    %v4306 = vpack.c.bf16 %v4304, %v4303
    %v4307 = vpack.c.bf16 %v4148, %v4145
    %v4308 = vpack.c.bf16 %v4156, %v4153
    %v4310 = vsel %vm753, %v4305, 0
    %4312 = vmatprep.subr.bf16.mxu0 0
    %4313 = vmatpush1.bf16.msra.mxu0 %v4307
    %4314 = vmatprep.subr.bf16.mxu0 0
    %4315 = vmatpush1.bf16.msra.mxu0 0
    %4316 = vmatprep.subr.bf16.mxu0 0
    %4317 = vmatpush1.bf16.msra.mxu0 0
    %4318 = vmatprep.subr.bf16.mxu0 0
    %4319 = vmatpush1.bf16.msra.mxu0 0
    %4320 = vmatprep.subr.bf16.mxu0 0
    %4321 = vmatpush1.bf16.msra.mxu0 0
    %4322 = vmatprep.subr.bf16.mxu0 0
    %4323 = vmatpush1.bf16.msra.mxu0 0
    %4324 = vmatprep.subr.bf16.mxu0 0
    %4325 = vmatpush1.bf16.msra.mxu0 0
    %4326 = vmatprep.subr.bf16.mxu0 0
    %4327 = vmatpush1.bf16.msra.mxu0 0
    %4328 = vmatprep.subr.bf16.mxu0 0
    %4329 = vmatpush1.bf16.msra.mxu0 0
    %4330 = vmatprep.subr.bf16.mxu0 0
    %4331 = vmatpush1.bf16.msra.mxu0 0
    %4332 = vmatprep.subr.bf16.mxu0 0
    %4333 = vmatpush1.bf16.msra.mxu0 0
    %4334 = vmatprep.subr.bf16.mxu0 0
    %4335 = vmatpush1.bf16.msra.mxu0 0
    %4336 = vmatprep.subr.bf16.mxu0 0
    %4337 = vmatpush1.bf16.msra.mxu0 0
    %4338 = vmatprep.subr.bf16.mxu0 0
    %4339 = vmatpush1.bf16.msra.mxu0 0
    %4340 = vmatprep.subr.bf16.mxu0 0
    %4341 = vmatpush1.bf16.msra.mxu0 0
    %4342 = vmatprep.subr.bf16.mxu0 0
    %4343 = vmatpush1.bf16.msra.mxu0 0
    %4344 = vmatprep.mubr.bf16.mxu0 0
    %4345 = vmatmul.mubr.bf16.gmra.mrb[0].mxu0 %v4310
    %v4346 = vpop.f32.mrb[0].mxu0
    %v4347 = vadd.f32 0.0, %v4346
    %v4348 = vpop.f32.mrb[0].mxu0
    %v4349 = vpop.f32.mrb[0].mxu0
    %v4350 = vadd.f32 0.0, %v4349
    %v4351 = vpop.f32.mrb[0].mxu0
    %4352 = vdwg.mxu0
    %v4354 = vsel %vm753, %v4306, 0
    %4356 = vmatprep.subr.bf16.mxu0 0
    %4357 = vmatpush1.bf16.msra.mxu0 %v4308
    %4358 = vmatprep.subr.bf16.mxu0 0
    %4359 = vmatpush1.bf16.msra.mxu0 0
    %4360 = vmatprep.subr.bf16.mxu0 0
    %4361 = vmatpush1.bf16.msra.mxu0 0
    %4362 = vmatprep.subr.bf16.mxu0 0
    %4363 = vmatpush1.bf16.msra.mxu0 0
    %4364 = vmatprep.subr.bf16.mxu0 0
    %4365 = vmatpush1.bf16.msra.mxu0 0
    %4366 = vmatprep.subr.bf16.mxu0 0
    %4367 = vmatpush1.bf16.msra.mxu0 0
    %4368 = vmatprep.subr.bf16.mxu0 0
    %4369 = vmatpush1.bf16.msra.mxu0 0
    %4370 = vmatprep.subr.bf16.mxu0 0
    %4371 = vmatpush1.bf16.msra.mxu0 0
    %4372 = vmatprep.subr.bf16.mxu0 0
    %4373 = vmatpush1.bf16.msra.mxu0 0
    %4374 = vmatprep.subr.bf16.mxu0 0
    %4375 = vmatpush1.bf16.msra.mxu0 0
    %4376 = vmatprep.subr.bf16.mxu0 0
    %4377 = vmatpush1.bf16.msra.mxu0 0
    %4378 = vmatprep.subr.bf16.mxu0 0
    %4379 = vmatpush1.bf16.msra.mxu0 0
    %4380 = vmatprep.subr.bf16.mxu0 0
    %4381 = vmatpush1.bf16.msra.mxu0 0
    %4382 = vmatprep.subr.bf16.mxu0 0
    %4383 = vmatpush1.bf16.msra.mxu0 0
    %4384 = vmatprep.subr.bf16.mxu0 0
    %4385 = vmatpush1.bf16.msra.mxu0 0
    %4386 = vmatprep.subr.bf16.mxu0 0
    %4387 = vmatpush1.bf16.msra.mxu0 0
    %4388 = vmatprep.mubr.bf16.mxu0 0
    %4389 = vmatmul.mubr.bf16.gmra.mrb[0].mxu0 %v4354
    %v4390 = vpop.f32.mrb[0].mxu0
    %v4391 = vadd.f32 0.0, %v4390
    %v4392 = vpop.f32.mrb[0].mxu0
    %v4393 = vpop.f32.mrb[0].mxu0
    %v4394 = vadd.f32 0.0, %v4393
    %v4395 = vpop.f32.mrb[0].mxu0
    %4396 = vdwg.mxu0
    %v4397 = vpack.c.bf16 %v4350, %v4347
    %v4398 = vpack.c.bf16 %v4394, %v4391
    %s4399 = scalar_lea.vmem %s12, 64
    %v4400 = vld [vmem:[%s4399] sm:$0xf]
    %v4401 = vld [vmem:[%s4399 + $0x4] sm:$0xf]
    %v4402 = vld [vmem:[%s4399 + $0x8] sm:$0xf]
    %v4403 = vld [vmem:[%s4399 + $0xc] sm:$0xf]
    %v4408 = vunpack.c.l.b16 %v4400
    %v4409 = vunpack.c.l.b16 %v4401
    %v4410 = vunpack.c.l.b16 %v4402
    %v4411 = vunpack.c.l.b16 %v4403
    %v4412 = vpack.c.b16 %v4409, %v4408
    %v4413 = vpack.c.b16 %v4411, %v4410
    %v4417 = vsel %vm654, %v4397, 0
    %v4420 = vsel %vm654, %v4398, 0
    %4422 = vmatprep.subr.bf16.mxu0 0
    %4423 = vmatpush1.bf16.msra.mxu0 %v4412
    %4424 = vmatprep.subr.bf16.mxu0 0
    %4425 = vmatpush1.bf16.msra.mxu0 %v4413
    %4426 = vmatprep.subr.bf16.mxu0 0
    %4427 = vmatpush1.bf16.msra.mxu0 0
    %4428 = vmatprep.subr.bf16.mxu0 0
    %4429 = vmatpush1.bf16.msra.mxu0 0
    %4430 = vmatprep.subr.bf16.mxu0 0
    %4431 = vmatpush1.bf16.msra.mxu0 0
    %4432 = vmatprep.subr.bf16.mxu0 0
    %4433 = vmatpush1.bf16.msra.mxu0 0
    %4434 = vmatprep.subr.bf16.mxu0 0
    %4435 = vmatpush1.bf16.msra.mxu0 0
    %4436 = vmatprep.subr.bf16.mxu0 0
    %4437 = vmatpush1.bf16.msra.mxu0 0
    %4438 = vmatprep.subr.bf16.mxu0 0
    %4439 = vmatpush1.bf16.msra.mxu0 0
    %4440 = vmatprep.subr.bf16.mxu0 0
    %4441 = vmatpush1.bf16.msra.mxu0 0
    %4442 = vmatprep.subr.bf16.mxu0 0
    %4443 = vmatpush1.bf16.msra.mxu0 0
    %4444 = vmatprep.subr.bf16.mxu0 0
    %4445 = vmatpush1.bf16.msra.mxu0 0
    %4446 = vmatprep.subr.bf16.mxu0 0
    %4447 = vmatpush1.bf16.msra.mxu0 0
    %4448 = vmatprep.subr.bf16.mxu0 0
    %4449 = vmatpush1.bf16.msra.mxu0 0
    %4450 = vmatprep.subr.bf16.mxu0 0
    %4451 = vmatpush1.bf16.msra.mxu0 0
    %4452 = vmatprep.subr.bf16.mxu0 0
    %4453 = vmatpush1.bf16.msra.mxu0 0
    %4454 = vmatprep.mubr.bf16.mxu0 0
    %4455 = vmatmul.mubr.bf16.gmra.mrb[0].mxu0 %v4417
    %v4456 = vpop.f32.mrb[0].mxu0
    %v4457 = vadd.f32 0.0, %v4456
    %v4458 = vpop.f32.mrb[0].mxu0
    %v4459 = vpop.f32.mrb[0].mxu0
    %v4460 = vadd.f32 0.0, %v4459
    %v4461 = vpop.f32.mrb[0].mxu0
    %4462 = vmatprep.mubr.bf16.mxu0 0
    %4463 = vmatmul.mubr.bf16.gmra.mrb[0].mxu0 %v4420
    %v4464 = vpop.f32.mrb[0].mxu0
    %v4465 = vadd.f32 0.0, %v4464
    %v4466 = vpop.f32.mrb[0].mxu0
    %v4467 = vpop.f32.mrb[0].mxu0
    %v4468 = vadd.f32 0.0, %v4467
    %v4469 = vpop.f32.mrb[0].mxu0
    %4470 = vdwg.mxu0
    %v4475 = vunpack.c.l.b16 %v3789
    %v4476 = vunpack.c.l.b16 %v3790
    %v4477 = vunpack.c.l.b16 %v3791
    %v4478 = vunpack.c.l.b16 %v3792
    %v4479 = vpack.c.b16 %v4476, %v4475
    %v4480 = vpack.c.b16 %v4478, %v4477
    %v4484 = vsel %vm654, %v3786, 0
    %v4487 = vsel %vm654, %v3787, 0
    %4489 = vmatprep.subr.bf16.mxu0 0
    %4490 = vmatpush1.bf16.msra.mxu0 %v4479
    %4491 = vmatprep.subr.bf16.mxu0 0
    %4492 = vmatpush1.bf16.msra.mxu0 %v4480
    %4493 = vmatprep.subr.bf16.mxu0 0
    %4494 = vmatpush1.bf16.msra.mxu0 0
    %4495 = vmatprep.subr.bf16.mxu0 0
    %4496 = vmatpush1.bf16.msra.mxu0 0
    %4497 = vmatprep.subr.bf16.mxu0 0
    %4498 = vmatpush1.bf16.msra.mxu0 0
    %4499 = vmatprep.subr.bf16.mxu0 0
    %4500 = vmatpush1.bf16.msra.mxu0 0
    %4501 = vmatprep.subr.bf16.mxu0 0
    %4502 = vmatpush1.bf16.msra.mxu0 0
    %4503 = vmatprep.subr.bf16.mxu0 0
    %4504 = vmatpush1.bf16.msra.mxu0 0
    %4505 = vmatprep.subr.bf16.mxu0 0
    %4506 = vmatpush1.bf16.msra.mxu0 0
    %4507 = vmatprep.subr.bf16.mxu0 0
    %4508 = vmatpush1.bf16.msra.mxu0 0
    %4509 = vmatprep.subr.bf16.mxu0 0
    %4510 = vmatpush1.bf16.msra.mxu0 0
    %4511 = vmatprep.subr.bf16.mxu0 0
    %4512 = vmatpush1.bf16.msra.mxu0 0
    %4513 = vmatprep.subr.bf16.mxu0 0
    %4514 = vmatpush1.bf16.msra.mxu0 0
    %4515 = vmatprep.subr.bf16.mxu0 0
    %4516 = vmatpush1.bf16.msra.mxu0 0
    %4517 = vmatprep.subr.bf16.mxu0 0
    %4518 = vmatpush1.bf16.msra.mxu0 0
    %4519 = vmatprep.subr.bf16.mxu0 0
    %4520 = vmatpush1.bf16.msra.mxu0 0
    %4521 = vmatprep.mubr.bf16.mxu0 0
    %4522 = vmatmul.mubr.bf16.gmra.mrb[0].mxu0 %v4484
    %v4523 = vpop.f32.mrb[0].mxu0
    %v4524 = vadd.f32 %v4457, %v4523
    %v4525 = vpop.f32.mrb[0].mxu0
    %v4526 = vpop.f32.mrb[0].mxu0
    %v4527 = vadd.f32 %v4460, %v4526
    %v4528 = vpop.f32.mrb[0].mxu0
    %4529 = vmatprep.mubr.bf16.mxu0 0
    %4530 = vmatmul.mubr.bf16.gmra.mrb[0].mxu0 %v4487
    %v4531 = vpop.f32.mrb[0].mxu0
    %v4532 = vadd.f32 %v4465, %v4531
    %v4533 = vpop.f32.mrb[0].mxu0
    %v4534 = vpop.f32.mrb[0].mxu0
    %v4535 = vadd.f32 %v4468, %v4534
    %v4536 = vpop.f32.mrb[0].mxu0
    %4537 = vdwg.mxu0
    %s4538 = scalar_lea.vmem %s6, 320
    %v4539 = vld [vmem:[%s4538] sm:$0xf]
    %v4540 = vld [vmem:[%s4538 + $0x4] sm:$0xf]
    %v4541 = vld [vmem:[%s4538 + $0x8] sm:$0xf]
    %v4542 = vld [vmem:[%s4538 + $0xc] sm:$0xf]
    %v4543 = vld [vmem:[%s4538 + $0x10] sm:$0xf]
    %v4544 = vld [vmem:[%s4538 + $0x14] sm:$0xf]
    %v4545 = vld [vmem:[%s4538 + $0x18] sm:$0xf]
    %v4546 = vld [vmem:[%s4538 + $0x1c] sm:$0xf]
    %v4547 = vld [vmem:[%s4538 + $0x20] sm:$0xf]
    %v4548 = vld [vmem:[%s4538 + $0x24] sm:$0xf]
    %v4549 = vld [vmem:[%s4538 + $0x28] sm:$0xf]
    %v4550 = vld [vmem:[%s4538 + $0x2c] sm:$0xf]
    %v4551 = vld [vmem:[%s4538 + $0x30] sm:$0xf]
    %v4552 = vld [vmem:[%s4538 + $0x34] sm:$0xf]
    %v4553 = vld [vmem:[%s4538 + $0x38] sm:$0xf]
    %v4554 = vld [vmem:[%s4538 + $0x3c] sm:$0xf]
    %s4555 = scalar_lea.vmem %s7, 5
    %v4556 = vld [vmem:[%s4555] sm:$0x1]
    %v4558 = vlaneseq
    %v4559 = vshrl.u32 %v4558, 7
    %v4560 = vsub.s32 0, %v4559
    %v4561 = vrot.slane %v4556, %v4560
    %v4579 = vunpack.c.l.b16 %v4539
    %v4580 = vunpack.c.l.b16 %v4540
    %v4581 = vunpack.c.l.b16 %v4541
    %v4582 = vunpack.c.l.b16 %v4542
    %v4583 = vunpack.c.l.b16 %v4543
    %v4584 = vunpack.c.l.b16 %v4544
    %v4585 = vunpack.c.l.b16 %v4545
    %v4586 = vunpack.c.l.b16 %v4546
    %v4587 = vunpack.c.l.b16 %v4547
    %v4588 = vunpack.c.l.b16 %v4548
    %v4589 = vunpack.c.l.b16 %v4549
    %v4590 = vunpack.c.l.b16 %v4550
    %v4591 = vunpack.c.l.b16 %v4551
    %v4592 = vunpack.c.l.b16 %v4552
    %v4593 = vunpack.c.l.b16 %v4553
    %v4594 = vunpack.c.l.b16 %v4554
    %v4595 = vpack.c.b16 %v4580, %v4579
    %v4596 = vpack.c.b16 %v4582, %v4581
    %v4597 = vpack.c.b16 %v4584, %v4583
    %v4598 = vpack.c.b16 %v4586, %v4585
    %v4599 = vpack.c.b16 %v4588, %v4587
    %v4600 = vpack.c.b16 %v4590, %v4589
    %v4601 = vpack.c.b16 %v4592, %v4591
    %v4602 = vpack.c.b16 %v4594, %v4593
    %4611 = vmatprep.subr.bf16.mxu0 0
    %4612 = vmatpush1.bf16.msra.mxu0 %v4595
    %4613 = vmatprep.subr.bf16.mxu0 0
    %4614 = vmatpush1.bf16.msra.mxu0 %v4596
    %4615 = vmatprep.subr.bf16.mxu0 0
    %4616 = vmatpush1.bf16.msra.mxu0 %v4597
    %4617 = vmatprep.subr.bf16.mxu0 0
    %4618 = vmatpush1.bf16.msra.mxu0 %v4598
    %4619 = vmatprep.subr.bf16.mxu0 0
    %4620 = vmatpush1.bf16.msra.mxu0 %v4599
    %4621 = vmatprep.subr.bf16.mxu0 0
    %4622 = vmatpush1.bf16.msra.mxu0 %v4600
    %4623 = vmatprep.subr.bf16.mxu0 0
    %4624 = vmatpush1.bf16.msra.mxu0 %v4601
    %4625 = vmatprep.subr.bf16.mxu0 0
    %4626 = vmatpush1.bf16.msra.mxu0 %v4602
    %4627 = vmatprep.subr.bf16.mxu0 0
    %4628 = vmatpush1.bf16.msra.mxu0 0
    %4629 = vmatprep.subr.bf16.mxu0 0
    %4630 = vmatpush1.bf16.msra.mxu0 0
    %4631 = vmatprep.subr.bf16.mxu0 0
    %4632 = vmatpush1.bf16.msra.mxu0 0
    %4633 = vmatprep.subr.bf16.mxu0 0
    %4634 = vmatpush1.bf16.msra.mxu0 0
    %4635 = vmatprep.subr.bf16.mxu0 0
    %4636 = vmatpush1.bf16.msra.mxu0 0
    %4637 = vmatprep.subr.bf16.mxu0 0
    %4638 = vmatpush1.bf16.msra.mxu0 0
    %4639 = vmatprep.subr.bf16.mxu0 0
    %4640 = vmatpush1.bf16.msra.mxu0 0
    %4641 = vmatprep.subr.bf16.mxu0 0
    %4642 = vmatpush1.bf16.msra.mxu0 0
    %4643 = vmatprep.mubr.bf16.mxu0 0
    %4644 = vmatmul.mubr.bf16.gmra.mrb[0].mxu0 %v3180
    %v4645 = vpop.f32.mrb[0].mxu0
    %v4646 = vadd.f32 %v4561, %v4645
    %v4647 = vpop.f32.mrb[0].mxu0
    %v4648 = vpop.f32.mrb[0].mxu0
    %v4649 = vadd.f32 %v4561, %v4648
    %v4650 = vpop.f32.mrb[0].mxu0
    %4651 = vmatprep.mubr.bf16.mxu0 0
    %4652 = vmatmul.mubr.bf16.gmra.mrb[0].mxu0 %v3181
    %v4653 = vpop.f32.mrb[0].mxu0
    %v4654 = vadd.f32 %v4561, %v4653
    %v4655 = vpop.f32.mrb[0].mxu0
    %v4656 = vpop.f32.mrb[0].mxu0
    %v4657 = vadd.f32 %v4561, %v4656
    %v4658 = vpop.f32.mrb[0].mxu0
    %4659 = vdwg.mxu0
    %s4660 = scalar_lea.vmem %s8, 320
    %v4661 = vld [vmem:[%s4660] sm:$0xf]
    %v4662 = vld [vmem:[%s4660 + $0x4] sm:$0xf]
    %v4663 = vld [vmem:[%s4660 + $0x8] sm:$0xf]
    %v4664 = vld [vmem:[%s4660 + $0xc] sm:$0xf]
    %v4665 = vld [vmem:[%s4660 + $0x10] sm:$0xf]
    %v4666 = vld [vmem:[%s4660 + $0x14] sm:$0xf]
    %v4667 = vld [vmem:[%s4660 + $0x18] sm:$0xf]
    %v4668 = vld [vmem:[%s4660 + $0x1c] sm:$0xf]
    %v4669 = vld [vmem:[%s4660 + $0x20] sm:$0xf]
    %v4670 = vld [vmem:[%s4660 + $0x24] sm:$0xf]
    %v4671 = vld [vmem:[%s4660 + $0x28] sm:$0xf]
    %v4672 = vld [vmem:[%s4660 + $0x2c] sm:$0xf]
    %v4673 = vld [vmem:[%s4660 + $0x30] sm:$0xf]
    %v4674 = vld [vmem:[%s4660 + $0x34] sm:$0xf]
    %v4675 = vld [vmem:[%s4660 + $0x38] sm:$0xf]
    %v4676 = vld [vmem:[%s4660 + $0x3c] sm:$0xf]
    %s4677 = scalar_lea.vmem %s9, 5
    %v4678 = vld [vmem:[%s4677] sm:$0x1]
    %v4680 = vlaneseq
    %v4681 = vshrl.u32 %v4680, 7
    %v4682 = vsub.s32 0, %v4681
    %v4683 = vrot.slane %v4678, %v4682
    %v4701 = vunpack.c.l.b16 %v4661
    %v4702 = vunpack.c.l.b16 %v4662
    %v4703 = vunpack.c.l.b16 %v4663
    %v4704 = vunpack.c.l.b16 %v4664
    %v4705 = vunpack.c.l.b16 %v4665
    %v4706 = vunpack.c.l.b16 %v4666
    %v4707 = vunpack.c.l.b16 %v4667
    %v4708 = vunpack.c.l.b16 %v4668
    %v4709 = vunpack.c.l.b16 %v4669
    %v4710 = vunpack.c.l.b16 %v4670
    %v4711 = vunpack.c.l.b16 %v4671
    %v4712 = vunpack.c.l.b16 %v4672
    %v4713 = vunpack.c.l.b16 %v4673
    %v4714 = vunpack.c.l.b16 %v4674
    %v4715 = vunpack.c.l.b16 %v4675
    %v4716 = vunpack.c.l.b16 %v4676
    %v4717 = vpack.c.b16 %v4702, %v4701
    %v4718 = vpack.c.b16 %v4704, %v4703
    %v4719 = vpack.c.b16 %v4706, %v4705
    %v4720 = vpack.c.b16 %v4708, %v4707
    %v4721 = vpack.c.b16 %v4710, %v4709
    %v4722 = vpack.c.b16 %v4712, %v4711
    %v4723 = vpack.c.b16 %v4714, %v4713
    %v4724 = vpack.c.b16 %v4716, %v4715
    %4733 = vmatprep.subr.bf16.mxu0 0
    %4734 = vmatpush1.bf16.msra.mxu0 %v4717
    %4735 = vmatprep.subr.bf16.mxu0 0
    %4736 = vmatpush1.bf16.msra.mxu0 %v4718
    %4737 = vmatprep.subr.bf16.mxu0 0
    %4738 = vmatpush1.bf16.msra.mxu0 %v4719
    %4739 = vmatprep.subr.bf16.mxu0 0
    %4740 = vmatpush1.bf16.msra.mxu0 %v4720
    %4741 = vmatprep.subr.bf16.mxu0 0
    %4742 = vmatpush1.bf16.msra.mxu0 %v4721
    %4743 = vmatprep.subr.bf16.mxu0 0
    %4744 = vmatpush1.bf16.msra.mxu0 %v4722
    %4745 = vmatprep.subr.bf16.mxu0 0
    %4746 = vmatpush1.bf16.msra.mxu0 %v4723
    %4747 = vmatprep.subr.bf16.mxu0 0
    %4748 = vmatpush1.bf16.msra.mxu0 %v4724
    %4749 = vmatprep.subr.bf16.mxu0 0
    %4750 = vmatpush1.bf16.msra.mxu0 0
    %4751 = vmatprep.subr.bf16.mxu0 0
    %4752 = vmatpush1.bf16.msra.mxu0 0
    %4753 = vmatprep.subr.bf16.mxu0 0
    %4754 = vmatpush1.bf16.msra.mxu0 0
    %4755 = vmatprep.subr.bf16.mxu0 0
    %4756 = vmatpush1.bf16.msra.mxu0 0
    %4757 = vmatprep.subr.bf16.mxu0 0
    %4758 = vmatpush1.bf16.msra.mxu0 0
    %4759 = vmatprep.subr.bf16.mxu0 0
    %4760 = vmatpush1.bf16.msra.mxu0 0
    %4761 = vmatprep.subr.bf16.mxu0 0
    %4762 = vmatpush1.bf16.msra.mxu0 0
    %4763 = vmatprep.subr.bf16.mxu0 0
    %4764 = vmatpush1.bf16.msra.mxu0 0
    %4765 = vmatprep.mubr.bf16.mxu0 0
    %4766 = vmatmul.mubr.bf16.gmra.mrb[0].mxu0 %v3180
    %v4767 = vpop.f32.mrb[0].mxu0
    %v4768 = vadd.f32 %v4683, %v4767
    %v4769 = vpop.f32.mrb[0].mxu0
    %v4770 = vpop.f32.mrb[0].mxu0
    %v4771 = vadd.f32 %v4683, %v4770
    %v4772 = vpop.f32.mrb[0].mxu0
    %4773 = vmatprep.mubr.bf16.mxu0 0
    %4774 = vmatmul.mubr.bf16.gmra.mrb[0].mxu0 %v3181
    %v4775 = vpop.f32.mrb[0].mxu0
    %v4776 = vadd.f32 %v4683, %v4775
    %v4777 = vpop.f32.mrb[0].mxu0
    %v4778 = vpop.f32.mrb[0].mxu0
    %v4779 = vadd.f32 %v4683, %v4778
    %v4780 = vpop.f32.mrb[0].mxu0
    %4781 = vdwg.mxu0
    %s4782 = scalar_lea.vmem %s10, 320
    %v4783 = vld [vmem:[%s4782] sm:$0xf]
    %v4784 = vld [vmem:[%s4782 + $0x4] sm:$0xf]
    %v4785 = vld [vmem:[%s4782 + $0x8] sm:$0xf]
    %v4786 = vld [vmem:[%s4782 + $0xc] sm:$0xf]
    %v4787 = vld [vmem:[%s4782 + $0x10] sm:$0xf]
    %v4788 = vld [vmem:[%s4782 + $0x14] sm:$0xf]
    %v4789 = vld [vmem:[%s4782 + $0x18] sm:$0xf]
    %v4790 = vld [vmem:[%s4782 + $0x1c] sm:$0xf]
    %v4791 = vld [vmem:[%s4782 + $0x20] sm:$0xf]
    %v4792 = vld [vmem:[%s4782 + $0x24] sm:$0xf]
    %v4793 = vld [vmem:[%s4782 + $0x28] sm:$0xf]
    %v4794 = vld [vmem:[%s4782 + $0x2c] sm:$0xf]
    %v4795 = vld [vmem:[%s4782 + $0x30] sm:$0xf]
    %v4796 = vld [vmem:[%s4782 + $0x34] sm:$0xf]
    %v4797 = vld [vmem:[%s4782 + $0x38] sm:$0xf]
    %v4798 = vld [vmem:[%s4782 + $0x3c] sm:$0xf]
    %s4799 = scalar_lea.vmem %s11, 5
    %v4800 = vld [vmem:[%s4799] sm:$0x1]
    %v4802 = vlaneseq
    %v4803 = vshrl.u32 %v4802, 7
    %v4804 = vsub.s32 0, %v4803
    %v4805 = vrot.slane %v4800, %v4804
    %v4823 = vunpack.c.l.b16 %v4783
    %v4824 = vunpack.c.l.b16 %v4784
    %v4825 = vunpack.c.l.b16 %v4785
    %v4826 = vunpack.c.l.b16 %v4786
    %v4827 = vunpack.c.l.b16 %v4787
    %v4828 = vunpack.c.l.b16 %v4788
    %v4829 = vunpack.c.l.b16 %v4789
    %v4830 = vunpack.c.l.b16 %v4790
    %v4831 = vunpack.c.l.b16 %v4791
    %v4832 = vunpack.c.l.b16 %v4792
    %v4833 = vunpack.c.l.b16 %v4793
    %v4834 = vunpack.c.l.b16 %v4794
    %v4835 = vunpack.c.l.b16 %v4795
    %v4836 = vunpack.c.l.b16 %v4796
    %v4837 = vunpack.c.l.b16 %v4797
    %v4838 = vunpack.c.l.b16 %v4798
    %v4839 = vpack.c.b16 %v4824, %v4823
    %v4840 = vpack.c.b16 %v4826, %v4825
    %v4841 = vpack.c.b16 %v4828, %v4827
    %v4842 = vpack.c.b16 %v4830, %v4829
    %v4843 = vpack.c.b16 %v4832, %v4831
    %v4844 = vpack.c.b16 %v4834, %v4833
    %v4845 = vpack.c.b16 %v4836, %v4835
    %v4846 = vpack.c.b16 %v4838, %v4837
    %4855 = vmatprep.subr.bf16.mxu0 0
    %4856 = vmatpush1.bf16.msra.mxu0 %v4839
    %4857 = vmatprep.subr.bf16.mxu0 0
    %4858 = vmatpush1.bf16.msra.mxu0 %v4840
    %4859 = vmatprep.subr.bf16.mxu0 0
    %4860 = vmatpush1.bf16.msra.mxu0 %v4841
    %4861 = vmatprep.subr.bf16.mxu0 0
    %4862 = vmatpush1.bf16.msra.mxu0 %v4842
    %4863 = vmatprep.subr.bf16.mxu0 0
    %4864 = vmatpush1.bf16.msra.mxu0 %v4843
    %4865 = vmatprep.subr.bf16.mxu0 0
    %4866 = vmatpush1.bf16.msra.mxu0 %v4844
    %4867 = vmatprep.subr.bf16.mxu0 0
    %4868 = vmatpush1.bf16.msra.mxu0 %v4845
    %4869 = vmatprep.subr.bf16.mxu0 0
    %4870 = vmatpush1.bf16.msra.mxu0 %v4846
    %4871 = vmatprep.subr.bf16.mxu0 0
    %4872 = vmatpush1.bf16.msra.mxu0 0
    %4873 = vmatprep.subr.bf16.mxu0 0
    %4874 = vmatpush1.bf16.msra.mxu0 0
    %4875 = vmatprep.subr.bf16.mxu0 0
    %4876 = vmatpush1.bf16.msra.mxu0 0
    %4877 = vmatprep.subr.bf16.mxu0 0
    %4878 = vmatpush1.bf16.msra.mxu0 0
    %4879 = vmatprep.subr.bf16.mxu0 0
    %4880 = vmatpush1.bf16.msra.mxu0 0
    %4881 = vmatprep.subr.bf16.mxu0 0
    %4882 = vmatpush1.bf16.msra.mxu0 0
    %4883 = vmatprep.subr.bf16.mxu0 0
    %4884 = vmatpush1.bf16.msra.mxu0 0
    %4885 = vmatprep.subr.bf16.mxu0 0
    %4886 = vmatpush1.bf16.msra.mxu0 0
    %4887 = vmatprep.mubr.bf16.mxu0 0
    %4888 = vmatmul.mubr.bf16.gmra.mrb[0].mxu0 %v3180
    %v4889 = vpop.f32.mrb[0].mxu0
    %v4890 = vadd.f32 %v4805, %v4889
    %v4891 = vpop.f32.mrb[0].mxu0
    %v4892 = vpop.f32.mrb[0].mxu0
    %v4893 = vadd.f32 %v4805, %v4892
    %v4894 = vpop.f32.mrb[0].mxu0
    %4895 = vmatprep.mubr.bf16.mxu0 0
    %4896 = vmatmul.mubr.bf16.gmra.mrb[0].mxu0 %v3181
    %v4897 = vpop.f32.mrb[0].mxu0
    %v4898 = vadd.f32 %v4805, %v4897
    %v4899 = vpop.f32.mrb[0].mxu0
    %v4900 = vpop.f32.mrb[0].mxu0
    %v4901 = vadd.f32 %v4805, %v4900
    %v4902 = vpop.f32.mrb[0].mxu0
    %4903 = vdwg.mxu0
    %v4904 = vpack.c.bf16 %v4649, %v4646
    %v4905 = vpack.c.bf16 %v4657, %v4654
    %v4906 = vpack.c.bf16 %v4771, %v4768
    %v4907 = vpack.c.bf16 %v4779, %v4776
    %v4909 = vsel %vm654, %v4904, 0
    %v4912 = vsel %vm654, %v4906, 0
    %4914 = vmatprep.subr.bf16.mxu0 0
    %4915 = vmatpush1.bf16.xpose.msra.mxu0 %v4912
    %4916 = vmatprep.subr.bf16.mxu0 0
    %4917 = vmatpush1.bf16.xpose.msra.mxu0 0
    %4918 = vmatprep.subr.bf16.mxu0 0
    %4919 = vmatpush1.bf16.xpose.msra.mxu0 0
    %4920 = vmatprep.subr.bf16.mxu0 0
    %4921 = vmatpush1.bf16.xpose.msra.mxu0 0
    %4922 = vmatprep.subr.bf16.mxu0 0
    %4923 = vmatpush1.bf16.xpose.msra.mxu0 0
    %4924 = vmatprep.subr.bf16.mxu0 0
    %4925 = vmatpush1.bf16.xpose.msra.mxu0 0
    %4926 = vmatprep.subr.bf16.mxu0 0
    %4927 = vmatpush1.bf16.xpose.msra.mxu0 0
    %4928 = vmatprep.subr.bf16.mxu0 0
    %4929 = vmatpush1.bf16.xpose.msra.mxu0 0
    %4930 = vmatprep.subr.bf16.mxu0 0
    %4931 = vmatpush1.bf16.xpose.msra.mxu0 0
    %4932 = vmatprep.subr.bf16.mxu0 0
    %4933 = vmatpush1.bf16.xpose.msra.mxu0 0
    %4934 = vmatprep.subr.bf16.mxu0 0
    %4935 = vmatpush1.bf16.xpose.msra.mxu0 0
    %4936 = vmatprep.subr.bf16.mxu0 0
    %4937 = vmatpush1.bf16.xpose.msra.mxu0 0
    %4938 = vmatprep.subr.bf16.mxu0 0
    %4939 = vmatpush1.bf16.xpose.msra.mxu0 0
    %4940 = vmatprep.subr.bf16.mxu0 0
    %4941 = vmatpush1.bf16.xpose.msra.mxu0 0
    %4942 = vmatprep.subr.bf16.mxu0 0
    %4943 = vmatpush1.bf16.xpose.msra.mxu0 0
    %4944 = vmatprep.subr.bf16.mxu0 0
    %4945 = vmatpush1.bf16.xpose.msra.mxu0 0
    %4946 = vmatprep.mubr.bf16.mxu0 0
    %4947 = vmatmul.mubr.bf16.gmra.mrb[0].mxu0 %v4909
    %v4948 = vpop.f32.mrb[0].mxu0
    %v4949 = vadd.f32 0.0, %v4948
    %v4950 = vpop.f32.mrb[0].mxu0
    %v4951 = vpop.f32.mrb[0].mxu0
    %v4952 = vadd.f32 0.0, %v4951
    %v4953 = vpop.f32.mrb[0].mxu0
    %4954 = vdwg.mxu0
    %v4956 = vsel %vm654, %v4905, 0
    %v4959 = vsel %vm654, %v4907, 0
    %4961 = vmatprep.subr.bf16.mxu0 0
    %4962 = vmatpush1.bf16.xpose.msra.mxu0 %v4959
    %4963 = vmatprep.subr.bf16.mxu0 0
    %4964 = vmatpush1.bf16.xpose.msra.mxu0 0
    %4965 = vmatprep.subr.bf16.mxu0 0
    %4966 = vmatpush1.bf16.xpose.msra.mxu0 0
    %4967 = vmatprep.subr.bf16.mxu0 0
    %4968 = vmatpush1.bf16.xpose.msra.mxu0 0
    %4969 = vmatprep.subr.bf16.mxu0 0
    %4970 = vmatpush1.bf16.xpose.msra.mxu0 0
    %4971 = vmatprep.subr.bf16.mxu0 0
    %4972 = vmatpush1.bf16.xpose.msra.mxu0 0
    %4973 = vmatprep.subr.bf16.mxu0 0
    %4974 = vmatpush1.bf16.xpose.msra.mxu0 0
    %4975 = vmatprep.subr.bf16.mxu0 0
    %4976 = vmatpush1.bf16.xpose.msra.mxu0 0
    %4977 = vmatprep.subr.bf16.mxu0 0
    %4978 = vmatpush1.bf16.xpose.msra.mxu0 0
    %4979 = vmatprep.subr.bf16.mxu0 0
    %4980 = vmatpush1.bf16.xpose.msra.mxu0 0
    %4981 = vmatprep.subr.bf16.mxu0 0
    %4982 = vmatpush1.bf16.xpose.msra.mxu0 0
    %4983 = vmatprep.subr.bf16.mxu0 0
    %4984 = vmatpush1.bf16.xpose.msra.mxu0 0
    %4985 = vmatprep.subr.bf16.mxu0 0
    %4986 = vmatpush1.bf16.xpose.msra.mxu0 0
    %4987 = vmatprep.subr.bf16.mxu0 0
    %4988 = vmatpush1.bf16.xpose.msra.mxu0 0
    %4989 = vmatprep.subr.bf16.mxu0 0
    %4990 = vmatpush1.bf16.xpose.msra.mxu0 0
    %4991 = vmatprep.subr.bf16.mxu0 0
    %4992 = vmatpush1.bf16.xpose.msra.mxu0 0
    %4993 = vmatprep.mubr.bf16.mxu0 0
    %4994 = vmatmul.mubr.bf16.gmra.mrb[0].mxu0 %v4956
    %v4995 = vpop.f32.mrb[0].mxu0
    %v4996 = vadd.f32 0.0, %v4995
    %v4997 = vpop.f32.mrb[0].mxu0
    %v4998 = vpop.f32.mrb[0].mxu0
    %v4999 = vadd.f32 0.0, %v4998
    %v5000 = vpop.f32.mrb[0].mxu0
    %5001 = vdwg.mxu0
    %v5002 = vmul.f32 %v4949, 0.17677669
    %v5003 = vmul.f32 %v4952, 0.17677669
    %v5004 = vmul.f32 %v4996, 0.17677669
    %v5005 = vmul.f32 %v4999, 0.17677669
    %v5006 = vsel %vm753, %v5002, -inf
    %5007 = vmax.xlane.f32.xlu0 %v5006
    %v5008 = vpop.xlane.xlu0 %5007
    %v5009 = vsel %vm753, %v5003, -inf
    %5010 = vmax.xlane.f32.xlu0 %v5009
    %v5011 = vpop.xlane.xlu0 %5010
    %v5012 = vsel %vm753, %v5004, -inf
    %5013 = vmax.xlane.f32.xlu0 %v5012
    %v5014 = vpop.xlane.xlu0 %5013
    %v5015 = vsel %vm753, %v5005, -inf
    %5016 = vmax.xlane.f32.xlu0 %v5015
    %v5017 = vpop.xlane.xlu0 %5016
    %v5018 = vsub.f32 %v5002, %v5008
    %v5019 = vsub.f32 %v5003, %v5011
    %v5020 = vsub.f32 %v5004, %v5014
    %v5021 = vsub.f32 %v5005, %v5017
    %v5022 = vmul.f32 %v5018, 1.442695
    %v5023 = vpow.pop %v5022
    %v5024 = vmul.f32 %v5019, 1.442695
    %v5025 = vpow.pop %v5024
    %v5026 = vmul.f32 %v5020, 1.442695
    %v5027 = vpow.pop %v5026
    %v5028 = vmul.f32 %v5021, 1.442695
    %v5029 = vpow.pop %v5028
    %v5030 = vsel %vm753, %v5023, 0.0
    %5031 = vadd.xlane.f32.xlu0 %v5030
    %v5032 = vpop.xlane.xlu0 %5031
    %v5033 = vsel %vm753, %v5025, 0.0
    %5034 = vadd.xlane.f32.xlu0 %v5033
    %v5035 = vpop.xlane.xlu0 %5034
    %v5036 = vsel %vm753, %v5027, 0.0
    %5037 = vadd.xlane.f32.xlu0 %v5036
    %v5038 = vpop.xlane.xlu0 %5037
    %v5039 = vsel %vm753, %v5029, 0.0
    %5040 = vadd.xlane.f32.xlu0 %v5039
    %v5041 = vpop.xlane.xlu0 %5040
    %v5042 = vrcp.pop %v5032
    %v5043 = vrcp.pop %v5035
    %v5044 = vrcp.pop %v5038
    %v5045 = vrcp.pop %v5041
    %v5046 = vmul.f32 %v5023, %v5042
    %v5047 = vmul.f32 %v5025, %v5043
    %v5048 = vmul.f32 %v5027, %v5044
    %v5049 = vmul.f32 %v5029, %v5045
    %v5050 = vpack.c.bf16 %v5047, %v5046
    %v5051 = vpack.c.bf16 %v5049, %v5048
    %v5052 = vpack.c.bf16 %v4893, %v4890
    %v5053 = vpack.c.bf16 %v4901, %v4898
    %v5055 = vsel %vm753, %v5050, 0
    %5057 = vmatprep.subr.bf16.mxu0 0
    %5058 = vmatpush1.bf16.msra.mxu0 %v5052
    %5059 = vmatprep.subr.bf16.mxu0 0
    %5060 = vmatpush1.bf16.msra.mxu0 0
    %5061 = vmatprep.subr.bf16.mxu0 0
    %5062 = vmatpush1.bf16.msra.mxu0 0
    %5063 = vmatprep.subr.bf16.mxu0 0
    %5064 = vmatpush1.bf16.msra.mxu0 0
    %5065 = vmatprep.subr.bf16.mxu0 0
    %5066 = vmatpush1.bf16.msra.mxu0 0
    %5067 = vmatprep.subr.bf16.mxu0 0
    %5068 = vmatpush1.bf16.msra.mxu0 0
    %5069 = vmatprep.subr.bf16.mxu0 0
    %5070 = vmatpush1.bf16.msra.mxu0 0
    %5071 = vmatprep.subr.bf16.mxu0 0
    %5072 = vmatpush1.bf16.msra.mxu0 0
    %5073 = vmatprep.subr.bf16.mxu0 0
    %5074 = vmatpush1.bf16.msra.mxu0 0
    %5075 = vmatprep.subr.bf16.mxu0 0
    %5076 = vmatpush1.bf16.msra.mxu0 0
    %5077 = vmatprep.subr.bf16.mxu0 0
    %5078 = vmatpush1.bf16.msra.mxu0 0
    %5079 = vmatprep.subr.bf16.mxu0 0
    %5080 = vmatpush1.bf16.msra.mxu0 0
    %5081 = vmatprep.subr.bf16.mxu0 0
    %5082 = vmatpush1.bf16.msra.mxu0 0
    %5083 = vmatprep.subr.bf16.mxu0 0
    %5084 = vmatpush1.bf16.msra.mxu0 0
    %5085 = vmatprep.subr.bf16.mxu0 0
    %5086 = vmatpush1.bf16.msra.mxu0 0
    %5087 = vmatprep.subr.bf16.mxu0 0
    %5088 = vmatpush1.bf16.msra.mxu0 0
    %5089 = vmatprep.mubr.bf16.mxu0 0
    %5090 = vmatmul.mubr.bf16.gmra.mrb[0].mxu0 %v5055
    %v5091 = vpop.f32.mrb[0].mxu0
    %v5092 = vadd.f32 0.0, %v5091
    %v5093 = vpop.f32.mrb[0].mxu0
    %v5094 = vpop.f32.mrb[0].mxu0
    %v5095 = vadd.f32 0.0, %v5094
    %v5096 = vpop.f32.mrb[0].mxu0
    %5097 = vdwg.mxu0
    %v5099 = vsel %vm753, %v5051, 0
    %5101 = vmatprep.subr.bf16.mxu0 0
    %5102 = vmatpush1.bf16.msra.mxu0 %v5053
    %5103 = vmatprep.subr.bf16.mxu0 0
    %5104 = vmatpush1.bf16.msra.mxu0 0
    %5105 = vmatprep.subr.bf16.mxu0 0
    %5106 = vmatpush1.bf16.msra.mxu0 0
    %5107 = vmatprep.subr.bf16.mxu0 0
    %5108 = vmatpush1.bf16.msra.mxu0 0
    %5109 = vmatprep.subr.bf16.mxu0 0
    %5110 = vmatpush1.bf16.msra.mxu0 0
    %5111 = vmatprep.subr.bf16.mxu0 0
    %5112 = vmatpush1.bf16.msra.mxu0 0
    %5113 = vmatprep.subr.bf16.mxu0 0
    %5114 = vmatpush1.bf16.msra.mxu0 0
    %5115 = vmatprep.subr.bf16.mxu0 0
    %5116 = vmatpush1.bf16.msra.mxu0 0
    %5117 = vmatprep.subr.bf16.mxu0 0
    %5118 = vmatpush1.bf16.msra.mxu0 0
    %5119 = vmatprep.subr.bf16.mxu0 0
    %5120 = vmatpush1.bf16.msra.mxu0 0
    %5121 = vmatprep.subr.bf16.mxu0 0
    %5122 = vmatpush1.bf16.msra.mxu0 0
    %5123 = vmatprep.subr.bf16.mxu0 0
    %5124 = vmatpush1.bf16.msra.mxu0 0
    %5125 = vmatprep.subr.bf16.mxu0 0
    %5126 = vmatpush1.bf16.msra.mxu0 0
    %5127 = vmatprep.subr.bf16.mxu0 0
    %5128 = vmatpush1.bf16.msra.mxu0 0
    %5129 = vmatprep.subr.bf16.mxu0 0
    %5130 = vmatpush1.bf16.msra.mxu0 0
    %5131 = vmatprep.subr.bf16.mxu0 0
    %5132 = vmatpush1.bf16.msra.mxu0 0
    %5133 = vmatprep.mubr.bf16.mxu0 0
    %5134 = vmatmul.mubr.bf16.gmra.mrb[0].mxu0 %v5099
    %v5135 = vpop.f32.mrb[0].mxu0
    %v5136 = vadd.f32 0.0, %v5135
    %v5137 = vpop.f32.mrb[0].mxu0
    %v5138 = vpop.f32.mrb[0].mxu0
    %v5139 = vadd.f32 0.0, %v5138
    %v5140 = vpop.f32.mrb[0].mxu0
    %5141 = vdwg.mxu0
    %v5142 = vpack.c.bf16 %v5095, %v5092
    %v5143 = vpack.c.bf16 %v5139, %v5136
    %s5144 = scalar_lea.vmem %s12, 80
    %v5145 = vld [vmem:[%s5144] sm:$0xf]
    %v5146 = vld [vmem:[%s5144 + $0x4] sm:$0xf]
    %v5147 = vld [vmem:[%s5144 + $0x8] sm:$0xf]
    %v5148 = vld [vmem:[%s5144 + $0xc] sm:$0xf]
    %v5153 = vunpack.c.l.b16 %v5145
    %v5154 = vunpack.c.l.b16 %v5146
    %v5155 = vunpack.c.l.b16 %v5147
    %v5156 = vunpack.c.l.b16 %v5148
    %v5157 = vpack.c.b16 %v5154, %v5153
    %v5158 = vpack.c.b16 %v5156, %v5155
    %v5162 = vsel %vm654, %v5142, 0
    %v5165 = vsel %vm654, %v5143, 0
    %5167 = vmatprep.subr.bf16.mxu0 0
    %5168 = vmatpush1.bf16.msra.mxu0 %v5157
    %5169 = vmatprep.subr.bf16.mxu0 0
    %5170 = vmatpush1.bf16.msra.mxu0 %v5158
    %5171 = vmatprep.subr.bf16.mxu0 0
    %5172 = vmatpush1.bf16.msra.mxu0 0
    %5173 = vmatprep.subr.bf16.mxu0 0
    %5174 = vmatpush1.bf16.msra.mxu0 0
    %5175 = vmatprep.subr.bf16.mxu0 0
    %5176 = vmatpush1.bf16.msra.mxu0 0
    %5177 = vmatprep.subr.bf16.mxu0 0
    %5178 = vmatpush1.bf16.msra.mxu0 0
    %5179 = vmatprep.subr.bf16.mxu0 0
    %5180 = vmatpush1.bf16.msra.mxu0 0
    %5181 = vmatprep.subr.bf16.mxu0 0
    %5182 = vmatpush1.bf16.msra.mxu0 0
    %5183 = vmatprep.subr.bf16.mxu0 0
    %5184 = vmatpush1.bf16.msra.mxu0 0
    %5185 = vmatprep.subr.bf16.mxu0 0
    %5186 = vmatpush1.bf16.msra.mxu0 0
    %5187 = vmatprep.subr.bf16.mxu0 0
    %5188 = vmatpush1.bf16.msra.mxu0 0
    %5189 = vmatprep.subr.bf16.mxu0 0
    %5190 = vmatpush1.bf16.msra.mxu0 0
    %5191 = vmatprep.subr.bf16.mxu0 0
    %5192 = vmatpush1.bf16.msra.mxu0 0
    %5193 = vmatprep.subr.bf16.mxu0 0
    %5194 = vmatpush1.bf16.msra.mxu0 0
    %5195 = vmatprep.subr.bf16.mxu0 0
    %5196 = vmatpush1.bf16.msra.mxu0 0
    %5197 = vmatprep.subr.bf16.mxu0 0
    %5198 = vmatpush1.bf16.msra.mxu0 0
    %5199 = vmatprep.mubr.bf16.mxu0 0
    %5200 = vmatmul.mubr.bf16.gmra.mrb[0].mxu0 %v5162
    %v5201 = vpop.f32.mrb[0].mxu0
    %v5202 = vadd.f32 0.0, %v5201
    %v5203 = vpop.f32.mrb[0].mxu0
    %v5204 = vpop.f32.mrb[0].mxu0
    %v5205 = vadd.f32 0.0, %v5204
    %v5206 = vpop.f32.mrb[0].mxu0
    %5207 = vmatprep.mubr.bf16.mxu0 0
    %5208 = vmatmul.mubr.bf16.gmra.mrb[0].mxu0 %v5165
    %v5209 = vpop.f32.mrb[0].mxu0
    %v5210 = vadd.f32 0.0, %v5209
    %v5211 = vpop.f32.mrb[0].mxu0
    %v5212 = vpop.f32.mrb[0].mxu0
    %v5213 = vadd.f32 0.0, %v5212
    %v5214 = vpop.f32.mrb[0].mxu0
    %5215 = vdwg.mxu0
    %v5216 = vadd.f32 %v4524, %v5202
    %v5217 = vadd.f32 %v4527, %v5205
    %v5218 = vadd.f32 %v4532, %v5210
    %v5219 = vadd.f32 %v4535, %v5213
    %v5220 = vadd.f32 %v3104, %v5216
    %v5221 = vadd.f32 %v3105, %v5217
    %v5222 = vadd.f32 %v3106, %v5218
    %v5223 = vadd.f32 %v3107, %v5219
    %s5224 = scalar_lea.vmem %s13, 1
    %v5225 = vld [vmem:[%s5224] sm:$0x1]
    %v5227 = vlaneseq
    %v5228 = vshrl.u32 %v5227, 7
    %v5229 = vsub.s32 0, %v5228
    %v5230 = vrot.slane %v5225, %v5229
    %v5232 = vadd.f32 %v5220, %v5230
    %v5233 = vadd.f32 %v5221, %v5230
    %v5234 = vadd.f32 %v5222, %v5230
    %v5235 = vadd.f32 %v5223, %v5230
    %s5236 = scalar_lea.vmem %s14, 1
    %v5237 = vld [vmem:[%s5236] sm:$0x1]
    %s5238 = scalar_lea.vmem %s15, 1
    %v5239 = vld [vmem:[%s5238] sm:$0x1]
    %5240 = vadd.xlane.f32.xlu0 %v5232
    %v5241 = vpop.xlane.xlu0 %5240
    %5242 = vadd.xlane.f32.xlu0 %v5233
    %v5243 = vpop.xlane.xlu0 %5242
    %5244 = vadd.xlane.f32.xlu0 %v5234
    %v5245 = vpop.xlane.xlu0 %5244
    %5246 = vadd.xlane.f32.xlu0 %v5235
    %v5247 = vpop.xlane.xlu0 %5246
    %v5248 = vmul.f32 %v5241, 0.010416667
    %v5249 = vmul.f32 %v5243, 0.010416667
    %v5250 = vmul.f32 %v5245, 0.010416667
    %v5251 = vmul.f32 %v5247, 0.010416667
    %v5252 = vsub.f32 %v5232, %v5248
    %v5253 = vsub.f32 %v5233, %v5249
    %v5254 = vsub.f32 %v5234, %v5250
    %v5255 = vsub.f32 %v5235, %v5251
    %v5256 = vmul.f32 %v5252, %v83
    %v5257 = vmul.f32 %v5253, %v83
    %v5258 = vmul.f32 %v5254, %v83
    %v5259 = vmul.f32 %v5255, %v83
    %v5260 = vmul.f32 %v5256, %v5256
    %v5261 = vmul.f32 %v5257, %v5257
    %v5262 = vmul.f32 %v5258, %v5258
    %v5263 = vmul.f32 %v5259, %v5259
    %5264 = vadd.xlane.f32.xlu0 %v5260
    %v5265 = vpop.xlane.xlu0 %5264
    %5266 = vadd.xlane.f32.xlu0 %v5261
    %v5267 = vpop.xlane.xlu0 %5266
    %5268 = vadd.xlane.f32.xlu0 %v5262
    %v5269 = vpop.xlane.xlu0 %5268
    %5270 = vadd.xlane.f32.xlu0 %v5263
    %v5271 = vpop.xlane.xlu0 %5270
    %v5272 = vmul.f32 %v5265, 0.010416667
    %v5273 = vmul.f32 %v5267, 0.010416667
    %v5274 = vmul.f32 %v5269, 0.010416667
    %v5275 = vmul.f32 %v5271, 0.010416667
    %v5276 = vadd.f32 %v5272, 1e-05
    %v5277 = vadd.f32 %v5273, 1e-05
    %v5278 = vadd.f32 %v5274, 1e-05
    %v5279 = vadd.f32 %v5275, 1e-05
    %v5280 = vrsqrt.pop %v5276
    %v5281 = vrsqrt.pop %v5277
    %v5282 = vrsqrt.pop %v5278
    %v5283 = vrsqrt.pop %v5279
    %v5284 = vmul.f32 %v5252, %v5280
    %v5285 = vmul.f32 %v5253, %v5281
    %v5286 = vmul.f32 %v5254, %v5282
    %v5287 = vmul.f32 %v5255, %v5283
    %v5289 = vlaneseq
    %v5290 = vshrl.u32 %v5289, 7
    %v5291 = vsub.s32 0, %v5290
    %v5292 = vrot.slane %v5237, %v5291
    %v5294 = vmul.f32 %v5284, %v5292
    %v5295 = vmul.f32 %v5285, %v5292
    %v5296 = vmul.f32 %v5286, %v5292
    %v5297 = vmul.f32 %v5287, %v5292
    %v5299 = vlaneseq
    %v5300 = vshrl.u32 %v5299, 7
    %v5301 = vsub.s32 0, %v5300
    %v5302 = vrot.slane %v5239, %v5301
    %v5304 = vadd.f32 %v5294, %v5302
    %v5305 = vadd.f32 %v5295, %v5302
    %v5306 = vadd.f32 %v5296, %v5302
    %v5307 = vadd.f32 %v5297, %v5302
    %s5308 = scalar_lea.vmem %s16, 192
    %v5309 = vld [vmem:[%s5308] sm:$0xff]
    %v5310 = vld [vmem:[%s5308 + $0x8] sm:$0xf]
    %v5311 = vld [vmem:[%s5308 + $0xc] sm:$0xff]
    %v5312 = vld [vmem:[%s5308 + $0x14] sm:$0xf]
    %v5313 = vld [vmem:[%s5308 + $0x18] sm:$0xff]
    %v5314 = vld [vmem:[%s5308 + $0x20] sm:$0xf]
    %v5315 = vld [vmem:[%s5308 + $0x24] sm:$0xff]
    %v5316 = vld [vmem:[%s5308 + $0x2c] sm:$0xf]
    %v5317 = vld [vmem:[%s5308 + $0x30] sm:$0xff]
    %v5318 = vld [vmem:[%s5308 + $0x38] sm:$0xf]
    %v5319 = vld [vmem:[%s5308 + $0x3c] sm:$0xff]
    %v5320 = vld [vmem:[%s5308 + $0x44] sm:$0xf]
    %v5321 = vld [vmem:[%s5308 + $0x48] sm:$0xff]
    %v5322 = vld [vmem:[%s5308 + $0x50] sm:$0xf]
    %v5323 = vld [vmem:[%s5308 + $0x54] sm:$0xff]
    %v5324 = vld [vmem:[%s5308 + $0x5c] sm:$0xf]
    %v5325 = vld [vmem:[%s5308 + $0x60] sm:$0xff]
    %v5326 = vld [vmem:[%s5308 + $0x68] sm:$0xf]
    %v5327 = vld [vmem:[%s5308 + $0x6c] sm:$0xff]
    %v5328 = vld [vmem:[%s5308 + $0x74] sm:$0xf]
    %v5329 = vld [vmem:[%s5308 + $0x78] sm:$0xff]
    %v5330 = vld [vmem:[%s5308 + $0x80] sm:$0xf]
    %v5331 = vld [vmem:[%s5308 + $0x84] sm:$0xff]
    %v5332 = vld [vmem:[%s5308 + $0x8c] sm:$0xf]
    %v5333 = vld [vmem:[%s5308 + $0x90] sm:$0xff]
    %v5334 = vld [vmem:[%s5308 + $0x98] sm:$0xf]
    %v5335 = vld [vmem:[%s5308 + $0x9c] sm:$0xff]
    %v5336 = vld [vmem:[%s5308 + $0xa4] sm:$0xf]
    %v5337 = vld [vmem:[%s5308 + $0xa8] sm:$0xff]
    %v5338 = vld [vmem:[%s5308 + $0xb0] sm:$0xf]
    %v5339 = vld [vmem:[%s5308 + $0xb4] sm:$0xff]
    %v5340 = vld [vmem:[%s5308 + $0xbc] sm:$0xf]
    %v5341 = vpack.c.bf16 %v5305, %v5304
    %v5342 = vpack.c.bf16 %v5307, %v5306
    %s5343 = scalar_lea.vmem %s17, 3
    %v5344 = vld [vmem:[%s5343] sm:$0x7]
    %v5346 = vlaneseq
    %v5347 = vshrl.u32 %v5346, 7
    %v5348 = vsub.s32 0, %v5347
    %v5349 = vrot.slane %v5344, %v5348
    %v5350 = vlaneseq
    %v5351 = vshrl.u32 %v5350, 7
    %v5352 = vsub.s32 1, %v5351
    %v5353 = vrot.slane %v5344, %v5352
    %v5354 = vlaneseq
    %v5355 = vshrl.u32 %v5354, 7
    %v5356 = vsub.s32 2, %v5355
    %v5357 = vrot.slane %v5344, %v5356
    %v5393 = vunpack.c.l.b16 %v5309
    %v5394 = vunpack.c.h.b16 %v5309
    %v5395 = vunpack.c.l.b16 %v5310
    %v5396 = vunpack.c.l.b16 %v5311
    %v5397 = vunpack.c.h.b16 %v5311
    %v5398 = vunpack.c.l.b16 %v5312
    %v5399 = vunpack.c.l.b16 %v5313
    %v5400 = vunpack.c.h.b16 %v5313
    %v5401 = vunpack.c.l.b16 %v5314
    %v5402 = vunpack.c.l.b16 %v5315
    %v5403 = vunpack.c.h.b16 %v5315
    %v5404 = vunpack.c.l.b16 %v5316
    %v5405 = vunpack.c.l.b16 %v5317
    %v5406 = vunpack.c.h.b16 %v5317
    %v5407 = vunpack.c.l.b16 %v5318
    %v5408 = vunpack.c.l.b16 %v5319
    %v5409 = vunpack.c.h.b16 %v5319
    %v5410 = vunpack.c.l.b16 %v5320
    %v5411 = vunpack.c.l.b16 %v5321
    %v5412 = vunpack.c.h.b16 %v5321
    %v5413 = vunpack.c.l.b16 %v5322
    %v5414 = vunpack.c.l.b16 %v5323
    %v5415 = vunpack.c.h.b16 %v5323
    %v5416 = vunpack.c.l.b16 %v5324
    %v5417 = vunpack.c.l.b16 %v5325
    %v5418 = vunpack.c.h.b16 %v5325
    %v5419 = vunpack.c.l.b16 %v5326
    %v5420 = vunpack.c.l.b16 %v5327
    %v5421 = vunpack.c.h.b16 %v5327
    %v5422 = vunpack.c.l.b16 %v5328
    %v5423 = vunpack.c.l.b16 %v5329
    %v5424 = vunpack.c.h.b16 %v5329
    %v5425 = vunpack.c.l.b16 %v5330
    %v5426 = vunpack.c.l.b16 %v5331
    %v5427 = vunpack.c.h.b16 %v5331
    %v5428 = vunpack.c.l.b16 %v5332
    %v5429 = vunpack.c.l.b16 %v5333
    %v5430 = vunpack.c.h.b16 %v5333
    %v5431 = vunpack.c.l.b16 %v5334
    %v5432 = vunpack.c.l.b16 %v5335
    %v5433 = vunpack.c.h.b16 %v5335
    %v5434 = vunpack.c.l.b16 %v5336
    %v5435 = vunpack.c.l.b16 %v5337
    %v5436 = vunpack.c.h.b16 %v5337
    %v5437 = vunpack.c.l.b16 %v5338
    %v5438 = vunpack.c.l.b16 %v5339
    %v5439 = vunpack.c.h.b16 %v5339
    %v5440 = vunpack.c.l.b16 %v5340
    %v5441 = vpack.c.b16 %v5396, %v5393
    %v5442 = vpack.c.b16 %v5397, %v5394
    %v5443 = vpack.c.b16 %v5398, %v5395
    %v5444 = vpack.c.b16 %v5402, %v5399
    %v5445 = vpack.c.b16 %v5403, %v5400
    %v5446 = vpack.c.b16 %v5404, %v5401
    %v5447 = vpack.c.b16 %v5408, %v5405
    %v5448 = vpack.c.b16 %v5409, %v5406
    %v5449 = vpack.c.b16 %v5410, %v5407
    %v5450 = vpack.c.b16 %v5414, %v5411
    %v5451 = vpack.c.b16 %v5415, %v5412
    %v5452 = vpack.c.b16 %v5416, %v5413
    %v5453 = vpack.c.b16 %v5420, %v5417
    %v5454 = vpack.c.b16 %v5421, %v5418
    %v5455 = vpack.c.b16 %v5422, %v5419
    %v5456 = vpack.c.b16 %v5426, %v5423
    %v5457 = vpack.c.b16 %v5427, %v5424
    %v5458 = vpack.c.b16 %v5428, %v5425
    %v5459 = vpack.c.b16 %v5432, %v5429
    %v5460 = vpack.c.b16 %v5433, %v5430
    %v5461 = vpack.c.b16 %v5434, %v5431
    %v5462 = vpack.c.b16 %v5438, %v5435
    %v5463 = vpack.c.b16 %v5439, %v5436
    %v5464 = vpack.c.b16 %v5440, %v5437
    %5489 = vmatprep.subr.bf16.mxu0 %v5442
    %5490 = vmatpush1.bf16.msra.mxu0 %v5441
    %5491 = vmatprep.subr.bf16.mxu0 %v5445
    %5492 = vmatpush1.bf16.msra.mxu0 %v5444
    %5493 = vmatprep.subr.bf16.mxu0 %v5448
    %5494 = vmatpush1.bf16.msra.mxu0 %v5447
    %5495 = vmatprep.subr.bf16.mxu0 %v5451
    %5496 = vmatpush1.bf16.msra.mxu0 %v5450
    %5497 = vmatprep.subr.bf16.mxu0 %v5454
    %5498 = vmatpush1.bf16.msra.mxu0 %v5453
    %5499 = vmatprep.subr.bf16.mxu0 %v5457
    %5500 = vmatpush1.bf16.msra.mxu0 %v5456
    %5501 = vmatprep.subr.bf16.mxu0 %v5460
    %5502 = vmatpush1.bf16.msra.mxu0 %v5459
    %5503 = vmatprep.subr.bf16.mxu0 %v5463
    %5504 = vmatpush1.bf16.msra.mxu0 %v5462
    %5505 = vmatprep.subr.bf16.mxu0 0
    %5506 = vmatpush1.bf16.msra.mxu0 0
    %5507 = vmatprep.subr.bf16.mxu0 0
    %5508 = vmatpush1.bf16.msra.mxu0 0
    %5509 = vmatprep.subr.bf16.mxu0 0
    %5510 = vmatpush1.bf16.msra.mxu0 0
    %5511 = vmatprep.subr.bf16.mxu0 0
    %5512 = vmatpush1.bf16.msra.mxu0 0
    %5513 = vmatprep.subr.bf16.mxu0 0
    %5514 = vmatpush1.bf16.msra.mxu0 0
    %5515 = vmatprep.subr.bf16.mxu0 0
    %5516 = vmatpush1.bf16.msra.mxu0 0
    %5517 = vmatprep.subr.bf16.mxu0 0
    %5518 = vmatpush1.bf16.msra.mxu0 0
    %5519 = vmatprep.subr.bf16.mxu0 0
    %5520 = vmatpush1.bf16.msra.mxu0 0
    %5521 = vmatprep.mubr.bf16.mxu0 0
    %5522 = vmatmul.mubr.bf16.gmra.mrb[0].mxu0 %v5341
    %v5523 = vpop.f32.mrb[0].mxu0
    %v5524 = vadd.f32 %v5349, %v5523
    %v5525 = vpop.f32.mrb[0].mxu0
    %v5526 = vadd.f32 %v5353, %v5525
    %v5527 = vpop.f32.mrb[0].mxu0
    %v5528 = vadd.f32 %v5349, %v5527
    %v5529 = vpop.f32.mrb[0].mxu0
    %v5530 = vadd.f32 %v5353, %v5529
    %5531 = vmatprep.mubr.bf16.mxu0 0
    %5532 = vmatmul.mubr.bf16.gmra.mrb[0].mxu0 %v5342
    %v5533 = vpop.f32.mrb[0].mxu0
    %v5534 = vadd.f32 %v5349, %v5533
    %v5535 = vpop.f32.mrb[0].mxu0
    %v5536 = vadd.f32 %v5353, %v5535
    %v5537 = vpop.f32.mrb[0].mxu0
    %v5538 = vadd.f32 %v5349, %v5537
    %v5539 = vpop.f32.mrb[0].mxu0
    %v5540 = vadd.f32 %v5353, %v5539
    %5541 = vdwg.mxu0
    %5542 = vmatprep.subr.bf16.mxu0 0
    %5543 = vmatpush1.bf16.msra.mxu0 %v5443
    %5544 = vmatprep.subr.bf16.mxu0 0
    %5545 = vmatpush1.bf16.msra.mxu0 %v5446
    %5546 = vmatprep.subr.bf16.mxu0 0
    %5547 = vmatpush1.bf16.msra.mxu0 %v5449
    %5548 = vmatprep.subr.bf16.mxu0 0
    %5549 = vmatpush1.bf16.msra.mxu0 %v5452
    %5550 = vmatprep.subr.bf16.mxu0 0
    %5551 = vmatpush1.bf16.msra.mxu0 %v5455
    %5552 = vmatprep.subr.bf16.mxu0 0
    %5553 = vmatpush1.bf16.msra.mxu0 %v5458
    %5554 = vmatprep.subr.bf16.mxu0 0
    %5555 = vmatpush1.bf16.msra.mxu0 %v5461
    %5556 = vmatprep.subr.bf16.mxu0 0
    %5557 = vmatpush1.bf16.msra.mxu0 %v5464
    %5558 = vmatprep.subr.bf16.mxu0 0
    %5559 = vmatpush1.bf16.msra.mxu0 0
    %5560 = vmatprep.subr.bf16.mxu0 0
    %5561 = vmatpush1.bf16.msra.mxu0 0
    %5562 = vmatprep.subr.bf16.mxu0 0
    %5563 = vmatpush1.bf16.msra.mxu0 0
    %5564 = vmatprep.subr.bf16.mxu0 0
    %5565 = vmatpush1.bf16.msra.mxu0 0
    %5566 = vmatprep.subr.bf16.mxu0 0
    %5567 = vmatpush1.bf16.msra.mxu0 0
    %5568 = vmatprep.subr.bf16.mxu0 0
    %5569 = vmatpush1.bf16.msra.mxu0 0
    %5570 = vmatprep.subr.bf16.mxu0 0
    %5571 = vmatpush1.bf16.msra.mxu0 0
    %5572 = vmatprep.subr.bf16.mxu0 0
    %5573 = vmatpush1.bf16.msra.mxu0 0
    %5574 = vmatprep.mubr.bf16.mxu0 0
    %5575 = vmatmul.mubr.bf16.gmra.mrb[0].mxu0 %v5341
    %v5576 = vpop.f32.mrb[0].mxu0
    %v5577 = vadd.f32 %v5357, %v5576
    %v5578 = vpop.f32.mrb[0].mxu0
    %v5579 = vpop.f32.mrb[0].mxu0
    %v5580 = vadd.f32 %v5357, %v5579
    %v5581 = vpop.f32.mrb[0].mxu0
    %5582 = vmatprep.mubr.bf16.mxu0 0
    %5583 = vmatmul.mubr.bf16.gmra.mrb[0].mxu0 %v5342
    %v5584 = vpop.f32.mrb[0].mxu0
    %v5585 = vadd.f32 %v5357, %v5584
    %v5586 = vpop.f32.mrb[0].mxu0
    %v5587 = vpop.f32.mrb[0].mxu0
    %v5588 = vadd.f32 %v5357, %v5587
    %v5589 = vpop.f32.mrb[0].mxu0
    %5590 = vdwg.mxu0
    %v5591 = vmul.f32 %v5524, 0.5
    %v5592 = vmul.f32 %v5526, 0.5
    %v5593 = vmul.f32 %v5577, 0.5
    %v5594 = vmul.f32 %v5528, 0.5
    %v5595 = vmul.f32 %v5530, 0.5
    %v5596 = vmul.f32 %v5580, 0.5
    %v5597 = vmul.f32 %v5534, 0.5
    %v5598 = vmul.f32 %v5536, 0.5
    %v5599 = vmul.f32 %v5585, 0.5
    %v5600 = vmul.f32 %v5538, 0.5
    %v5601 = vmul.f32 %v5540, 0.5
    %v5602 = vmul.f32 %v5588, 0.5
    %v5603 = vmul.f32 %v5524, 0.044715
    %v5604 = vmul.f32 %v5526, 0.044715
    %v5605 = vmul.f32 %v5577, 0.044715
    %v5606 = vmul.f32 %v5528, 0.044715
    %v5607 = vmul.f32 %v5530, 0.044715
    %v5608 = vmul.f32 %v5580, 0.044715
    %v5609 = vmul.f32 %v5534, 0.044715
    %v5610 = vmul.f32 %v5536, 0.044715
    %v5611 = vmul.f32 %v5585, 0.044715
    %v5612 = vmul.f32 %v5538, 0.044715
    %v5613 = vmul.f32 %v5540, 0.044715
    %v5614 = vmul.f32 %v5588, 0.044715
    %v5615 = vmul.f32 %v5603, %v5524
    %v5616 = vmul.f32 %v5604, %v5526
    %v5617 = vmul.f32 %v5605, %v5577
    %v5618 = vmul.f32 %v5606, %v5528
    %v5619 = vmul.f32 %v5607, %v5530
    %v5620 = vmul.f32 %v5608, %v5580
    %v5621 = vmul.f32 %v5609, %v5534
    %v5622 = vmul.f32 %v5610, %v5536
    %v5623 = vmul.f32 %v5611, %v5585
    %v5624 = vmul.f32 %v5612, %v5538
    %v5625 = vmul.f32 %v5613, %v5540
    %v5626 = vmul.f32 %v5614, %v5588
    %v5627 = vmul.f32 %v5615, %v5524
    %v5628 = vmul.f32 %v5616, %v5526
    %v5629 = vmul.f32 %v5617, %v5577
    %v5630 = vmul.f32 %v5618, %v5528
    %v5631 = vmul.f32 %v5619, %v5530
    %v5632 = vmul.f32 %v5620, %v5580
    %v5633 = vmul.f32 %v5621, %v5534
    %v5634 = vmul.f32 %v5622, %v5536
    %v5635 = vmul.f32 %v5623, %v5585
    %v5636 = vmul.f32 %v5624, %v5538
    %v5637 = vmul.f32 %v5625, %v5540
    %v5638 = vmul.f32 %v5626, %v5588
    %v5639 = vadd.f32 %v5524, %v5627
    %v5640 = vadd.f32 %v5526, %v5628
    %v5641 = vadd.f32 %v5577, %v5629
    %v5642 = vadd.f32 %v5528, %v5630
    %v5643 = vadd.f32 %v5530, %v5631
    %v5644 = vadd.f32 %v5580, %v5632
    %v5645 = vadd.f32 %v5534, %v5633
    %v5646 = vadd.f32 %v5536, %v5634
    %v5647 = vadd.f32 %v5585, %v5635
    %v5648 = vadd.f32 %v5538, %v5636
    %v5649 = vadd.f32 %v5540, %v5637
    %v5650 = vadd.f32 %v5588, %v5638
    %v5651 = vmul.f32 %v5639, 0.7978846
    %v5652 = vmul.f32 %v5640, 0.7978846
    %v5653 = vmul.f32 %v5641, 0.7978846
    %v5654 = vmul.f32 %v5642, 0.7978846
    %v5655 = vmul.f32 %v5643, 0.7978846
    %v5656 = vmul.f32 %v5644, 0.7978846
    %v5657 = vmul.f32 %v5645, 0.7978846
    %v5658 = vmul.f32 %v5646, 0.7978846
    %v5659 = vmul.f32 %v5647, 0.7978846
    %v5660 = vmul.f32 %v5648, 0.7978846
    %v5661 = vmul.f32 %v5649, 0.7978846
    %v5662 = vmul.f32 %v5650, 0.7978846
    %v5663 = vtanh.pop %v5651
    %v5664 = vtanh.pop %v5652
    %v5665 = vtanh.pop %v5653
    %v5666 = vtanh.pop %v5654
    %v5667 = vtanh.pop %v5655
    %v5668 = vtanh.pop %v5656
    %v5669 = vtanh.pop %v5657
    %v5670 = vtanh.pop %v5658
    %v5671 = vtanh.pop %v5659
    %v5672 = vtanh.pop %v5660
    %v5673 = vtanh.pop %v5661
    %v5674 = vtanh.pop %v5662
    %v5675 = vadd.f32 %v5663, 1.0
    %v5676 = vadd.f32 %v5664, 1.0
    %v5677 = vadd.f32 %v5665, 1.0
    %v5678 = vadd.f32 %v5666, 1.0
    %v5679 = vadd.f32 %v5667, 1.0
    %v5680 = vadd.f32 %v5668, 1.0
    %v5681 = vadd.f32 %v5669, 1.0
    %v5682 = vadd.f32 %v5670, 1.0
    %v5683 = vadd.f32 %v5671, 1.0
    %v5684 = vadd.f32 %v5672, 1.0
    %v5685 = vadd.f32 %v5673, 1.0
    %v5686 = vadd.f32 %v5674, 1.0
    %v5687 = vmul.f32 %v5591, %v5675
    %v5688 = vmul.f32 %v5592, %v5676
    %v5689 = vmul.f32 %v5593, %v5677
    %v5690 = vmul.f32 %v5594, %v5678
    %v5691 = vmul.f32 %v5595, %v5679
    %v5692 = vmul.f32 %v5596, %v5680
    %v5693 = vmul.f32 %v5597, %v5681
    %v5694 = vmul.f32 %v5598, %v5682
    %v5695 = vmul.f32 %v5599, %v5683
    %v5696 = vmul.f32 %v5600, %v5684
    %v5697 = vmul.f32 %v5601, %v5685
    %v5698 = vmul.f32 %v5602, %v5686
    %s5699 = scalar_lea.vmem %s18, 192
    %v5700 = vld [vmem:[%s5699] sm:$0xf]
    %v5701 = vld [vmem:[%s5699 + $0x4] sm:$0xf]
    %v5702 = vld [vmem:[%s5699 + $0x8] sm:$0xf]
    %v5703 = vld [vmem:[%s5699 + $0xc] sm:$0xf]
    %v5704 = vld [vmem:[%s5699 + $0x10] sm:$0xf]
    %v5705 = vld [vmem:[%s5699 + $0x14] sm:$0xf]
    %v5706 = vld [vmem:[%s5699 + $0x18] sm:$0xf]
    %v5707 = vld [vmem:[%s5699 + $0x1c] sm:$0xf]
    %v5708 = vld [vmem:[%s5699 + $0x20] sm:$0xf]
    %v5709 = vld [vmem:[%s5699 + $0x24] sm:$0xf]
    %v5710 = vld [vmem:[%s5699 + $0x28] sm:$0xf]
    %v5711 = vld [vmem:[%s5699 + $0x2c] sm:$0xf]
    %v5712 = vld [vmem:[%s5699 + $0x30] sm:$0xf]
    %v5713 = vld [vmem:[%s5699 + $0x34] sm:$0xf]
    %v5714 = vld [vmem:[%s5699 + $0x38] sm:$0xf]
    %v5715 = vld [vmem:[%s5699 + $0x3c] sm:$0xf]
    %v5716 = vld [vmem:[%s5699 + $0x40] sm:$0xf]
    %v5717 = vld [vmem:[%s5699 + $0x44] sm:$0xf]
    %v5718 = vld [vmem:[%s5699 + $0x48] sm:$0xf]
    %v5719 = vld [vmem:[%s5699 + $0x4c] sm:$0xf]
    %v5720 = vld [vmem:[%s5699 + $0x50] sm:$0xf]
    %v5721 = vld [vmem:[%s5699 + $0x54] sm:$0xf]
    %v5722 = vld [vmem:[%s5699 + $0x58] sm:$0xf]
    %v5723 = vld [vmem:[%s5699 + $0x5c] sm:$0xf]
    %v5724 = vld [vmem:[%s5699 + $0x60] sm:$0xf]
    %v5725 = vld [vmem:[%s5699 + $0x64] sm:$0xf]
    %v5726 = vld [vmem:[%s5699 + $0x68] sm:$0xf]
    %v5727 = vld [vmem:[%s5699 + $0x6c] sm:$0xf]
    %v5728 = vld [vmem:[%s5699 + $0x70] sm:$0xf]
    %v5729 = vld [vmem:[%s5699 + $0x74] sm:$0xf]
    %v5730 = vld [vmem:[%s5699 + $0x78] sm:$0xf]
    %v5731 = vld [vmem:[%s5699 + $0x7c] sm:$0xf]
    %v5732 = vld [vmem:[%s5699 + $0x80] sm:$0xf]
    %v5733 = vld [vmem:[%s5699 + $0x84] sm:$0xf]
    %v5734 = vld [vmem:[%s5699 + $0x88] sm:$0xf]
    %v5735 = vld [vmem:[%s5699 + $0x8c] sm:$0xf]
    %v5736 = vld [vmem:[%s5699 + $0x90] sm:$0xf]
    %v5737 = vld [vmem:[%s5699 + $0x94] sm:$0xf]
    %v5738 = vld [vmem:[%s5699 + $0x98] sm:$0xf]
    %v5739 = vld [vmem:[%s5699 + $0x9c] sm:$0xf]
    %v5740 = vld [vmem:[%s5699 + $0xa0] sm:$0xf]
    %v5741 = vld [vmem:[%s5699 + $0xa4] sm:$0xf]
    %v5742 = vld [vmem:[%s5699 + $0xa8] sm:$0xf]
    %v5743 = vld [vmem:[%s5699 + $0xac] sm:$0xf]
    %v5744 = vld [vmem:[%s5699 + $0xb0] sm:$0xf]
    %v5745 = vld [vmem:[%s5699 + $0xb4] sm:$0xf]
    %v5746 = vld [vmem:[%s5699 + $0xb8] sm:$0xf]
    %v5747 = vld [vmem:[%s5699 + $0xbc] sm:$0xf]
    %v5748 = vpack.c.bf16 %v5690, %v5687
    %v5749 = vpack.c.bf16 %v5691, %v5688
    %v5750 = vpack.c.bf16 %v5692, %v5689
    %v5751 = vpack.c.bf16 %v5696, %v5693
    %v5752 = vpack.c.bf16 %v5697, %v5694
    %v5753 = vpack.c.bf16 %v5698, %v5695
    %v5802 = vunpack.c.l.b16 %v5700
    %v5803 = vunpack.c.l.b16 %v5701
    %v5804 = vunpack.c.l.b16 %v5702
    %v5805 = vunpack.c.l.b16 %v5703
    %v5806 = vunpack.c.l.b16 %v5704
    %v5807 = vunpack.c.l.b16 %v5705
    %v5808 = vunpack.c.l.b16 %v5706
    %v5809 = vunpack.c.l.b16 %v5707
    %v5810 = vunpack.c.l.b16 %v5708
    %v5811 = vunpack.c.l.b16 %v5709
    %v5812 = vunpack.c.l.b16 %v5710
    %v5813 = vunpack.c.l.b16 %v5711
    %v5814 = vunpack.c.l.b16 %v5712
    %v5815 = vunpack.c.l.b16 %v5713
    %v5816 = vunpack.c.l.b16 %v5714
    %v5817 = vunpack.c.l.b16 %v5715
    %v5818 = vunpack.c.l.b16 %v5716
    %v5819 = vunpack.c.l.b16 %v5717
    %v5820 = vunpack.c.l.b16 %v5718
    %v5821 = vunpack.c.l.b16 %v5719
    %v5822 = vunpack.c.l.b16 %v5720
    %v5823 = vunpack.c.l.b16 %v5721
    %v5824 = vunpack.c.l.b16 %v5722
    %v5825 = vunpack.c.l.b16 %v5723
    %v5826 = vunpack.c.l.b16 %v5724
    %v5827 = vunpack.c.l.b16 %v5725
    %v5828 = vunpack.c.l.b16 %v5726
    %v5829 = vunpack.c.l.b16 %v5727
    %v5830 = vunpack.c.l.b16 %v5728
    %v5831 = vunpack.c.l.b16 %v5729
    %v5832 = vunpack.c.l.b16 %v5730
    %v5833 = vunpack.c.l.b16 %v5731
    %v5834 = vunpack.c.l.b16 %v5732
    %v5835 = vunpack.c.l.b16 %v5733
    %v5836 = vunpack.c.l.b16 %v5734
    %v5837 = vunpack.c.l.b16 %v5735
    %v5838 = vunpack.c.l.b16 %v5736
    %v5839 = vunpack.c.l.b16 %v5737
    %v5840 = vunpack.c.l.b16 %v5738
    %v5841 = vunpack.c.l.b16 %v5739
    %v5842 = vunpack.c.l.b16 %v5740
    %v5843 = vunpack.c.l.b16 %v5741
    %v5844 = vunpack.c.l.b16 %v5742
    %v5845 = vunpack.c.l.b16 %v5743
    %v5846 = vunpack.c.l.b16 %v5744
    %v5847 = vunpack.c.l.b16 %v5745
    %v5848 = vunpack.c.l.b16 %v5746
    %v5849 = vunpack.c.l.b16 %v5747
    %v5850 = vpack.c.b16 %v5803, %v5802
    %v5851 = vpack.c.b16 %v5805, %v5804
    %v5852 = vpack.c.b16 %v5807, %v5806
    %v5853 = vpack.c.b16 %v5809, %v5808
    %v5854 = vpack.c.b16 %v5811, %v5810
    %v5855 = vpack.c.b16 %v5813, %v5812
    %v5856 = vpack.c.b16 %v5815, %v5814
    %v5857 = vpack.c.b16 %v5817, %v5816
    %v5858 = vpack.c.b16 %v5819, %v5818
    %v5859 = vpack.c.b16 %v5821, %v5820
    %v5860 = vpack.c.b16 %v5823, %v5822
    %v5861 = vpack.c.b16 %v5825, %v5824
    %v5862 = vpack.c.b16 %v5827, %v5826
    %v5863 = vpack.c.b16 %v5829, %v5828
    %v5864 = vpack.c.b16 %v5831, %v5830
    %v5865 = vpack.c.b16 %v5833, %v5832
    %v5866 = vpack.c.b16 %v5835, %v5834
    %v5867 = vpack.c.b16 %v5837, %v5836
    %v5868 = vpack.c.b16 %v5839, %v5838
    %v5869 = vpack.c.b16 %v5841, %v5840
    %v5870 = vpack.c.b16 %v5843, %v5842
    %v5871 = vpack.c.b16 %v5845, %v5844
    %v5872 = vpack.c.b16 %v5847, %v5846
    %v5873 = vpack.c.b16 %v5849, %v5848
    %5898 = vmatprep.subr.bf16.mxu0 0
    %5899 = vmatpush1.bf16.msra.mxu0 %v5850
    %5900 = vmatprep.subr.bf16.mxu0 0
    %5901 = vmatpush1.bf16.msra.mxu0 %v5851
    %5902 = vmatprep.subr.bf16.mxu0 0
    %5903 = vmatpush1.bf16.msra.mxu0 %v5852
    %5904 = vmatprep.subr.bf16.mxu0 0
    %5905 = vmatpush1.bf16.msra.mxu0 %v5853
    %5906 = vmatprep.subr.bf16.mxu0 0
    %5907 = vmatpush1.bf16.msra.mxu0 %v5854
    %5908 = vmatprep.subr.bf16.mxu0 0
    %5909 = vmatpush1.bf16.msra.mxu0 %v5855
    %5910 = vmatprep.subr.bf16.mxu0 0
    %5911 = vmatpush1.bf16.msra.mxu0 %v5856
    %5912 = vmatprep.subr.bf16.mxu0 0
    %5913 = vmatpush1.bf16.msra.mxu0 %v5857
    %5914 = vmatprep.subr.bf16.mxu0 0
    %5915 = vmatpush1.bf16.msra.mxu0 %v5858
    %5916 = vmatprep.subr.bf16.mxu0 0
    %5917 = vmatpush1.bf16.msra.mxu0 %v5859
    %5918 = vmatprep.subr.bf16.mxu0 0
    %5919 = vmatpush1.bf16.msra.mxu0 %v5860
    %5920 = vmatprep.subr.bf16.mxu0 0
    %5921 = vmatpush1.bf16.msra.mxu0 %v5861
    %5922 = vmatprep.subr.bf16.mxu0 0
    %5923 = vmatpush1.bf16.msra.mxu0 %v5862
    %5924 = vmatprep.subr.bf16.mxu0 0
    %5925 = vmatpush1.bf16.msra.mxu0 %v5863
    %5926 = vmatprep.subr.bf16.mxu0 0
    %5927 = vmatpush1.bf16.msra.mxu0 %v5864
    %5928 = vmatprep.subr.bf16.mxu0 0
    %5929 = vmatpush1.bf16.msra.mxu0 %v5865
    %5930 = vmatprep.mubr.bf16.mxu0 %v5749
    %5931 = vmatmul.mubr.bf16.gmra.mrb[0].mxu0 %v5748
    %v5932 = vpop.f32.mrb[0].mxu0
    %v5933 = vadd.f32 0.0, %v5932
    %v5934 = vpop.f32.mrb[0].mxu0
    %v5935 = vpop.f32.mrb[0].mxu0
    %v5936 = vadd.f32 0.0, %v5935
    %v5937 = vpop.f32.mrb[0].mxu0
    %5938 = vmatprep.mubr.bf16.mxu0 %v5752
    %5939 = vmatmul.mubr.bf16.gmra.mrb[0].mxu0 %v5751
    %v5940 = vpop.f32.mrb[0].mxu0
    %v5941 = vadd.f32 0.0, %v5940
    %v5942 = vpop.f32.mrb[0].mxu0
    %v5943 = vpop.f32.mrb[0].mxu0
    %v5944 = vadd.f32 0.0, %v5943
    %v5945 = vpop.f32.mrb[0].mxu0
    %5946 = vdwg.mxu0
    %5947 = vmatprep.subr.bf16.mxu0 0
    %5948 = vmatpush1.bf16.msra.mxu0 %v5866
    %5949 = vmatprep.subr.bf16.mxu0 0
    %5950 = vmatpush1.bf16.msra.mxu0 %v5867
    %5951 = vmatprep.subr.bf16.mxu0 0
    %5952 = vmatpush1.bf16.msra.mxu0 %v5868
    %5953 = vmatprep.subr.bf16.mxu0 0
    %5954 = vmatpush1.bf16.msra.mxu0 %v5869
    %5955 = vmatprep.subr.bf16.mxu0 0
    %5956 = vmatpush1.bf16.msra.mxu0 %v5870
    %5957 = vmatprep.subr.bf16.mxu0 0
    %5958 = vmatpush1.bf16.msra.mxu0 %v5871
    %5959 = vmatprep.subr.bf16.mxu0 0
    %5960 = vmatpush1.bf16.msra.mxu0 %v5872
    %5961 = vmatprep.subr.bf16.mxu0 0
    %5962 = vmatpush1.bf16.msra.mxu0 %v5873
    %5963 = vmatprep.subr.bf16.mxu0 0
    %5964 = vmatpush1.bf16.msra.mxu0 0
    %5965 = vmatprep.subr.bf16.mxu0 0
    %5966 = vmatpush1.bf16.msra.mxu0 0
    %5967 = vmatprep.subr.bf16.mxu0 0
    %5968 = vmatpush1.bf16.msra.mxu0 0
    %5969 = vmatprep.subr.bf16.mxu0 0
    %5970 = vmatpush1.bf16.msra.mxu0 0
    %5971 = vmatprep.subr.bf16.mxu0 0
    %5972 = vmatpush1.bf16.msra.mxu0 0
    %5973 = vmatprep.subr.bf16.mxu0 0
    %5974 = vmatpush1.bf16.msra.mxu0 0
    %5975 = vmatprep.subr.bf16.mxu0 0
    %5976 = vmatpush1.bf16.msra.mxu0 0
    %5977 = vmatprep.subr.bf16.mxu0 0
    %5978 = vmatpush1.bf16.msra.mxu0 0
    %5979 = vmatprep.mubr.bf16.mxu0 0
    %5980 = vmatmul.mubr.bf16.gmra.mrb[0].mxu0 %v5750
    %v5981 = vpop.f32.mrb[0].mxu0
    %v5982 = vadd.f32 %v5933, %v5981
    %v5983 = vpop.f32.mrb[0].mxu0
    %v5984 = vpop.f32.mrb[0].mxu0
    %v5985 = vadd.f32 %v5936, %v5984
    %v5986 = vpop.f32.mrb[0].mxu0
    %5987 = vmatprep.mubr.bf16.mxu0 0
    %5988 = vmatmul.mubr.bf16.gmra.mrb[0].mxu0 %v5753
    %v5989 = vpop.f32.mrb[0].mxu0
    %v5990 = vadd.f32 %v5941, %v5989
    %v5991 = vpop.f32.mrb[0].mxu0
    %v5992 = vpop.f32.mrb[0].mxu0
    %v5993 = vadd.f32 %v5944, %v5992
    %v5994 = vpop.f32.mrb[0].mxu0
    %5995 = vdwg.mxu0
    %v5996 = vadd.f32 %v5232, %v5982
    %v5997 = vadd.f32 %v5233, %v5985
    %v5998 = vadd.f32 %v5234, %v5990
    %v5999 = vadd.f32 %v5235, %v5993
    %s6000 = scalar_lea.vmem %s19, 1
    %v6001 = vld [vmem:[%s6000] sm:$0x1]
    %v6003 = vlaneseq
    %v6004 = vshrl.u32 %v6003, 7
    %v6005 = vsub.s32 0, %v6004
    %v6006 = vrot.slane %v6001, %v6005
    %v6008 = vadd.f32 %v5996, %v6006
    %v6009 = vadd.f32 %v5997, %v6006
    %v6010 = vadd.f32 %v5998, %v6006
    %v6011 = vadd.f32 %v5999, %v6006
    %v6012 = vld [vmem:[%s20] sm:$0x1]
    %v6013 = vld [vmem:[%s21] sm:$0x1]
    %6014 = vadd.xlane.f32.xlu0 %v6008
    %v6015 = vpop.xlane.xlu0 %6014
    %6016 = vadd.xlane.f32.xlu0 %v6009
    %v6017 = vpop.xlane.xlu0 %6016
    %6018 = vadd.xlane.f32.xlu0 %v6010
    %v6019 = vpop.xlane.xlu0 %6018
    %6020 = vadd.xlane.f32.xlu0 %v6011
    %v6021 = vpop.xlane.xlu0 %6020
    %v6022 = vmul.f32 %v6015, 0.010416667
    %v6023 = vmul.f32 %v6017, 0.010416667
    %v6024 = vmul.f32 %v6019, 0.010416667
    %v6025 = vmul.f32 %v6021, 0.010416667
    %v6026 = vsub.f32 %v6008, %v6022
    %v6027 = vsub.f32 %v6009, %v6023
    %v6028 = vsub.f32 %v6010, %v6024
    %v6029 = vsub.f32 %v6011, %v6025
    %v6030 = vmul.f32 %v6026, %v83
    %v6031 = vmul.f32 %v6027, %v83
    %v6032 = vmul.f32 %v6028, %v83
    %v6033 = vmul.f32 %v6029, %v83
    %v6034 = vmul.f32 %v6030, %v6030
    %v6035 = vmul.f32 %v6031, %v6031
    %v6036 = vmul.f32 %v6032, %v6032
    %v6037 = vmul.f32 %v6033, %v6033
    %6038 = vadd.xlane.f32.xlu0 %v6034
    %v6039 = vpop.xlane.xlu0 %6038
    %6040 = vadd.xlane.f32.xlu0 %v6035
    %v6041 = vpop.xlane.xlu0 %6040
    %6042 = vadd.xlane.f32.xlu0 %v6036
    %v6043 = vpop.xlane.xlu0 %6042
    %6044 = vadd.xlane.f32.xlu0 %v6037
    %v6045 = vpop.xlane.xlu0 %6044
    %v6046 = vmul.f32 %v6039, 0.010416667
    %v6047 = vmul.f32 %v6041, 0.010416667
    %v6048 = vmul.f32 %v6043, 0.010416667
    %v6049 = vmul.f32 %v6045, 0.010416667
    %v6050 = vadd.f32 %v6046, 1e-05
    %v6051 = vadd.f32 %v6047, 1e-05
    %v6052 = vadd.f32 %v6048, 1e-05
    %v6053 = vadd.f32 %v6049, 1e-05
    %v6054 = vrsqrt.pop %v6050
    %v6055 = vrsqrt.pop %v6051
    %v6056 = vrsqrt.pop %v6052
    %v6057 = vrsqrt.pop %v6053
    %v6058 = vmul.f32 %v6026, %v6054
    %v6059 = vmul.f32 %v6027, %v6055
    %v6060 = vmul.f32 %v6028, %v6056
    %v6061 = vmul.f32 %v6029, %v6057
    %v6063 = vlaneseq
    %v6064 = vshrl.u32 %v6063, 7
    %v6065 = vsub.s32 0, %v6064
    %v6066 = vrot.slane %v6012, %v6065
    %v6068 = vmul.f32 %v6058, %v6066
    %v6069 = vmul.f32 %v6059, %v6066
    %v6070 = vmul.f32 %v6060, %v6066
    %v6071 = vmul.f32 %v6061, %v6066
    %v6073 = vlaneseq
    %v6074 = vshrl.u32 %v6073, 7
    %v6075 = vsub.s32 0, %v6074
    %v6076 = vrot.slane %v6013, %v6075
    %v6078 = vadd.f32 %v6068, %v6076
    %v6079 = vadd.f32 %v6069, %v6076
    %v6080 = vadd.f32 %v6070, %v6076
    %v6081 = vadd.f32 %v6071, %v6076
    %v6082 = vadd.f32 %v6078, %v6079
    %v6083 = vrot.slane %v6082, 4
    %v6084 = vadd.f32 %v6082, %v6083
    %v6085 = vrot.slane %v6084, 2
    %v6086 = vadd.f32 %v6084, %v6085
    %v6087 = vrot.slane %v6086, 1
    %v6088 = vadd.f32 %v6086, %v6087
    %v6089 = vadd.f32 %v6080, %v6081
    %v6090 = vrot.slane %v6089, 4
    %v6091 = vadd.f32 %v6089, %v6090
    %v6092 = vrot.slane %v6091, 2
    %v6093 = vadd.f32 %v6091, %v6092
    %v6094 = vrot.slane %v6093, 1
    %v6095 = vadd.f32 %v6093, %v6094
    %v6096 = vrcp.pop 16.0
    %v6097 = vmul.f32 %v6088, %v6096
    %v6098 = vmul.f32 %v6095, %v6096
    %v6099 = vld [vmem:[%s22] sm:$0xf]
    %v6100 = vld [vmem:[%s22 + $0x4] sm:$0xf]
    %v6101 = vld [vmem:[%s22 + $0x8] sm:$0xf]
    %v6102 = vld [vmem:[%s22 + $0xc] sm:$0xf]
    %v6103 = vld [vmem:[%s22 + $0x10] sm:$0xf]
    %v6104 = vld [vmem:[%s22 + $0x14] sm:$0xf]
    %v6105 = vld [vmem:[%s22 + $0x18] sm:$0xf]
    %v6106 = vld [vmem:[%s22 + $0x1c] sm:$0xf]
    %v6107 = vld [vmem:[%s22 + $0x20] sm:$0xf]
    %v6108 = vld [vmem:[%s22 + $0x24] sm:$0xf]
    %v6109 = vld [vmem:[%s22 + $0x28] sm:$0xf]
    %v6110 = vld [vmem:[%s22 + $0x2c] sm:$0xf]
    %v6111 = vld [vmem:[%s22 + $0x30] sm:$0xf]
    %v6112 = vld [vmem:[%s22 + $0x34] sm:$0xf]
    %v6113 = vld [vmem:[%s22 + $0x38] sm:$0xf]
    %v6114 = vld [vmem:[%s22 + $0x3c] sm:$0xf]
    %v6115 = vpack.c.bf16 %v6097, %v6097
    %v6116 = vpack.c.bf16 %v6098, %v6098
    %v6117 = vld [vmem:[%s23] sm:$0x1]
    %v6119 = vlaneseq
    %v6120 = vshrl.u32 %v6119, 7
    %v6121 = vsub.s32 0, %v6120
    %v6122 = vrot.slane %v6117, %v6121
    %v6126 = vunpack.c.l.b16 %v6115
    %v6127 = vunpack.c.l.b16 %v6116
    %vm6128 = vcmask 1041409
    %v6129 = vsel %vm6128, %v6127, %v6126
    %v6130 = vpack.c.b16 %v6129, %v6129
    %v6148 = vunpack.c.l.b16 %v6099
    %v6149 = vunpack.c.l.b16 %v6100
    %v6150 = vunpack.c.l.b16 %v6101
    %v6151 = vunpack.c.l.b16 %v6102
    %v6152 = vunpack.c.l.b16 %v6103
    %v6153 = vunpack.c.l.b16 %v6104
    %v6154 = vunpack.c.l.b16 %v6105
    %v6155 = vunpack.c.l.b16 %v6106
    %v6156 = vunpack.c.l.b16 %v6107
    %v6157 = vunpack.c.l.b16 %v6108
    %v6158 = vunpack.c.l.b16 %v6109
    %v6159 = vunpack.c.l.b16 %v6110
    %v6160 = vunpack.c.l.b16 %v6111
    %v6161 = vunpack.c.l.b16 %v6112
    %v6162 = vunpack.c.l.b16 %v6113
    %v6163 = vunpack.c.l.b16 %v6114
    %v6164 = vpack.c.b16 %v6149, %v6148
    %v6165 = vpack.c.b16 %v6151, %v6150
    %v6166 = vpack.c.b16 %v6153, %v6152
    %v6167 = vpack.c.b16 %v6155, %v6154
    %v6168 = vpack.c.b16 %v6157, %v6156
    %v6169 = vpack.c.b16 %v6159, %v6158
    %v6170 = vpack.c.b16 %v6161, %v6160
    %v6171 = vpack.c.b16 %v6163, %v6162
    %6180 = vmatprep.subr.bf16.mxu0 0
    %6181 = vmatpush1.bf16.msra.mxu0 %v6164
    %6182 = vmatprep.subr.bf16.mxu0 0
    %6183 = vmatpush1.bf16.msra.mxu0 %v6165
    %6184 = vmatprep.subr.bf16.mxu0 0
    %6185 = vmatpush1.bf16.msra.mxu0 %v6166
    %6186 = vmatprep.subr.bf16.mxu0 0
    %6187 = vmatpush1.bf16.msra.mxu0 %v6167
    %6188 = vmatprep.subr.bf16.mxu0 0
    %6189 = vmatpush1.bf16.msra.mxu0 %v6168
    %6190 = vmatprep.subr.bf16.mxu0 0
    %6191 = vmatpush1.bf16.msra.mxu0 %v6169
    %6192 = vmatprep.subr.bf16.mxu0 0
    %6193 = vmatpush1.bf16.msra.mxu0 %v6170
    %6194 = vmatprep.subr.bf16.mxu0 0
    %6195 = vmatpush1.bf16.msra.mxu0 %v6171
    %6196 = vmatprep.subr.bf16.mxu0 0
    %6197 = vmatpush1.bf16.msra.mxu0 0
    %6198 = vmatprep.subr.bf16.mxu0 0
    %6199 = vmatpush1.bf16.msra.mxu0 0
    %6200 = vmatprep.subr.bf16.mxu0 0
    %6201 = vmatpush1.bf16.msra.mxu0 0
    %6202 = vmatprep.subr.bf16.mxu0 0
    %6203 = vmatpush1.bf16.msra.mxu0 0
    %6204 = vmatprep.subr.bf16.mxu0 0
    %6205 = vmatpush1.bf16.msra.mxu0 0
    %6206 = vmatprep.subr.bf16.mxu0 0
    %6207 = vmatpush1.bf16.msra.mxu0 0
    %6208 = vmatprep.subr.bf16.mxu0 0
    %6209 = vmatpush1.bf16.msra.mxu0 0
    %6210 = vmatprep.subr.bf16.mxu0 0
    %6211 = vmatpush1.bf16.msra.mxu0 0
    %6212 = vmatprep.mubr.bf16.mxu0 0
    %6213 = vmatmul.mubr.bf16.gmra.mrb[0].mxu0 %v6130
    %v6214 = vpop.f32.mrb[0].mxu0
    %v6215 = vadd.f32 %v6122, %v6214
    %v6216 = vpop.f32.mrb[0].mxu0
    %v6217 = vpop.f32.mrb[0].mxu0
    %v6218 = vpop.f32.mrb[0].mxu0
    %6219 = vdwg.mxu0
    %6220 = vst [vmem:[#allocation2] sm:$0x3] %v6215
    // Predicated region
    $region98: #{tpu_custom_call.1} parent=1 // pred_check
      _
    $region99: #{tpu_custom_call.1} parent=1 // pred_check_branch
      %6222 = sbr.rel (0) target = $region101
    $region100: #{tpu_custom_call.1} parent=1 // pred_region
      %s6224 = ssub.s32 32, 32
      %6225 = vsyncadd [#allocation3], %s6224
      %s6227 = sshll.u32 [#allocation2], 4
      %s6228 = int_to_ptr.vmem [resolvable:$true] %s6227
      %6230 = dma.vmem_to_hbm [thread:$0]  %s6228, 32, %s24, [#allocation3]
    $region101: #{tpu_custom_call.1} parent=1 // pred_fallthru
      _
    // Predicated region
    $region102: #{tpu_custom_call.1} parent=1 // pred_check
      _
    $region103: #{tpu_custom_call.1} parent=1 // pred_check_branch
      %6232 = sbr.rel (0) target = $region105
    $region104: #{tpu_custom_call.1} parent=1 // pred_region
      %6233 = dma.done [#allocation3], 32
    $region105: #{tpu_custom_call.1} parent=1 // pred_fallthru
      _
    %6234 = vsyncpa [#allocation3], 1

</llo_original>
